<compile_context>
chip_gen: v7x
topology: tpu7x:2x2x1
jax: 0.10.0
libtpu: 0.0.40
codegen_flags: <defaults>
</compile_context>

<pallas_src>
import jax
import jax.numpy as jnp
from jax.experimental import pallas as pl
from jax.experimental.pallas import tpu as pltpu


def _silu(x):
    return x * jax.nn.sigmoid(x)


def _layernorm(x, gamma, beta, eps=1e-5):
    # LayerNorm over the last (lane) dim, biased variance, like torch.nn.LayerNorm.
    mean = jnp.mean(x, axis=-1, keepdims=True)
    var = jnp.mean((x - mean) ** 2, axis=-1, keepdims=True)
    return (x - mean) * jax.lax.rsqrt(var + eps) * gamma + beta


def force_vec_kernel(x_ref, w1_ref, g1_ref, b1_ref, w2_ref, g2_ref, b2_ref,
                     w3_ref, o_ref):
    """One grid step processes a (TM, H) row-tile of the flattened input."""
    H = x_ref.shape[-1]

    # mlp[0..2]: Linear(H->H) on the MXU (bf16 in, f32 acc) -> SiLU -> LayerNorm.
    h = jnp.dot(x_ref[...], w1_ref[...],
                preferred_element_type=jnp.float32)          # (TM, H) f32
    h = _layernorm(_silu(h), g1_ref[...], b1_ref[...])
    h_bf = h.astype(jnp.bfloat16)                            # feed MXU in bf16

    # Hoist per-branch constants (read once, f32).
    g2 = g2_ref[...]
    b2 = b2_ref[...]
    w3 = w3_ref[...]                                         # (1, H)

    # mlp[3] fused with proj: per branch k, (TM,H)@(H,H) -> SiLU -> LN -> <., w3>.
    for k in range(3):                                       # trace-time unrolled
        w2k = w2_ref[:, k * H:(k + 1) * H]                   # bf16 (H, H), lane-aligned
        hk = jnp.dot(h_bf, w2k, preferred_element_type=jnp.float32)
        ln = _layernorm(_silu(hk), g2, b2)
        col = jnp.sum(ln * w3, axis=-1, keepdims=True)       # (TM, 1) f32
        o_ref[:, k:k + 1] = col.astype(o_ref.dtype)          # direct column store


def force_vec_output(x, v, params, *, tm=256):
    """Pallas wrapper. `v` is accepted for API parity but unused (as in torch)."""
    del v
    B, N, H = x.shape
    assert H % 128 == 0, "hidden dim must be a multiple of 128 for lane tiling"
    assert tm % 8 == 0
    M = B * N
    Mp = pl.cdiv(M, tm) * tm                                 # pad rows to tile multiple
    w1, g1, b1, w2, g2, b2, w3 = params

    # bf16 operands into the MXU; LayerNorm params / final projection stay f32.
    xf = x.reshape(M, H).astype(jnp.bfloat16)
    if Mp != M:
        xf = jnp.pad(xf, ((0, Mp - M), (0, 0)))
    w1_bf = w1.astype(jnp.bfloat16)
    w2_bf = w2.astype(jnp.bfloat16)

    flops = 8 * Mp * H * H                                   # 4 (H,H)-sized matmuls/row
    transcendentals = 4 * Mp * H                             # sigmoid on h + 3 branches
    bytes_accessed = (xf.size * 2 + w1_bf.size * 2 + w2_bf.size * 2
                      + (g1.size + b1.size + g2.size + b2.size + w3.size) * 4
                      + Mp * 3 * 4)

    full = lambda i: (0, 0)
    out = pl.pallas_call(
        force_vec_kernel,
        out_shape=jax.ShapeDtypeStruct((Mp, 3), jnp.float32),
        grid_spec=pltpu.PrefetchScalarGridSpec(
            num_scalar_prefetch=0,
            grid=(Mp // tm,),
            in_specs=[
                pl.BlockSpec((tm, H), lambda i: (i, 0)),     # x row-tile (bf16)
                pl.BlockSpec((H, H), full),                  # W1  (H, H)   bf16
                pl.BlockSpec((1, H), full),                  # ln1 gamma    f32
                pl.BlockSpec((1, H), full),                  # ln1 beta     f32
                pl.BlockSpec((H, 3 * H), full),              # W2  (H, 3H)  bf16
                pl.BlockSpec((1, H), full),                  # ln2 gamma    f32
                pl.BlockSpec((1, H), full),                  # ln2 beta     f32
                pl.BlockSpec((1, H), full),                  # w3  (1, H)   f32
            ],
            out_specs=pl.BlockSpec((tm, 3), lambda i: (i, 0)),
        ),
        compiler_params=pltpu.CompilerParams(
            dimension_semantics=("parallel",),
            vmem_limit_bytes=32 * 1024 * 1024,
        ),
        cost_estimate=pl.CostEstimate(
            flops=flops,
            transcendentals=transcendentals,
            bytes_accessed=bytes_accessed,
        ),
    )(xf, w1_bf, g1, b1, w2_bf, g2, b2, w3)
    return out[:M].reshape(B, N, 3)


def force_vec_reference(x, params, *, mixed=True):
    """Pure-JAX reference reproducing the torch forward.

    mixed=True mirrors the kernel's numerics exactly (bf16 matmul operands,
    f32 accumulation, f32 elementwise); mixed=False is the full-f32 reference.
    """
    w1, g1, b1, w2, g2, b2, w3 = params
    B, N, _ = x.shape
    if mixed:
        x_in = x.astype(jnp.bfloat16)
        w1 = w1.astype(jnp.bfloat16)
        w2 = w2.astype(jnp.bfloat16)
    else:
        x_in = x
    h = jnp.dot(x_in, w1, preferred_element_type=jnp.float32)
    h = _layernorm(_silu(h), g1[0], b1[0])
    if mixed:
        h = h.astype(jnp.bfloat16)
    h = jnp.dot(h, w2, preferred_element_type=jnp.float32)   # (B, N, 3H)
    h = h.reshape(B, N, 3, -1)
    h = _layernorm(_silu(h), g2[0], b2[0])
    return jnp.einsum("bnkh,h->bnk", h, w3[0])


def make_params(key, H):
    """Deterministic synthetic parameters (shapes match the torch module)."""
    k1, k2, k3, k4, k5, k6, k7 = jax.random.split(key, 7)
    scale = 1.0 / jnp.sqrt(H)
    # Stored in "x @ W" layout (in_dim, out_dim), transposed vs torch (out, in).
    w1 = jax.random.normal(k1, (H, H), jnp.float32) * scale
    w2 = jax.random.normal(k2, (H, 3 * H), jnp.float32) * scale
    w3 = jax.random.normal(k3, (1, H), jnp.float32) * scale
    g1 = 1.0 + 0.1 * jax.random.normal(k4, (1, H), jnp.float32)
    b1 = 0.1 * jax.random.normal(k5, (1, H), jnp.float32)
    g2 = 1.0 + 0.1 * jax.random.normal(k6, (1, H), jnp.float32)
    b2 = 0.1 * jax.random.normal(k7, (1, H), jnp.float32)
    return (w1, g1, b1, w2, g2, b2, w3)


if __name__ == "__main__":
    B, N, H = 2, 8, 256          # small stand-in for hidden_channels=768
    key = jax.random.PRNGKey(0)
    kx, kv, kp = jax.random.split(key, 3)
    x = jax.random.normal(kx, (B, N, H), jnp.float32)
    v = jax.random.normal(kv, (B, N, 3, H), jnp.float32)   # unused, as in torch forward
    params = make_params(kp, H)

    out = jax.block_until_ready(force_vec_output(x, v, params, tm=256))
    assert out.shape == (B, N, 3)

    # Tight check against the precision-matched reference.
    ref_mixed = force_vec_reference(x, params, mixed=True)
    assert jnp.allclose(out, ref_mixed, rtol=2e-3, atol=2e-3), "mismatch vs mixed ref"

    # Loose sanity check against the pure-f32 reference (bf16 MXU rounding).
    ref_f32 = force_vec_reference(x, params, mixed=False)
    assert jnp.allclose(out, ref_f32, rtol=1e-1, atol=1e-1), "mismatch vs f32 ref"

    print("KERNEL_OK")
</pallas_src>

<mosaic_0001>
module attributes {stable_mosaic.version = 11 : i64} {
  func.func @force_vec_kernel(%arg0: i32, %arg1: memref<256x256xbf16, #tpu.memory_space<vmem>>, %arg2: memref<256x256xbf16, #tpu.memory_space<vmem>>, %arg3: memref<1x256xf32, #tpu.memory_space<vmem>>, %arg4: memref<1x256xf32, #tpu.memory_space<vmem>>, %arg5: memref<256x768xbf16, #tpu.memory_space<vmem>>, %arg6: memref<1x256xf32, #tpu.memory_space<vmem>>, %arg7: memref<1x256xf32, #tpu.memory_space<vmem>>, %arg8: memref<1x256xf32, #tpu.memory_space<vmem>>, %arg9: memref<256x3xf32, #tpu.memory_space<vmem>>) attributes {dimension_semantics = [#tpu.dimension_semantics<parallel>], iteration_bounds = array<i64: 1>, scalar_prefetch = 0 : i64, scratch_operands = 0 : i64, tpu.core_type = #tpu.core_type<tc>, window_params = [{transform_indices = @transform_0, window_bounds = array<i64: 256, 256>}, {pipeline_mode = #tpu.pipeline_mode<synchronous>, transform_indices = @transform_1, window_bounds = array<i64: 256, 256>}, {pipeline_mode = #tpu.pipeline_mode<synchronous>, transform_indices = @transform_2, window_bounds = array<i64: 1, 256>}, {pipeline_mode = #tpu.pipeline_mode<synchronous>, transform_indices = @transform_3, window_bounds = array<i64: 1, 256>}, {pipeline_mode = #tpu.pipeline_mode<synchronous>, transform_indices = @transform_4, window_bounds = array<i64: 256, 768>}, {pipeline_mode = #tpu.pipeline_mode<synchronous>, transform_indices = @transform_5, window_bounds = array<i64: 1, 256>}, {pipeline_mode = #tpu.pipeline_mode<synchronous>, transform_indices = @transform_6, window_bounds = array<i64: 1, 256>}, {pipeline_mode = #tpu.pipeline_mode<synchronous>, transform_indices = @transform_7, window_bounds = array<i64: 1, 256>}, {transform_indices = @transform_8, window_bounds = array<i64: 256, 3>}]} {
    %c0 = arith.constant 0 : index
    %c0_0 = arith.constant 0 : index
    %0 = vector.load %arg1[%c0, %c0_0] : memref<256x256xbf16, #tpu.memory_space<vmem>>, vector<256x256xbf16>
    %c0_1 = arith.constant 0 : index
    %c0_2 = arith.constant 0 : index
    %1 = vector.load %arg2[%c0_1, %c0_2] : memref<256x256xbf16, #tpu.memory_space<vmem>>, vector<256x256xbf16>
    %cst = arith.constant dense<0.000000e+00> : vector<256x256xf32>
    %2 = tpu.matmul %0, %1, %cst {dimension_numbers = #tpu.dot_dimension_numbers<[1], [0], [0], [1], [0, 0, 1, 1], [], []>} : vector<256x256xbf16>, vector<256x256xbf16>, vector<256x256xf32> -> vector<256x256xf32>
    %3 = arith.negf %2 : vector<256x256xf32>
    %4 = math.exp %3 : vector<256x256xf32>
    %cst_3 = arith.constant 1.000000e+00 : f32
    %5 = vector.broadcast %cst_3 : f32 to vector<256x256xf32>
    %6 = arith.addf %5, %4 : vector<256x256xf32>
    %7 = arith.divf %5, %6 : vector<256x256xf32>
    %8 = arith.mulf %2, %7 : vector<256x256xf32>
    %c0_4 = arith.constant 0 : index
    %c0_5 = arith.constant 0 : index
    %9 = vector.load %arg3[%c0_4, %c0_5] : memref<1x256xf32, #tpu.memory_space<vmem>>, vector<1x256xf32>
    %c0_6 = arith.constant 0 : index
    %c0_7 = arith.constant 0 : index
    %10 = vector.load %arg4[%c0_6, %c0_7] : memref<1x256xf32, #tpu.memory_space<vmem>>, vector<1x256xf32>
    %cst_8 = arith.constant dense<0.000000e+00> : vector<256xf32>
    %11 = vector.multi_reduction <add>, %8, %cst_8 [1] : vector<256x256xf32> to vector<256xf32>
    %12 = vector.shape_cast %11 : vector<256xf32> to vector<256x1xf32>
    %cst_9 = arith.constant 2.560000e+02 : f32
    %13 = vector.broadcast %cst_9 : f32 to vector<256x1xf32>
    %14 = arith.divf %12, %13 : vector<256x1xf32>
    %15 = vector.broadcast %14 : vector<256x1xf32> to vector<256x256xf32>
    %16 = arith.subf %8, %15 : vector<256x256xf32>
    %17 = arith.mulf %16, %16 : vector<256x256xf32>
    %cst_10 = arith.constant dense<0.000000e+00> : vector<256xf32>
    %18 = vector.multi_reduction <add>, %17, %cst_10 [1] : vector<256x256xf32> to vector<256xf32>
    %19 = vector.shape_cast %18 : vector<256xf32> to vector<256x1xf32>
    %cst_11 = arith.constant 2.560000e+02 : f32
    %20 = vector.broadcast %cst_11 : f32 to vector<256x1xf32>
    %21 = arith.divf %19, %20 : vector<256x1xf32>
    %22 = vector.broadcast %14 : vector<256x1xf32> to vector<256x256xf32>
    %23 = arith.subf %8, %22 : vector<256x256xf32>
    %cst_12 = arith.constant 9.99999974E-6 : f32
    %24 = vector.broadcast %cst_12 : f32 to vector<256x1xf32>
    %25 = arith.addf %21, %24 : vector<256x1xf32>
    %26 = math.rsqrt %25 : vector<256x1xf32>
    %27 = vector.broadcast %26 : vector<256x1xf32> to vector<256x256xf32>
    %28 = arith.mulf %23, %27 : vector<256x256xf32>
    %29 = vector.broadcast %9 : vector<1x256xf32> to vector<256x256xf32>
    %30 = arith.mulf %28, %29 : vector<256x256xf32>
    %31 = vector.broadcast %10 : vector<1x256xf32> to vector<256x256xf32>
    %32 = arith.addf %30, %31 : vector<256x256xf32>
    %33 = arith.truncf %32 : vector<256x256xf32> to vector<256x256xbf16>
    %c0_13 = arith.constant 0 : index
    %c0_14 = arith.constant 0 : index
    %34 = vector.load %arg6[%c0_13, %c0_14] : memref<1x256xf32, #tpu.memory_space<vmem>>, vector<1x256xf32>
    %c0_15 = arith.constant 0 : index
    %c0_16 = arith.constant 0 : index
    %35 = vector.load %arg7[%c0_15, %c0_16] : memref<1x256xf32, #tpu.memory_space<vmem>>, vector<1x256xf32>
    %c0_17 = arith.constant 0 : index
    %c0_18 = arith.constant 0 : index
    %36 = vector.load %arg8[%c0_17, %c0_18] : memref<1x256xf32, #tpu.memory_space<vmem>>, vector<1x256xf32>
    %c0_19 = arith.constant 0 : index
    %c0_20 = arith.constant 0 : index
    %37 = vector.load %arg5[%c0_19, %c0_20] : memref<256x768xbf16, #tpu.memory_space<vmem>>, vector<256x256xbf16>
    %cst_21 = arith.constant dense<0.000000e+00> : vector<256x256xf32>
    %38 = tpu.matmul %33, %37, %cst_21 {dimension_numbers = #tpu.dot_dimension_numbers<[1], [0], [0], [1], [0, 0, 1, 1], [], []>} : vector<256x256xbf16>, vector<256x256xbf16>, vector<256x256xf32> -> vector<256x256xf32>
    %39 = arith.negf %38 : vector<256x256xf32>
    %40 = math.exp %39 : vector<256x256xf32>
    %cst_22 = arith.constant 1.000000e+00 : f32
    %41 = vector.broadcast %cst_22 : f32 to vector<256x256xf32>
    %42 = arith.addf %41, %40 : vector<256x256xf32>
    %43 = arith.divf %41, %42 : vector<256x256xf32>
    %44 = arith.mulf %38, %43 : vector<256x256xf32>
    %cst_23 = arith.constant dense<0.000000e+00> : vector<256xf32>
    %45 = vector.multi_reduction <add>, %44, %cst_23 [1] : vector<256x256xf32> to vector<256xf32>
    %46 = vector.shape_cast %45 : vector<256xf32> to vector<256x1xf32>
    %cst_24 = arith.constant 2.560000e+02 : f32
    %47 = vector.broadcast %cst_24 : f32 to vector<256x1xf32>
    %48 = arith.divf %46, %47 : vector<256x1xf32>
    %49 = vector.broadcast %48 : vector<256x1xf32> to vector<256x256xf32>
    %50 = arith.subf %44, %49 : vector<256x256xf32>
    %51 = arith.mulf %50, %50 : vector<256x256xf32>
    %cst_25 = arith.constant dense<0.000000e+00> : vector<256xf32>
    %52 = vector.multi_reduction <add>, %51, %cst_25 [1] : vector<256x256xf32> to vector<256xf32>
    %53 = vector.shape_cast %52 : vector<256xf32> to vector<256x1xf32>
    %cst_26 = arith.constant 2.560000e+02 : f32
    %54 = vector.broadcast %cst_26 : f32 to vector<256x1xf32>
    %55 = arith.divf %53, %54 : vector<256x1xf32>
    %56 = vector.broadcast %48 : vector<256x1xf32> to vector<256x256xf32>
    %57 = arith.subf %44, %56 : vector<256x256xf32>
    %cst_27 = arith.constant 9.99999974E-6 : f32
    %58 = vector.broadcast %cst_27 : f32 to vector<256x1xf32>
    %59 = arith.addf %55, %58 : vector<256x1xf32>
    %60 = math.rsqrt %59 : vector<256x1xf32>
    %61 = vector.broadcast %60 : vector<256x1xf32> to vector<256x256xf32>
    %62 = arith.mulf %57, %61 : vector<256x256xf32>
    %63 = vector.broadcast %34 : vector<1x256xf32> to vector<256x256xf32>
    %64 = arith.mulf %62, %63 : vector<256x256xf32>
    %65 = vector.broadcast %35 : vector<1x256xf32> to vector<256x256xf32>
    %66 = arith.addf %64, %65 : vector<256x256xf32>
    %67 = vector.broadcast %36 : vector<1x256xf32> to vector<256x256xf32>
    %68 = arith.mulf %66, %67 : vector<256x256xf32>
    %cst_28 = arith.constant dense<0.000000e+00> : vector<256xf32>
    %69 = vector.multi_reduction <add>, %68, %cst_28 [1] : vector<256x256xf32> to vector<256xf32>
    %70 = vector.shape_cast %69 : vector<256xf32> to vector<256x1xf32>
    %c0_29 = arith.constant 0 : index
    %c0_30 = arith.constant 0 : index
    %71 = vector.load %arg9[%c0_29, %c0_30] : memref<256x3xf32, #tpu.memory_space<vmem>>, vector<256x1xf32>
    tpu.vector_store %arg9[%c0_29, %c0_30], %70 {strides = array<i32>} : memref<256x3xf32, #tpu.memory_space<vmem>>, vector<256x1xf32>,
    %c0_31 = arith.constant 0 : index
    %c256 = arith.constant 256 : index
    %72 = vector.load %arg5[%c0_31, %c256] : memref<256x768xbf16, #tpu.memory_space<vmem>>, vector<256x256xbf16>
    %cst_32 = arith.constant dense<0.000000e+00> : vector<256x256xf32>
    %73 = tpu.matmul %33, %72, %cst_32 {dimension_numbers = #tpu.dot_dimension_numbers<[1], [0], [0], [1], [0, 0, 1, 1], [], []>} : vector<256x256xbf16>, vector<256x256xbf16>, vector<256x256xf32> -> vector<256x256xf32>
    %74 = arith.negf %73 : vector<256x256xf32>
    %75 = math.exp %74 : vector<256x256xf32>
    %cst_33 = arith.constant 1.000000e+00 : f32
    %76 = vector.broadcast %cst_33 : f32 to vector<256x256xf32>
    %77 = arith.addf %76, %75 : vector<256x256xf32>
    %78 = arith.divf %76, %77 : vector<256x256xf32>
    %79 = arith.mulf %73, %78 : vector<256x256xf32>
    %cst_34 = arith.constant dense<0.000000e+00> : vector<256xf32>
    %80 = vector.multi_reduction <add>, %79, %cst_34 [1] : vector<256x256xf32> to vector<256xf32>
    %81 = vector.shape_cast %80 : vector<256xf32> to vector<256x1xf32>
    %cst_35 = arith.constant 2.560000e+02 : f32
    %82 = vector.broadcast %cst_35 : f32 to vector<256x1xf32>
    %83 = arith.divf %81, %82 : vector<256x1xf32>
    %84 = vector.broadcast %83 : vector<256x1xf32> to vector<256x256xf32>
    %85 = arith.subf %79, %84 : vector<256x256xf32>
    %86 = arith.mulf %85, %85 : vector<256x256xf32>
    %cst_36 = arith.constant dense<0.000000e+00> : vector<256xf32>
    %87 = vector.multi_reduction <add>, %86, %cst_36 [1] : vector<256x256xf32> to vector<256xf32>
    %88 = vector.shape_cast %87 : vector<256xf32> to vector<256x1xf32>
    %cst_37 = arith.constant 2.560000e+02 : f32
    %89 = vector.broadcast %cst_37 : f32 to vector<256x1xf32>
    %90 = arith.divf %88, %89 : vector<256x1xf32>
    %91 = vector.broadcast %83 : vector<256x1xf32> to vector<256x256xf32>
    %92 = arith.subf %79, %91 : vector<256x256xf32>
    %cst_38 = arith.constant 9.99999974E-6 : f32
    %93 = vector.broadcast %cst_38 : f32 to vector<256x1xf32>
    %94 = arith.addf %90, %93 : vector<256x1xf32>
    %95 = math.rsqrt %94 : vector<256x1xf32>
    %96 = vector.broadcast %95 : vector<256x1xf32> to vector<256x256xf32>
    %97 = arith.mulf %92, %96 : vector<256x256xf32>
    %98 = vector.broadcast %34 : vector<1x256xf32> to vector<256x256xf32>
    %99 = arith.mulf %97, %98 : vector<256x256xf32>
    %100 = vector.broadcast %35 : vector<1x256xf32> to vector<256x256xf32>
    %101 = arith.addf %99, %100 : vector<256x256xf32>
    %102 = vector.broadcast %36 : vector<1x256xf32> to vector<256x256xf32>
    %103 = arith.mulf %101, %102 : vector<256x256xf32>
    %cst_39 = arith.constant dense<0.000000e+00> : vector<256xf32>
    %104 = vector.multi_reduction <add>, %103, %cst_39 [1] : vector<256x256xf32> to vector<256xf32>
    %105 = vector.shape_cast %104 : vector<256xf32> to vector<256x1xf32>
    %c0_40 = arith.constant 0 : index
    %c1 = arith.constant 1 : index
    %106 = vector.load %arg9[%c0_40, %c1] : memref<256x3xf32, #tpu.memory_space<vmem>>, vector<256x1xf32>
    tpu.vector_store %arg9[%c0_40, %c1], %105 {strides = array<i32>} : memref<256x3xf32, #tpu.memory_space<vmem>>, vector<256x1xf32>,
    %c0_41 = arith.constant 0 : index
    %c512 = arith.constant 512 : index
    %107 = vector.load %arg5[%c0_41, %c512] : memref<256x768xbf16, #tpu.memory_space<vmem>>, vector<256x256xbf16>
    %cst_42 = arith.constant dense<0.000000e+00> : vector<256x256xf32>
    %108 = tpu.matmul %33, %107, %cst_42 {dimension_numbers = #tpu.dot_dimension_numbers<[1], [0], [0], [1], [0, 0, 1, 1], [], []>} : vector<256x256xbf16>, vector<256x256xbf16>, vector<256x256xf32> -> vector<256x256xf32>
    %109 = arith.negf %108 : vector<256x256xf32>
    %110 = math.exp %109 : vector<256x256xf32>
    %cst_43 = arith.constant 1.000000e+00 : f32
    %111 = vector.broadcast %cst_43 : f32 to vector<256x256xf32>
    %112 = arith.addf %111, %110 : vector<256x256xf32>
    %113 = arith.divf %111, %112 : vector<256x256xf32>
    %114 = arith.mulf %108, %113 : vector<256x256xf32>
    %cst_44 = arith.constant dense<0.000000e+00> : vector<256xf32>
    %115 = vector.multi_reduction <add>, %114, %cst_44 [1] : vector<256x256xf32> to vector<256xf32>
    %116 = vector.shape_cast %115 : vector<256xf32> to vector<256x1xf32>
    %cst_45 = arith.constant 2.560000e+02 : f32
    %117 = vector.broadcast %cst_45 : f32 to vector<256x1xf32>
    %118 = arith.divf %116, %117 : vector<256x1xf32>
    %119 = vector.broadcast %118 : vector<256x1xf32> to vector<256x256xf32>
    %120 = arith.subf %114, %119 : vector<256x256xf32>
    %121 = arith.mulf %120, %120 : vector<256x256xf32>
    %cst_46 = arith.constant dense<0.000000e+00> : vector<256xf32>
    %122 = vector.multi_reduction <add>, %121, %cst_46 [1] : vector<256x256xf32> to vector<256xf32>
    %123 = vector.shape_cast %122 : vector<256xf32> to vector<256x1xf32>
    %cst_47 = arith.constant 2.560000e+02 : f32
    %124 = vector.broadcast %cst_47 : f32 to vector<256x1xf32>
    %125 = arith.divf %123, %124 : vector<256x1xf32>
    %126 = vector.broadcast %118 : vector<256x1xf32> to vector<256x256xf32>
    %127 = arith.subf %114, %126 : vector<256x256xf32>
    %cst_48 = arith.constant 9.99999974E-6 : f32
    %128 = vector.broadcast %cst_48 : f32 to vector<256x1xf32>
    %129 = arith.addf %125, %128 : vector<256x1xf32>
    %130 = math.rsqrt %129 : vector<256x1xf32>
    %131 = vector.broadcast %130 : vector<256x1xf32> to vector<256x256xf32>
    %132 = arith.mulf %127, %131 : vector<256x256xf32>
    %133 = vector.broadcast %34 : vector<1x256xf32> to vector<256x256xf32>
    %134 = arith.mulf %132, %133 : vector<256x256xf32>
    %135 = vector.broadcast %35 : vector<1x256xf32> to vector<256x256xf32>
    %136 = arith.addf %134, %135 : vector<256x256xf32>
    %137 = vector.broadcast %36 : vector<1x256xf32> to vector<256x256xf32>
    %138 = arith.mulf %136, %137 : vector<256x256xf32>
    %cst_49 = arith.constant dense<0.000000e+00> : vector<256xf32>
    %139 = vector.multi_reduction <add>, %138, %cst_49 [1] : vector<256x256xf32> to vector<256xf32>
    %140 = vector.shape_cast %139 : vector<256xf32> to vector<256x1xf32>
    %c0_50 = arith.constant 0 : index
    %c2 = arith.constant 2 : index
    %141 = vector.load %arg9[%c0_50, %c2] : memref<256x3xf32, #tpu.memory_space<vmem>>, vector<256x1xf32>
    tpu.vector_store %arg9[%c0_50, %c2], %140 {strides = array<i32>} : memref<256x3xf32, #tpu.memory_space<vmem>>, vector<256x1xf32>,
    return
  }
  func.func @transform_0(%arg0: i32) -> (i32, i32) {
    %c0_i32 = arith.constant 0 : i32
    %c0_i32_0 = arith.constant 0 : i32
    return %arg0, %c0_i32 : i32, i32
  }
  func.func @transform_1(%arg0: i32) -> (i32, i32) {
    %c0_i32 = arith.constant 0 : i32
    %c0_i32_0 = arith.constant 0 : i32
    %c0_i32_1 = arith.constant 0 : i32
    return %c0_i32, %c0_i32_0 : i32, i32
  }
  func.func @transform_2(%arg0: i32) -> (i32, i32) {
    %c0_i32 = arith.constant 0 : i32
    %c0_i32_0 = arith.constant 0 : i32
    %c0_i32_1 = arith.constant 0 : i32
    return %c0_i32, %c0_i32_0 : i32, i32
  }
  func.func @transform_3(%arg0: i32) -> (i32, i32) {
    %c0_i32 = arith.constant 0 : i32
    %c0_i32_0 = arith.constant 0 : i32
    %c0_i32_1 = arith.constant 0 : i32
    return %c0_i32, %c0_i32_0 : i32, i32
  }
  func.func @transform_4(%arg0: i32) -> (i32, i32) {
    %c0_i32 = arith.constant 0 : i32
    %c0_i32_0 = arith.constant 0 : i32
    %c0_i32_1 = arith.constant 0 : i32
    return %c0_i32, %c0_i32_0 : i32, i32
  }
  func.func @transform_5(%arg0: i32) -> (i32, i32) {
    %c0_i32 = arith.constant 0 : i32
    %c0_i32_0 = arith.constant 0 : i32
    %c0_i32_1 = arith.constant 0 : i32
    return %c0_i32, %c0_i32_0 : i32, i32
  }
  func.func @transform_6(%arg0: i32) -> (i32, i32) {
    %c0_i32 = arith.constant 0 : i32
    %c0_i32_0 = arith.constant 0 : i32
    %c0_i32_1 = arith.constant 0 : i32
    return %c0_i32, %c0_i32_0 : i32, i32
  }
  func.func @transform_7(%arg0: i32) -> (i32, i32) {
    %c0_i32 = arith.constant 0 : i32
    %c0_i32_0 = arith.constant 0 : i32
    %c0_i32_1 = arith.constant 0 : i32
    return %c0_i32, %c0_i32_0 : i32, i32
  }
  func.func @transform_8(%arg0: i32) -> (i32, i32) {
    %c0_i32 = arith.constant 0 : i32
    %c0_i32_0 = arith.constant 0 : i32
    return %arg0, %c0_i32 : i32, i32
  }
}

</mosaic_0001>

<llo_original>
// kernel: tpu_custom_call.1
$region0: #{tpu_custom_call.1}
  #allocation0 [shape = 'u32[]', space=smem, size = 0x4, offset = 0x4, fixed_abs, tag = 'smem constant byte address 0x4 - core index']
  #allocation1 [shape = 'u32[144,128]{1,0:T(1,128)}', space=vmem, size = 0x12000, scoped, tag = 'internal scratch']
  %s0 = inlined_call_operand.hbm [shape: bf16[256,256], index: 0, kind: input, shape index: {}]
  %s1 = inlined_call_operand.hbm [shape: bf16[256,256], index: 1, kind: input, shape index: {}]
  %s2 = inlined_call_operand.vmem [shape: f32[1,256], index: 2, kind: input, shape index: {}]
  %s3 = inlined_call_operand.vmem [shape: f32[1,256], index: 3, kind: input, shape index: {}]
  %s4 = inlined_call_operand.hbm [shape: bf16[256,768], index: 4, kind: input, shape index: {}]
  %s5 = inlined_call_operand.vmem [shape: f32[1,256], index: 5, kind: input, shape index: {}]
  %s6 = inlined_call_operand.vmem [shape: f32[1,256], index: 6, kind: input, shape index: {}]
  %s7 = inlined_call_operand.vmem [shape: f32[1,256], index: 7, kind: input, shape index: {}]
  %s8 = inlined_call_operand.vmem [shape: f32[256,3], index: 8, kind: output, shape index: {}]
  %s9 = sld [smem:[#allocation0]]
  $region54: #{tpu_custom_call.1} parent=0
    _
  %s11 = ssub.s32 1, %s9
  %s12 = scalar_select 0, %s11, %s9
  $region1: #{tpu_custom_call.1} parent=0
    #allocation2 [shape = 'u8[131072]{0}', space=vmem, size = 0x20000, scoped, tag = 'input window, operand 0, single buffered']
    #allocation3 [shape = 's32[1]{0}', space=sflag, size = 0x4, scoped, tag = 'scoped memory for tpu_custom_call.1']
    #allocation4 [shape = 'u8[131072]{0}', space=vmem, size = 0x20000, scoped, tag = 'input window, operand 1, single buffered']
    #allocation5 [shape = 's32[1]{0}', space=sflag, size = 0x4, scoped, tag = 'scoped memory for tpu_custom_call.1']
    #allocation6 [shape = 'u8[393216]{0}', space=vmem, size = 0x60000, scoped, tag = 'input window, operand 4, single buffered']
    %13 = vsyncpa [#allocation3], 0
    %14 = vsyncpa [#allocation5], 0
    // Predicated region
    $region2: #{tpu_custom_call.1} parent=1 // pred_check
      _
    $region3: #{tpu_custom_call.1} parent=1 // pred_check_branch
      %16 = sbr.rel (0) target = $region5
    $region4: #{tpu_custom_call.1} parent=1 // pred_region
      %s18 = ssub.s32 4096, 4096
      %19 = vsyncadd [#allocation3], %s18
      %s20 = sshll.u32 [#allocation2], 4
      %s21 = int_to_ptr.vmem [resolvable:$true] %s20
      %26 = dma.hbm_to_vmem [thread:$0]  %s0, 4096, %s21, [#allocation3], 128, 128, 8
    $region5: #{tpu_custom_call.1} parent=1 // pred_fallthru
      _
    // Predicated region
    $region6: #{tpu_custom_call.1} parent=1 // pred_check
      _
    $region7: #{tpu_custom_call.1} parent=1 // pred_check_branch
      %28 = sbr.rel (0) target = $region9
    $region8: #{tpu_custom_call.1} parent=1 // pred_region
      %s30 = ssub.s32 4096, 4096
      %31 = vsyncadd [#allocation5], %s30
      %s32 = sshll.u32 [#allocation4], 4
      %s33 = int_to_ptr.vmem [resolvable:$true] %s32
      %38 = dma.hbm_to_vmem [thread:$0]  %s1, 4096, %s33, [#allocation5], 128, 128, 8
    $region9: #{tpu_custom_call.1} parent=1 // pred_fallthru
      _
    // Predicated region
    $region10: #{tpu_custom_call.1} parent=1 // pred_check
      _
    $region11: #{tpu_custom_call.1} parent=1 // pred_check_branch
      %40 = sbr.rel (0) target = $region13
    $region12: #{tpu_custom_call.1} parent=1 // pred_region
      _
    $region13: #{tpu_custom_call.1} parent=1 // pred_fallthru
      _
    // Predicated region
    $region14: #{tpu_custom_call.1} parent=1 // pred_check
      _
    $region15: #{tpu_custom_call.1} parent=1 // pred_check_branch
      %42 = sbr.rel (0) target = $region17
    $region16: #{tpu_custom_call.1} parent=1 // pred_region
      _
    $region17: #{tpu_custom_call.1} parent=1 // pred_fallthru
      _
    // Predicated region
    $region18: #{tpu_custom_call.1} parent=1 // pred_check
      _
    $region19: #{tpu_custom_call.1} parent=1 // pred_check_branch
      %44 = sbr.rel (0) target = $region21
    $region20: #{tpu_custom_call.1} parent=1 // pred_region
      %s46 = ssub.s32 12288, 12288
      %47 = vsyncadd [#allocation5], %s46
      %s48 = sshll.u32 [#allocation6], 4
      %s49 = int_to_ptr.vmem [resolvable:$true] %s48
      %54 = dma.hbm_to_vmem [thread:$0]  %s4, 12288, %s49, [#allocation5], 384, 384, 24
    $region21: #{tpu_custom_call.1} parent=1 // pred_fallthru
      _
    // Predicated region
    $region22: #{tpu_custom_call.1} parent=1 // pred_check
      _
    $region23: #{tpu_custom_call.1} parent=1 // pred_check_branch
      %56 = sbr.rel (0) target = $region25
    $region24: #{tpu_custom_call.1} parent=1 // pred_region
      _
    $region25: #{tpu_custom_call.1} parent=1 // pred_fallthru
      _
    // Predicated region
    $region26: #{tpu_custom_call.1} parent=1 // pred_check
      _
    $region27: #{tpu_custom_call.1} parent=1 // pred_check_branch
      %58 = sbr.rel (0) target = $region29
    $region28: #{tpu_custom_call.1} parent=1 // pred_region
      _
    $region29: #{tpu_custom_call.1} parent=1 // pred_fallthru
      _
    // Predicated region
    $region30: #{tpu_custom_call.1} parent=1 // pred_check
      _
    $region31: #{tpu_custom_call.1} parent=1 // pred_check_branch
      %60 = sbr.rel (0) target = $region33
    $region32: #{tpu_custom_call.1} parent=1 // pred_region
      _
    $region33: #{tpu_custom_call.1} parent=1 // pred_fallthru
      _
    // Predicated region
    $region34: #{tpu_custom_call.1} parent=1 // pred_check
      _
    $region35: #{tpu_custom_call.1} parent=1 // pred_check_branch
      %62 = sbr.rel (0) target = $region37
    $region36: #{tpu_custom_call.1} parent=1 // pred_region
      %63 = dma.done [#allocation3], 4096
    $region37: #{tpu_custom_call.1} parent=1 // pred_fallthru
      _
    // Predicated region
    $region38: #{tpu_custom_call.1} parent=1 // pred_check
      _
    $region39: #{tpu_custom_call.1} parent=1 // pred_check_branch
      %65 = sbr.rel (0) target = $region41
    $region40: #{tpu_custom_call.1} parent=1 // pred_region
      %66 = dma.done [#allocation5], 4096
    $region41: #{tpu_custom_call.1} parent=1 // pred_fallthru
      _
    // Predicated region
    $region42: #{tpu_custom_call.1} parent=1 // pred_check
      _
    $region43: #{tpu_custom_call.1} parent=1 // pred_check_branch
      %68 = sbr.rel (0) target = $region45
    $region44: #{tpu_custom_call.1} parent=1 // pred_region
      %69 = dma.done [#allocation5], 12288
    $region45: #{tpu_custom_call.1} parent=1 // pred_fallthru
      _
    %v70 = vld [vmem:[#allocation2] sm:$0xff]
    %v71 = vld [vmem:[#allocation2 + $0x8] sm:$0xff]
    %v72 = vld [vmem:[#allocation2 + $0x10] sm:$0xff]
    %v73 = vld [vmem:[#allocation2 + $0x18] sm:$0xff]
    %v74 = vld [vmem:[#allocation2 + $0x20] sm:$0xff]
    %v75 = vld [vmem:[#allocation2 + $0x28] sm:$0xff]
    %v76 = vld [vmem:[#allocation2 + $0x30] sm:$0xff]
    %v77 = vld [vmem:[#allocation2 + $0x38] sm:$0xff]
    %v78 = vld [vmem:[#allocation2 + $0x40] sm:$0xff]
    %v79 = vld [vmem:[#allocation2 + $0x48] sm:$0xff]
    %v80 = vld [vmem:[#allocation2 + $0x50] sm:$0xff]
    %v81 = vld [vmem:[#allocation2 + $0x58] sm:$0xff]
    %v82 = vld [vmem:[#allocation2 + $0x60] sm:$0xff]
    %v83 = vld [vmem:[#allocation2 + $0x68] sm:$0xff]
    %v84 = vld [vmem:[#allocation2 + $0x70] sm:$0xff]
    %v85 = vld [vmem:[#allocation2 + $0x78] sm:$0xff]
    %v86 = vld [vmem:[#allocation2 + $0x80] sm:$0xff]
    %v87 = vld [vmem:[#allocation2 + $0x88] sm:$0xff]
    %v88 = vld [vmem:[#allocation2 + $0x90] sm:$0xff]
    %v89 = vld [vmem:[#allocation2 + $0x98] sm:$0xff]
    %v90 = vld [vmem:[#allocation2 + $0xa0] sm:$0xff]
    %v91 = vld [vmem:[#allocation2 + $0xa8] sm:$0xff]
    %v92 = vld [vmem:[#allocation2 + $0xb0] sm:$0xff]
    %v93 = vld [vmem:[#allocation2 + $0xb8] sm:$0xff]
    %v94 = vld [vmem:[#allocation2 + $0xc0] sm:$0xff]
    %v95 = vld [vmem:[#allocation2 + $0xc8] sm:$0xff]
    %v96 = vld [vmem:[#allocation2 + $0xd0] sm:$0xff]
    %v97 = vld [vmem:[#allocation2 + $0xd8] sm:$0xff]
    %v98 = vld [vmem:[#allocation2 + $0xe0] sm:$0xff]
    %v99 = vld [vmem:[#allocation2 + $0xe8] sm:$0xff]
    %v100 = vld [vmem:[#allocation2 + $0xf0] sm:$0xff]
    %v101 = vld [vmem:[#allocation2 + $0xf8] sm:$0xff]
    %v102 = vld [vmem:[#allocation4] sm:$0xff]
    %v103 = vld [vmem:[#allocation4 + $0x8] sm:$0xff]
    %v104 = vld [vmem:[#allocation4 + $0x10] sm:$0xff]
    %v105 = vld [vmem:[#allocation4 + $0x18] sm:$0xff]
    %v106 = vld [vmem:[#allocation4 + $0x20] sm:$0xff]
    %v107 = vld [vmem:[#allocation4 + $0x28] sm:$0xff]
    %v108 = vld [vmem:[#allocation4 + $0x30] sm:$0xff]
    %v109 = vld [vmem:[#allocation4 + $0x38] sm:$0xff]
    %v110 = vld [vmem:[#allocation4 + $0x40] sm:$0xff]
    %v111 = vld [vmem:[#allocation4 + $0x48] sm:$0xff]
    %v112 = vld [vmem:[#allocation4 + $0x50] sm:$0xff]
    %v113 = vld [vmem:[#allocation4 + $0x58] sm:$0xff]
    %v114 = vld [vmem:[#allocation4 + $0x60] sm:$0xff]
    %v115 = vld [vmem:[#allocation4 + $0x68] sm:$0xff]
    %v116 = vld [vmem:[#allocation4 + $0x70] sm:$0xff]
    %v117 = vld [vmem:[#allocation4 + $0x78] sm:$0xff]
    %v118 = vld [vmem:[#allocation4 + $0x80] sm:$0xff]
    %v119 = vld [vmem:[#allocation4 + $0x88] sm:$0xff]
    %v120 = vld [vmem:[#allocation4 + $0x90] sm:$0xff]
    %v121 = vld [vmem:[#allocation4 + $0x98] sm:$0xff]
    %v122 = vld [vmem:[#allocation4 + $0xa0] sm:$0xff]
    %v123 = vld [vmem:[#allocation4 + $0xa8] sm:$0xff]
    %v124 = vld [vmem:[#allocation4 + $0xb0] sm:$0xff]
    %v125 = vld [vmem:[#allocation4 + $0xb8] sm:$0xff]
    %v126 = vld [vmem:[#allocation4 + $0xc0] sm:$0xff]
    %v127 = vld [vmem:[#allocation4 + $0xc8] sm:$0xff]
    %v128 = vld [vmem:[#allocation4 + $0xd0] sm:$0xff]
    %v129 = vld [vmem:[#allocation4 + $0xd8] sm:$0xff]
    %v130 = vld [vmem:[#allocation4 + $0xe0] sm:$0xff]
    %v131 = vld [vmem:[#allocation4 + $0xe8] sm:$0xff]
    %v132 = vld [vmem:[#allocation4 + $0xf0] sm:$0xff]
    %v133 = vld [vmem:[#allocation4 + $0xf8] sm:$0xff]
    %v166 = vunpack.c.l.b16 %v70
    %v167 = vunpack.c.h.b16 %v70
    %v168 = vunpack.c.l.b16 %v71
    %v169 = vunpack.c.h.b16 %v71
    %v170 = vunpack.c.l.b16 %v72
    %v171 = vunpack.c.h.b16 %v72
    %v172 = vunpack.c.l.b16 %v73
    %v173 = vunpack.c.h.b16 %v73
    %v174 = vunpack.c.l.b16 %v74
    %v175 = vunpack.c.h.b16 %v74
    %v176 = vunpack.c.l.b16 %v75
    %v177 = vunpack.c.h.b16 %v75
    %v178 = vunpack.c.l.b16 %v76
    %v179 = vunpack.c.h.b16 %v76
    %v180 = vunpack.c.l.b16 %v77
    %v181 = vunpack.c.h.b16 %v77
    %v182 = vunpack.c.l.b16 %v78
    %v183 = vunpack.c.h.b16 %v78
    %v184 = vunpack.c.l.b16 %v79
    %v185 = vunpack.c.h.b16 %v79
    %v186 = vunpack.c.l.b16 %v80
    %v187 = vunpack.c.h.b16 %v80
    %v188 = vunpack.c.l.b16 %v81
    %v189 = vunpack.c.h.b16 %v81
    %v190 = vunpack.c.l.b16 %v82
    %v191 = vunpack.c.h.b16 %v82
    %v192 = vunpack.c.l.b16 %v83
    %v193 = vunpack.c.h.b16 %v83
    %v194 = vunpack.c.l.b16 %v84
    %v195 = vunpack.c.h.b16 %v84
    %v196 = vunpack.c.l.b16 %v85
    %v197 = vunpack.c.h.b16 %v85
    %v198 = vunpack.c.l.b16 %v86
    %v199 = vunpack.c.h.b16 %v86
    %v200 = vunpack.c.l.b16 %v87
    %v201 = vunpack.c.h.b16 %v87
    %v202 = vunpack.c.l.b16 %v88
    %v203 = vunpack.c.h.b16 %v88
    %v204 = vunpack.c.l.b16 %v89
    %v205 = vunpack.c.h.b16 %v89
    %v206 = vunpack.c.l.b16 %v90
    %v207 = vunpack.c.h.b16 %v90
    %v208 = vunpack.c.l.b16 %v91
    %v209 = vunpack.c.h.b16 %v91
    %v210 = vunpack.c.l.b16 %v92
    %v211 = vunpack.c.h.b16 %v92
    %v212 = vunpack.c.l.b16 %v93
    %v213 = vunpack.c.h.b16 %v93
    %v214 = vunpack.c.l.b16 %v94
    %v215 = vunpack.c.h.b16 %v94
    %v216 = vunpack.c.l.b16 %v95
    %v217 = vunpack.c.h.b16 %v95
    %v218 = vunpack.c.l.b16 %v96
    %v219 = vunpack.c.h.b16 %v96
    %v220 = vunpack.c.l.b16 %v97
    %v221 = vunpack.c.h.b16 %v97
    %v222 = vunpack.c.l.b16 %v98
    %v223 = vunpack.c.h.b16 %v98
    %v224 = vunpack.c.l.b16 %v99
    %v225 = vunpack.c.h.b16 %v99
    %v226 = vunpack.c.l.b16 %v100
    %v227 = vunpack.c.h.b16 %v100
    %v228 = vunpack.c.l.b16 %v101
    %v229 = vunpack.c.h.b16 %v101
    %v230 = vpack.c.b16 %v168, %v166
    %v231 = vpack.c.b16 %v169, %v167
    %v232 = vpack.c.b16 %v172, %v170
    %v233 = vpack.c.b16 %v173, %v171
    %v234 = vpack.c.b16 %v176, %v174
    %v235 = vpack.c.b16 %v177, %v175
    %v236 = vpack.c.b16 %v180, %v178
    %v237 = vpack.c.b16 %v181, %v179
    %v238 = vpack.c.b16 %v184, %v182
    %v239 = vpack.c.b16 %v185, %v183
    %v240 = vpack.c.b16 %v188, %v186
    %v241 = vpack.c.b16 %v189, %v187
    %v242 = vpack.c.b16 %v192, %v190
    %v243 = vpack.c.b16 %v193, %v191
    %v244 = vpack.c.b16 %v196, %v194
    %v245 = vpack.c.b16 %v197, %v195
    %v246 = vpack.c.b16 %v200, %v198
    %v247 = vpack.c.b16 %v201, %v199
    %v248 = vpack.c.b16 %v204, %v202
    %v249 = vpack.c.b16 %v205, %v203
    %v250 = vpack.c.b16 %v208, %v206
    %v251 = vpack.c.b16 %v209, %v207
    %v252 = vpack.c.b16 %v212, %v210
    %v253 = vpack.c.b16 %v213, %v211
    %v254 = vpack.c.b16 %v216, %v214
    %v255 = vpack.c.b16 %v217, %v215
    %v256 = vpack.c.b16 %v220, %v218
    %v257 = vpack.c.b16 %v221, %v219
    %v258 = vpack.c.b16 %v224, %v222
    %v259 = vpack.c.b16 %v225, %v223
    %v260 = vpack.c.b16 %v228, %v226
    %v261 = vpack.c.b16 %v229, %v227
    %v326 = vunpack.c.l.b16 %v102
    %v327 = vunpack.c.h.b16 %v102
    %v328 = vunpack.c.l.b16 %v103
    %v329 = vunpack.c.h.b16 %v103
    %v330 = vunpack.c.l.b16 %v104
    %v331 = vunpack.c.h.b16 %v104
    %v332 = vunpack.c.l.b16 %v105
    %v333 = vunpack.c.h.b16 %v105
    %v334 = vunpack.c.l.b16 %v106
    %v335 = vunpack.c.h.b16 %v106
    %v336 = vunpack.c.l.b16 %v107
    %v337 = vunpack.c.h.b16 %v107
    %v338 = vunpack.c.l.b16 %v108
    %v339 = vunpack.c.h.b16 %v108
    %v340 = vunpack.c.l.b16 %v109
    %v341 = vunpack.c.h.b16 %v109
    %v342 = vunpack.c.l.b16 %v110
    %v343 = vunpack.c.h.b16 %v110
    %v344 = vunpack.c.l.b16 %v111
    %v345 = vunpack.c.h.b16 %v111
    %v346 = vunpack.c.l.b16 %v112
    %v347 = vunpack.c.h.b16 %v112
    %v348 = vunpack.c.l.b16 %v113
    %v349 = vunpack.c.h.b16 %v113
    %v350 = vunpack.c.l.b16 %v114
    %v351 = vunpack.c.h.b16 %v114
    %v352 = vunpack.c.l.b16 %v115
    %v353 = vunpack.c.h.b16 %v115
    %v354 = vunpack.c.l.b16 %v116
    %v355 = vunpack.c.h.b16 %v116
    %v356 = vunpack.c.l.b16 %v117
    %v357 = vunpack.c.h.b16 %v117
    %v358 = vunpack.c.l.b16 %v118
    %v359 = vunpack.c.h.b16 %v118
    %v360 = vunpack.c.l.b16 %v119
    %v361 = vunpack.c.h.b16 %v119
    %v362 = vunpack.c.l.b16 %v120
    %v363 = vunpack.c.h.b16 %v120
    %v364 = vunpack.c.l.b16 %v121
    %v365 = vunpack.c.h.b16 %v121
    %v366 = vunpack.c.l.b16 %v122
    %v367 = vunpack.c.h.b16 %v122
    %v368 = vunpack.c.l.b16 %v123
    %v369 = vunpack.c.h.b16 %v123
    %v370 = vunpack.c.l.b16 %v124
    %v371 = vunpack.c.h.b16 %v124
    %v372 = vunpack.c.l.b16 %v125
    %v373 = vunpack.c.h.b16 %v125
    %v374 = vunpack.c.l.b16 %v126
    %v375 = vunpack.c.h.b16 %v126
    %v376 = vunpack.c.l.b16 %v127
    %v377 = vunpack.c.h.b16 %v127
    %v378 = vunpack.c.l.b16 %v128
    %v379 = vunpack.c.h.b16 %v128
    %v380 = vunpack.c.l.b16 %v129
    %v381 = vunpack.c.h.b16 %v129
    %v382 = vunpack.c.l.b16 %v130
    %v383 = vunpack.c.h.b16 %v130
    %v384 = vunpack.c.l.b16 %v131
    %v385 = vunpack.c.h.b16 %v131
    %v386 = vunpack.c.l.b16 %v132
    %v387 = vunpack.c.h.b16 %v132
    %v388 = vunpack.c.l.b16 %v133
    %v389 = vunpack.c.h.b16 %v133
    %v390 = vpack.c.b16 %v328, %v326
    %v391 = vpack.c.b16 %v329, %v327
    %v392 = vpack.c.b16 %v332, %v330
    %v393 = vpack.c.b16 %v333, %v331
    %v394 = vpack.c.b16 %v336, %v334
    %v395 = vpack.c.b16 %v337, %v335
    %v396 = vpack.c.b16 %v340, %v338
    %v397 = vpack.c.b16 %v341, %v339
    %v398 = vpack.c.b16 %v344, %v342
    %v399 = vpack.c.b16 %v345, %v343
    %v400 = vpack.c.b16 %v348, %v346
    %v401 = vpack.c.b16 %v349, %v347
    %v402 = vpack.c.b16 %v352, %v350
    %v403 = vpack.c.b16 %v353, %v351
    %v404 = vpack.c.b16 %v356, %v354
    %v405 = vpack.c.b16 %v357, %v355
    %v406 = vpack.c.b16 %v360, %v358
    %v407 = vpack.c.b16 %v361, %v359
    %v408 = vpack.c.b16 %v364, %v362
    %v409 = vpack.c.b16 %v365, %v363
    %v410 = vpack.c.b16 %v368, %v366
    %v411 = vpack.c.b16 %v369, %v367
    %v412 = vpack.c.b16 %v372, %v370
    %v413 = vpack.c.b16 %v373, %v371
    %v414 = vpack.c.b16 %v376, %v374
    %v415 = vpack.c.b16 %v377, %v375
    %v416 = vpack.c.b16 %v380, %v378
    %v417 = vpack.c.b16 %v381, %v379
    %v418 = vpack.c.b16 %v384, %v382
    %v419 = vpack.c.b16 %v385, %v383
    %v420 = vpack.c.b16 %v388, %v386
    %v421 = vpack.c.b16 %v389, %v387
    %454 = vmatprep.subr.bf16.mxu0 %v391
    %455 = vmatpush1.bf16.msra.mxu0 %v390
    %456 = vmatprep.subr.bf16.mxu0 %v393
    %457 = vmatpush1.bf16.msra.mxu0 %v392
    %458 = vmatprep.subr.bf16.mxu0 %v395
    %459 = vmatpush1.bf16.msra.mxu0 %v394
    %460 = vmatprep.subr.bf16.mxu0 %v397
    %461 = vmatpush1.bf16.msra.mxu0 %v396
    %462 = vmatprep.subr.bf16.mxu0 %v399
    %463 = vmatpush1.bf16.msra.mxu0 %v398
    %464 = vmatprep.subr.bf16.mxu0 %v401
    %465 = vmatpush1.bf16.msra.mxu0 %v400
    %466 = vmatprep.subr.bf16.mxu0 %v403
    %467 = vmatpush1.bf16.msra.mxu0 %v402
    %468 = vmatprep.subr.bf16.mxu0 %v405
    %469 = vmatpush1.bf16.msra.mxu0 %v404
    %470 = vmatprep.subr.bf16.mxu0 %v407
    %471 = vmatpush1.bf16.msra.mxu0 %v406
    %472 = vmatprep.subr.bf16.mxu0 %v409
    %473 = vmatpush1.bf16.msra.mxu0 %v408
    %474 = vmatprep.subr.bf16.mxu0 %v411
    %475 = vmatpush1.bf16.msra.mxu0 %v410
    %476 = vmatprep.subr.bf16.mxu0 %v413
    %477 = vmatpush1.bf16.msra.mxu0 %v412
    %478 = vmatprep.subr.bf16.mxu0 %v415
    %479 = vmatpush1.bf16.msra.mxu0 %v414
    %480 = vmatprep.subr.bf16.mxu0 %v417
    %481 = vmatpush1.bf16.msra.mxu0 %v416
    %482 = vmatprep.subr.bf16.mxu0 %v419
    %483 = vmatpush1.bf16.msra.mxu0 %v418
    %484 = vmatprep.subr.bf16.mxu0 %v421
    %485 = vmatpush1.bf16.msra.mxu0 %v420
    %486 = vmatprep.mubr.bf16.mxu0 %v231
    %487 = vmatmul.mubr.bf16.gmra.mrb[0].mxu0 %v230
    %v488 = vpop.f32.mrb[0].mxu0
    %v489 = vadd.f32 0.0, %v488
    %v490 = vpop.f32.mrb[0].mxu0
    %v491 = vadd.f32 0.0, %v490
    %v492 = vpop.f32.mrb[0].mxu0
    %v493 = vadd.f32 0.0, %v492
    %v494 = vpop.f32.mrb[0].mxu0
    %v495 = vadd.f32 0.0, %v494
    %496 = vmatprep.mubr.bf16.mxu0 %v233
    %497 = vmatmul.mubr.bf16.gmra.mrb[0].mxu0 %v232
    %v498 = vpop.f32.mrb[0].mxu0
    %v499 = vadd.f32 0.0, %v498
    %v500 = vpop.f32.mrb[0].mxu0
    %v501 = vadd.f32 0.0, %v500
    %v502 = vpop.f32.mrb[0].mxu0
    %v503 = vadd.f32 0.0, %v502
    %v504 = vpop.f32.mrb[0].mxu0
    %v505 = vadd.f32 0.0, %v504
    %506 = vmatprep.mubr.bf16.mxu0 %v235
    %507 = vmatmul.mubr.bf16.gmra.mrb[0].mxu0 %v234
    %v508 = vpop.f32.mrb[0].mxu0
    %v509 = vadd.f32 0.0, %v508
    %v510 = vpop.f32.mrb[0].mxu0
    %v511 = vadd.f32 0.0, %v510
    %v512 = vpop.f32.mrb[0].mxu0
    %v513 = vadd.f32 0.0, %v512
    %v514 = vpop.f32.mrb[0].mxu0
    %v515 = vadd.f32 0.0, %v514
    %516 = vmatprep.mubr.bf16.mxu0 %v237
    %517 = vmatmul.mubr.bf16.gmra.mrb[0].mxu0 %v236
    %v518 = vpop.f32.mrb[0].mxu0
    %v519 = vadd.f32 0.0, %v518
    %v520 = vpop.f32.mrb[0].mxu0
    %v521 = vadd.f32 0.0, %v520
    %v522 = vpop.f32.mrb[0].mxu0
    %v523 = vadd.f32 0.0, %v522
    %v524 = vpop.f32.mrb[0].mxu0
    %v525 = vadd.f32 0.0, %v524
    %526 = vmatprep.mubr.bf16.mxu0 %v239
    %527 = vmatmul.mubr.bf16.gmra.mrb[0].mxu0 %v238
    %v528 = vpop.f32.mrb[0].mxu0
    %v529 = vadd.f32 0.0, %v528
    %v530 = vpop.f32.mrb[0].mxu0
    %v531 = vadd.f32 0.0, %v530
    %v532 = vpop.f32.mrb[0].mxu0
    %v533 = vadd.f32 0.0, %v532
    %v534 = vpop.f32.mrb[0].mxu0
    %v535 = vadd.f32 0.0, %v534
    %536 = vmatprep.mubr.bf16.mxu0 %v241
    %537 = vmatmul.mubr.bf16.gmra.mrb[0].mxu0 %v240
    %v538 = vpop.f32.mrb[0].mxu0
    %v539 = vadd.f32 0.0, %v538
    %v540 = vpop.f32.mrb[0].mxu0
    %v541 = vadd.f32 0.0, %v540
    %v542 = vpop.f32.mrb[0].mxu0
    %v543 = vadd.f32 0.0, %v542
    %v544 = vpop.f32.mrb[0].mxu0
    %v545 = vadd.f32 0.0, %v544
    %546 = vmatprep.mubr.bf16.mxu0 %v243
    %547 = vmatmul.mubr.bf16.gmra.mrb[0].mxu0 %v242
    %v548 = vpop.f32.mrb[0].mxu0
    %v549 = vadd.f32 0.0, %v548
    %v550 = vpop.f32.mrb[0].mxu0
    %v551 = vadd.f32 0.0, %v550
    %v552 = vpop.f32.mrb[0].mxu0
    %v553 = vadd.f32 0.0, %v552
    %v554 = vpop.f32.mrb[0].mxu0
    %v555 = vadd.f32 0.0, %v554
    %556 = vmatprep.mubr.bf16.mxu0 %v245
    %557 = vmatmul.mubr.bf16.gmra.mrb[0].mxu0 %v244
    %v558 = vpop.f32.mrb[0].mxu0
    %v559 = vadd.f32 0.0, %v558
    %v560 = vpop.f32.mrb[0].mxu0
    %v561 = vadd.f32 0.0, %v560
    %v562 = vpop.f32.mrb[0].mxu0
    %v563 = vadd.f32 0.0, %v562
    %v564 = vpop.f32.mrb[0].mxu0
    %v565 = vadd.f32 0.0, %v564
    %566 = vmatprep.mubr.bf16.mxu0 %v247
    %567 = vmatmul.mubr.bf16.gmra.mrb[0].mxu0 %v246
    %v568 = vpop.f32.mrb[0].mxu0
    %v569 = vadd.f32 0.0, %v568
    %v570 = vpop.f32.mrb[0].mxu0
    %v571 = vadd.f32 0.0, %v570
    %v572 = vpop.f32.mrb[0].mxu0
    %v573 = vadd.f32 0.0, %v572
    %v574 = vpop.f32.mrb[0].mxu0
    %v575 = vadd.f32 0.0, %v574
    %576 = vmatprep.mubr.bf16.mxu0 %v249
    %577 = vmatmul.mubr.bf16.gmra.mrb[0].mxu0 %v248
    %v578 = vpop.f32.mrb[0].mxu0
    %v579 = vadd.f32 0.0, %v578
    %v580 = vpop.f32.mrb[0].mxu0
    %v581 = vadd.f32 0.0, %v580
    %v582 = vpop.f32.mrb[0].mxu0
    %v583 = vadd.f32 0.0, %v582
    %v584 = vpop.f32.mrb[0].mxu0
    %v585 = vadd.f32 0.0, %v584
    %586 = vmatprep.mubr.bf16.mxu0 %v251
    %587 = vmatmul.mubr.bf16.gmra.mrb[0].mxu0 %v250
    %v588 = vpop.f32.mrb[0].mxu0
    %v589 = vadd.f32 0.0, %v588
    %v590 = vpop.f32.mrb[0].mxu0
    %v591 = vadd.f32 0.0, %v590
    %v592 = vpop.f32.mrb[0].mxu0
    %v593 = vadd.f32 0.0, %v592
    %v594 = vpop.f32.mrb[0].mxu0
    %v595 = vadd.f32 0.0, %v594
    %596 = vmatprep.mubr.bf16.mxu0 %v253
    %597 = vmatmul.mubr.bf16.gmra.mrb[0].mxu0 %v252
    %v598 = vpop.f32.mrb[0].mxu0
    %v599 = vadd.f32 0.0, %v598
    %v600 = vpop.f32.mrb[0].mxu0
    %v601 = vadd.f32 0.0, %v600
    %v602 = vpop.f32.mrb[0].mxu0
    %v603 = vadd.f32 0.0, %v602
    %v604 = vpop.f32.mrb[0].mxu0
    %v605 = vadd.f32 0.0, %v604
    %606 = vmatprep.mubr.bf16.mxu0 %v255
    %607 = vmatmul.mubr.bf16.gmra.mrb[0].mxu0 %v254
    %v608 = vpop.f32.mrb[0].mxu0
    %v609 = vadd.f32 0.0, %v608
    %v610 = vpop.f32.mrb[0].mxu0
    %v611 = vadd.f32 0.0, %v610
    %v612 = vpop.f32.mrb[0].mxu0
    %v613 = vadd.f32 0.0, %v612
    %v614 = vpop.f32.mrb[0].mxu0
    %v615 = vadd.f32 0.0, %v614
    %616 = vmatprep.mubr.bf16.mxu0 %v257
    %617 = vmatmul.mubr.bf16.gmra.mrb[0].mxu0 %v256
    %v618 = vpop.f32.mrb[0].mxu0
    %v619 = vadd.f32 0.0, %v618
    %v620 = vpop.f32.mrb[0].mxu0
    %v621 = vadd.f32 0.0, %v620
    %v622 = vpop.f32.mrb[0].mxu0
    %v623 = vadd.f32 0.0, %v622
    %v624 = vpop.f32.mrb[0].mxu0
    %v625 = vadd.f32 0.0, %v624
    %626 = vmatprep.mubr.bf16.mxu0 %v259
    %627 = vmatmul.mubr.bf16.gmra.mrb[0].mxu0 %v258
    %v628 = vpop.f32.mrb[0].mxu0
    %v629 = vadd.f32 0.0, %v628
    %v630 = vpop.f32.mrb[0].mxu0
    %v631 = vadd.f32 0.0, %v630
    %v632 = vpop.f32.mrb[0].mxu0
    %v633 = vadd.f32 0.0, %v632
    %v634 = vpop.f32.mrb[0].mxu0
    %v635 = vadd.f32 0.0, %v634
    %636 = vmatprep.mubr.bf16.mxu0 %v261
    %637 = vmatmul.mubr.bf16.gmra.mrb[0].mxu0 %v260
    %v638 = vpop.f32.mrb[0].mxu0
    %v639 = vadd.f32 0.0, %v638
    %v640 = vpop.f32.mrb[0].mxu0
    %v641 = vadd.f32 0.0, %v640
    %v642 = vpop.f32.mrb[0].mxu0
    %v643 = vadd.f32 0.0, %v642
    %v644 = vpop.f32.mrb[0].mxu0
    %v645 = vadd.f32 0.0, %v644
    %646 = vdwg.mxu0
    %v647 = vxor.u32 %v489, 2147483648
    %v648 = vxor.u32 %v491, 2147483648
    %v649 = vxor.u32 %v493, 2147483648
    %v650 = vxor.u32 %v495, 2147483648
    %v651 = vxor.u32 %v499, 2147483648
    %v652 = vxor.u32 %v501, 2147483648
    %v653 = vxor.u32 %v503, 2147483648
    %v654 = vxor.u32 %v505, 2147483648
    %v655 = vxor.u32 %v509, 2147483648
    %v656 = vxor.u32 %v511, 2147483648
    %v657 = vxor.u32 %v513, 2147483648
    %v658 = vxor.u32 %v515, 2147483648
    %v659 = vxor.u32 %v519, 2147483648
    %v660 = vxor.u32 %v521, 2147483648
    %v661 = vxor.u32 %v523, 2147483648
    %v662 = vxor.u32 %v525, 2147483648
    %v663 = vxor.u32 %v529, 2147483648
    %v664 = vxor.u32 %v531, 2147483648
    %v665 = vxor.u32 %v533, 2147483648
    %v666 = vxor.u32 %v535, 2147483648
    %v667 = vxor.u32 %v539, 2147483648
    %v668 = vxor.u32 %v541, 2147483648
    %v669 = vxor.u32 %v543, 2147483648
    %v670 = vxor.u32 %v545, 2147483648
    %v671 = vxor.u32 %v549, 2147483648
    %v672 = vxor.u32 %v551, 2147483648
    %v673 = vxor.u32 %v553, 2147483648
    %v674 = vxor.u32 %v555, 2147483648
    %v675 = vxor.u32 %v559, 2147483648
    %v676 = vxor.u32 %v561, 2147483648
    %v677 = vxor.u32 %v563, 2147483648
    %v678 = vxor.u32 %v565, 2147483648
    %v679 = vxor.u32 %v569, 2147483648
    %v680 = vxor.u32 %v571, 2147483648
    %v681 = vxor.u32 %v573, 2147483648
    %v682 = vxor.u32 %v575, 2147483648
    %v683 = vxor.u32 %v579, 2147483648
    %v684 = vxor.u32 %v581, 2147483648
    %v685 = vxor.u32 %v583, 2147483648
    %v686 = vxor.u32 %v585, 2147483648
    %v687 = vxor.u32 %v589, 2147483648
    %v688 = vxor.u32 %v591, 2147483648
    %v689 = vxor.u32 %v593, 2147483648
    %v690 = vxor.u32 %v595, 2147483648
    %v691 = vxor.u32 %v599, 2147483648
    %v692 = vxor.u32 %v601, 2147483648
    %v693 = vxor.u32 %v603, 2147483648
    %v694 = vxor.u32 %v605, 2147483648
    %v695 = vxor.u32 %v609, 2147483648
    %v696 = vxor.u32 %v611, 2147483648
    %v697 = vxor.u32 %v613, 2147483648
    %v698 = vxor.u32 %v615, 2147483648
    %v699 = vxor.u32 %v619, 2147483648
    %v700 = vxor.u32 %v621, 2147483648
    %v701 = vxor.u32 %v623, 2147483648
    %v702 = vxor.u32 %v625, 2147483648
    %v703 = vxor.u32 %v629, 2147483648
    %v704 = vxor.u32 %v631, 2147483648
    %v705 = vxor.u32 %v633, 2147483648
    %v706 = vxor.u32 %v635, 2147483648
    %v707 = vxor.u32 %v639, 2147483648
    %v708 = vxor.u32 %v641, 2147483648
    %v709 = vxor.u32 %v643, 2147483648
    %v710 = vxor.u32 %v645, 2147483648
    %v711 = vmul.f32 %v647, 1.442695
    %v712 = vpow.pop %v711
    %v713 = vmul.f32 %v648, 1.442695
    %v714 = vpow.pop %v713
    %v715 = vmul.f32 %v649, 1.442695
    %v716 = vpow.pop %v715
    %v717 = vmul.f32 %v650, 1.442695
    %v718 = vpow.pop %v717
    %v719 = vmul.f32 %v651, 1.442695
    %v720 = vpow.pop %v719
    %v721 = vmul.f32 %v652, 1.442695
    %v722 = vpow.pop %v721
    %v723 = vmul.f32 %v653, 1.442695
    %v724 = vpow.pop %v723
    %v725 = vmul.f32 %v654, 1.442695
    %v726 = vpow.pop %v725
    %v727 = vmul.f32 %v655, 1.442695
    %v728 = vpow.pop %v727
    %v729 = vmul.f32 %v656, 1.442695
    %v730 = vpow.pop %v729
    %v731 = vmul.f32 %v657, 1.442695
    %v732 = vpow.pop %v731
    %v733 = vmul.f32 %v658, 1.442695
    %v734 = vpow.pop %v733
    %v735 = vmul.f32 %v659, 1.442695
    %v736 = vpow.pop %v735
    %v737 = vmul.f32 %v660, 1.442695
    %v738 = vpow.pop %v737
    %v739 = vmul.f32 %v661, 1.442695
    %v740 = vpow.pop %v739
    %v741 = vmul.f32 %v662, 1.442695
    %v742 = vpow.pop %v741
    %v743 = vmul.f32 %v663, 1.442695
    %v744 = vpow.pop %v743
    %v745 = vmul.f32 %v664, 1.442695
    %v746 = vpow.pop %v745
    %v747 = vmul.f32 %v665, 1.442695
    %v748 = vpow.pop %v747
    %v749 = vmul.f32 %v666, 1.442695
    %v750 = vpow.pop %v749
    %v751 = vmul.f32 %v667, 1.442695
    %v752 = vpow.pop %v751
    %v753 = vmul.f32 %v668, 1.442695
    %v754 = vpow.pop %v753
    %v755 = vmul.f32 %v669, 1.442695
    %v756 = vpow.pop %v755
    %v757 = vmul.f32 %v670, 1.442695
    %v758 = vpow.pop %v757
    %v759 = vmul.f32 %v671, 1.442695
    %v760 = vpow.pop %v759
    %v761 = vmul.f32 %v672, 1.442695
    %v762 = vpow.pop %v761
    %v763 = vmul.f32 %v673, 1.442695
    %v764 = vpow.pop %v763
    %v765 = vmul.f32 %v674, 1.442695
    %v766 = vpow.pop %v765
    %v767 = vmul.f32 %v675, 1.442695
    %v768 = vpow.pop %v767
    %v769 = vmul.f32 %v676, 1.442695
    %v770 = vpow.pop %v769
    %v771 = vmul.f32 %v677, 1.442695
    %v772 = vpow.pop %v771
    %v773 = vmul.f32 %v678, 1.442695
    %v774 = vpow.pop %v773
    %v775 = vmul.f32 %v679, 1.442695
    %v776 = vpow.pop %v775
    %v777 = vmul.f32 %v680, 1.442695
    %v778 = vpow.pop %v777
    %v779 = vmul.f32 %v681, 1.442695
    %v780 = vpow.pop %v779
    %v781 = vmul.f32 %v682, 1.442695
    %v782 = vpow.pop %v781
    %v783 = vmul.f32 %v683, 1.442695
    %v784 = vpow.pop %v783
    %v785 = vmul.f32 %v684, 1.442695
    %v786 = vpow.pop %v785
    %v787 = vmul.f32 %v685, 1.442695
    %v788 = vpow.pop %v787
    %v789 = vmul.f32 %v686, 1.442695
    %v790 = vpow.pop %v789
    %v791 = vmul.f32 %v687, 1.442695
    %v792 = vpow.pop %v791
    %v793 = vmul.f32 %v688, 1.442695
    %v794 = vpow.pop %v793
    %v795 = vmul.f32 %v689, 1.442695
    %v796 = vpow.pop %v795
    %v797 = vmul.f32 %v690, 1.442695
    %v798 = vpow.pop %v797
    %v799 = vmul.f32 %v691, 1.442695
    %v800 = vpow.pop %v799
    %v801 = vmul.f32 %v692, 1.442695
    %v802 = vpow.pop %v801
    %v803 = vmul.f32 %v693, 1.442695
    %v804 = vpow.pop %v803
    %v805 = vmul.f32 %v694, 1.442695
    %v806 = vpow.pop %v805
    %v807 = vmul.f32 %v695, 1.442695
    %v808 = vpow.pop %v807
    %v809 = vmul.f32 %v696, 1.442695
    %v810 = vpow.pop %v809
    %v811 = vmul.f32 %v697, 1.442695
    %v812 = vpow.pop %v811
    %v813 = vmul.f32 %v698, 1.442695
    %v814 = vpow.pop %v813
    %v815 = vmul.f32 %v699, 1.442695
    %v816 = vpow.pop %v815
    %v817 = vmul.f32 %v700, 1.442695
    %v818 = vpow.pop %v817
    %v819 = vmul.f32 %v701, 1.442695
    %v820 = vpow.pop %v819
    %v821 = vmul.f32 %v702, 1.442695
    %v822 = vpow.pop %v821
    %v823 = vmul.f32 %v703, 1.442695
    %v824 = vpow.pop %v823
    %v825 = vmul.f32 %v704, 1.442695
    %v826 = vpow.pop %v825
    %v827 = vmul.f32 %v705, 1.442695
    %v828 = vpow.pop %v827
    %v829 = vmul.f32 %v706, 1.442695
    %v830 = vpow.pop %v829
    %v831 = vmul.f32 %v707, 1.442695
    %v832 = vpow.pop %v831
    %v833 = vmul.f32 %v708, 1.442695
    %v834 = vpow.pop %v833
    %v835 = vmul.f32 %v709, 1.442695
    %v836 = vpow.pop %v835
    %v837 = vmul.f32 %v710, 1.442695
    %v838 = vpow.pop %v837
    %v839 = vadd.f32 %v712, 1.0
    %v840 = vadd.f32 %v714, 1.0
    %v841 = vadd.f32 %v716, 1.0
    %v842 = vadd.f32 %v718, 1.0
    %v843 = vadd.f32 %v720, 1.0
    %v844 = vadd.f32 %v722, 1.0
    %v845 = vadd.f32 %v724, 1.0
    %v846 = vadd.f32 %v726, 1.0
    %v847 = vadd.f32 %v728, 1.0
    %v848 = vadd.f32 %v730, 1.0
    %v849 = vadd.f32 %v732, 1.0
    %v850 = vadd.f32 %v734, 1.0
    %v851 = vadd.f32 %v736, 1.0
    %v852 = vadd.f32 %v738, 1.0
    %v853 = vadd.f32 %v740, 1.0
    %v854 = vadd.f32 %v742, 1.0
    %v855 = vadd.f32 %v744, 1.0
    %v856 = vadd.f32 %v746, 1.0
    %v857 = vadd.f32 %v748, 1.0
    %v858 = vadd.f32 %v750, 1.0
    %v859 = vadd.f32 %v752, 1.0
    %v860 = vadd.f32 %v754, 1.0
    %v861 = vadd.f32 %v756, 1.0
    %v862 = vadd.f32 %v758, 1.0
    %v863 = vadd.f32 %v760, 1.0
    %v864 = vadd.f32 %v762, 1.0
    %v865 = vadd.f32 %v764, 1.0
    %v866 = vadd.f32 %v766, 1.0
    %v867 = vadd.f32 %v768, 1.0
    %v868 = vadd.f32 %v770, 1.0
    %v869 = vadd.f32 %v772, 1.0
    %v870 = vadd.f32 %v774, 1.0
    %v871 = vadd.f32 %v776, 1.0
    %v872 = vadd.f32 %v778, 1.0
    %v873 = vadd.f32 %v780, 1.0
    %v874 = vadd.f32 %v782, 1.0
    %v875 = vadd.f32 %v784, 1.0
    %v876 = vadd.f32 %v786, 1.0
    %v877 = vadd.f32 %v788, 1.0
    %v878 = vadd.f32 %v790, 1.0
    %v879 = vadd.f32 %v792, 1.0
    %v880 = vadd.f32 %v794, 1.0
    %v881 = vadd.f32 %v796, 1.0
    %v882 = vadd.f32 %v798, 1.0
    %v883 = vadd.f32 %v800, 1.0
    %v884 = vadd.f32 %v802, 1.0
    %v885 = vadd.f32 %v804, 1.0
    %v886 = vadd.f32 %v806, 1.0
    %v887 = vadd.f32 %v808, 1.0
    %v888 = vadd.f32 %v810, 1.0
    %v889 = vadd.f32 %v812, 1.0
    %v890 = vadd.f32 %v814, 1.0
    %v891 = vadd.f32 %v816, 1.0
    %v892 = vadd.f32 %v818, 1.0
    %v893 = vadd.f32 %v820, 1.0
    %v894 = vadd.f32 %v822, 1.0
    %v895 = vadd.f32 %v824, 1.0
    %v896 = vadd.f32 %v826, 1.0
    %v897 = vadd.f32 %v828, 1.0
    %v898 = vadd.f32 %v830, 1.0
    %v899 = vadd.f32 %v832, 1.0
    %v900 = vadd.f32 %v834, 1.0
    %v901 = vadd.f32 %v836, 1.0
    %v902 = vadd.f32 %v838, 1.0
    %v903 = vrcp.pop %v839
    %v904 = vmul.f32 1.0, %v903
    %v905 = vrcp.pop %v840
    %v906 = vmul.f32 1.0, %v905
    %v907 = vrcp.pop %v841
    %v908 = vmul.f32 1.0, %v907
    %v909 = vrcp.pop %v842
    %v910 = vmul.f32 1.0, %v909
    %v911 = vrcp.pop %v843
    %v912 = vmul.f32 1.0, %v911
    %v913 = vrcp.pop %v844
    %v914 = vmul.f32 1.0, %v913
    %v915 = vrcp.pop %v845
    %v916 = vmul.f32 1.0, %v915
    %v917 = vrcp.pop %v846
    %v918 = vmul.f32 1.0, %v917
    %v919 = vrcp.pop %v847
    %v920 = vmul.f32 1.0, %v919
    %v921 = vrcp.pop %v848
    %v922 = vmul.f32 1.0, %v921
    %v923 = vrcp.pop %v849
    %v924 = vmul.f32 1.0, %v923
    %v925 = vrcp.pop %v850
    %v926 = vmul.f32 1.0, %v925
    %v927 = vrcp.pop %v851
    %v928 = vmul.f32 1.0, %v927
    %v929 = vrcp.pop %v852
    %v930 = vmul.f32 1.0, %v929
    %v931 = vrcp.pop %v853
    %v932 = vmul.f32 1.0, %v931
    %v933 = vrcp.pop %v854
    %v934 = vmul.f32 1.0, %v933
    %v935 = vrcp.pop %v855
    %v936 = vmul.f32 1.0, %v935
    %v937 = vrcp.pop %v856
    %v938 = vmul.f32 1.0, %v937
    %v939 = vrcp.pop %v857
    %v940 = vmul.f32 1.0, %v939
    %v941 = vrcp.pop %v858
    %v942 = vmul.f32 1.0, %v941
    %v943 = vrcp.pop %v859
    %v944 = vmul.f32 1.0, %v943
    %v945 = vrcp.pop %v860
    %v946 = vmul.f32 1.0, %v945
    %v947 = vrcp.pop %v861
    %v948 = vmul.f32 1.0, %v947
    %v949 = vrcp.pop %v862
    %v950 = vmul.f32 1.0, %v949
    %v951 = vrcp.pop %v863
    %v952 = vmul.f32 1.0, %v951
    %v953 = vrcp.pop %v864
    %v954 = vmul.f32 1.0, %v953
    %v955 = vrcp.pop %v865
    %v956 = vmul.f32 1.0, %v955
    %v957 = vrcp.pop %v866
    %v958 = vmul.f32 1.0, %v957
    %v959 = vrcp.pop %v867
    %v960 = vmul.f32 1.0, %v959
    %v961 = vrcp.pop %v868
    %v962 = vmul.f32 1.0, %v961
    %v963 = vrcp.pop %v869
    %v964 = vmul.f32 1.0, %v963
    %v965 = vrcp.pop %v870
    %v966 = vmul.f32 1.0, %v965
    %v967 = vrcp.pop %v871
    %v968 = vmul.f32 1.0, %v967
    %v969 = vrcp.pop %v872
    %v970 = vmul.f32 1.0, %v969
    %v971 = vrcp.pop %v873
    %v972 = vmul.f32 1.0, %v971
    %v973 = vrcp.pop %v874
    %v974 = vmul.f32 1.0, %v973
    %v975 = vrcp.pop %v875
    %v976 = vmul.f32 1.0, %v975
    %v977 = vrcp.pop %v876
    %v978 = vmul.f32 1.0, %v977
    %v979 = vrcp.pop %v877
    %v980 = vmul.f32 1.0, %v979
    %v981 = vrcp.pop %v878
    %v982 = vmul.f32 1.0, %v981
    %v983 = vrcp.pop %v879
    %v984 = vmul.f32 1.0, %v983
    %v985 = vrcp.pop %v880
    %v986 = vmul.f32 1.0, %v985
    %v987 = vrcp.pop %v881
    %v988 = vmul.f32 1.0, %v987
    %v989 = vrcp.pop %v882
    %v990 = vmul.f32 1.0, %v989
    %v991 = vrcp.pop %v883
    %v992 = vmul.f32 1.0, %v991
    %v993 = vrcp.pop %v884
    %v994 = vmul.f32 1.0, %v993
    %v995 = vrcp.pop %v885
    %v996 = vmul.f32 1.0, %v995
    %v997 = vrcp.pop %v886
    %v998 = vmul.f32 1.0, %v997
    %v999 = vrcp.pop %v887
    %v1000 = vmul.f32 1.0, %v999
    %v1001 = vrcp.pop %v888
    %v1002 = vmul.f32 1.0, %v1001
    %v1003 = vrcp.pop %v889
    %v1004 = vmul.f32 1.0, %v1003
    %v1005 = vrcp.pop %v890
    %v1006 = vmul.f32 1.0, %v1005
    %v1007 = vrcp.pop %v891
    %v1008 = vmul.f32 1.0, %v1007
    %v1009 = vrcp.pop %v892
    %v1010 = vmul.f32 1.0, %v1009
    %v1011 = vrcp.pop %v893
    %v1012 = vmul.f32 1.0, %v1011
    %v1013 = vrcp.pop %v894
    %v1014 = vmul.f32 1.0, %v1013
    %v1015 = vrcp.pop %v895
    %v1016 = vmul.f32 1.0, %v1015
    %v1017 = vrcp.pop %v896
    %v1018 = vmul.f32 1.0, %v1017
    %v1019 = vrcp.pop %v897
    %v1020 = vmul.f32 1.0, %v1019
    %v1021 = vrcp.pop %v898
    %v1022 = vmul.f32 1.0, %v1021
    %v1023 = vrcp.pop %v899
    %v1024 = vmul.f32 1.0, %v1023
    %v1025 = vrcp.pop %v900
    %v1026 = vmul.f32 1.0, %v1025
    %v1027 = vrcp.pop %v901
    %v1028 = vmul.f32 1.0, %v1027
    %v1029 = vrcp.pop %v902
    %v1030 = vmul.f32 1.0, %v1029
    %v1031 = vmul.f32 %v489, %v904
    %v1032 = vmul.f32 %v491, %v906
    %v1033 = vmul.f32 %v493, %v908
    %v1034 = vmul.f32 %v495, %v910
    %v1035 = vmul.f32 %v499, %v912
    %v1036 = vmul.f32 %v501, %v914
    %v1037 = vmul.f32 %v503, %v916
    %v1038 = vmul.f32 %v505, %v918
    %v1039 = vmul.f32 %v509, %v920
    %v1040 = vmul.f32 %v511, %v922
    %v1041 = vmul.f32 %v513, %v924
    %v1042 = vmul.f32 %v515, %v926
    %v1043 = vmul.f32 %v519, %v928
    %v1044 = vmul.f32 %v521, %v930
    %v1045 = vmul.f32 %v523, %v932
    %v1046 = vmul.f32 %v525, %v934
    %v1047 = vmul.f32 %v529, %v936
    %v1048 = vmul.f32 %v531, %v938
    %v1049 = vmul.f32 %v533, %v940
    %v1050 = vmul.f32 %v535, %v942
    %v1051 = vmul.f32 %v539, %v944
    %v1052 = vmul.f32 %v541, %v946
    %v1053 = vmul.f32 %v543, %v948
    %v1054 = vmul.f32 %v545, %v950
    %v1055 = vmul.f32 %v549, %v952
    %v1056 = vmul.f32 %v551, %v954
    %v1057 = vmul.f32 %v553, %v956
    %v1058 = vmul.f32 %v555, %v958
    %v1059 = vmul.f32 %v559, %v960
    %v1060 = vmul.f32 %v561, %v962
    %v1061 = vmul.f32 %v563, %v964
    %v1062 = vmul.f32 %v565, %v966
    %v1063 = vmul.f32 %v569, %v968
    %v1064 = vmul.f32 %v571, %v970
    %v1065 = vmul.f32 %v573, %v972
    %v1066 = vmul.f32 %v575, %v974
    %v1067 = vmul.f32 %v579, %v976
    %v1068 = vmul.f32 %v581, %v978
    %v1069 = vmul.f32 %v583, %v980
    %v1070 = vmul.f32 %v585, %v982
    %v1071 = vmul.f32 %v589, %v984
    %v1072 = vmul.f32 %v591, %v986
    %v1073 = vmul.f32 %v593, %v988
    %v1074 = vmul.f32 %v595, %v990
    %v1075 = vmul.f32 %v599, %v992
    %v1076 = vmul.f32 %v601, %v994
    %v1077 = vmul.f32 %v603, %v996
    %v1078 = vmul.f32 %v605, %v998
    %v1079 = vmul.f32 %v609, %v1000
    %v1080 = vmul.f32 %v611, %v1002
    %v1081 = vmul.f32 %v613, %v1004
    %v1082 = vmul.f32 %v615, %v1006
    %v1083 = vmul.f32 %v619, %v1008
    %v1084 = vmul.f32 %v621, %v1010
    %v1085 = vmul.f32 %v623, %v1012
    %v1086 = vmul.f32 %v625, %v1014
    %v1087 = vmul.f32 %v629, %v1016
    %v1088 = vmul.f32 %v631, %v1018
    %v1089 = vmul.f32 %v633, %v1020
    %v1090 = vmul.f32 %v635, %v1022
    %v1091 = vmul.f32 %v639, %v1024
    %v1092 = vmul.f32 %v641, %v1026
    %v1093 = vmul.f32 %v643, %v1028
    %v1094 = vmul.f32 %v645, %v1030
    %v1095 = vld [vmem:[%s2] sm:$0x3]
    %v1096 = vld [vmem:[%s3] sm:$0x3]
    %v1097 = vadd.f32 %v1031, %v1032
    %1098 = vadd.xlane.f32.xlu0 %v1097
    %v1099 = vpop.xlane.xlu0 %1098
    %v1100 = vadd.f32 %v1033, %v1034
    %1101 = vadd.xlane.f32.xlu0 %v1100
    %v1102 = vpop.xlane.xlu0 %1101
    %v1103 = vadd.f32 %v1035, %v1036
    %1104 = vadd.xlane.f32.xlu0 %v1103
    %v1105 = vpop.xlane.xlu0 %1104
    %v1106 = vadd.f32 %v1037, %v1038
    %1107 = vadd.xlane.f32.xlu0 %v1106
    %v1108 = vpop.xlane.xlu0 %1107
    %v1109 = vadd.f32 %v1039, %v1040
    %1110 = vadd.xlane.f32.xlu0 %v1109
    %v1111 = vpop.xlane.xlu0 %1110
    %v1112 = vadd.f32 %v1041, %v1042
    %1113 = vadd.xlane.f32.xlu0 %v1112
    %v1114 = vpop.xlane.xlu0 %1113
    %v1115 = vadd.f32 %v1043, %v1044
    %1116 = vadd.xlane.f32.xlu0 %v1115
    %v1117 = vpop.xlane.xlu0 %1116
    %v1118 = vadd.f32 %v1045, %v1046
    %1119 = vadd.xlane.f32.xlu0 %v1118
    %v1120 = vpop.xlane.xlu0 %1119
    %v1121 = vadd.f32 %v1047, %v1048
    %1122 = vadd.xlane.f32.xlu0 %v1121
    %v1123 = vpop.xlane.xlu0 %1122
    %v1124 = vadd.f32 %v1049, %v1050
    %1125 = vadd.xlane.f32.xlu0 %v1124
    %v1126 = vpop.xlane.xlu0 %1125
    %v1127 = vadd.f32 %v1051, %v1052
    %1128 = vadd.xlane.f32.xlu0 %v1127
    %v1129 = vpop.xlane.xlu0 %1128
    %v1130 = vadd.f32 %v1053, %v1054
    %1131 = vadd.xlane.f32.xlu0 %v1130
    %v1132 = vpop.xlane.xlu0 %1131
    %v1133 = vadd.f32 %v1055, %v1056
    %1134 = vadd.xlane.f32.xlu0 %v1133
    %v1135 = vpop.xlane.xlu0 %1134
    %v1136 = vadd.f32 %v1057, %v1058
    %1137 = vadd.xlane.f32.xlu0 %v1136
    %v1138 = vpop.xlane.xlu0 %1137
    %v1139 = vadd.f32 %v1059, %v1060
    %1140 = vadd.xlane.f32.xlu0 %v1139
    %v1141 = vpop.xlane.xlu0 %1140
    %v1142 = vadd.f32 %v1061, %v1062
    %1143 = vadd.xlane.f32.xlu0 %v1142
    %v1144 = vpop.xlane.xlu0 %1143
    %v1145 = vadd.f32 %v1063, %v1064
    %1146 = vadd.xlane.f32.xlu0 %v1145
    %v1147 = vpop.xlane.xlu0 %1146
    %v1148 = vadd.f32 %v1065, %v1066
    %1149 = vadd.xlane.f32.xlu0 %v1148
    %v1150 = vpop.xlane.xlu0 %1149
    %v1151 = vadd.f32 %v1067, %v1068
    %1152 = vadd.xlane.f32.xlu0 %v1151
    %v1153 = vpop.xlane.xlu0 %1152
    %v1154 = vadd.f32 %v1069, %v1070
    %1155 = vadd.xlane.f32.xlu0 %v1154
    %v1156 = vpop.xlane.xlu0 %1155
    %v1157 = vadd.f32 %v1071, %v1072
    %1158 = vadd.xlane.f32.xlu0 %v1157
    %v1159 = vpop.xlane.xlu0 %1158
    %v1160 = vadd.f32 %v1073, %v1074
    %1161 = vadd.xlane.f32.xlu0 %v1160
    %v1162 = vpop.xlane.xlu0 %1161
    %v1163 = vadd.f32 %v1075, %v1076
    %1164 = vadd.xlane.f32.xlu0 %v1163
    %v1165 = vpop.xlane.xlu0 %1164
    %v1166 = vadd.f32 %v1077, %v1078
    %1167 = vadd.xlane.f32.xlu0 %v1166
    %v1168 = vpop.xlane.xlu0 %1167
    %v1169 = vadd.f32 %v1079, %v1080
    %1170 = vadd.xlane.f32.xlu0 %v1169
    %v1171 = vpop.xlane.xlu0 %1170
    %v1172 = vadd.f32 %v1081, %v1082
    %1173 = vadd.xlane.f32.xlu0 %v1172
    %v1174 = vpop.xlane.xlu0 %1173
    %v1175 = vadd.f32 %v1083, %v1084
    %1176 = vadd.xlane.f32.xlu0 %v1175
    %v1177 = vpop.xlane.xlu0 %1176
    %v1178 = vadd.f32 %v1085, %v1086
    %1179 = vadd.xlane.f32.xlu0 %v1178
    %v1180 = vpop.xlane.xlu0 %1179
    %v1181 = vadd.f32 %v1087, %v1088
    %1182 = vadd.xlane.f32.xlu0 %v1181
    %v1183 = vpop.xlane.xlu0 %1182
    %v1184 = vadd.f32 %v1089, %v1090
    %1185 = vadd.xlane.f32.xlu0 %v1184
    %v1186 = vpop.xlane.xlu0 %1185
    %v1187 = vadd.f32 %v1091, %v1092
    %1188 = vadd.xlane.f32.xlu0 %v1187
    %v1189 = vpop.xlane.xlu0 %1188
    %v1190 = vadd.f32 %v1093, %v1094
    %1191 = vadd.xlane.f32.xlu0 %v1190
    %v1192 = vpop.xlane.xlu0 %1191
    %v1193 = vrcp.pop 256.0
    %v1194 = vmul.f32 %v1099, %v1193
    %v1195 = vmul.f32 %v1102, %v1193
    %v1196 = vmul.f32 %v1105, %v1193
    %v1197 = vmul.f32 %v1108, %v1193
    %v1198 = vmul.f32 %v1111, %v1193
    %v1199 = vmul.f32 %v1114, %v1193
    %v1200 = vmul.f32 %v1117, %v1193
    %v1201 = vmul.f32 %v1120, %v1193
    %v1202 = vmul.f32 %v1123, %v1193
    %v1203 = vmul.f32 %v1126, %v1193
    %v1204 = vmul.f32 %v1129, %v1193
    %v1205 = vmul.f32 %v1132, %v1193
    %v1206 = vmul.f32 %v1135, %v1193
    %v1207 = vmul.f32 %v1138, %v1193
    %v1208 = vmul.f32 %v1141, %v1193
    %v1209 = vmul.f32 %v1144, %v1193
    %v1210 = vmul.f32 %v1147, %v1193
    %v1211 = vmul.f32 %v1150, %v1193
    %v1212 = vmul.f32 %v1153, %v1193
    %v1213 = vmul.f32 %v1156, %v1193
    %v1214 = vmul.f32 %v1159, %v1193
    %v1215 = vmul.f32 %v1162, %v1193
    %v1216 = vmul.f32 %v1165, %v1193
    %v1217 = vmul.f32 %v1168, %v1193
    %v1218 = vmul.f32 %v1171, %v1193
    %v1219 = vmul.f32 %v1174, %v1193
    %v1220 = vmul.f32 %v1177, %v1193
    %v1221 = vmul.f32 %v1180, %v1193
    %v1222 = vmul.f32 %v1183, %v1193
    %v1223 = vmul.f32 %v1186, %v1193
    %v1224 = vmul.f32 %v1189, %v1193
    %v1225 = vmul.f32 %v1192, %v1193
    %v1226 = vsub.f32 %v1031, %v1194
    %v1227 = vsub.f32 %v1032, %v1194
    %v1228 = vsub.f32 %v1033, %v1195
    %v1229 = vsub.f32 %v1034, %v1195
    %v1230 = vsub.f32 %v1035, %v1196
    %v1231 = vsub.f32 %v1036, %v1196
    %v1232 = vsub.f32 %v1037, %v1197
    %v1233 = vsub.f32 %v1038, %v1197
    %v1234 = vsub.f32 %v1039, %v1198
    %v1235 = vsub.f32 %v1040, %v1198
    %v1236 = vsub.f32 %v1041, %v1199
    %v1237 = vsub.f32 %v1042, %v1199
    %v1238 = vsub.f32 %v1043, %v1200
    %v1239 = vsub.f32 %v1044, %v1200
    %v1240 = vsub.f32 %v1045, %v1201
    %v1241 = vsub.f32 %v1046, %v1201
    %v1242 = vsub.f32 %v1047, %v1202
    %v1243 = vsub.f32 %v1048, %v1202
    %v1244 = vsub.f32 %v1049, %v1203
    %v1245 = vsub.f32 %v1050, %v1203
    %v1246 = vsub.f32 %v1051, %v1204
    %v1247 = vsub.f32 %v1052, %v1204
    %v1248 = vsub.f32 %v1053, %v1205
    %v1249 = vsub.f32 %v1054, %v1205
    %v1250 = vsub.f32 %v1055, %v1206
    %v1251 = vsub.f32 %v1056, %v1206
    %v1252 = vsub.f32 %v1057, %v1207
    %v1253 = vsub.f32 %v1058, %v1207
    %v1254 = vsub.f32 %v1059, %v1208
    %v1255 = vsub.f32 %v1060, %v1208
    %v1256 = vsub.f32 %v1061, %v1209
    %v1257 = vsub.f32 %v1062, %v1209
    %v1258 = vsub.f32 %v1063, %v1210
    %v1259 = vsub.f32 %v1064, %v1210
    %v1260 = vsub.f32 %v1065, %v1211
    %v1261 = vsub.f32 %v1066, %v1211
    %v1262 = vsub.f32 %v1067, %v1212
    %v1263 = vsub.f32 %v1068, %v1212
    %v1264 = vsub.f32 %v1069, %v1213
    %v1265 = vsub.f32 %v1070, %v1213
    %v1266 = vsub.f32 %v1071, %v1214
    %v1267 = vsub.f32 %v1072, %v1214
    %v1268 = vsub.f32 %v1073, %v1215
    %v1269 = vsub.f32 %v1074, %v1215
    %v1270 = vsub.f32 %v1075, %v1216
    %v1271 = vsub.f32 %v1076, %v1216
    %v1272 = vsub.f32 %v1077, %v1217
    %v1273 = vsub.f32 %v1078, %v1217
    %v1274 = vsub.f32 %v1079, %v1218
    %v1275 = vsub.f32 %v1080, %v1218
    %v1276 = vsub.f32 %v1081, %v1219
    %v1277 = vsub.f32 %v1082, %v1219
    %v1278 = vsub.f32 %v1083, %v1220
    %v1279 = vsub.f32 %v1084, %v1220
    %v1280 = vsub.f32 %v1085, %v1221
    %v1281 = vsub.f32 %v1086, %v1221
    %v1282 = vsub.f32 %v1087, %v1222
    %v1283 = vsub.f32 %v1088, %v1222
    %v1284 = vsub.f32 %v1089, %v1223
    %v1285 = vsub.f32 %v1090, %v1223
    %v1286 = vsub.f32 %v1091, %v1224
    %v1287 = vsub.f32 %v1092, %v1224
    %v1288 = vsub.f32 %v1093, %v1225
    %v1289 = vsub.f32 %v1094, %v1225
    %v1290 = vmul.f32 %v1226, %v1226
    %v1291 = vmul.f32 %v1227, %v1227
    %v1292 = vmul.f32 %v1228, %v1228
    %v1293 = vmul.f32 %v1229, %v1229
    %v1294 = vmul.f32 %v1230, %v1230
    %v1295 = vmul.f32 %v1231, %v1231
    %v1296 = vmul.f32 %v1232, %v1232
    %v1297 = vmul.f32 %v1233, %v1233
    %v1298 = vmul.f32 %v1234, %v1234
    %v1299 = vmul.f32 %v1235, %v1235
    %v1300 = vmul.f32 %v1236, %v1236
    %v1301 = vmul.f32 %v1237, %v1237
    %v1302 = vmul.f32 %v1238, %v1238
    %v1303 = vmul.f32 %v1239, %v1239
    %v1304 = vmul.f32 %v1240, %v1240
    %v1305 = vmul.f32 %v1241, %v1241
    %v1306 = vmul.f32 %v1242, %v1242
    %v1307 = vmul.f32 %v1243, %v1243
    %v1308 = vmul.f32 %v1244, %v1244
    %v1309 = vmul.f32 %v1245, %v1245
    %v1310 = vmul.f32 %v1246, %v1246
    %v1311 = vmul.f32 %v1247, %v1247
    %v1312 = vmul.f32 %v1248, %v1248
    %v1313 = vmul.f32 %v1249, %v1249
    %v1314 = vmul.f32 %v1250, %v1250
    %v1315 = vmul.f32 %v1251, %v1251
    %v1316 = vmul.f32 %v1252, %v1252
    %v1317 = vmul.f32 %v1253, %v1253
    %v1318 = vmul.f32 %v1254, %v1254
    %v1319 = vmul.f32 %v1255, %v1255
    %v1320 = vmul.f32 %v1256, %v1256
    %v1321 = vmul.f32 %v1257, %v1257
    %v1322 = vmul.f32 %v1258, %v1258
    %v1323 = vmul.f32 %v1259, %v1259
    %v1324 = vmul.f32 %v1260, %v1260
    %v1325 = vmul.f32 %v1261, %v1261
    %v1326 = vmul.f32 %v1262, %v1262
    %v1327 = vmul.f32 %v1263, %v1263
    %v1328 = vmul.f32 %v1264, %v1264
    %v1329 = vmul.f32 %v1265, %v1265
    %v1330 = vmul.f32 %v1266, %v1266
    %v1331 = vmul.f32 %v1267, %v1267
    %v1332 = vmul.f32 %v1268, %v1268
    %v1333 = vmul.f32 %v1269, %v1269
    %v1334 = vmul.f32 %v1270, %v1270
    %v1335 = vmul.f32 %v1271, %v1271
    %v1336 = vmul.f32 %v1272, %v1272
    %v1337 = vmul.f32 %v1273, %v1273
    %v1338 = vmul.f32 %v1274, %v1274
    %v1339 = vmul.f32 %v1275, %v1275
    %v1340 = vmul.f32 %v1276, %v1276
    %v1341 = vmul.f32 %v1277, %v1277
    %v1342 = vmul.f32 %v1278, %v1278
    %v1343 = vmul.f32 %v1279, %v1279
    %v1344 = vmul.f32 %v1280, %v1280
    %v1345 = vmul.f32 %v1281, %v1281
    %v1346 = vmul.f32 %v1282, %v1282
    %v1347 = vmul.f32 %v1283, %v1283
    %v1348 = vmul.f32 %v1284, %v1284
    %v1349 = vmul.f32 %v1285, %v1285
    %v1350 = vmul.f32 %v1286, %v1286
    %v1351 = vmul.f32 %v1287, %v1287
    %v1352 = vmul.f32 %v1288, %v1288
    %v1353 = vmul.f32 %v1289, %v1289
    %v1354 = vadd.f32 %v1290, %v1291
    %1355 = vadd.xlane.f32.xlu0 %v1354
    %v1356 = vpop.xlane.xlu0 %1355
    %v1357 = vadd.f32 %v1292, %v1293
    %1358 = vadd.xlane.f32.xlu0 %v1357
    %v1359 = vpop.xlane.xlu0 %1358
    %v1360 = vadd.f32 %v1294, %v1295
    %1361 = vadd.xlane.f32.xlu0 %v1360
    %v1362 = vpop.xlane.xlu0 %1361
    %v1363 = vadd.f32 %v1296, %v1297
    %1364 = vadd.xlane.f32.xlu0 %v1363
    %v1365 = vpop.xlane.xlu0 %1364
    %v1366 = vadd.f32 %v1298, %v1299
    %1367 = vadd.xlane.f32.xlu0 %v1366
    %v1368 = vpop.xlane.xlu0 %1367
    %v1369 = vadd.f32 %v1300, %v1301
    %1370 = vadd.xlane.f32.xlu0 %v1369
    %v1371 = vpop.xlane.xlu0 %1370
    %v1372 = vadd.f32 %v1302, %v1303
    %1373 = vadd.xlane.f32.xlu0 %v1372
    %v1374 = vpop.xlane.xlu0 %1373
    %v1375 = vadd.f32 %v1304, %v1305
    %1376 = vadd.xlane.f32.xlu0 %v1375
    %v1377 = vpop.xlane.xlu0 %1376
    %v1378 = vadd.f32 %v1306, %v1307
    %1379 = vadd.xlane.f32.xlu0 %v1378
    %v1380 = vpop.xlane.xlu0 %1379
    %v1381 = vadd.f32 %v1308, %v1309
    %1382 = vadd.xlane.f32.xlu0 %v1381
    %v1383 = vpop.xlane.xlu0 %1382
    %v1384 = vadd.f32 %v1310, %v1311
    %1385 = vadd.xlane.f32.xlu0 %v1384
    %v1386 = vpop.xlane.xlu0 %1385
    %v1387 = vadd.f32 %v1312, %v1313
    %1388 = vadd.xlane.f32.xlu0 %v1387
    %v1389 = vpop.xlane.xlu0 %1388
    %v1390 = vadd.f32 %v1314, %v1315
    %1391 = vadd.xlane.f32.xlu0 %v1390
    %v1392 = vpop.xlane.xlu0 %1391
    %v1393 = vadd.f32 %v1316, %v1317
    %1394 = vadd.xlane.f32.xlu0 %v1393
    %v1395 = vpop.xlane.xlu0 %1394
    %v1396 = vadd.f32 %v1318, %v1319
    %1397 = vadd.xlane.f32.xlu0 %v1396
    %v1398 = vpop.xlane.xlu0 %1397
    %v1399 = vadd.f32 %v1320, %v1321
    %1400 = vadd.xlane.f32.xlu0 %v1399
    %v1401 = vpop.xlane.xlu0 %1400
    %v1402 = vadd.f32 %v1322, %v1323
    %1403 = vadd.xlane.f32.xlu0 %v1402
    %v1404 = vpop.xlane.xlu0 %1403
    %v1405 = vadd.f32 %v1324, %v1325
    %1406 = vadd.xlane.f32.xlu0 %v1405
    %v1407 = vpop.xlane.xlu0 %1406
    %v1408 = vadd.f32 %v1326, %v1327
    %1409 = vadd.xlane.f32.xlu0 %v1408
    %v1410 = vpop.xlane.xlu0 %1409
    %v1411 = vadd.f32 %v1328, %v1329
    %1412 = vadd.xlane.f32.xlu0 %v1411
    %v1413 = vpop.xlane.xlu0 %1412
    %v1414 = vadd.f32 %v1330, %v1331
    %1415 = vadd.xlane.f32.xlu0 %v1414
    %v1416 = vpop.xlane.xlu0 %1415
    %v1417 = vadd.f32 %v1332, %v1333
    %1418 = vadd.xlane.f32.xlu0 %v1417
    %v1419 = vpop.xlane.xlu0 %1418
    %v1420 = vadd.f32 %v1334, %v1335
    %1421 = vadd.xlane.f32.xlu0 %v1420
    %v1422 = vpop.xlane.xlu0 %1421
    %v1423 = vadd.f32 %v1336, %v1337
    %1424 = vadd.xlane.f32.xlu0 %v1423
    %v1425 = vpop.xlane.xlu0 %1424
    %v1426 = vadd.f32 %v1338, %v1339
    %1427 = vadd.xlane.f32.xlu0 %v1426
    %v1428 = vpop.xlane.xlu0 %1427
    %v1429 = vadd.f32 %v1340, %v1341
    %1430 = vadd.xlane.f32.xlu0 %v1429
    %v1431 = vpop.xlane.xlu0 %1430
    %v1432 = vadd.f32 %v1342, %v1343
    %1433 = vadd.xlane.f32.xlu0 %v1432
    %v1434 = vpop.xlane.xlu0 %1433
    %v1435 = vadd.f32 %v1344, %v1345
    %1436 = vadd.xlane.f32.xlu0 %v1435
    %v1437 = vpop.xlane.xlu0 %1436
    %v1438 = vadd.f32 %v1346, %v1347
    %1439 = vadd.xlane.f32.xlu0 %v1438
    %v1440 = vpop.xlane.xlu0 %1439
    %v1441 = vadd.f32 %v1348, %v1349
    %1442 = vadd.xlane.f32.xlu0 %v1441
    %v1443 = vpop.xlane.xlu0 %1442
    %v1444 = vadd.f32 %v1350, %v1351
    %1445 = vadd.xlane.f32.xlu0 %v1444
    %v1446 = vpop.xlane.xlu0 %1445
    %v1447 = vadd.f32 %v1352, %v1353
    %1448 = vadd.xlane.f32.xlu0 %v1447
    %v1449 = vpop.xlane.xlu0 %1448
    %v1450 = vmul.f32 %v1356, %v1193
    %v1451 = vmul.f32 %v1359, %v1193
    %v1452 = vmul.f32 %v1362, %v1193
    %v1453 = vmul.f32 %v1365, %v1193
    %v1454 = vmul.f32 %v1368, %v1193
    %v1455 = vmul.f32 %v1371, %v1193
    %v1456 = vmul.f32 %v1374, %v1193
    %v1457 = vmul.f32 %v1377, %v1193
    %v1458 = vmul.f32 %v1380, %v1193
    %v1459 = vmul.f32 %v1383, %v1193
    %v1460 = vmul.f32 %v1386, %v1193
    %v1461 = vmul.f32 %v1389, %v1193
    %v1462 = vmul.f32 %v1392, %v1193
    %v1463 = vmul.f32 %v1395, %v1193
    %v1464 = vmul.f32 %v1398, %v1193
    %v1465 = vmul.f32 %v1401, %v1193
    %v1466 = vmul.f32 %v1404, %v1193
    %v1467 = vmul.f32 %v1407, %v1193
    %v1468 = vmul.f32 %v1410, %v1193
    %v1469 = vmul.f32 %v1413, %v1193
    %v1470 = vmul.f32 %v1416, %v1193
    %v1471 = vmul.f32 %v1419, %v1193
    %v1472 = vmul.f32 %v1422, %v1193
    %v1473 = vmul.f32 %v1425, %v1193
    %v1474 = vmul.f32 %v1428, %v1193
    %v1475 = vmul.f32 %v1431, %v1193
    %v1476 = vmul.f32 %v1434, %v1193
    %v1477 = vmul.f32 %v1437, %v1193
    %v1478 = vmul.f32 %v1440, %v1193
    %v1479 = vmul.f32 %v1443, %v1193
    %v1480 = vmul.f32 %v1446, %v1193
    %v1481 = vmul.f32 %v1449, %v1193
    %v1482 = vadd.f32 %v1450, 1e-05
    %v1483 = vadd.f32 %v1451, 1e-05
    %v1484 = vadd.f32 %v1452, 1e-05
    %v1485 = vadd.f32 %v1453, 1e-05
    %v1486 = vadd.f32 %v1454, 1e-05
    %v1487 = vadd.f32 %v1455, 1e-05
    %v1488 = vadd.f32 %v1456, 1e-05
    %v1489 = vadd.f32 %v1457, 1e-05
    %v1490 = vadd.f32 %v1458, 1e-05
    %v1491 = vadd.f32 %v1459, 1e-05
    %v1492 = vadd.f32 %v1460, 1e-05
    %v1493 = vadd.f32 %v1461, 1e-05
    %v1494 = vadd.f32 %v1462, 1e-05
    %v1495 = vadd.f32 %v1463, 1e-05
    %v1496 = vadd.f32 %v1464, 1e-05
    %v1497 = vadd.f32 %v1465, 1e-05
    %v1498 = vadd.f32 %v1466, 1e-05
    %v1499 = vadd.f32 %v1467, 1e-05
    %v1500 = vadd.f32 %v1468, 1e-05
    %v1501 = vadd.f32 %v1469, 1e-05
    %v1502 = vadd.f32 %v1470, 1e-05
    %v1503 = vadd.f32 %v1471, 1e-05
    %v1504 = vadd.f32 %v1472, 1e-05
    %v1505 = vadd.f32 %v1473, 1e-05
    %v1506 = vadd.f32 %v1474, 1e-05
    %v1507 = vadd.f32 %v1475, 1e-05
    %v1508 = vadd.f32 %v1476, 1e-05
    %v1509 = vadd.f32 %v1477, 1e-05
    %v1510 = vadd.f32 %v1478, 1e-05
    %v1511 = vadd.f32 %v1479, 1e-05
    %v1512 = vadd.f32 %v1480, 1e-05
    %v1513 = vadd.f32 %v1481, 1e-05
    %v1514 = vrsqrt.pop %v1482
    %v1515 = vrsqrt.pop %v1483
    %v1516 = vrsqrt.pop %v1484
    %v1517 = vrsqrt.pop %v1485
    %v1518 = vrsqrt.pop %v1486
    %v1519 = vrsqrt.pop %v1487
    %v1520 = vrsqrt.pop %v1488
    %v1521 = vrsqrt.pop %v1489
    %v1522 = vrsqrt.pop %v1490
    %v1523 = vrsqrt.pop %v1491
    %v1524 = vrsqrt.pop %v1492
    %v1525 = vrsqrt.pop %v1493
    %v1526 = vrsqrt.pop %v1494
    %v1527 = vrsqrt.pop %v1495
    %v1528 = vrsqrt.pop %v1496
    %v1529 = vrsqrt.pop %v1497
    %v1530 = vrsqrt.pop %v1498
    %v1531 = vrsqrt.pop %v1499
    %v1532 = vrsqrt.pop %v1500
    %v1533 = vrsqrt.pop %v1501
    %v1534 = vrsqrt.pop %v1502
    %v1535 = vrsqrt.pop %v1503
    %v1536 = vrsqrt.pop %v1504
    %v1537 = vrsqrt.pop %v1505
    %v1538 = vrsqrt.pop %v1506
    %v1539 = vrsqrt.pop %v1507
    %v1540 = vrsqrt.pop %v1508
    %v1541 = vrsqrt.pop %v1509
    %v1542 = vrsqrt.pop %v1510
    %v1543 = vrsqrt.pop %v1511
    %v1544 = vrsqrt.pop %v1512
    %v1545 = vrsqrt.pop %v1513
    %v1546 = vmul.f32 %v1226, %v1514
    %v1547 = vmul.f32 %v1227, %v1514
    %v1548 = vmul.f32 %v1228, %v1515
    %v1549 = vmul.f32 %v1229, %v1515
    %v1550 = vmul.f32 %v1230, %v1516
    %v1551 = vmul.f32 %v1231, %v1516
    %v1552 = vmul.f32 %v1232, %v1517
    %v1553 = vmul.f32 %v1233, %v1517
    %v1554 = vmul.f32 %v1234, %v1518
    %v1555 = vmul.f32 %v1235, %v1518
    %v1556 = vmul.f32 %v1236, %v1519
    %v1557 = vmul.f32 %v1237, %v1519
    %v1558 = vmul.f32 %v1238, %v1520
    %v1559 = vmul.f32 %v1239, %v1520
    %v1560 = vmul.f32 %v1240, %v1521
    %v1561 = vmul.f32 %v1241, %v1521
    %v1562 = vmul.f32 %v1242, %v1522
    %v1563 = vmul.f32 %v1243, %v1522
    %v1564 = vmul.f32 %v1244, %v1523
    %v1565 = vmul.f32 %v1245, %v1523
    %v1566 = vmul.f32 %v1246, %v1524
    %v1567 = vmul.f32 %v1247, %v1524
    %v1568 = vmul.f32 %v1248, %v1525
    %v1569 = vmul.f32 %v1249, %v1525
    %v1570 = vmul.f32 %v1250, %v1526
    %v1571 = vmul.f32 %v1251, %v1526
    %v1572 = vmul.f32 %v1252, %v1527
    %v1573 = vmul.f32 %v1253, %v1527
    %v1574 = vmul.f32 %v1254, %v1528
    %v1575 = vmul.f32 %v1255, %v1528
    %v1576 = vmul.f32 %v1256, %v1529
    %v1577 = vmul.f32 %v1257, %v1529
    %v1578 = vmul.f32 %v1258, %v1530
    %v1579 = vmul.f32 %v1259, %v1530
    %v1580 = vmul.f32 %v1260, %v1531
    %v1581 = vmul.f32 %v1261, %v1531
    %v1582 = vmul.f32 %v1262, %v1532
    %v1583 = vmul.f32 %v1263, %v1532
    %v1584 = vmul.f32 %v1264, %v1533
    %v1585 = vmul.f32 %v1265, %v1533
    %v1586 = vmul.f32 %v1266, %v1534
    %v1587 = vmul.f32 %v1267, %v1534
    %v1588 = vmul.f32 %v1268, %v1535
    %v1589 = vmul.f32 %v1269, %v1535
    %v1590 = vmul.f32 %v1270, %v1536
    %v1591 = vmul.f32 %v1271, %v1536
    %v1592 = vmul.f32 %v1272, %v1537
    %v1593 = vmul.f32 %v1273, %v1537
    %v1594 = vmul.f32 %v1274, %v1538
    %v1595 = vmul.f32 %v1275, %v1538
    %v1596 = vmul.f32 %v1276, %v1539
    %v1597 = vmul.f32 %v1277, %v1539
    %v1598 = vmul.f32 %v1278, %v1540
    %v1599 = vmul.f32 %v1279, %v1540
    %v1600 = vmul.f32 %v1280, %v1541
    %v1601 = vmul.f32 %v1281, %v1541
    %v1602 = vmul.f32 %v1282, %v1542
    %v1603 = vmul.f32 %v1283, %v1542
    %v1604 = vmul.f32 %v1284, %v1543
    %v1605 = vmul.f32 %v1285, %v1543
    %v1606 = vmul.f32 %v1286, %v1544
    %v1607 = vmul.f32 %v1287, %v1544
    %v1608 = vmul.f32 %v1288, %v1545
    %v1609 = vmul.f32 %v1289, %v1545
    %v1611 = vlaneseq
    %v1612 = vshrl.u32 %v1611, 7
    %v1613 = vsub.s32 0, %v1612
    %v1614 = vrot.slane %v1095, %v1613
    %v1615 = vlaneseq
    %v1616 = vshrl.u32 %v1615, 7
    %v1617 = vsub.s32 1, %v1616
    %v1618 = vrot.slane %v1095, %v1617
    %v1621 = vmul.f32 %v1546, %v1614
    %v1622 = vmul.f32 %v1547, %v1618
    %v1623 = vmul.f32 %v1548, %v1614
    %v1624 = vmul.f32 %v1549, %v1618
    %v1625 = vmul.f32 %v1550, %v1614
    %v1626 = vmul.f32 %v1551, %v1618
    %v1627 = vmul.f32 %v1552, %v1614
    %v1628 = vmul.f32 %v1553, %v1618
    %v1629 = vmul.f32 %v1554, %v1614
    %v1630 = vmul.f32 %v1555, %v1618
    %v1631 = vmul.f32 %v1556, %v1614
    %v1632 = vmul.f32 %v1557, %v1618
    %v1633 = vmul.f32 %v1558, %v1614
    %v1634 = vmul.f32 %v1559, %v1618
    %v1635 = vmul.f32 %v1560, %v1614
    %v1636 = vmul.f32 %v1561, %v1618
    %v1637 = vmul.f32 %v1562, %v1614
    %v1638 = vmul.f32 %v1563, %v1618
    %v1639 = vmul.f32 %v1564, %v1614
    %v1640 = vmul.f32 %v1565, %v1618
    %v1641 = vmul.f32 %v1566, %v1614
    %v1642 = vmul.f32 %v1567, %v1618
    %v1643 = vmul.f32 %v1568, %v1614
    %v1644 = vmul.f32 %v1569, %v1618
    %v1645 = vmul.f32 %v1570, %v1614
    %v1646 = vmul.f32 %v1571, %v1618
    %v1647 = vmul.f32 %v1572, %v1614
    %v1648 = vmul.f32 %v1573, %v1618
    %v1649 = vmul.f32 %v1574, %v1614
    %v1650 = vmul.f32 %v1575, %v1618
    %v1651 = vmul.f32 %v1576, %v1614
    %v1652 = vmul.f32 %v1577, %v1618
    %v1653 = vmul.f32 %v1578, %v1614
    %v1654 = vmul.f32 %v1579, %v1618
    %v1655 = vmul.f32 %v1580, %v1614
    %v1656 = vmul.f32 %v1581, %v1618
    %v1657 = vmul.f32 %v1582, %v1614
    %v1658 = vmul.f32 %v1583, %v1618
    %v1659 = vmul.f32 %v1584, %v1614
    %v1660 = vmul.f32 %v1585, %v1618
    %v1661 = vmul.f32 %v1586, %v1614
    %v1662 = vmul.f32 %v1587, %v1618
    %v1663 = vmul.f32 %v1588, %v1614
    %v1664 = vmul.f32 %v1589, %v1618
    %v1665 = vmul.f32 %v1590, %v1614
    %v1666 = vmul.f32 %v1591, %v1618
    %v1667 = vmul.f32 %v1592, %v1614
    %v1668 = vmul.f32 %v1593, %v1618
    %v1669 = vmul.f32 %v1594, %v1614
    %v1670 = vmul.f32 %v1595, %v1618
    %v1671 = vmul.f32 %v1596, %v1614
    %v1672 = vmul.f32 %v1597, %v1618
    %v1673 = vmul.f32 %v1598, %v1614
    %v1674 = vmul.f32 %v1599, %v1618
    %v1675 = vmul.f32 %v1600, %v1614
    %v1676 = vmul.f32 %v1601, %v1618
    %v1677 = vmul.f32 %v1602, %v1614
    %v1678 = vmul.f32 %v1603, %v1618
    %v1679 = vmul.f32 %v1604, %v1614
    %v1680 = vmul.f32 %v1605, %v1618
    %v1681 = vmul.f32 %v1606, %v1614
    %v1682 = vmul.f32 %v1607, %v1618
    %v1683 = vmul.f32 %v1608, %v1614
    %v1684 = vmul.f32 %v1609, %v1618
    %v1686 = vlaneseq
    %v1687 = vshrl.u32 %v1686, 7
    %v1688 = vsub.s32 0, %v1687
    %v1689 = vrot.slane %v1096, %v1688
    %v1690 = vlaneseq
    %v1691 = vshrl.u32 %v1690, 7
    %v1692 = vsub.s32 1, %v1691
    %v1693 = vrot.slane %v1096, %v1692
    %v1696 = vadd.f32 %v1621, %v1689
    %v1697 = vadd.f32 %v1622, %v1693
    %v1698 = vadd.f32 %v1623, %v1689
    %v1699 = vadd.f32 %v1624, %v1693
    %v1700 = vadd.f32 %v1625, %v1689
    %v1701 = vadd.f32 %v1626, %v1693
    %v1702 = vadd.f32 %v1627, %v1689
    %v1703 = vadd.f32 %v1628, %v1693
    %v1704 = vadd.f32 %v1629, %v1689
    %v1705 = vadd.f32 %v1630, %v1693
    %v1706 = vadd.f32 %v1631, %v1689
    %v1707 = vadd.f32 %v1632, %v1693
    %v1708 = vadd.f32 %v1633, %v1689
    %v1709 = vadd.f32 %v1634, %v1693
    %v1710 = vadd.f32 %v1635, %v1689
    %v1711 = vadd.f32 %v1636, %v1693
    %v1712 = vadd.f32 %v1637, %v1689
    %v1713 = vadd.f32 %v1638, %v1693
    %v1714 = vadd.f32 %v1639, %v1689
    %v1715 = vadd.f32 %v1640, %v1693
    %v1716 = vadd.f32 %v1641, %v1689
    %v1717 = vadd.f32 %v1642, %v1693
    %v1718 = vadd.f32 %v1643, %v1689
    %v1719 = vadd.f32 %v1644, %v1693
    %v1720 = vadd.f32 %v1645, %v1689
    %v1721 = vadd.f32 %v1646, %v1693
    %v1722 = vadd.f32 %v1647, %v1689
    %v1723 = vadd.f32 %v1648, %v1693
    %v1724 = vadd.f32 %v1649, %v1689
    %v1725 = vadd.f32 %v1650, %v1693
    %v1726 = vadd.f32 %v1651, %v1689
    %v1727 = vadd.f32 %v1652, %v1693
    %v1728 = vadd.f32 %v1653, %v1689
    %v1729 = vadd.f32 %v1654, %v1693
    %v1730 = vadd.f32 %v1655, %v1689
    %v1731 = vadd.f32 %v1656, %v1693
    %v1732 = vadd.f32 %v1657, %v1689
    %v1733 = vadd.f32 %v1658, %v1693
    %v1734 = vadd.f32 %v1659, %v1689
    %v1735 = vadd.f32 %v1660, %v1693
    %v1736 = vadd.f32 %v1661, %v1689
    %v1737 = vadd.f32 %v1662, %v1693
    %v1738 = vadd.f32 %v1663, %v1689
    %v1739 = vadd.f32 %v1664, %v1693
    %v1740 = vadd.f32 %v1665, %v1689
    %v1741 = vadd.f32 %v1666, %v1693
    %v1742 = vadd.f32 %v1667, %v1689
    %v1743 = vadd.f32 %v1668, %v1693
    %v1744 = vadd.f32 %v1669, %v1689
    %v1745 = vadd.f32 %v1670, %v1693
    %v1746 = vadd.f32 %v1671, %v1689
    %v1747 = vadd.f32 %v1672, %v1693
    %v1748 = vadd.f32 %v1673, %v1689
    %v1749 = vadd.f32 %v1674, %v1693
    %v1750 = vadd.f32 %v1675, %v1689
    %v1751 = vadd.f32 %v1676, %v1693
    %v1752 = vadd.f32 %v1677, %v1689
    %v1753 = vadd.f32 %v1678, %v1693
    %v1754 = vadd.f32 %v1679, %v1689
    %v1755 = vadd.f32 %v1680, %v1693
    %v1756 = vadd.f32 %v1681, %v1689
    %v1757 = vadd.f32 %v1682, %v1693
    %v1758 = vadd.f32 %v1683, %v1689
    %v1759 = vadd.f32 %v1684, %v1693
    %v1760 = vpack.c.bf16 %v1698, %v1696
    %v1761 = vpack.c.bf16 %v1699, %v1697
    %v1762 = vpack.c.bf16 %v1702, %v1700
    %v1763 = vpack.c.bf16 %v1703, %v1701
    %v1764 = vpack.c.bf16 %v1706, %v1704
    %v1765 = vpack.c.bf16 %v1707, %v1705
    %v1766 = vpack.c.bf16 %v1710, %v1708
    %v1767 = vpack.c.bf16 %v1711, %v1709
    %v1768 = vpack.c.bf16 %v1714, %v1712
    %v1769 = vpack.c.bf16 %v1715, %v1713
    %v1770 = vpack.c.bf16 %v1718, %v1716
    %v1771 = vpack.c.bf16 %v1719, %v1717
    %v1772 = vpack.c.bf16 %v1722, %v1720
    %v1773 = vpack.c.bf16 %v1723, %v1721
    %v1774 = vpack.c.bf16 %v1726, %v1724
    %v1775 = vpack.c.bf16 %v1727, %v1725
    %v1776 = vpack.c.bf16 %v1730, %v1728
    %v1777 = vpack.c.bf16 %v1731, %v1729
    %v1778 = vpack.c.bf16 %v1734, %v1732
    %v1779 = vpack.c.bf16 %v1735, %v1733
    %v1780 = vpack.c.bf16 %v1738, %v1736
    %v1781 = vpack.c.bf16 %v1739, %v1737
    %v1782 = vpack.c.bf16 %v1742, %v1740
    %v1783 = vpack.c.bf16 %v1743, %v1741
    %v1784 = vpack.c.bf16 %v1746, %v1744
    %v1785 = vpack.c.bf16 %v1747, %v1745
    %v1786 = vpack.c.bf16 %v1750, %v1748
    %v1787 = vpack.c.bf16 %v1751, %v1749
    %v1788 = vpack.c.bf16 %v1754, %v1752
    %v1789 = vpack.c.bf16 %v1755, %v1753
    %v1790 = vpack.c.bf16 %v1758, %v1756
    %v1791 = vpack.c.bf16 %v1759, %v1757
    %v1792 = vld [vmem:[%s5] sm:$0x3]
    %v1793 = vld [vmem:[%s6] sm:$0x3]
    %v1794 = vld [vmem:[%s7] sm:$0x3]
    %v1795 = vld [vmem:[#allocation6] sm:$0xff]
    %v1796 = vld [vmem:[#allocation6 + $0x18] sm:$0xff]
    %v1797 = vld [vmem:[#allocation6 + $0x30] sm:$0xff]
    %v1798 = vld [vmem:[#allocation6 + $0x48] sm:$0xff]
    %v1799 = vld [vmem:[#allocation6 + $0x60] sm:$0xff]
    %v1800 = vld [vmem:[#allocation6 + $0x78] sm:$0xff]
    %v1801 = vld [vmem:[#allocation6 + $0x90] sm:$0xff]
    %v1802 = vld [vmem:[#allocation6 + $0xa8] sm:$0xff]
    %v1803 = vld [vmem:[#allocation6 + $0xc0] sm:$0xff]
    %v1804 = vld [vmem:[#allocation6 + $0xd8] sm:$0xff]
    %v1805 = vld [vmem:[#allocation6 + $0xf0] sm:$0xff]
    %v1806 = vld [vmem:[#allocation6 + $0x108] sm:$0xff]
    %v1807 = vld [vmem:[#allocation6 + $0x120] sm:$0xff]
    %v1808 = vld [vmem:[#allocation6 + $0x138] sm:$0xff]
    %v1809 = vld [vmem:[#allocation6 + $0x150] sm:$0xff]
    %v1810 = vld [vmem:[#allocation6 + $0x168] sm:$0xff]
    %v1811 = vld [vmem:[#allocation6 + $0x180] sm:$0xff]
    %v1812 = vld [vmem:[#allocation6 + $0x198] sm:$0xff]
    %v1813 = vld [vmem:[#allocation6 + $0x1b0] sm:$0xff]
    %v1814 = vld [vmem:[#allocation6 + $0x1c8] sm:$0xff]
    %v1815 = vld [vmem:[#allocation6 + $0x1e0] sm:$0xff]
    %v1816 = vld [vmem:[#allocation6 + $0x1f8] sm:$0xff]
    %v1817 = vld [vmem:[#allocation6 + $0x210] sm:$0xff]
    %v1818 = vld [vmem:[#allocation6 + $0x228] sm:$0xff]
    %v1819 = vld [vmem:[#allocation6 + $0x240] sm:$0xff]
    %v1820 = vld [vmem:[#allocation6 + $0x258] sm:$0xff]
    %v1821 = vld [vmem:[#allocation6 + $0x270] sm:$0xff]
    %v1822 = vld [vmem:[#allocation6 + $0x288] sm:$0xff]
    %v1823 = vld [vmem:[#allocation6 + $0x2a0] sm:$0xff]
    %v1824 = vld [vmem:[#allocation6 + $0x2b8] sm:$0xff]
    %v1825 = vld [vmem:[#allocation6 + $0x2d0] sm:$0xff]
    %v1826 = vld [vmem:[#allocation6 + $0x2e8] sm:$0xff]
    %v1859 = vunpack.c.l.b16 %v1795
    %v1860 = vunpack.c.h.b16 %v1795
    %v1861 = vunpack.c.l.b16 %v1796
    %v1862 = vunpack.c.h.b16 %v1796
    %v1863 = vunpack.c.l.b16 %v1797
    %v1864 = vunpack.c.h.b16 %v1797
    %v1865 = vunpack.c.l.b16 %v1798
    %v1866 = vunpack.c.h.b16 %v1798
    %v1867 = vunpack.c.l.b16 %v1799
    %v1868 = vunpack.c.h.b16 %v1799
    %v1869 = vunpack.c.l.b16 %v1800
    %v1870 = vunpack.c.h.b16 %v1800
    %v1871 = vunpack.c.l.b16 %v1801
    %v1872 = vunpack.c.h.b16 %v1801
    %v1873 = vunpack.c.l.b16 %v1802
    %v1874 = vunpack.c.h.b16 %v1802
    %v1875 = vunpack.c.l.b16 %v1803
    %v1876 = vunpack.c.h.b16 %v1803
    %v1877 = vunpack.c.l.b16 %v1804
    %v1878 = vunpack.c.h.b16 %v1804
    %v1879 = vunpack.c.l.b16 %v1805
    %v1880 = vunpack.c.h.b16 %v1805
    %v1881 = vunpack.c.l.b16 %v1806
    %v1882 = vunpack.c.h.b16 %v1806
    %v1883 = vunpack.c.l.b16 %v1807
    %v1884 = vunpack.c.h.b16 %v1807
    %v1885 = vunpack.c.l.b16 %v1808
    %v1886 = vunpack.c.h.b16 %v1808
    %v1887 = vunpack.c.l.b16 %v1809
    %v1888 = vunpack.c.h.b16 %v1809
    %v1889 = vunpack.c.l.b16 %v1810
    %v1890 = vunpack.c.h.b16 %v1810
    %v1891 = vunpack.c.l.b16 %v1811
    %v1892 = vunpack.c.h.b16 %v1811
    %v1893 = vunpack.c.l.b16 %v1812
    %v1894 = vunpack.c.h.b16 %v1812
    %v1895 = vunpack.c.l.b16 %v1813
    %v1896 = vunpack.c.h.b16 %v1813
    %v1897 = vunpack.c.l.b16 %v1814
    %v1898 = vunpack.c.h.b16 %v1814
    %v1899 = vunpack.c.l.b16 %v1815
    %v1900 = vunpack.c.h.b16 %v1815
    %v1901 = vunpack.c.l.b16 %v1816
    %v1902 = vunpack.c.h.b16 %v1816
    %v1903 = vunpack.c.l.b16 %v1817
    %v1904 = vunpack.c.h.b16 %v1817
    %v1905 = vunpack.c.l.b16 %v1818
    %v1906 = vunpack.c.h.b16 %v1818
    %v1907 = vunpack.c.l.b16 %v1819
    %v1908 = vunpack.c.h.b16 %v1819
    %v1909 = vunpack.c.l.b16 %v1820
    %v1910 = vunpack.c.h.b16 %v1820
    %v1911 = vunpack.c.l.b16 %v1821
    %v1912 = vunpack.c.h.b16 %v1821
    %v1913 = vunpack.c.l.b16 %v1822
    %v1914 = vunpack.c.h.b16 %v1822
    %v1915 = vunpack.c.l.b16 %v1823
    %v1916 = vunpack.c.h.b16 %v1823
    %v1917 = vunpack.c.l.b16 %v1824
    %v1918 = vunpack.c.h.b16 %v1824
    %v1919 = vunpack.c.l.b16 %v1825
    %v1920 = vunpack.c.h.b16 %v1825
    %v1921 = vunpack.c.l.b16 %v1826
    %v1922 = vunpack.c.h.b16 %v1826
    %v1923 = vpack.c.b16 %v1861, %v1859
    %v1924 = vpack.c.b16 %v1862, %v1860
    %v1925 = vpack.c.b16 %v1865, %v1863
    %v1926 = vpack.c.b16 %v1866, %v1864
    %v1927 = vpack.c.b16 %v1869, %v1867
    %v1928 = vpack.c.b16 %v1870, %v1868
    %v1929 = vpack.c.b16 %v1873, %v1871
    %v1930 = vpack.c.b16 %v1874, %v1872
    %v1931 = vpack.c.b16 %v1877, %v1875
    %v1932 = vpack.c.b16 %v1878, %v1876
    %v1933 = vpack.c.b16 %v1881, %v1879
    %v1934 = vpack.c.b16 %v1882, %v1880
    %v1935 = vpack.c.b16 %v1885, %v1883
    %v1936 = vpack.c.b16 %v1886, %v1884
    %v1937 = vpack.c.b16 %v1889, %v1887
    %v1938 = vpack.c.b16 %v1890, %v1888
    %v1939 = vpack.c.b16 %v1893, %v1891
    %v1940 = vpack.c.b16 %v1894, %v1892
    %v1941 = vpack.c.b16 %v1897, %v1895
    %v1942 = vpack.c.b16 %v1898, %v1896
    %v1943 = vpack.c.b16 %v1901, %v1899
    %v1944 = vpack.c.b16 %v1902, %v1900
    %v1945 = vpack.c.b16 %v1905, %v1903
    %v1946 = vpack.c.b16 %v1906, %v1904
    %v1947 = vpack.c.b16 %v1909, %v1907
    %v1948 = vpack.c.b16 %v1910, %v1908
    %v1949 = vpack.c.b16 %v1913, %v1911
    %v1950 = vpack.c.b16 %v1914, %v1912
    %v1951 = vpack.c.b16 %v1917, %v1915
    %v1952 = vpack.c.b16 %v1918, %v1916
    %v1953 = vpack.c.b16 %v1921, %v1919
    %v1954 = vpack.c.b16 %v1922, %v1920
    %1987 = vmatprep.subr.bf16.mxu0 %v1924
    %1988 = vmatpush1.bf16.msra.mxu0 %v1923
    %1989 = vmatprep.subr.bf16.mxu0 %v1926
    %1990 = vmatpush1.bf16.msra.mxu0 %v1925
    %1991 = vmatprep.subr.bf16.mxu0 %v1928
    %1992 = vmatpush1.bf16.msra.mxu0 %v1927
    %1993 = vmatprep.subr.bf16.mxu0 %v1930
    %1994 = vmatpush1.bf16.msra.mxu0 %v1929
    %1995 = vmatprep.subr.bf16.mxu0 %v1932
    %1996 = vmatpush1.bf16.msra.mxu0 %v1931
    %1997 = vmatprep.subr.bf16.mxu0 %v1934
    %1998 = vmatpush1.bf16.msra.mxu0 %v1933
    %1999 = vmatprep.subr.bf16.mxu0 %v1936
    %2000 = vmatpush1.bf16.msra.mxu0 %v1935
    %2001 = vmatprep.subr.bf16.mxu0 %v1938
    %2002 = vmatpush1.bf16.msra.mxu0 %v1937
    %2003 = vmatprep.subr.bf16.mxu0 %v1940
    %2004 = vmatpush1.bf16.msra.mxu0 %v1939
    %2005 = vmatprep.subr.bf16.mxu0 %v1942
    %2006 = vmatpush1.bf16.msra.mxu0 %v1941
    %2007 = vmatprep.subr.bf16.mxu0 %v1944
    %2008 = vmatpush1.bf16.msra.mxu0 %v1943
    %2009 = vmatprep.subr.bf16.mxu0 %v1946
    %2010 = vmatpush1.bf16.msra.mxu0 %v1945
    %2011 = vmatprep.subr.bf16.mxu0 %v1948
    %2012 = vmatpush1.bf16.msra.mxu0 %v1947
    %2013 = vmatprep.subr.bf16.mxu0 %v1950
    %2014 = vmatpush1.bf16.msra.mxu0 %v1949
    %2015 = vmatprep.subr.bf16.mxu0 %v1952
    %2016 = vmatpush1.bf16.msra.mxu0 %v1951
    %2017 = vmatprep.subr.bf16.mxu0 %v1954
    %2018 = vmatpush1.bf16.msra.mxu0 %v1953
    %2019 = vmatprep.mubr.bf16.mxu0 %v1761
    %2020 = vmatmul.mubr.bf16.gmra.mrb[0].mxu0 %v1760
    %v2021 = vpop.f32.mrb[0].mxu0
    %v2022 = vadd.f32 0.0, %v2021
    %v2023 = vpop.f32.mrb[0].mxu0
    %v2024 = vadd.f32 0.0, %v2023
    %v2025 = vpop.f32.mrb[0].mxu0
    %v2026 = vadd.f32 0.0, %v2025
    %v2027 = vpop.f32.mrb[0].mxu0
    %v2028 = vadd.f32 0.0, %v2027
    %2029 = vmatprep.mubr.bf16.mxu0 %v1763
    %2030 = vmatmul.mubr.bf16.gmra.mrb[0].mxu0 %v1762
    %v2031 = vpop.f32.mrb[0].mxu0
    %v2032 = vadd.f32 0.0, %v2031
    %v2033 = vpop.f32.mrb[0].mxu0
    %v2034 = vadd.f32 0.0, %v2033
    %v2035 = vpop.f32.mrb[0].mxu0
    %v2036 = vadd.f32 0.0, %v2035
    %v2037 = vpop.f32.mrb[0].mxu0
    %v2038 = vadd.f32 0.0, %v2037
    %2039 = vmatprep.mubr.bf16.mxu0 %v1765
    %2040 = vmatmul.mubr.bf16.gmra.mrb[0].mxu0 %v1764
    %v2041 = vpop.f32.mrb[0].mxu0
    %v2042 = vadd.f32 0.0, %v2041
    %v2043 = vpop.f32.mrb[0].mxu0
    %v2044 = vadd.f32 0.0, %v2043
    %v2045 = vpop.f32.mrb[0].mxu0
    %v2046 = vadd.f32 0.0, %v2045
    %v2047 = vpop.f32.mrb[0].mxu0
    %v2048 = vadd.f32 0.0, %v2047
    %2049 = vmatprep.mubr.bf16.mxu0 %v1767
    %2050 = vmatmul.mubr.bf16.gmra.mrb[0].mxu0 %v1766
    %v2051 = vpop.f32.mrb[0].mxu0
    %v2052 = vadd.f32 0.0, %v2051
    %v2053 = vpop.f32.mrb[0].mxu0
    %v2054 = vadd.f32 0.0, %v2053
    %v2055 = vpop.f32.mrb[0].mxu0
    %v2056 = vadd.f32 0.0, %v2055
    %v2057 = vpop.f32.mrb[0].mxu0
    %v2058 = vadd.f32 0.0, %v2057
    %2059 = vmatprep.mubr.bf16.mxu0 %v1769
    %2060 = vmatmul.mubr.bf16.gmra.mrb[0].mxu0 %v1768
    %v2061 = vpop.f32.mrb[0].mxu0
    %v2062 = vadd.f32 0.0, %v2061
    %v2063 = vpop.f32.mrb[0].mxu0
    %v2064 = vadd.f32 0.0, %v2063
    %v2065 = vpop.f32.mrb[0].mxu0
    %v2066 = vadd.f32 0.0, %v2065
    %v2067 = vpop.f32.mrb[0].mxu0
    %v2068 = vadd.f32 0.0, %v2067
    %2069 = vmatprep.mubr.bf16.mxu0 %v1771
    %2070 = vmatmul.mubr.bf16.gmra.mrb[0].mxu0 %v1770
    %v2071 = vpop.f32.mrb[0].mxu0
    %v2072 = vadd.f32 0.0, %v2071
    %v2073 = vpop.f32.mrb[0].mxu0
    %v2074 = vadd.f32 0.0, %v2073
    %v2075 = vpop.f32.mrb[0].mxu0
    %v2076 = vadd.f32 0.0, %v2075
    %v2077 = vpop.f32.mrb[0].mxu0
    %v2078 = vadd.f32 0.0, %v2077
    %2079 = vmatprep.mubr.bf16.mxu0 %v1773
    %2080 = vmatmul.mubr.bf16.gmra.mrb[0].mxu0 %v1772
    %v2081 = vpop.f32.mrb[0].mxu0
    %v2082 = vadd.f32 0.0, %v2081
    %v2083 = vpop.f32.mrb[0].mxu0
    %v2084 = vadd.f32 0.0, %v2083
    %v2085 = vpop.f32.mrb[0].mxu0
    %v2086 = vadd.f32 0.0, %v2085
    %v2087 = vpop.f32.mrb[0].mxu0
    %v2088 = vadd.f32 0.0, %v2087
    %2089 = vmatprep.mubr.bf16.mxu0 %v1775
    %2090 = vmatmul.mubr.bf16.gmra.mrb[0].mxu0 %v1774
    %v2091 = vpop.f32.mrb[0].mxu0
    %v2092 = vadd.f32 0.0, %v2091
    %v2093 = vpop.f32.mrb[0].mxu0
    %v2094 = vadd.f32 0.0, %v2093
    %v2095 = vpop.f32.mrb[0].mxu0
    %v2096 = vadd.f32 0.0, %v2095
    %v2097 = vpop.f32.mrb[0].mxu0
    %v2098 = vadd.f32 0.0, %v2097
    %2099 = vmatprep.mubr.bf16.mxu0 %v1777
    %2100 = vmatmul.mubr.bf16.gmra.mrb[0].mxu0 %v1776
    %v2101 = vpop.f32.mrb[0].mxu0
    %v2102 = vadd.f32 0.0, %v2101
    %v2103 = vpop.f32.mrb[0].mxu0
    %v2104 = vadd.f32 0.0, %v2103
    %v2105 = vpop.f32.mrb[0].mxu0
    %v2106 = vadd.f32 0.0, %v2105
    %v2107 = vpop.f32.mrb[0].mxu0
    %v2108 = vadd.f32 0.0, %v2107
    %2109 = vmatprep.mubr.bf16.mxu0 %v1779
    %2110 = vmatmul.mubr.bf16.gmra.mrb[0].mxu0 %v1778
    %v2111 = vpop.f32.mrb[0].mxu0
    %v2112 = vadd.f32 0.0, %v2111
    %v2113 = vpop.f32.mrb[0].mxu0
    %v2114 = vadd.f32 0.0, %v2113
    %v2115 = vpop.f32.mrb[0].mxu0
    %v2116 = vadd.f32 0.0, %v2115
    %v2117 = vpop.f32.mrb[0].mxu0
    %v2118 = vadd.f32 0.0, %v2117
    %2119 = vmatprep.mubr.bf16.mxu0 %v1781
    %2120 = vmatmul.mubr.bf16.gmra.mrb[0].mxu0 %v1780
    %v2121 = vpop.f32.mrb[0].mxu0
    %v2122 = vadd.f32 0.0, %v2121
    %v2123 = vpop.f32.mrb[0].mxu0
    %v2124 = vadd.f32 0.0, %v2123
    %v2125 = vpop.f32.mrb[0].mxu0
    %v2126 = vadd.f32 0.0, %v2125
    %v2127 = vpop.f32.mrb[0].mxu0
    %v2128 = vadd.f32 0.0, %v2127
    %2129 = vmatprep.mubr.bf16.mxu0 %v1783
    %2130 = vmatmul.mubr.bf16.gmra.mrb[0].mxu0 %v1782
    %v2131 = vpop.f32.mrb[0].mxu0
    %v2132 = vadd.f32 0.0, %v2131
    %v2133 = vpop.f32.mrb[0].mxu0
    %v2134 = vadd.f32 0.0, %v2133
    %v2135 = vpop.f32.mrb[0].mxu0
    %v2136 = vadd.f32 0.0, %v2135
    %v2137 = vpop.f32.mrb[0].mxu0
    %v2138 = vadd.f32 0.0, %v2137
    %2139 = vmatprep.mubr.bf16.mxu0 %v1785
    %2140 = vmatmul.mubr.bf16.gmra.mrb[0].mxu0 %v1784
    %v2141 = vpop.f32.mrb[0].mxu0
    %v2142 = vadd.f32 0.0, %v2141
    %v2143 = vpop.f32.mrb[0].mxu0
    %v2144 = vadd.f32 0.0, %v2143
    %v2145 = vpop.f32.mrb[0].mxu0
    %v2146 = vadd.f32 0.0, %v2145
    %v2147 = vpop.f32.mrb[0].mxu0
    %v2148 = vadd.f32 0.0, %v2147
    %2149 = vmatprep.mubr.bf16.mxu0 %v1787
    %2150 = vmatmul.mubr.bf16.gmra.mrb[0].mxu0 %v1786
    %v2151 = vpop.f32.mrb[0].mxu0
    %v2152 = vadd.f32 0.0, %v2151
    %v2153 = vpop.f32.mrb[0].mxu0
    %v2154 = vadd.f32 0.0, %v2153
    %v2155 = vpop.f32.mrb[0].mxu0
    %v2156 = vadd.f32 0.0, %v2155
    %v2157 = vpop.f32.mrb[0].mxu0
    %v2158 = vadd.f32 0.0, %v2157
    %2159 = vmatprep.mubr.bf16.mxu0 %v1789
    %2160 = vmatmul.mubr.bf16.gmra.mrb[0].mxu0 %v1788
    %v2161 = vpop.f32.mrb[0].mxu0
    %v2162 = vadd.f32 0.0, %v2161
    %v2163 = vpop.f32.mrb[0].mxu0
    %v2164 = vadd.f32 0.0, %v2163
    %v2165 = vpop.f32.mrb[0].mxu0
    %v2166 = vadd.f32 0.0, %v2165
    %v2167 = vpop.f32.mrb[0].mxu0
    %v2168 = vadd.f32 0.0, %v2167
    %2169 = vmatprep.mubr.bf16.mxu0 %v1791
    %2170 = vmatmul.mubr.bf16.gmra.mrb[0].mxu0 %v1790
    %v2171 = vpop.f32.mrb[0].mxu0
    %v2172 = vadd.f32 0.0, %v2171
    %v2173 = vpop.f32.mrb[0].mxu0
    %v2174 = vadd.f32 0.0, %v2173
    %v2175 = vpop.f32.mrb[0].mxu0
    %v2176 = vadd.f32 0.0, %v2175
    %v2177 = vpop.f32.mrb[0].mxu0
    %v2178 = vadd.f32 0.0, %v2177
    %2179 = vdwg.mxu0
    %v2180 = vxor.u32 %v2022, 2147483648
    %v2181 = vxor.u32 %v2024, 2147483648
    %v2182 = vxor.u32 %v2026, 2147483648
    %v2183 = vxor.u32 %v2028, 2147483648
    %v2184 = vxor.u32 %v2032, 2147483648
    %v2185 = vxor.u32 %v2034, 2147483648
    %v2186 = vxor.u32 %v2036, 2147483648
    %v2187 = vxor.u32 %v2038, 2147483648
    %v2188 = vxor.u32 %v2042, 2147483648
    %v2189 = vxor.u32 %v2044, 2147483648
    %v2190 = vxor.u32 %v2046, 2147483648
    %v2191 = vxor.u32 %v2048, 2147483648
    %v2192 = vxor.u32 %v2052, 2147483648
    %v2193 = vxor.u32 %v2054, 2147483648
    %v2194 = vxor.u32 %v2056, 2147483648
    %v2195 = vxor.u32 %v2058, 2147483648
    %v2196 = vxor.u32 %v2062, 2147483648
    %v2197 = vxor.u32 %v2064, 2147483648
    %v2198 = vxor.u32 %v2066, 2147483648
    %v2199 = vxor.u32 %v2068, 2147483648
    %v2200 = vxor.u32 %v2072, 2147483648
    %v2201 = vxor.u32 %v2074, 2147483648
    %v2202 = vxor.u32 %v2076, 2147483648
    %v2203 = vxor.u32 %v2078, 2147483648
    %v2204 = vxor.u32 %v2082, 2147483648
    %v2205 = vxor.u32 %v2084, 2147483648
    %v2206 = vxor.u32 %v2086, 2147483648
    %v2207 = vxor.u32 %v2088, 2147483648
    %v2208 = vxor.u32 %v2092, 2147483648
    %v2209 = vxor.u32 %v2094, 2147483648
    %v2210 = vxor.u32 %v2096, 2147483648
    %v2211 = vxor.u32 %v2098, 2147483648
    %v2212 = vxor.u32 %v2102, 2147483648
    %v2213 = vxor.u32 %v2104, 2147483648
    %v2214 = vxor.u32 %v2106, 2147483648
    %v2215 = vxor.u32 %v2108, 2147483648
    %v2216 = vxor.u32 %v2112, 2147483648
    %v2217 = vxor.u32 %v2114, 2147483648
    %v2218 = vxor.u32 %v2116, 2147483648
    %v2219 = vxor.u32 %v2118, 2147483648
    %v2220 = vxor.u32 %v2122, 2147483648
    %v2221 = vxor.u32 %v2124, 2147483648
    %v2222 = vxor.u32 %v2126, 2147483648
    %v2223 = vxor.u32 %v2128, 2147483648
    %v2224 = vxor.u32 %v2132, 2147483648
    %v2225 = vxor.u32 %v2134, 2147483648
    %v2226 = vxor.u32 %v2136, 2147483648
    %v2227 = vxor.u32 %v2138, 2147483648
    %v2228 = vxor.u32 %v2142, 2147483648
    %v2229 = vxor.u32 %v2144, 2147483648
    %v2230 = vxor.u32 %v2146, 2147483648
    %v2231 = vxor.u32 %v2148, 2147483648
    %v2232 = vxor.u32 %v2152, 2147483648
    %v2233 = vxor.u32 %v2154, 2147483648
    %v2234 = vxor.u32 %v2156, 2147483648
    %v2235 = vxor.u32 %v2158, 2147483648
    %v2236 = vxor.u32 %v2162, 2147483648
    %v2237 = vxor.u32 %v2164, 2147483648
    %v2238 = vxor.u32 %v2166, 2147483648
    %v2239 = vxor.u32 %v2168, 2147483648
    %v2240 = vxor.u32 %v2172, 2147483648
    %v2241 = vxor.u32 %v2174, 2147483648
    %v2242 = vxor.u32 %v2176, 2147483648
    %v2243 = vxor.u32 %v2178, 2147483648
    %v2244 = vmul.f32 %v2180, 1.442695
    %v2245 = vpow.pop %v2244
    %v2246 = vmul.f32 %v2181, 1.442695
    %v2247 = vpow.pop %v2246
    %v2248 = vmul.f32 %v2182, 1.442695
    %v2249 = vpow.pop %v2248
    %v2250 = vmul.f32 %v2183, 1.442695
    %v2251 = vpow.pop %v2250
    %v2252 = vmul.f32 %v2184, 1.442695
    %v2253 = vpow.pop %v2252
    %v2254 = vmul.f32 %v2185, 1.442695
    %v2255 = vpow.pop %v2254
    %v2256 = vmul.f32 %v2186, 1.442695
    %v2257 = vpow.pop %v2256
    %v2258 = vmul.f32 %v2187, 1.442695
    %v2259 = vpow.pop %v2258
    %v2260 = vmul.f32 %v2188, 1.442695
    %v2261 = vpow.pop %v2260
    %v2262 = vmul.f32 %v2189, 1.442695
    %v2263 = vpow.pop %v2262
    %v2264 = vmul.f32 %v2190, 1.442695
    %v2265 = vpow.pop %v2264
    %v2266 = vmul.f32 %v2191, 1.442695
    %v2267 = vpow.pop %v2266
    %v2268 = vmul.f32 %v2192, 1.442695
    %v2269 = vpow.pop %v2268
    %v2270 = vmul.f32 %v2193, 1.442695
    %v2271 = vpow.pop %v2270
    %v2272 = vmul.f32 %v2194, 1.442695
    %v2273 = vpow.pop %v2272
    %v2274 = vmul.f32 %v2195, 1.442695
    %v2275 = vpow.pop %v2274
    %v2276 = vmul.f32 %v2196, 1.442695
    %v2277 = vpow.pop %v2276
    %v2278 = vmul.f32 %v2197, 1.442695
    %v2279 = vpow.pop %v2278
    %v2280 = vmul.f32 %v2198, 1.442695
    %v2281 = vpow.pop %v2280
    %v2282 = vmul.f32 %v2199, 1.442695
    %v2283 = vpow.pop %v2282
    %v2284 = vmul.f32 %v2200, 1.442695
    %v2285 = vpow.pop %v2284
    %v2286 = vmul.f32 %v2201, 1.442695
    %v2287 = vpow.pop %v2286
    %v2288 = vmul.f32 %v2202, 1.442695
    %v2289 = vpow.pop %v2288
    %v2290 = vmul.f32 %v2203, 1.442695
    %v2291 = vpow.pop %v2290
    %v2292 = vmul.f32 %v2204, 1.442695
    %v2293 = vpow.pop %v2292
    %v2294 = vmul.f32 %v2205, 1.442695
    %v2295 = vpow.pop %v2294
    %v2296 = vmul.f32 %v2206, 1.442695
    %v2297 = vpow.pop %v2296
    %v2298 = vmul.f32 %v2207, 1.442695
    %v2299 = vpow.pop %v2298
    %v2300 = vmul.f32 %v2208, 1.442695
    %v2301 = vpow.pop %v2300
    %v2302 = vmul.f32 %v2209, 1.442695
    %v2303 = vpow.pop %v2302
    %v2304 = vmul.f32 %v2210, 1.442695
    %v2305 = vpow.pop %v2304
    %v2306 = vmul.f32 %v2211, 1.442695
    %v2307 = vpow.pop %v2306
    %v2308 = vmul.f32 %v2212, 1.442695
    %v2309 = vpow.pop %v2308
    %v2310 = vmul.f32 %v2213, 1.442695
    %v2311 = vpow.pop %v2310
    %v2312 = vmul.f32 %v2214, 1.442695
    %v2313 = vpow.pop %v2312
    %v2314 = vmul.f32 %v2215, 1.442695
    %v2315 = vpow.pop %v2314
    %v2316 = vmul.f32 %v2216, 1.442695
    %v2317 = vpow.pop %v2316
    %v2318 = vmul.f32 %v2217, 1.442695
    %v2319 = vpow.pop %v2318
    %v2320 = vmul.f32 %v2218, 1.442695
    %v2321 = vpow.pop %v2320
    %v2322 = vmul.f32 %v2219, 1.442695
    %v2323 = vpow.pop %v2322
    %v2324 = vmul.f32 %v2220, 1.442695
    %v2325 = vpow.pop %v2324
    %v2326 = vmul.f32 %v2221, 1.442695
    %v2327 = vpow.pop %v2326
    %v2328 = vmul.f32 %v2222, 1.442695
    %v2329 = vpow.pop %v2328
    %v2330 = vmul.f32 %v2223, 1.442695
    %v2331 = vpow.pop %v2330
    %v2332 = vmul.f32 %v2224, 1.442695
    %v2333 = vpow.pop %v2332
    %v2334 = vmul.f32 %v2225, 1.442695
    %v2335 = vpow.pop %v2334
    %v2336 = vmul.f32 %v2226, 1.442695
    %v2337 = vpow.pop %v2336
    %v2338 = vmul.f32 %v2227, 1.442695
    %v2339 = vpow.pop %v2338
    %v2340 = vmul.f32 %v2228, 1.442695
    %v2341 = vpow.pop %v2340
    %v2342 = vmul.f32 %v2229, 1.442695
    %v2343 = vpow.pop %v2342
    %v2344 = vmul.f32 %v2230, 1.442695
    %v2345 = vpow.pop %v2344
    %v2346 = vmul.f32 %v2231, 1.442695
    %v2347 = vpow.pop %v2346
    %v2348 = vmul.f32 %v2232, 1.442695
    %v2349 = vpow.pop %v2348
    %v2350 = vmul.f32 %v2233, 1.442695
    %v2351 = vpow.pop %v2350
    %v2352 = vmul.f32 %v2234, 1.442695
    %v2353 = vpow.pop %v2352
    %v2354 = vmul.f32 %v2235, 1.442695
    %v2355 = vpow.pop %v2354
    %v2356 = vmul.f32 %v2236, 1.442695
    %v2357 = vpow.pop %v2356
    %v2358 = vmul.f32 %v2237, 1.442695
    %v2359 = vpow.pop %v2358
    %v2360 = vmul.f32 %v2238, 1.442695
    %v2361 = vpow.pop %v2360
    %v2362 = vmul.f32 %v2239, 1.442695
    %v2363 = vpow.pop %v2362
    %v2364 = vmul.f32 %v2240, 1.442695
    %v2365 = vpow.pop %v2364
    %v2366 = vmul.f32 %v2241, 1.442695
    %v2367 = vpow.pop %v2366
    %v2368 = vmul.f32 %v2242, 1.442695
    %v2369 = vpow.pop %v2368
    %v2370 = vmul.f32 %v2243, 1.442695
    %v2371 = vpow.pop %v2370
    %v2372 = vadd.f32 %v2245, 1.0
    %v2373 = vadd.f32 %v2247, 1.0
    %v2374 = vadd.f32 %v2249, 1.0
    %v2375 = vadd.f32 %v2251, 1.0
    %v2376 = vadd.f32 %v2253, 1.0
    %v2377 = vadd.f32 %v2255, 1.0
    %v2378 = vadd.f32 %v2257, 1.0
    %v2379 = vadd.f32 %v2259, 1.0
    %v2380 = vadd.f32 %v2261, 1.0
    %v2381 = vadd.f32 %v2263, 1.0
    %v2382 = vadd.f32 %v2265, 1.0
    %v2383 = vadd.f32 %v2267, 1.0
    %v2384 = vadd.f32 %v2269, 1.0
    %v2385 = vadd.f32 %v2271, 1.0
    %v2386 = vadd.f32 %v2273, 1.0
    %v2387 = vadd.f32 %v2275, 1.0
    %v2388 = vadd.f32 %v2277, 1.0
    %v2389 = vadd.f32 %v2279, 1.0
    %v2390 = vadd.f32 %v2281, 1.0
    %v2391 = vadd.f32 %v2283, 1.0
    %v2392 = vadd.f32 %v2285, 1.0
    %v2393 = vadd.f32 %v2287, 1.0
    %v2394 = vadd.f32 %v2289, 1.0
    %v2395 = vadd.f32 %v2291, 1.0
    %v2396 = vadd.f32 %v2293, 1.0
    %v2397 = vadd.f32 %v2295, 1.0
    %v2398 = vadd.f32 %v2297, 1.0
    %v2399 = vadd.f32 %v2299, 1.0
    %v2400 = vadd.f32 %v2301, 1.0
    %v2401 = vadd.f32 %v2303, 1.0
    %v2402 = vadd.f32 %v2305, 1.0
    %v2403 = vadd.f32 %v2307, 1.0
    %v2404 = vadd.f32 %v2309, 1.0
    %v2405 = vadd.f32 %v2311, 1.0
    %v2406 = vadd.f32 %v2313, 1.0
    %v2407 = vadd.f32 %v2315, 1.0
    %v2408 = vadd.f32 %v2317, 1.0
    %v2409 = vadd.f32 %v2319, 1.0
    %v2410 = vadd.f32 %v2321, 1.0
    %v2411 = vadd.f32 %v2323, 1.0
    %v2412 = vadd.f32 %v2325, 1.0
    %v2413 = vadd.f32 %v2327, 1.0
    %v2414 = vadd.f32 %v2329, 1.0
    %v2415 = vadd.f32 %v2331, 1.0
    %v2416 = vadd.f32 %v2333, 1.0
    %v2417 = vadd.f32 %v2335, 1.0
    %v2418 = vadd.f32 %v2337, 1.0
    %v2419 = vadd.f32 %v2339, 1.0
    %v2420 = vadd.f32 %v2341, 1.0
    %v2421 = vadd.f32 %v2343, 1.0
    %v2422 = vadd.f32 %v2345, 1.0
    %v2423 = vadd.f32 %v2347, 1.0
    %v2424 = vadd.f32 %v2349, 1.0
    %v2425 = vadd.f32 %v2351, 1.0
    %v2426 = vadd.f32 %v2353, 1.0
    %v2427 = vadd.f32 %v2355, 1.0
    %v2428 = vadd.f32 %v2357, 1.0
    %v2429 = vadd.f32 %v2359, 1.0
    %v2430 = vadd.f32 %v2361, 1.0
    %v2431 = vadd.f32 %v2363, 1.0
    %v2432 = vadd.f32 %v2365, 1.0
    %v2433 = vadd.f32 %v2367, 1.0
    %v2434 = vadd.f32 %v2369, 1.0
    %v2435 = vadd.f32 %v2371, 1.0
    %v2436 = vrcp.pop %v2372
    %v2437 = vmul.f32 1.0, %v2436
    %v2438 = vrcp.pop %v2373
    %v2439 = vmul.f32 1.0, %v2438
    %v2440 = vrcp.pop %v2374
    %v2441 = vmul.f32 1.0, %v2440
    %v2442 = vrcp.pop %v2375
    %v2443 = vmul.f32 1.0, %v2442
    %v2444 = vrcp.pop %v2376
    %v2445 = vmul.f32 1.0, %v2444
    %v2446 = vrcp.pop %v2377
    %v2447 = vmul.f32 1.0, %v2446
    %v2448 = vrcp.pop %v2378
    %v2449 = vmul.f32 1.0, %v2448
    %v2450 = vrcp.pop %v2379
    %v2451 = vmul.f32 1.0, %v2450
    %v2452 = vrcp.pop %v2380
    %v2453 = vmul.f32 1.0, %v2452
    %v2454 = vrcp.pop %v2381
    %v2455 = vmul.f32 1.0, %v2454
    %v2456 = vrcp.pop %v2382
    %v2457 = vmul.f32 1.0, %v2456
    %v2458 = vrcp.pop %v2383
    %v2459 = vmul.f32 1.0, %v2458
    %v2460 = vrcp.pop %v2384
    %v2461 = vmul.f32 1.0, %v2460
    %v2462 = vrcp.pop %v2385
    %v2463 = vmul.f32 1.0, %v2462
    %v2464 = vrcp.pop %v2386
    %v2465 = vmul.f32 1.0, %v2464
    %v2466 = vrcp.pop %v2387
    %v2467 = vmul.f32 1.0, %v2466
    %v2468 = vrcp.pop %v2388
    %v2469 = vmul.f32 1.0, %v2468
    %v2470 = vrcp.pop %v2389
    %v2471 = vmul.f32 1.0, %v2470
    %v2472 = vrcp.pop %v2390
    %v2473 = vmul.f32 1.0, %v2472
    %v2474 = vrcp.pop %v2391
    %v2475 = vmul.f32 1.0, %v2474
    %v2476 = vrcp.pop %v2392
    %v2477 = vmul.f32 1.0, %v2476
    %v2478 = vrcp.pop %v2393
    %v2479 = vmul.f32 1.0, %v2478
    %v2480 = vrcp.pop %v2394
    %v2481 = vmul.f32 1.0, %v2480
    %v2482 = vrcp.pop %v2395
    %v2483 = vmul.f32 1.0, %v2482
    %v2484 = vrcp.pop %v2396
    %v2485 = vmul.f32 1.0, %v2484
    %v2486 = vrcp.pop %v2397
    %v2487 = vmul.f32 1.0, %v2486
    %v2488 = vrcp.pop %v2398
    %v2489 = vmul.f32 1.0, %v2488
    %v2490 = vrcp.pop %v2399
    %v2491 = vmul.f32 1.0, %v2490
    %v2492 = vrcp.pop %v2400
    %v2493 = vmul.f32 1.0, %v2492
    %v2494 = vrcp.pop %v2401
    %v2495 = vmul.f32 1.0, %v2494
    %v2496 = vrcp.pop %v2402
    %v2497 = vmul.f32 1.0, %v2496
    %v2498 = vrcp.pop %v2403
    %v2499 = vmul.f32 1.0, %v2498
    %v2500 = vrcp.pop %v2404
    %v2501 = vmul.f32 1.0, %v2500
    %v2502 = vrcp.pop %v2405
    %v2503 = vmul.f32 1.0, %v2502
    %v2504 = vrcp.pop %v2406
    %v2505 = vmul.f32 1.0, %v2504
    %v2506 = vrcp.pop %v2407
    %v2507 = vmul.f32 1.0, %v2506
    %v2508 = vrcp.pop %v2408
    %v2509 = vmul.f32 1.0, %v2508
    %v2510 = vrcp.pop %v2409
    %v2511 = vmul.f32 1.0, %v2510
    %v2512 = vrcp.pop %v2410
    %v2513 = vmul.f32 1.0, %v2512
    %v2514 = vrcp.pop %v2411
    %v2515 = vmul.f32 1.0, %v2514
    %v2516 = vrcp.pop %v2412
    %v2517 = vmul.f32 1.0, %v2516
    %v2518 = vrcp.pop %v2413
    %v2519 = vmul.f32 1.0, %v2518
    %v2520 = vrcp.pop %v2414
    %v2521 = vmul.f32 1.0, %v2520
    %v2522 = vrcp.pop %v2415
    %v2523 = vmul.f32 1.0, %v2522
    %v2524 = vrcp.pop %v2416
    %v2525 = vmul.f32 1.0, %v2524
    %v2526 = vrcp.pop %v2417
    %v2527 = vmul.f32 1.0, %v2526
    %v2528 = vrcp.pop %v2418
    %v2529 = vmul.f32 1.0, %v2528
    %v2530 = vrcp.pop %v2419
    %v2531 = vmul.f32 1.0, %v2530
    %v2532 = vrcp.pop %v2420
    %v2533 = vmul.f32 1.0, %v2532
    %v2534 = vrcp.pop %v2421
    %v2535 = vmul.f32 1.0, %v2534
    %v2536 = vrcp.pop %v2422
    %v2537 = vmul.f32 1.0, %v2536
    %v2538 = vrcp.pop %v2423
    %v2539 = vmul.f32 1.0, %v2538
    %v2540 = vrcp.pop %v2424
    %v2541 = vmul.f32 1.0, %v2540
    %v2542 = vrcp.pop %v2425
    %v2543 = vmul.f32 1.0, %v2542
    %v2544 = vrcp.pop %v2426
    %v2545 = vmul.f32 1.0, %v2544
    %v2546 = vrcp.pop %v2427
    %v2547 = vmul.f32 1.0, %v2546
    %v2548 = vrcp.pop %v2428
    %v2549 = vmul.f32 1.0, %v2548
    %v2550 = vrcp.pop %v2429
    %v2551 = vmul.f32 1.0, %v2550
    %v2552 = vrcp.pop %v2430
    %v2553 = vmul.f32 1.0, %v2552
    %v2554 = vrcp.pop %v2431
    %v2555 = vmul.f32 1.0, %v2554
    %v2556 = vrcp.pop %v2432
    %v2557 = vmul.f32 1.0, %v2556
    %v2558 = vrcp.pop %v2433
    %v2559 = vmul.f32 1.0, %v2558
    %v2560 = vrcp.pop %v2434
    %v2561 = vmul.f32 1.0, %v2560
    %v2562 = vrcp.pop %v2435
    %v2563 = vmul.f32 1.0, %v2562
    %v2564 = vmul.f32 %v2022, %v2437
    %v2565 = vmul.f32 %v2024, %v2439
    %v2566 = vmul.f32 %v2026, %v2441
    %v2567 = vmul.f32 %v2028, %v2443
    %v2568 = vmul.f32 %v2032, %v2445
    %v2569 = vmul.f32 %v2034, %v2447
    %v2570 = vmul.f32 %v2036, %v2449
    %v2571 = vmul.f32 %v2038, %v2451
    %v2572 = vmul.f32 %v2042, %v2453
    %v2573 = vmul.f32 %v2044, %v2455
    %v2574 = vmul.f32 %v2046, %v2457
    %v2575 = vmul.f32 %v2048, %v2459
    %v2576 = vmul.f32 %v2052, %v2461
    %v2577 = vmul.f32 %v2054, %v2463
    %v2578 = vmul.f32 %v2056, %v2465
    %v2579 = vmul.f32 %v2058, %v2467
    %v2580 = vmul.f32 %v2062, %v2469
    %v2581 = vmul.f32 %v2064, %v2471
    %v2582 = vmul.f32 %v2066, %v2473
    %v2583 = vmul.f32 %v2068, %v2475
    %v2584 = vmul.f32 %v2072, %v2477
    %v2585 = vmul.f32 %v2074, %v2479
    %v2586 = vmul.f32 %v2076, %v2481
    %v2587 = vmul.f32 %v2078, %v2483
    %v2588 = vmul.f32 %v2082, %v2485
    %v2589 = vmul.f32 %v2084, %v2487
    %v2590 = vmul.f32 %v2086, %v2489
    %v2591 = vmul.f32 %v2088, %v2491
    %v2592 = vmul.f32 %v2092, %v2493
    %v2593 = vmul.f32 %v2094, %v2495
    %v2594 = vmul.f32 %v2096, %v2497
    %v2595 = vmul.f32 %v2098, %v2499
    %v2596 = vmul.f32 %v2102, %v2501
    %v2597 = vmul.f32 %v2104, %v2503
    %v2598 = vmul.f32 %v2106, %v2505
    %v2599 = vmul.f32 %v2108, %v2507
    %v2600 = vmul.f32 %v2112, %v2509
    %v2601 = vmul.f32 %v2114, %v2511
    %v2602 = vmul.f32 %v2116, %v2513
    %v2603 = vmul.f32 %v2118, %v2515
    %v2604 = vmul.f32 %v2122, %v2517
    %v2605 = vmul.f32 %v2124, %v2519
    %v2606 = vmul.f32 %v2126, %v2521
    %v2607 = vmul.f32 %v2128, %v2523
    %v2608 = vmul.f32 %v2132, %v2525
    %v2609 = vmul.f32 %v2134, %v2527
    %v2610 = vmul.f32 %v2136, %v2529
    %v2611 = vmul.f32 %v2138, %v2531
    %v2612 = vmul.f32 %v2142, %v2533
    %v2613 = vmul.f32 %v2144, %v2535
    %v2614 = vmul.f32 %v2146, %v2537
    %v2615 = vmul.f32 %v2148, %v2539
    %v2616 = vmul.f32 %v2152, %v2541
    %v2617 = vmul.f32 %v2154, %v2543
    %v2618 = vmul.f32 %v2156, %v2545
    %v2619 = vmul.f32 %v2158, %v2547
    %v2620 = vmul.f32 %v2162, %v2549
    %v2621 = vmul.f32 %v2164, %v2551
    %v2622 = vmul.f32 %v2166, %v2553
    %v2623 = vmul.f32 %v2168, %v2555
    %v2624 = vmul.f32 %v2172, %v2557
    %v2625 = vmul.f32 %v2174, %v2559
    %v2626 = vmul.f32 %v2176, %v2561
    %v2627 = vmul.f32 %v2178, %v2563
    %v2628 = vadd.f32 %v2564, %v2565
    %2629 = vadd.xlane.f32.xlu0 %v2628
    %v2630 = vpop.xlane.xlu0 %2629
    %v2631 = vadd.f32 %v2566, %v2567
    %2632 = vadd.xlane.f32.xlu0 %v2631
    %v2633 = vpop.xlane.xlu0 %2632
    %v2634 = vadd.f32 %v2568, %v2569
    %2635 = vadd.xlane.f32.xlu0 %v2634
    %v2636 = vpop.xlane.xlu0 %2635
    %v2637 = vadd.f32 %v2570, %v2571
    %2638 = vadd.xlane.f32.xlu0 %v2637
    %v2639 = vpop.xlane.xlu0 %2638
    %v2640 = vadd.f32 %v2572, %v2573
    %2641 = vadd.xlane.f32.xlu0 %v2640
    %v2642 = vpop.xlane.xlu0 %2641
    %v2643 = vadd.f32 %v2574, %v2575
    %2644 = vadd.xlane.f32.xlu0 %v2643
    %v2645 = vpop.xlane.xlu0 %2644
    %v2646 = vadd.f32 %v2576, %v2577
    %2647 = vadd.xlane.f32.xlu0 %v2646
    %v2648 = vpop.xlane.xlu0 %2647
    %v2649 = vadd.f32 %v2578, %v2579
    %2650 = vadd.xlane.f32.xlu0 %v2649
    %v2651 = vpop.xlane.xlu0 %2650
    %v2652 = vadd.f32 %v2580, %v2581
    %2653 = vadd.xlane.f32.xlu0 %v2652
    %v2654 = vpop.xlane.xlu0 %2653
    %v2655 = vadd.f32 %v2582, %v2583
    %2656 = vadd.xlane.f32.xlu0 %v2655
    %v2657 = vpop.xlane.xlu0 %2656
    %v2658 = vadd.f32 %v2584, %v2585
    %2659 = vadd.xlane.f32.xlu0 %v2658
    %v2660 = vpop.xlane.xlu0 %2659
    %v2661 = vadd.f32 %v2586, %v2587
    %2662 = vadd.xlane.f32.xlu0 %v2661
    %v2663 = vpop.xlane.xlu0 %2662
    %v2664 = vadd.f32 %v2588, %v2589
    %2665 = vadd.xlane.f32.xlu0 %v2664
    %v2666 = vpop.xlane.xlu0 %2665
    %v2667 = vadd.f32 %v2590, %v2591
    %2668 = vadd.xlane.f32.xlu0 %v2667
    %v2669 = vpop.xlane.xlu0 %2668
    %v2670 = vadd.f32 %v2592, %v2593
    %2671 = vadd.xlane.f32.xlu0 %v2670
    %v2672 = vpop.xlane.xlu0 %2671
    %v2673 = vadd.f32 %v2594, %v2595
    %2674 = vadd.xlane.f32.xlu0 %v2673
    %v2675 = vpop.xlane.xlu0 %2674
    %v2676 = vadd.f32 %v2596, %v2597
    %2677 = vadd.xlane.f32.xlu0 %v2676
    %v2678 = vpop.xlane.xlu0 %2677
    %v2679 = vadd.f32 %v2598, %v2599
    %2680 = vadd.xlane.f32.xlu0 %v2679
    %v2681 = vpop.xlane.xlu0 %2680
    %v2682 = vadd.f32 %v2600, %v2601
    %2683 = vadd.xlane.f32.xlu0 %v2682
    %v2684 = vpop.xlane.xlu0 %2683
    %v2685 = vadd.f32 %v2602, %v2603
    %2686 = vadd.xlane.f32.xlu0 %v2685
    %v2687 = vpop.xlane.xlu0 %2686
    %v2688 = vadd.f32 %v2604, %v2605
    %2689 = vadd.xlane.f32.xlu0 %v2688
    %v2690 = vpop.xlane.xlu0 %2689
    %v2691 = vadd.f32 %v2606, %v2607
    %2692 = vadd.xlane.f32.xlu0 %v2691
    %v2693 = vpop.xlane.xlu0 %2692
    %v2694 = vadd.f32 %v2608, %v2609
    %2695 = vadd.xlane.f32.xlu0 %v2694
    %v2696 = vpop.xlane.xlu0 %2695
    %v2697 = vadd.f32 %v2610, %v2611
    %2698 = vadd.xlane.f32.xlu0 %v2697
    %v2699 = vpop.xlane.xlu0 %2698
    %v2700 = vadd.f32 %v2612, %v2613
    %2701 = vadd.xlane.f32.xlu0 %v2700
    %v2702 = vpop.xlane.xlu0 %2701
    %v2703 = vadd.f32 %v2614, %v2615
    %2704 = vadd.xlane.f32.xlu0 %v2703
    %v2705 = vpop.xlane.xlu0 %2704
    %v2706 = vadd.f32 %v2616, %v2617
    %2707 = vadd.xlane.f32.xlu0 %v2706
    %v2708 = vpop.xlane.xlu0 %2707
    %v2709 = vadd.f32 %v2618, %v2619
    %2710 = vadd.xlane.f32.xlu0 %v2709
    %v2711 = vpop.xlane.xlu0 %2710
    %v2712 = vadd.f32 %v2620, %v2621
    %2713 = vadd.xlane.f32.xlu0 %v2712
    %v2714 = vpop.xlane.xlu0 %2713
    %v2715 = vadd.f32 %v2622, %v2623
    %2716 = vadd.xlane.f32.xlu0 %v2715
    %v2717 = vpop.xlane.xlu0 %2716
    %v2718 = vadd.f32 %v2624, %v2625
    %2719 = vadd.xlane.f32.xlu0 %v2718
    %v2720 = vpop.xlane.xlu0 %2719
    %v2721 = vadd.f32 %v2626, %v2627
    %2722 = vadd.xlane.f32.xlu0 %v2721
    %v2723 = vpop.xlane.xlu0 %2722
    %v2724 = vmul.f32 %v2630, %v1193
    %v2725 = vmul.f32 %v2633, %v1193
    %v2726 = vmul.f32 %v2636, %v1193
    %v2727 = vmul.f32 %v2639, %v1193
    %v2728 = vmul.f32 %v2642, %v1193
    %v2729 = vmul.f32 %v2645, %v1193
    %v2730 = vmul.f32 %v2648, %v1193
    %v2731 = vmul.f32 %v2651, %v1193
    %v2732 = vmul.f32 %v2654, %v1193
    %v2733 = vmul.f32 %v2657, %v1193
    %v2734 = vmul.f32 %v2660, %v1193
    %v2735 = vmul.f32 %v2663, %v1193
    %v2736 = vmul.f32 %v2666, %v1193
    %v2737 = vmul.f32 %v2669, %v1193
    %v2738 = vmul.f32 %v2672, %v1193
    %v2739 = vmul.f32 %v2675, %v1193
    %v2740 = vmul.f32 %v2678, %v1193
    %v2741 = vmul.f32 %v2681, %v1193
    %v2742 = vmul.f32 %v2684, %v1193
    %v2743 = vmul.f32 %v2687, %v1193
    %v2744 = vmul.f32 %v2690, %v1193
    %v2745 = vmul.f32 %v2693, %v1193
    %v2746 = vmul.f32 %v2696, %v1193
    %v2747 = vmul.f32 %v2699, %v1193
    %v2748 = vmul.f32 %v2702, %v1193
    %v2749 = vmul.f32 %v2705, %v1193
    %v2750 = vmul.f32 %v2708, %v1193
    %v2751 = vmul.f32 %v2711, %v1193
    %v2752 = vmul.f32 %v2714, %v1193
    %v2753 = vmul.f32 %v2717, %v1193
    %v2754 = vmul.f32 %v2720, %v1193
    %v2755 = vmul.f32 %v2723, %v1193
    %v2756 = vsub.f32 %v2564, %v2724
    %v2757 = vsub.f32 %v2565, %v2724
    %v2758 = vsub.f32 %v2566, %v2725
    %v2759 = vsub.f32 %v2567, %v2725
    %v2760 = vsub.f32 %v2568, %v2726
    %v2761 = vsub.f32 %v2569, %v2726
    %v2762 = vsub.f32 %v2570, %v2727
    %v2763 = vsub.f32 %v2571, %v2727
    %v2764 = vsub.f32 %v2572, %v2728
    %v2765 = vsub.f32 %v2573, %v2728
    %v2766 = vsub.f32 %v2574, %v2729
    %v2767 = vsub.f32 %v2575, %v2729
    %v2768 = vsub.f32 %v2576, %v2730
    %v2769 = vsub.f32 %v2577, %v2730
    %v2770 = vsub.f32 %v2578, %v2731
    %v2771 = vsub.f32 %v2579, %v2731
    %v2772 = vsub.f32 %v2580, %v2732
    %v2773 = vsub.f32 %v2581, %v2732
    %v2774 = vsub.f32 %v2582, %v2733
    %v2775 = vsub.f32 %v2583, %v2733
    %v2776 = vsub.f32 %v2584, %v2734
    %v2777 = vsub.f32 %v2585, %v2734
    %v2778 = vsub.f32 %v2586, %v2735
    %v2779 = vsub.f32 %v2587, %v2735
    %v2780 = vsub.f32 %v2588, %v2736
    %v2781 = vsub.f32 %v2589, %v2736
    %v2782 = vsub.f32 %v2590, %v2737
    %v2783 = vsub.f32 %v2591, %v2737
    %v2784 = vsub.f32 %v2592, %v2738
    %v2785 = vsub.f32 %v2593, %v2738
    %v2786 = vsub.f32 %v2594, %v2739
    %v2787 = vsub.f32 %v2595, %v2739
    %v2788 = vsub.f32 %v2596, %v2740
    %v2789 = vsub.f32 %v2597, %v2740
    %v2790 = vsub.f32 %v2598, %v2741
    %v2791 = vsub.f32 %v2599, %v2741
    %v2792 = vsub.f32 %v2600, %v2742
    %v2793 = vsub.f32 %v2601, %v2742
    %v2794 = vsub.f32 %v2602, %v2743
    %v2795 = vsub.f32 %v2603, %v2743
    %v2796 = vsub.f32 %v2604, %v2744
    %v2797 = vsub.f32 %v2605, %v2744
    %v2798 = vsub.f32 %v2606, %v2745
    %v2799 = vsub.f32 %v2607, %v2745
    %v2800 = vsub.f32 %v2608, %v2746
    %v2801 = vsub.f32 %v2609, %v2746
    %v2802 = vsub.f32 %v2610, %v2747
    %v2803 = vsub.f32 %v2611, %v2747
    %v2804 = vsub.f32 %v2612, %v2748
    %v2805 = vsub.f32 %v2613, %v2748
    %v2806 = vsub.f32 %v2614, %v2749
    %v2807 = vsub.f32 %v2615, %v2749
    %v2808 = vsub.f32 %v2616, %v2750
    %v2809 = vsub.f32 %v2617, %v2750
    %v2810 = vsub.f32 %v2618, %v2751
    %v2811 = vsub.f32 %v2619, %v2751
    %v2812 = vsub.f32 %v2620, %v2752
    %v2813 = vsub.f32 %v2621, %v2752
    %v2814 = vsub.f32 %v2622, %v2753
    %v2815 = vsub.f32 %v2623, %v2753
    %v2816 = vsub.f32 %v2624, %v2754
    %v2817 = vsub.f32 %v2625, %v2754
    %v2818 = vsub.f32 %v2626, %v2755
    %v2819 = vsub.f32 %v2627, %v2755
    %v2820 = vmul.f32 %v2756, %v2756
    %v2821 = vmul.f32 %v2757, %v2757
    %v2822 = vmul.f32 %v2758, %v2758
    %v2823 = vmul.f32 %v2759, %v2759
    %v2824 = vmul.f32 %v2760, %v2760
    %v2825 = vmul.f32 %v2761, %v2761
    %v2826 = vmul.f32 %v2762, %v2762
    %v2827 = vmul.f32 %v2763, %v2763
    %v2828 = vmul.f32 %v2764, %v2764
    %v2829 = vmul.f32 %v2765, %v2765
    %v2830 = vmul.f32 %v2766, %v2766
    %v2831 = vmul.f32 %v2767, %v2767
    %v2832 = vmul.f32 %v2768, %v2768
    %v2833 = vmul.f32 %v2769, %v2769
    %v2834 = vmul.f32 %v2770, %v2770
    %v2835 = vmul.f32 %v2771, %v2771
    %v2836 = vmul.f32 %v2772, %v2772
    %v2837 = vmul.f32 %v2773, %v2773
    %v2838 = vmul.f32 %v2774, %v2774
    %v2839 = vmul.f32 %v2775, %v2775
    %v2840 = vmul.f32 %v2776, %v2776
    %v2841 = vmul.f32 %v2777, %v2777
    %v2842 = vmul.f32 %v2778, %v2778
    %v2843 = vmul.f32 %v2779, %v2779
    %v2844 = vmul.f32 %v2780, %v2780
    %v2845 = vmul.f32 %v2781, %v2781
    %v2846 = vmul.f32 %v2782, %v2782
    %v2847 = vmul.f32 %v2783, %v2783
    %v2848 = vmul.f32 %v2784, %v2784
    %v2849 = vmul.f32 %v2785, %v2785
    %v2850 = vmul.f32 %v2786, %v2786
    %v2851 = vmul.f32 %v2787, %v2787
    %v2852 = vmul.f32 %v2788, %v2788
    %v2853 = vmul.f32 %v2789, %v2789
    %v2854 = vmul.f32 %v2790, %v2790
    %v2855 = vmul.f32 %v2791, %v2791
    %v2856 = vmul.f32 %v2792, %v2792
    %v2857 = vmul.f32 %v2793, %v2793
    %v2858 = vmul.f32 %v2794, %v2794
    %v2859 = vmul.f32 %v2795, %v2795
    %v2860 = vmul.f32 %v2796, %v2796
    %v2861 = vmul.f32 %v2797, %v2797
    %v2862 = vmul.f32 %v2798, %v2798
    %v2863 = vmul.f32 %v2799, %v2799
    %v2864 = vmul.f32 %v2800, %v2800
    %v2865 = vmul.f32 %v2801, %v2801
    %v2866 = vmul.f32 %v2802, %v2802
    %v2867 = vmul.f32 %v2803, %v2803
    %v2868 = vmul.f32 %v2804, %v2804
    %v2869 = vmul.f32 %v2805, %v2805
    %v2870 = vmul.f32 %v2806, %v2806
    %v2871 = vmul.f32 %v2807, %v2807
    %v2872 = vmul.f32 %v2808, %v2808
    %v2873 = vmul.f32 %v2809, %v2809
    %v2874 = vmul.f32 %v2810, %v2810
    %v2875 = vmul.f32 %v2811, %v2811
    %v2876 = vmul.f32 %v2812, %v2812
    %v2877 = vmul.f32 %v2813, %v2813
    %v2878 = vmul.f32 %v2814, %v2814
    %v2879 = vmul.f32 %v2815, %v2815
    %v2880 = vmul.f32 %v2816, %v2816
    %v2881 = vmul.f32 %v2817, %v2817
    %v2882 = vmul.f32 %v2818, %v2818
    %v2883 = vmul.f32 %v2819, %v2819
    %v2884 = vadd.f32 %v2820, %v2821
    %2885 = vadd.xlane.f32.xlu0 %v2884
    %v2886 = vpop.xlane.xlu0 %2885
    %v2887 = vadd.f32 %v2822, %v2823
    %2888 = vadd.xlane.f32.xlu0 %v2887
    %v2889 = vpop.xlane.xlu0 %2888
    %v2890 = vadd.f32 %v2824, %v2825
    %2891 = vadd.xlane.f32.xlu0 %v2890
    %v2892 = vpop.xlane.xlu0 %2891
    %v2893 = vadd.f32 %v2826, %v2827
    %2894 = vadd.xlane.f32.xlu0 %v2893
    %v2895 = vpop.xlane.xlu0 %2894
    %v2896 = vadd.f32 %v2828, %v2829
    %2897 = vadd.xlane.f32.xlu0 %v2896
    %v2898 = vpop.xlane.xlu0 %2897
    %v2899 = vadd.f32 %v2830, %v2831
    %2900 = vadd.xlane.f32.xlu0 %v2899
    %v2901 = vpop.xlane.xlu0 %2900
    %v2902 = vadd.f32 %v2832, %v2833
    %2903 = vadd.xlane.f32.xlu0 %v2902
    %v2904 = vpop.xlane.xlu0 %2903
    %v2905 = vadd.f32 %v2834, %v2835
    %2906 = vadd.xlane.f32.xlu0 %v2905
    %v2907 = vpop.xlane.xlu0 %2906
    %v2908 = vadd.f32 %v2836, %v2837
    %2909 = vadd.xlane.f32.xlu0 %v2908
    %v2910 = vpop.xlane.xlu0 %2909
    %v2911 = vadd.f32 %v2838, %v2839
    %2912 = vadd.xlane.f32.xlu0 %v2911
    %v2913 = vpop.xlane.xlu0 %2912
    %v2914 = vadd.f32 %v2840, %v2841
    %2915 = vadd.xlane.f32.xlu0 %v2914
    %v2916 = vpop.xlane.xlu0 %2915
    %v2917 = vadd.f32 %v2842, %v2843
    %2918 = vadd.xlane.f32.xlu0 %v2917
    %v2919 = vpop.xlane.xlu0 %2918
    %v2920 = vadd.f32 %v2844, %v2845
    %2921 = vadd.xlane.f32.xlu0 %v2920
    %v2922 = vpop.xlane.xlu0 %2921
    %v2923 = vadd.f32 %v2846, %v2847
    %2924 = vadd.xlane.f32.xlu0 %v2923
    %v2925 = vpop.xlane.xlu0 %2924
    %v2926 = vadd.f32 %v2848, %v2849
    %2927 = vadd.xlane.f32.xlu0 %v2926
    %v2928 = vpop.xlane.xlu0 %2927
    %v2929 = vadd.f32 %v2850, %v2851
    %2930 = vadd.xlane.f32.xlu0 %v2929
    %v2931 = vpop.xlane.xlu0 %2930
    %v2932 = vadd.f32 %v2852, %v2853
    %2933 = vadd.xlane.f32.xlu0 %v2932
    %v2934 = vpop.xlane.xlu0 %2933
    %v2935 = vadd.f32 %v2854, %v2855
    %2936 = vadd.xlane.f32.xlu0 %v2935
    %v2937 = vpop.xlane.xlu0 %2936
    %v2938 = vadd.f32 %v2856, %v2857
    %2939 = vadd.xlane.f32.xlu0 %v2938
    %v2940 = vpop.xlane.xlu0 %2939
    %v2941 = vadd.f32 %v2858, %v2859
    %2942 = vadd.xlane.f32.xlu0 %v2941
    %v2943 = vpop.xlane.xlu0 %2942
    %v2944 = vadd.f32 %v2860, %v2861
    %2945 = vadd.xlane.f32.xlu0 %v2944
    %v2946 = vpop.xlane.xlu0 %2945
    %v2947 = vadd.f32 %v2862, %v2863
    %2948 = vadd.xlane.f32.xlu0 %v2947
    %v2949 = vpop.xlane.xlu0 %2948
    %v2950 = vadd.f32 %v2864, %v2865
    %2951 = vadd.xlane.f32.xlu0 %v2950
    %v2952 = vpop.xlane.xlu0 %2951
    %v2953 = vadd.f32 %v2866, %v2867
    %2954 = vadd.xlane.f32.xlu0 %v2953
    %v2955 = vpop.xlane.xlu0 %2954
    %v2956 = vadd.f32 %v2868, %v2869
    %2957 = vadd.xlane.f32.xlu0 %v2956
    %v2958 = vpop.xlane.xlu0 %2957
    %v2959 = vadd.f32 %v2870, %v2871
    %2960 = vadd.xlane.f32.xlu0 %v2959
    %v2961 = vpop.xlane.xlu0 %2960
    %v2962 = vadd.f32 %v2872, %v2873
    %2963 = vadd.xlane.f32.xlu0 %v2962
    %v2964 = vpop.xlane.xlu0 %2963
    %v2965 = vadd.f32 %v2874, %v2875
    %2966 = vadd.xlane.f32.xlu0 %v2965
    %v2967 = vpop.xlane.xlu0 %2966
    %v2968 = vadd.f32 %v2876, %v2877
    %2969 = vadd.xlane.f32.xlu0 %v2968
    %v2970 = vpop.xlane.xlu0 %2969
    %v2971 = vadd.f32 %v2878, %v2879
    %2972 = vadd.xlane.f32.xlu0 %v2971
    %v2973 = vpop.xlane.xlu0 %2972
    %v2974 = vadd.f32 %v2880, %v2881
    %2975 = vadd.xlane.f32.xlu0 %v2974
    %v2976 = vpop.xlane.xlu0 %2975
    %v2977 = vadd.f32 %v2882, %v2883
    %2978 = vadd.xlane.f32.xlu0 %v2977
    %v2979 = vpop.xlane.xlu0 %2978
    %v2980 = vmul.f32 %v2886, %v1193
    %v2981 = vmul.f32 %v2889, %v1193
    %v2982 = vmul.f32 %v2892, %v1193
    %v2983 = vmul.f32 %v2895, %v1193
    %v2984 = vmul.f32 %v2898, %v1193
    %v2985 = vmul.f32 %v2901, %v1193
    %v2986 = vmul.f32 %v2904, %v1193
    %v2987 = vmul.f32 %v2907, %v1193
    %v2988 = vmul.f32 %v2910, %v1193
    %v2989 = vmul.f32 %v2913, %v1193
    %v2990 = vmul.f32 %v2916, %v1193
    %v2991 = vmul.f32 %v2919, %v1193
    %v2992 = vmul.f32 %v2922, %v1193
    %v2993 = vmul.f32 %v2925, %v1193
    %v2994 = vmul.f32 %v2928, %v1193
    %v2995 = vmul.f32 %v2931, %v1193
    %v2996 = vmul.f32 %v2934, %v1193
    %v2997 = vmul.f32 %v2937, %v1193
    %v2998 = vmul.f32 %v2940, %v1193
    %v2999 = vmul.f32 %v2943, %v1193
    %v3000 = vmul.f32 %v2946, %v1193
    %v3001 = vmul.f32 %v2949, %v1193
    %v3002 = vmul.f32 %v2952, %v1193
    %v3003 = vmul.f32 %v2955, %v1193
    %v3004 = vmul.f32 %v2958, %v1193
    %v3005 = vmul.f32 %v2961, %v1193
    %v3006 = vmul.f32 %v2964, %v1193
    %v3007 = vmul.f32 %v2967, %v1193
    %v3008 = vmul.f32 %v2970, %v1193
    %v3009 = vmul.f32 %v2973, %v1193
    %v3010 = vmul.f32 %v2976, %v1193
    %v3011 = vmul.f32 %v2979, %v1193
    %v3012 = vadd.f32 %v2980, 1e-05
    %v3013 = vadd.f32 %v2981, 1e-05
    %v3014 = vadd.f32 %v2982, 1e-05
    %v3015 = vadd.f32 %v2983, 1e-05
    %v3016 = vadd.f32 %v2984, 1e-05
    %v3017 = vadd.f32 %v2985, 1e-05
    %v3018 = vadd.f32 %v2986, 1e-05
    %v3019 = vadd.f32 %v2987, 1e-05
    %v3020 = vadd.f32 %v2988, 1e-05
    %v3021 = vadd.f32 %v2989, 1e-05
    %v3022 = vadd.f32 %v2990, 1e-05
    %v3023 = vadd.f32 %v2991, 1e-05
    %v3024 = vadd.f32 %v2992, 1e-05
    %v3025 = vadd.f32 %v2993, 1e-05
    %v3026 = vadd.f32 %v2994, 1e-05
    %v3027 = vadd.f32 %v2995, 1e-05
    %v3028 = vadd.f32 %v2996, 1e-05
    %v3029 = vadd.f32 %v2997, 1e-05
    %v3030 = vadd.f32 %v2998, 1e-05
    %v3031 = vadd.f32 %v2999, 1e-05
    %v3032 = vadd.f32 %v3000, 1e-05
    %v3033 = vadd.f32 %v3001, 1e-05
    %v3034 = vadd.f32 %v3002, 1e-05
    %v3035 = vadd.f32 %v3003, 1e-05
    %v3036 = vadd.f32 %v3004, 1e-05
    %v3037 = vadd.f32 %v3005, 1e-05
    %v3038 = vadd.f32 %v3006, 1e-05
    %v3039 = vadd.f32 %v3007, 1e-05
    %v3040 = vadd.f32 %v3008, 1e-05
    %v3041 = vadd.f32 %v3009, 1e-05
    %v3042 = vadd.f32 %v3010, 1e-05
    %v3043 = vadd.f32 %v3011, 1e-05
    %v3044 = vrsqrt.pop %v3012
    %v3045 = vrsqrt.pop %v3013
    %v3046 = vrsqrt.pop %v3014
    %v3047 = vrsqrt.pop %v3015
    %v3048 = vrsqrt.pop %v3016
    %v3049 = vrsqrt.pop %v3017
    %v3050 = vrsqrt.pop %v3018
    %v3051 = vrsqrt.pop %v3019
    %v3052 = vrsqrt.pop %v3020
    %v3053 = vrsqrt.pop %v3021
    %v3054 = vrsqrt.pop %v3022
    %v3055 = vrsqrt.pop %v3023
    %v3056 = vrsqrt.pop %v3024
    %v3057 = vrsqrt.pop %v3025
    %v3058 = vrsqrt.pop %v3026
    %v3059 = vrsqrt.pop %v3027
    %v3060 = vrsqrt.pop %v3028
    %v3061 = vrsqrt.pop %v3029
    %v3062 = vrsqrt.pop %v3030
    %v3063 = vrsqrt.pop %v3031
    %v3064 = vrsqrt.pop %v3032
    %v3065 = vrsqrt.pop %v3033
    %v3066 = vrsqrt.pop %v3034
    %v3067 = vrsqrt.pop %v3035
    %v3068 = vrsqrt.pop %v3036
    %v3069 = vrsqrt.pop %v3037
    %v3070 = vrsqrt.pop %v3038
    %v3071 = vrsqrt.pop %v3039
    %v3072 = vrsqrt.pop %v3040
    %v3073 = vrsqrt.pop %v3041
    %v3074 = vrsqrt.pop %v3042
    %v3075 = vrsqrt.pop %v3043
    %v3076 = vmul.f32 %v2756, %v3044
    %v3077 = vmul.f32 %v2757, %v3044
    %v3078 = vmul.f32 %v2758, %v3045
    %v3079 = vmul.f32 %v2759, %v3045
    %v3080 = vmul.f32 %v2760, %v3046
    %v3081 = vmul.f32 %v2761, %v3046
    %v3082 = vmul.f32 %v2762, %v3047
    %v3083 = vmul.f32 %v2763, %v3047
    %v3084 = vmul.f32 %v2764, %v3048
    %v3085 = vmul.f32 %v2765, %v3048
    %v3086 = vmul.f32 %v2766, %v3049
    %v3087 = vmul.f32 %v2767, %v3049
    %v3088 = vmul.f32 %v2768, %v3050
    %v3089 = vmul.f32 %v2769, %v3050
    %v3090 = vmul.f32 %v2770, %v3051
    %v3091 = vmul.f32 %v2771, %v3051
    %v3092 = vmul.f32 %v2772, %v3052
    %v3093 = vmul.f32 %v2773, %v3052
    %v3094 = vmul.f32 %v2774, %v3053
    %v3095 = vmul.f32 %v2775, %v3053
    %v3096 = vmul.f32 %v2776, %v3054
    %v3097 = vmul.f32 %v2777, %v3054
    %v3098 = vmul.f32 %v2778, %v3055
    %v3099 = vmul.f32 %v2779, %v3055
    %v3100 = vmul.f32 %v2780, %v3056
    %v3101 = vmul.f32 %v2781, %v3056
    %v3102 = vmul.f32 %v2782, %v3057
    %v3103 = vmul.f32 %v2783, %v3057
    %v3104 = vmul.f32 %v2784, %v3058
    %v3105 = vmul.f32 %v2785, %v3058
    %v3106 = vmul.f32 %v2786, %v3059
    %v3107 = vmul.f32 %v2787, %v3059
    %v3108 = vmul.f32 %v2788, %v3060
    %v3109 = vmul.f32 %v2789, %v3060
    %v3110 = vmul.f32 %v2790, %v3061
    %v3111 = vmul.f32 %v2791, %v3061
    %v3112 = vmul.f32 %v2792, %v3062
    %v3113 = vmul.f32 %v2793, %v3062
    %v3114 = vmul.f32 %v2794, %v3063
    %v3115 = vmul.f32 %v2795, %v3063
    %v3116 = vmul.f32 %v2796, %v3064
    %v3117 = vmul.f32 %v2797, %v3064
    %v3118 = vmul.f32 %v2798, %v3065
    %v3119 = vmul.f32 %v2799, %v3065
    %v3120 = vmul.f32 %v2800, %v3066
    %v3121 = vmul.f32 %v2801, %v3066
    %v3122 = vmul.f32 %v2802, %v3067
    %v3123 = vmul.f32 %v2803, %v3067
    %v3124 = vmul.f32 %v2804, %v3068
    %v3125 = vmul.f32 %v2805, %v3068
    %v3126 = vmul.f32 %v2806, %v3069
    %v3127 = vmul.f32 %v2807, %v3069
    %v3128 = vmul.f32 %v2808, %v3070
    %v3129 = vmul.f32 %v2809, %v3070
    %v3130 = vmul.f32 %v2810, %v3071
    %v3131 = vmul.f32 %v2811, %v3071
    %v3132 = vmul.f32 %v2812, %v3072
    %v3133 = vmul.f32 %v2813, %v3072
    %v3134 = vmul.f32 %v2814, %v3073
    %v3135 = vmul.f32 %v2815, %v3073
    %v3136 = vmul.f32 %v2816, %v3074
    %v3137 = vmul.f32 %v2817, %v3074
    %v3138 = vmul.f32 %v2818, %v3075
    %v3139 = vmul.f32 %v2819, %v3075
    %v3141 = vlaneseq
    %v3142 = vshrl.u32 %v3141, 7
    %v3143 = vsub.s32 0, %v3142
    %v3144 = vrot.slane %v1792, %v3143
    %v3145 = vlaneseq
    %v3146 = vshrl.u32 %v3145, 7
    %v3147 = vsub.s32 1, %v3146
    %v3148 = vrot.slane %v1792, %v3147
    %v3151 = vmul.f32 %v3076, %v3144
    %v3152 = vmul.f32 %v3077, %v3148
    %v3153 = vmul.f32 %v3078, %v3144
    %v3154 = vmul.f32 %v3079, %v3148
    %v3155 = vmul.f32 %v3080, %v3144
    %v3156 = vmul.f32 %v3081, %v3148
    %v3157 = vmul.f32 %v3082, %v3144
    %v3158 = vmul.f32 %v3083, %v3148
    %v3159 = vmul.f32 %v3084, %v3144
    %v3160 = vmul.f32 %v3085, %v3148
    %v3161 = vmul.f32 %v3086, %v3144
    %v3162 = vmul.f32 %v3087, %v3148
    %v3163 = vmul.f32 %v3088, %v3144
    %v3164 = vmul.f32 %v3089, %v3148
    %v3165 = vmul.f32 %v3090, %v3144
    %v3166 = vmul.f32 %v3091, %v3148
    %v3167 = vmul.f32 %v3092, %v3144
    %v3168 = vmul.f32 %v3093, %v3148
    %v3169 = vmul.f32 %v3094, %v3144
    %v3170 = vmul.f32 %v3095, %v3148
    %v3171 = vmul.f32 %v3096, %v3144
    %v3172 = vmul.f32 %v3097, %v3148
    %v3173 = vmul.f32 %v3098, %v3144
    %v3174 = vmul.f32 %v3099, %v3148
    %v3175 = vmul.f32 %v3100, %v3144
    %v3176 = vmul.f32 %v3101, %v3148
    %v3177 = vmul.f32 %v3102, %v3144
    %v3178 = vmul.f32 %v3103, %v3148
    %v3179 = vmul.f32 %v3104, %v3144
    %v3180 = vmul.f32 %v3105, %v3148
    %v3181 = vmul.f32 %v3106, %v3144
    %v3182 = vmul.f32 %v3107, %v3148
    %v3183 = vmul.f32 %v3108, %v3144
    %v3184 = vmul.f32 %v3109, %v3148
    %v3185 = vmul.f32 %v3110, %v3144
    %v3186 = vmul.f32 %v3111, %v3148
    %v3187 = vmul.f32 %v3112, %v3144
    %v3188 = vmul.f32 %v3113, %v3148
    %v3189 = vmul.f32 %v3114, %v3144
    %v3190 = vmul.f32 %v3115, %v3148
    %v3191 = vmul.f32 %v3116, %v3144
    %v3192 = vmul.f32 %v3117, %v3148
    %v3193 = vmul.f32 %v3118, %v3144
    %v3194 = vmul.f32 %v3119, %v3148
    %v3195 = vmul.f32 %v3120, %v3144
    %v3196 = vmul.f32 %v3121, %v3148
    %v3197 = vmul.f32 %v3122, %v3144
    %v3198 = vmul.f32 %v3123, %v3148
    %v3199 = vmul.f32 %v3124, %v3144
    %v3200 = vmul.f32 %v3125, %v3148
    %v3201 = vmul.f32 %v3126, %v3144
    %v3202 = vmul.f32 %v3127, %v3148
    %v3203 = vmul.f32 %v3128, %v3144
    %v3204 = vmul.f32 %v3129, %v3148
    %v3205 = vmul.f32 %v3130, %v3144
    %v3206 = vmul.f32 %v3131, %v3148
    %v3207 = vmul.f32 %v3132, %v3144
    %v3208 = vmul.f32 %v3133, %v3148
    %v3209 = vmul.f32 %v3134, %v3144
    %v3210 = vmul.f32 %v3135, %v3148
    %v3211 = vmul.f32 %v3136, %v3144
    %v3212 = vmul.f32 %v3137, %v3148
    %v3213 = vmul.f32 %v3138, %v3144
    %v3214 = vmul.f32 %v3139, %v3148
    %v3216 = vlaneseq
    %v3217 = vshrl.u32 %v3216, 7
    %v3218 = vsub.s32 0, %v3217
    %v3219 = vrot.slane %v1793, %v3218
    %v3220 = vlaneseq
    %v3221 = vshrl.u32 %v3220, 7
    %v3222 = vsub.s32 1, %v3221
    %v3223 = vrot.slane %v1793, %v3222
    %v3226 = vadd.f32 %v3151, %v3219
    %v3227 = vadd.f32 %v3152, %v3223
    %v3228 = vadd.f32 %v3153, %v3219
    %v3229 = vadd.f32 %v3154, %v3223
    %v3230 = vadd.f32 %v3155, %v3219
    %v3231 = vadd.f32 %v3156, %v3223
    %v3232 = vadd.f32 %v3157, %v3219
    %v3233 = vadd.f32 %v3158, %v3223
    %v3234 = vadd.f32 %v3159, %v3219
    %v3235 = vadd.f32 %v3160, %v3223
    %v3236 = vadd.f32 %v3161, %v3219
    %v3237 = vadd.f32 %v3162, %v3223
    %v3238 = vadd.f32 %v3163, %v3219
    %v3239 = vadd.f32 %v3164, %v3223
    %v3240 = vadd.f32 %v3165, %v3219
    %v3241 = vadd.f32 %v3166, %v3223
    %v3242 = vadd.f32 %v3167, %v3219
    %v3243 = vadd.f32 %v3168, %v3223
    %v3244 = vadd.f32 %v3169, %v3219
    %v3245 = vadd.f32 %v3170, %v3223
    %v3246 = vadd.f32 %v3171, %v3219
    %v3247 = vadd.f32 %v3172, %v3223
    %v3248 = vadd.f32 %v3173, %v3219
    %v3249 = vadd.f32 %v3174, %v3223
    %v3250 = vadd.f32 %v3175, %v3219
    %v3251 = vadd.f32 %v3176, %v3223
    %v3252 = vadd.f32 %v3177, %v3219
    %v3253 = vadd.f32 %v3178, %v3223
    %v3254 = vadd.f32 %v3179, %v3219
    %v3255 = vadd.f32 %v3180, %v3223
    %v3256 = vadd.f32 %v3181, %v3219
    %v3257 = vadd.f32 %v3182, %v3223
    %v3258 = vadd.f32 %v3183, %v3219
    %v3259 = vadd.f32 %v3184, %v3223
    %v3260 = vadd.f32 %v3185, %v3219
    %v3261 = vadd.f32 %v3186, %v3223
    %v3262 = vadd.f32 %v3187, %v3219
    %v3263 = vadd.f32 %v3188, %v3223
    %v3264 = vadd.f32 %v3189, %v3219
    %v3265 = vadd.f32 %v3190, %v3223
    %v3266 = vadd.f32 %v3191, %v3219
    %v3267 = vadd.f32 %v3192, %v3223
    %v3268 = vadd.f32 %v3193, %v3219
    %v3269 = vadd.f32 %v3194, %v3223
    %v3270 = vadd.f32 %v3195, %v3219
    %v3271 = vadd.f32 %v3196, %v3223
    %v3272 = vadd.f32 %v3197, %v3219
    %v3273 = vadd.f32 %v3198, %v3223
    %v3274 = vadd.f32 %v3199, %v3219
    %v3275 = vadd.f32 %v3200, %v3223
    %v3276 = vadd.f32 %v3201, %v3219
    %v3277 = vadd.f32 %v3202, %v3223
    %v3278 = vadd.f32 %v3203, %v3219
    %v3279 = vadd.f32 %v3204, %v3223
    %v3280 = vadd.f32 %v3205, %v3219
    %v3281 = vadd.f32 %v3206, %v3223
    %v3282 = vadd.f32 %v3207, %v3219
    %v3283 = vadd.f32 %v3208, %v3223
    %v3284 = vadd.f32 %v3209, %v3219
    %v3285 = vadd.f32 %v3210, %v3223
    %v3286 = vadd.f32 %v3211, %v3219
    %v3287 = vadd.f32 %v3212, %v3223
    %v3288 = vadd.f32 %v3213, %v3219
    %v3289 = vadd.f32 %v3214, %v3223
    %v3291 = vlaneseq
    %v3292 = vshrl.u32 %v3291, 7
    %v3293 = vsub.s32 0, %v3292
    %v3294 = vrot.slane %v1794, %v3293
    %v3295 = vlaneseq
    %v3296 = vshrl.u32 %v3295, 7
    %v3297 = vsub.s32 1, %v3296
    %v3298 = vrot.slane %v1794, %v3297
    %v3301 = vmul.f32 %v3226, %v3294
    %v3302 = vmul.f32 %v3227, %v3298
    %v3303 = vmul.f32 %v3228, %v3294
    %v3304 = vmul.f32 %v3229, %v3298
    %v3305 = vmul.f32 %v3230, %v3294
    %v3306 = vmul.f32 %v3231, %v3298
    %v3307 = vmul.f32 %v3232, %v3294
    %v3308 = vmul.f32 %v3233, %v3298
    %v3309 = vmul.f32 %v3234, %v3294
    %v3310 = vmul.f32 %v3235, %v3298
    %v3311 = vmul.f32 %v3236, %v3294
    %v3312 = vmul.f32 %v3237, %v3298
    %v3313 = vmul.f32 %v3238, %v3294
    %v3314 = vmul.f32 %v3239, %v3298
    %v3315 = vmul.f32 %v3240, %v3294
    %v3316 = vmul.f32 %v3241, %v3298
    %v3317 = vmul.f32 %v3242, %v3294
    %v3318 = vmul.f32 %v3243, %v3298
    %v3319 = vmul.f32 %v3244, %v3294
    %v3320 = vmul.f32 %v3245, %v3298
    %v3321 = vmul.f32 %v3246, %v3294
    %v3322 = vmul.f32 %v3247, %v3298
    %v3323 = vmul.f32 %v3248, %v3294
    %v3324 = vmul.f32 %v3249, %v3298
    %v3325 = vmul.f32 %v3250, %v3294
    %v3326 = vmul.f32 %v3251, %v3298
    %v3327 = vmul.f32 %v3252, %v3294
    %v3328 = vmul.f32 %v3253, %v3298
    %v3329 = vmul.f32 %v3254, %v3294
    %v3330 = vmul.f32 %v3255, %v3298
    %v3331 = vmul.f32 %v3256, %v3294
    %v3332 = vmul.f32 %v3257, %v3298
    %v3333 = vmul.f32 %v3258, %v3294
    %v3334 = vmul.f32 %v3259, %v3298
    %v3335 = vmul.f32 %v3260, %v3294
    %v3336 = vmul.f32 %v3261, %v3298
    %v3337 = vmul.f32 %v3262, %v3294
    %v3338 = vmul.f32 %v3263, %v3298
    %v3339 = vmul.f32 %v3264, %v3294
    %v3340 = vmul.f32 %v3265, %v3298
    %v3341 = vmul.f32 %v3266, %v3294
    %v3342 = vmul.f32 %v3267, %v3298
    %v3343 = vmul.f32 %v3268, %v3294
    %v3344 = vmul.f32 %v3269, %v3298
    %v3345 = vmul.f32 %v3270, %v3294
    %v3346 = vmul.f32 %v3271, %v3298
    %v3347 = vmul.f32 %v3272, %v3294
    %v3348 = vmul.f32 %v3273, %v3298
    %v3349 = vmul.f32 %v3274, %v3294
    %v3350 = vmul.f32 %v3275, %v3298
    %v3351 = vmul.f32 %v3276, %v3294
    %v3352 = vmul.f32 %v3277, %v3298
    %v3353 = vmul.f32 %v3278, %v3294
    %v3354 = vmul.f32 %v3279, %v3298
    %v3355 = vmul.f32 %v3280, %v3294
    %v3356 = vmul.f32 %v3281, %v3298
    %v3357 = vmul.f32 %v3282, %v3294
    %v3358 = vmul.f32 %v3283, %v3298
    %v3359 = vmul.f32 %v3284, %v3294
    %v3360 = vmul.f32 %v3285, %v3298
    %v3361 = vmul.f32 %v3286, %v3294
    %v3362 = vmul.f32 %v3287, %v3298
    %v3363 = vmul.f32 %v3288, %v3294
    %v3364 = vmul.f32 %v3289, %v3298
    %v3365 = vadd.f32 %v3301, %v3302
    %3366 = vadd.xlane.f32.xlu0 %v3365
    %v3367 = vpop.xlane.xlu0 %3366
    %v3368 = vadd.f32 %v3303, %v3304
    %3369 = vadd.xlane.f32.xlu0 %v3368
    %v3370 = vpop.xlane.xlu0 %3369
    %v3371 = vadd.f32 %v3305, %v3306
    %3372 = vadd.xlane.f32.xlu0 %v3371
    %v3373 = vpop.xlane.xlu0 %3372
    %v3374 = vadd.f32 %v3307, %v3308
    %3375 = vadd.xlane.f32.xlu0 %v3374
    %v3376 = vpop.xlane.xlu0 %3375
    %v3377 = vadd.f32 %v3309, %v3310
    %3378 = vadd.xlane.f32.xlu0 %v3377
    %v3379 = vpop.xlane.xlu0 %3378
    %v3380 = vadd.f32 %v3311, %v3312
    %3381 = vadd.xlane.f32.xlu0 %v3380
    %v3382 = vpop.xlane.xlu0 %3381
    %v3383 = vadd.f32 %v3313, %v3314
    %3384 = vadd.xlane.f32.xlu0 %v3383
    %v3385 = vpop.xlane.xlu0 %3384
    %v3386 = vadd.f32 %v3315, %v3316
    %3387 = vadd.xlane.f32.xlu0 %v3386
    %v3388 = vpop.xlane.xlu0 %3387
    %v3389 = vadd.f32 %v3317, %v3318
    %3390 = vadd.xlane.f32.xlu0 %v3389
    %v3391 = vpop.xlane.xlu0 %3390
    %v3392 = vadd.f32 %v3319, %v3320
    %3393 = vadd.xlane.f32.xlu0 %v3392
    %v3394 = vpop.xlane.xlu0 %3393
    %v3395 = vadd.f32 %v3321, %v3322
    %3396 = vadd.xlane.f32.xlu0 %v3395
    %v3397 = vpop.xlane.xlu0 %3396
    %v3398 = vadd.f32 %v3323, %v3324
    %3399 = vadd.xlane.f32.xlu0 %v3398
    %v3400 = vpop.xlane.xlu0 %3399
    %v3401 = vadd.f32 %v3325, %v3326
    %3402 = vadd.xlane.f32.xlu0 %v3401
    %v3403 = vpop.xlane.xlu0 %3402
    %v3404 = vadd.f32 %v3327, %v3328
    %3405 = vadd.xlane.f32.xlu0 %v3404
    %v3406 = vpop.xlane.xlu0 %3405
    %v3407 = vadd.f32 %v3329, %v3330
    %3408 = vadd.xlane.f32.xlu0 %v3407
    %v3409 = vpop.xlane.xlu0 %3408
    %v3410 = vadd.f32 %v3331, %v3332
    %3411 = vadd.xlane.f32.xlu0 %v3410
    %v3412 = vpop.xlane.xlu0 %3411
    %v3413 = vadd.f32 %v3333, %v3334
    %3414 = vadd.xlane.f32.xlu0 %v3413
    %v3415 = vpop.xlane.xlu0 %3414
    %v3416 = vadd.f32 %v3335, %v3336
    %3417 = vadd.xlane.f32.xlu0 %v3416
    %v3418 = vpop.xlane.xlu0 %3417
    %v3419 = vadd.f32 %v3337, %v3338
    %3420 = vadd.xlane.f32.xlu0 %v3419
    %v3421 = vpop.xlane.xlu0 %3420
    %v3422 = vadd.f32 %v3339, %v3340
    %3423 = vadd.xlane.f32.xlu0 %v3422
    %v3424 = vpop.xlane.xlu0 %3423
    %v3425 = vadd.f32 %v3341, %v3342
    %3426 = vadd.xlane.f32.xlu0 %v3425
    %v3427 = vpop.xlane.xlu0 %3426
    %v3428 = vadd.f32 %v3343, %v3344
    %3429 = vadd.xlane.f32.xlu0 %v3428
    %v3430 = vpop.xlane.xlu0 %3429
    %v3431 = vadd.f32 %v3345, %v3346
    %3432 = vadd.xlane.f32.xlu0 %v3431
    %v3433 = vpop.xlane.xlu0 %3432
    %v3434 = vadd.f32 %v3347, %v3348
    %3435 = vadd.xlane.f32.xlu0 %v3434
    %v3436 = vpop.xlane.xlu0 %3435
    %v3437 = vadd.f32 %v3349, %v3350
    %3438 = vadd.xlane.f32.xlu0 %v3437
    %v3439 = vpop.xlane.xlu0 %3438
    %v3440 = vadd.f32 %v3351, %v3352
    %3441 = vadd.xlane.f32.xlu0 %v3440
    %v3442 = vpop.xlane.xlu0 %3441
    %v3443 = vadd.f32 %v3353, %v3354
    %3444 = vadd.xlane.f32.xlu0 %v3443
    %v3445 = vpop.xlane.xlu0 %3444
    %v3446 = vadd.f32 %v3355, %v3356
    %3447 = vadd.xlane.f32.xlu0 %v3446
    %v3448 = vpop.xlane.xlu0 %3447
    %v3449 = vadd.f32 %v3357, %v3358
    %3450 = vadd.xlane.f32.xlu0 %v3449
    %v3451 = vpop.xlane.xlu0 %3450
    %v3452 = vadd.f32 %v3359, %v3360
    %3453 = vadd.xlane.f32.xlu0 %v3452
    %v3454 = vpop.xlane.xlu0 %3453
    %v3455 = vadd.f32 %v3361, %v3362
    %3456 = vadd.xlane.f32.xlu0 %v3455
    %v3457 = vpop.xlane.xlu0 %3456
    %v3458 = vadd.f32 %v3363, %v3364
    %3459 = vadd.xlane.f32.xlu0 %v3458
    %v3460 = vpop.xlane.xlu0 %3459
    %vm3461 = vcmask 7168
    %3462 = vst.msk [vmem:[%s8] sm:$0xff] %vm3461, %v3367
    %3463 = vst.msk [vmem:[%s8 + $0x8] sm:$0xff] %vm3461, %v3370
    %3464 = vst.msk [vmem:[%s8 + $0x10] sm:$0xff] %vm3461, %v3373
    %3465 = vst.msk [vmem:[%s8 + $0x18] sm:$0xff] %vm3461, %v3376
    %3466 = vst.msk [vmem:[%s8 + $0x20] sm:$0xff] %vm3461, %v3379
    %3467 = vst.msk [vmem:[%s8 + $0x28] sm:$0xff] %vm3461, %v3382
    %3468 = vst.msk [vmem:[%s8 + $0x30] sm:$0xff] %vm3461, %v3385
    %3469 = vst.msk [vmem:[%s8 + $0x38] sm:$0xff] %vm3461, %v3388
    %3470 = vst.msk [vmem:[%s8 + $0x40] sm:$0xff] %vm3461, %v3391
    %3471 = vst.msk [vmem:[%s8 + $0x48] sm:$0xff] %vm3461, %v3394
    %3472 = vst.msk [vmem:[%s8 + $0x50] sm:$0xff] %vm3461, %v3397
    %3473 = vst.msk [vmem:[%s8 + $0x58] sm:$0xff] %vm3461, %v3400
    %3474 = vst.msk [vmem:[%s8 + $0x60] sm:$0xff] %vm3461, %v3403
    %3475 = vst.msk [vmem:[%s8 + $0x68] sm:$0xff] %vm3461, %v3406
    %3476 = vst.msk [vmem:[%s8 + $0x70] sm:$0xff] %vm3461, %v3409
    %3477 = vst.msk [vmem:[%s8 + $0x78] sm:$0xff] %vm3461, %v3412
    %3478 = vst.msk [vmem:[%s8 + $0x80] sm:$0xff] %vm3461, %v3415
    %3479 = vst.msk [vmem:[%s8 + $0x88] sm:$0xff] %vm3461, %v3418
    %3480 = vst.msk [vmem:[%s8 + $0x90] sm:$0xff] %vm3461, %v3421
    %3481 = vst.msk [vmem:[%s8 + $0x98] sm:$0xff] %vm3461, %v3424
    %3482 = vst.msk [vmem:[%s8 + $0xa0] sm:$0xff] %vm3461, %v3427
    %3483 = vst.msk [vmem:[%s8 + $0xa8] sm:$0xff] %vm3461, %v3430
    %3484 = vst.msk [vmem:[%s8 + $0xb0] sm:$0xff] %vm3461, %v3433
    %3485 = vst.msk [vmem:[%s8 + $0xb8] sm:$0xff] %vm3461, %v3436
    %3486 = vst.msk [vmem:[%s8 + $0xc0] sm:$0xff] %vm3461, %v3439
    %3487 = vst.msk [vmem:[%s8 + $0xc8] sm:$0xff] %vm3461, %v3442
    %3488 = vst.msk [vmem:[%s8 + $0xd0] sm:$0xff] %vm3461, %v3445
    %3489 = vst.msk [vmem:[%s8 + $0xd8] sm:$0xff] %vm3461, %v3448
    %3490 = vst.msk [vmem:[%s8 + $0xe0] sm:$0xff] %vm3461, %v3451
    %3491 = vst.msk [vmem:[%s8 + $0xe8] sm:$0xff] %vm3461, %v3454
    %3492 = vst.msk [vmem:[%s8 + $0xf0] sm:$0xff] %vm3461, %v3457
    %3493 = vst.msk [vmem:[%s8 + $0xf8] sm:$0xff] %vm3461, %v3460
    %v3494 = vld [vmem:[#allocation6 + $0x8] sm:$0xff]
    %v3495 = vld [vmem:[#allocation6 + $0x20] sm:$0xff]
    %v3496 = vld [vmem:[#allocation6 + $0x38] sm:$0xff]
    %v3497 = vld [vmem:[#allocation6 + $0x50] sm:$0xff]
    %v3498 = vld [vmem:[#allocation6 + $0x68] sm:$0xff]
    %v3499 = vld [vmem:[#allocation6 + $0x80] sm:$0xff]
    %v3500 = vld [vmem:[#allocation6 + $0x98] sm:$0xff]
    %v3501 = vld [vmem:[#allocation6 + $0xb0] sm:$0xff]
    %v3502 = vld [vmem:[#allocation6 + $0xc8] sm:$0xff]
    %v3503 = vld [vmem:[#allocation6 + $0xe0] sm:$0xff]
    %v3504 = vld [vmem:[#allocation6 + $0xf8] sm:$0xff]
    %v3505 = vld [vmem:[#allocation6 + $0x110] sm:$0xff]
    %v3506 = vld [vmem:[#allocation6 + $0x128] sm:$0xff]
    %v3507 = vld [vmem:[#allocation6 + $0x140] sm:$0xff]
    %v3508 = vld [vmem:[#allocation6 + $0x158] sm:$0xff]
    %v3509 = vld [vmem:[#allocation6 + $0x170] sm:$0xff]
    %v3510 = vld [vmem:[#allocation6 + $0x188] sm:$0xff]
    %v3511 = vld [vmem:[#allocation6 + $0x1a0] sm:$0xff]
    %v3512 = vld [vmem:[#allocation6 + $0x1b8] sm:$0xff]
    %v3513 = vld [vmem:[#allocation6 + $0x1d0] sm:$0xff]
    %v3514 = vld [vmem:[#allocation6 + $0x1e8] sm:$0xff]
    %v3515 = vld [vmem:[#allocation6 + $0x200] sm:$0xff]
    %v3516 = vld [vmem:[#allocation6 + $0x218] sm:$0xff]
    %v3517 = vld [vmem:[#allocation6 + $0x230] sm:$0xff]
    %v3518 = vld [vmem:[#allocation6 + $0x248] sm:$0xff]
    %v3519 = vld [vmem:[#allocation6 + $0x260] sm:$0xff]
    %v3520 = vld [vmem:[#allocation6 + $0x278] sm:$0xff]
    %v3521 = vld [vmem:[#allocation6 + $0x290] sm:$0xff]
    %v3522 = vld [vmem:[#allocation6 + $0x2a8] sm:$0xff]
    %v3523 = vld [vmem:[#allocation6 + $0x2c0] sm:$0xff]
    %v3524 = vld [vmem:[#allocation6 + $0x2d8] sm:$0xff]
    %v3525 = vld [vmem:[#allocation6 + $0x2f0] sm:$0xff]
    %v3558 = vunpack.c.l.b16 %v3494
    %v3559 = vunpack.c.h.b16 %v3494
    %v3560 = vunpack.c.l.b16 %v3495
    %v3561 = vunpack.c.h.b16 %v3495
    %v3562 = vunpack.c.l.b16 %v3496
    %v3563 = vunpack.c.h.b16 %v3496
    %v3564 = vunpack.c.l.b16 %v3497
    %v3565 = vunpack.c.h.b16 %v3497
    %v3566 = vunpack.c.l.b16 %v3498
    %v3567 = vunpack.c.h.b16 %v3498
    %v3568 = vunpack.c.l.b16 %v3499
    %v3569 = vunpack.c.h.b16 %v3499
    %v3570 = vunpack.c.l.b16 %v3500
    %v3571 = vunpack.c.h.b16 %v3500
    %v3572 = vunpack.c.l.b16 %v3501
    %v3573 = vunpack.c.h.b16 %v3501
    %v3574 = vunpack.c.l.b16 %v3502
    %v3575 = vunpack.c.h.b16 %v3502
    %v3576 = vunpack.c.l.b16 %v3503
    %v3577 = vunpack.c.h.b16 %v3503
    %v3578 = vunpack.c.l.b16 %v3504
    %v3579 = vunpack.c.h.b16 %v3504
    %v3580 = vunpack.c.l.b16 %v3505
    %v3581 = vunpack.c.h.b16 %v3505
    %v3582 = vunpack.c.l.b16 %v3506
    %v3583 = vunpack.c.h.b16 %v3506
    %v3584 = vunpack.c.l.b16 %v3507
    %v3585 = vunpack.c.h.b16 %v3507
    %v3586 = vunpack.c.l.b16 %v3508
    %v3587 = vunpack.c.h.b16 %v3508
    %v3588 = vunpack.c.l.b16 %v3509
    %v3589 = vunpack.c.h.b16 %v3509
    %v3590 = vunpack.c.l.b16 %v3510
    %v3591 = vunpack.c.h.b16 %v3510
    %v3592 = vunpack.c.l.b16 %v3511
    %v3593 = vunpack.c.h.b16 %v3511
    %v3594 = vunpack.c.l.b16 %v3512
    %v3595 = vunpack.c.h.b16 %v3512
    %v3596 = vunpack.c.l.b16 %v3513
    %v3597 = vunpack.c.h.b16 %v3513
    %v3598 = vunpack.c.l.b16 %v3514
    %v3599 = vunpack.c.h.b16 %v3514
    %v3600 = vunpack.c.l.b16 %v3515
    %v3601 = vunpack.c.h.b16 %v3515
    %v3602 = vunpack.c.l.b16 %v3516
    %v3603 = vunpack.c.h.b16 %v3516
    %v3604 = vunpack.c.l.b16 %v3517
    %v3605 = vunpack.c.h.b16 %v3517
    %v3606 = vunpack.c.l.b16 %v3518
    %v3607 = vunpack.c.h.b16 %v3518
    %v3608 = vunpack.c.l.b16 %v3519
    %v3609 = vunpack.c.h.b16 %v3519
    %v3610 = vunpack.c.l.b16 %v3520
    %v3611 = vunpack.c.h.b16 %v3520
    %v3612 = vunpack.c.l.b16 %v3521
    %v3613 = vunpack.c.h.b16 %v3521
    %v3614 = vunpack.c.l.b16 %v3522
    %v3615 = vunpack.c.h.b16 %v3522
    %v3616 = vunpack.c.l.b16 %v3523
    %v3617 = vunpack.c.h.b16 %v3523
    %v3618 = vunpack.c.l.b16 %v3524
    %v3619 = vunpack.c.h.b16 %v3524
    %v3620 = vunpack.c.l.b16 %v3525
    %v3621 = vunpack.c.h.b16 %v3525
    %v3622 = vpack.c.b16 %v3560, %v3558
    %v3623 = vpack.c.b16 %v3561, %v3559
    %v3624 = vpack.c.b16 %v3564, %v3562
    %v3625 = vpack.c.b16 %v3565, %v3563
    %v3626 = vpack.c.b16 %v3568, %v3566
    %v3627 = vpack.c.b16 %v3569, %v3567
    %v3628 = vpack.c.b16 %v3572, %v3570
    %v3629 = vpack.c.b16 %v3573, %v3571
    %v3630 = vpack.c.b16 %v3576, %v3574
    %v3631 = vpack.c.b16 %v3577, %v3575
    %v3632 = vpack.c.b16 %v3580, %v3578
    %v3633 = vpack.c.b16 %v3581, %v3579
    %v3634 = vpack.c.b16 %v3584, %v3582
    %v3635 = vpack.c.b16 %v3585, %v3583
    %v3636 = vpack.c.b16 %v3588, %v3586
    %v3637 = vpack.c.b16 %v3589, %v3587
    %v3638 = vpack.c.b16 %v3592, %v3590
    %v3639 = vpack.c.b16 %v3593, %v3591
    %v3640 = vpack.c.b16 %v3596, %v3594
    %v3641 = vpack.c.b16 %v3597, %v3595
    %v3642 = vpack.c.b16 %v3600, %v3598
    %v3643 = vpack.c.b16 %v3601, %v3599
    %v3644 = vpack.c.b16 %v3604, %v3602
    %v3645 = vpack.c.b16 %v3605, %v3603
    %v3646 = vpack.c.b16 %v3608, %v3606
    %v3647 = vpack.c.b16 %v3609, %v3607
    %v3648 = vpack.c.b16 %v3612, %v3610
    %v3649 = vpack.c.b16 %v3613, %v3611
    %v3650 = vpack.c.b16 %v3616, %v3614
    %v3651 = vpack.c.b16 %v3617, %v3615
    %v3652 = vpack.c.b16 %v3620, %v3618
    %v3653 = vpack.c.b16 %v3621, %v3619
    %3686 = vmatprep.subr.bf16.mxu0 %v3623
    %3687 = vmatpush1.bf16.msra.mxu0 %v3622
    %3688 = vmatprep.subr.bf16.mxu0 %v3625
    %3689 = vmatpush1.bf16.msra.mxu0 %v3624
    %3690 = vmatprep.subr.bf16.mxu0 %v3627
    %3691 = vmatpush1.bf16.msra.mxu0 %v3626
    %3692 = vmatprep.subr.bf16.mxu0 %v3629
    %3693 = vmatpush1.bf16.msra.mxu0 %v3628
    %3694 = vmatprep.subr.bf16.mxu0 %v3631
    %3695 = vmatpush1.bf16.msra.mxu0 %v3630
    %3696 = vmatprep.subr.bf16.mxu0 %v3633
    %3697 = vmatpush1.bf16.msra.mxu0 %v3632
    %3698 = vmatprep.subr.bf16.mxu0 %v3635
    %3699 = vmatpush1.bf16.msra.mxu0 %v3634
    %3700 = vmatprep.subr.bf16.mxu0 %v3637
    %3701 = vmatpush1.bf16.msra.mxu0 %v3636
    %3702 = vmatprep.subr.bf16.mxu0 %v3639
    %3703 = vmatpush1.bf16.msra.mxu0 %v3638
    %3704 = vmatprep.subr.bf16.mxu0 %v3641
    %3705 = vmatpush1.bf16.msra.mxu0 %v3640
    %3706 = vmatprep.subr.bf16.mxu0 %v3643
    %3707 = vmatpush1.bf16.msra.mxu0 %v3642
    %3708 = vmatprep.subr.bf16.mxu0 %v3645
    %3709 = vmatpush1.bf16.msra.mxu0 %v3644
    %3710 = vmatprep.subr.bf16.mxu0 %v3647
    %3711 = vmatpush1.bf16.msra.mxu0 %v3646
    %3712 = vmatprep.subr.bf16.mxu0 %v3649
    %3713 = vmatpush1.bf16.msra.mxu0 %v3648
    %3714 = vmatprep.subr.bf16.mxu0 %v3651
    %3715 = vmatpush1.bf16.msra.mxu0 %v3650
    %3716 = vmatprep.subr.bf16.mxu0 %v3653
    %3717 = vmatpush1.bf16.msra.mxu0 %v3652
    %3718 = vmatprep.mubr.bf16.mxu0 %v1761
    %3719 = vmatmul.mubr.bf16.gmra.mrb[0].mxu0 %v1760
    %v3720 = vpop.f32.mrb[0].mxu0
    %v3721 = vadd.f32 0.0, %v3720
    %v3722 = vpop.f32.mrb[0].mxu0
    %v3723 = vadd.f32 0.0, %v3722
    %v3724 = vpop.f32.mrb[0].mxu0
    %v3725 = vadd.f32 0.0, %v3724
    %v3726 = vpop.f32.mrb[0].mxu0
    %v3727 = vadd.f32 0.0, %v3726
    %3728 = vmatprep.mubr.bf16.mxu0 %v1763
    %3729 = vmatmul.mubr.bf16.gmra.mrb[0].mxu0 %v1762
    %v3730 = vpop.f32.mrb[0].mxu0
    %v3731 = vadd.f32 0.0, %v3730
    %v3732 = vpop.f32.mrb[0].mxu0
    %v3733 = vadd.f32 0.0, %v3732
    %v3734 = vpop.f32.mrb[0].mxu0
    %v3735 = vadd.f32 0.0, %v3734
    %v3736 = vpop.f32.mrb[0].mxu0
    %v3737 = vadd.f32 0.0, %v3736
    %3738 = vmatprep.mubr.bf16.mxu0 %v1765
    %3739 = vmatmul.mubr.bf16.gmra.mrb[0].mxu0 %v1764
    %v3740 = vpop.f32.mrb[0].mxu0
    %v3741 = vadd.f32 0.0, %v3740
    %v3742 = vpop.f32.mrb[0].mxu0
    %v3743 = vadd.f32 0.0, %v3742
    %v3744 = vpop.f32.mrb[0].mxu0
    %v3745 = vadd.f32 0.0, %v3744
    %v3746 = vpop.f32.mrb[0].mxu0
    %v3747 = vadd.f32 0.0, %v3746
    %3748 = vmatprep.mubr.bf16.mxu0 %v1767
    %3749 = vmatmul.mubr.bf16.gmra.mrb[0].mxu0 %v1766
    %v3750 = vpop.f32.mrb[0].mxu0
    %v3751 = vadd.f32 0.0, %v3750
    %v3752 = vpop.f32.mrb[0].mxu0
    %v3753 = vadd.f32 0.0, %v3752
    %v3754 = vpop.f32.mrb[0].mxu0
    %v3755 = vadd.f32 0.0, %v3754
    %v3756 = vpop.f32.mrb[0].mxu0
    %v3757 = vadd.f32 0.0, %v3756
    %3758 = vmatprep.mubr.bf16.mxu0 %v1769
    %3759 = vmatmul.mubr.bf16.gmra.mrb[0].mxu0 %v1768
    %v3760 = vpop.f32.mrb[0].mxu0
    %v3761 = vadd.f32 0.0, %v3760
    %v3762 = vpop.f32.mrb[0].mxu0
    %v3763 = vadd.f32 0.0, %v3762
    %v3764 = vpop.f32.mrb[0].mxu0
    %v3765 = vadd.f32 0.0, %v3764
    %v3766 = vpop.f32.mrb[0].mxu0
    %v3767 = vadd.f32 0.0, %v3766
    %3768 = vmatprep.mubr.bf16.mxu0 %v1771
    %3769 = vmatmul.mubr.bf16.gmra.mrb[0].mxu0 %v1770
    %v3770 = vpop.f32.mrb[0].mxu0
    %v3771 = vadd.f32 0.0, %v3770
    %v3772 = vpop.f32.mrb[0].mxu0
    %v3773 = vadd.f32 0.0, %v3772
    %v3774 = vpop.f32.mrb[0].mxu0
    %v3775 = vadd.f32 0.0, %v3774
    %v3776 = vpop.f32.mrb[0].mxu0
    %v3777 = vadd.f32 0.0, %v3776
    %3778 = vmatprep.mubr.bf16.mxu0 %v1773
    %3779 = vmatmul.mubr.bf16.gmra.mrb[0].mxu0 %v1772
    %v3780 = vpop.f32.mrb[0].mxu0
    %v3781 = vadd.f32 0.0, %v3780
    %v3782 = vpop.f32.mrb[0].mxu0
    %v3783 = vadd.f32 0.0, %v3782
    %v3784 = vpop.f32.mrb[0].mxu0
    %v3785 = vadd.f32 0.0, %v3784
    %v3786 = vpop.f32.mrb[0].mxu0
    %v3787 = vadd.f32 0.0, %v3786
    %3788 = vmatprep.mubr.bf16.mxu0 %v1775
    %3789 = vmatmul.mubr.bf16.gmra.mrb[0].mxu0 %v1774
    %v3790 = vpop.f32.mrb[0].mxu0
    %v3791 = vadd.f32 0.0, %v3790
    %v3792 = vpop.f32.mrb[0].mxu0
    %v3793 = vadd.f32 0.0, %v3792
    %v3794 = vpop.f32.mrb[0].mxu0
    %v3795 = vadd.f32 0.0, %v3794
    %v3796 = vpop.f32.mrb[0].mxu0
    %v3797 = vadd.f32 0.0, %v3796
    %3798 = vmatprep.mubr.bf16.mxu0 %v1777
    %3799 = vmatmul.mubr.bf16.gmra.mrb[0].mxu0 %v1776
    %v3800 = vpop.f32.mrb[0].mxu0
    %v3801 = vadd.f32 0.0, %v3800
    %v3802 = vpop.f32.mrb[0].mxu0
    %v3803 = vadd.f32 0.0, %v3802
    %v3804 = vpop.f32.mrb[0].mxu0
    %v3805 = vadd.f32 0.0, %v3804
    %v3806 = vpop.f32.mrb[0].mxu0
    %v3807 = vadd.f32 0.0, %v3806
    %3808 = vmatprep.mubr.bf16.mxu0 %v1779
    %3809 = vmatmul.mubr.bf16.gmra.mrb[0].mxu0 %v1778
    %v3810 = vpop.f32.mrb[0].mxu0
    %v3811 = vadd.f32 0.0, %v3810
    %v3812 = vpop.f32.mrb[0].mxu0
    %v3813 = vadd.f32 0.0, %v3812
    %v3814 = vpop.f32.mrb[0].mxu0
    %v3815 = vadd.f32 0.0, %v3814
    %v3816 = vpop.f32.mrb[0].mxu0
    %v3817 = vadd.f32 0.0, %v3816
    %3818 = vmatprep.mubr.bf16.mxu0 %v1781
    %3819 = vmatmul.mubr.bf16.gmra.mrb[0].mxu0 %v1780
    %v3820 = vpop.f32.mrb[0].mxu0
    %v3821 = vadd.f32 0.0, %v3820
    %v3822 = vpop.f32.mrb[0].mxu0
    %v3823 = vadd.f32 0.0, %v3822
    %v3824 = vpop.f32.mrb[0].mxu0
    %v3825 = vadd.f32 0.0, %v3824
    %v3826 = vpop.f32.mrb[0].mxu0
    %v3827 = vadd.f32 0.0, %v3826
    %3828 = vmatprep.mubr.bf16.mxu0 %v1783
    %3829 = vmatmul.mubr.bf16.gmra.mrb[0].mxu0 %v1782
    %v3830 = vpop.f32.mrb[0].mxu0
    %v3831 = vadd.f32 0.0, %v3830
    %v3832 = vpop.f32.mrb[0].mxu0
    %v3833 = vadd.f32 0.0, %v3832
    %v3834 = vpop.f32.mrb[0].mxu0
    %v3835 = vadd.f32 0.0, %v3834
    %v3836 = vpop.f32.mrb[0].mxu0
    %v3837 = vadd.f32 0.0, %v3836
    %3838 = vmatprep.mubr.bf16.mxu0 %v1785
    %3839 = vmatmul.mubr.bf16.gmra.mrb[0].mxu0 %v1784
    %v3840 = vpop.f32.mrb[0].mxu0
    %v3841 = vadd.f32 0.0, %v3840
    %v3842 = vpop.f32.mrb[0].mxu0
    %v3843 = vadd.f32 0.0, %v3842
    %v3844 = vpop.f32.mrb[0].mxu0
    %v3845 = vadd.f32 0.0, %v3844
    %v3846 = vpop.f32.mrb[0].mxu0
    %v3847 = vadd.f32 0.0, %v3846
    %3848 = vmatprep.mubr.bf16.mxu0 %v1787
    %3849 = vmatmul.mubr.bf16.gmra.mrb[0].mxu0 %v1786
    %v3850 = vpop.f32.mrb[0].mxu0
    %v3851 = vadd.f32 0.0, %v3850
    %v3852 = vpop.f32.mrb[0].mxu0
    %v3853 = vadd.f32 0.0, %v3852
    %v3854 = vpop.f32.mrb[0].mxu0
    %v3855 = vadd.f32 0.0, %v3854
    %v3856 = vpop.f32.mrb[0].mxu0
    %v3857 = vadd.f32 0.0, %v3856
    %3858 = vmatprep.mubr.bf16.mxu0 %v1789
    %3859 = vmatmul.mubr.bf16.gmra.mrb[0].mxu0 %v1788
    %v3860 = vpop.f32.mrb[0].mxu0
    %v3861 = vadd.f32 0.0, %v3860
    %v3862 = vpop.f32.mrb[0].mxu0
    %v3863 = vadd.f32 0.0, %v3862
    %v3864 = vpop.f32.mrb[0].mxu0
    %v3865 = vadd.f32 0.0, %v3864
    %v3866 = vpop.f32.mrb[0].mxu0
    %v3867 = vadd.f32 0.0, %v3866
    %3868 = vmatprep.mubr.bf16.mxu0 %v1791
    %3869 = vmatmul.mubr.bf16.gmra.mrb[0].mxu0 %v1790
    %v3870 = vpop.f32.mrb[0].mxu0
    %v3871 = vadd.f32 0.0, %v3870
    %v3872 = vpop.f32.mrb[0].mxu0
    %v3873 = vadd.f32 0.0, %v3872
    %v3874 = vpop.f32.mrb[0].mxu0
    %v3875 = vadd.f32 0.0, %v3874
    %v3876 = vpop.f32.mrb[0].mxu0
    %v3877 = vadd.f32 0.0, %v3876
    %3878 = vdwg.mxu0
    %v3879 = vxor.u32 %v3721, 2147483648
    %v3880 = vxor.u32 %v3723, 2147483648
    %v3881 = vxor.u32 %v3725, 2147483648
    %v3882 = vxor.u32 %v3727, 2147483648
    %v3883 = vxor.u32 %v3731, 2147483648
    %v3884 = vxor.u32 %v3733, 2147483648
    %v3885 = vxor.u32 %v3735, 2147483648
    %v3886 = vxor.u32 %v3737, 2147483648
    %v3887 = vxor.u32 %v3741, 2147483648
    %v3888 = vxor.u32 %v3743, 2147483648
    %v3889 = vxor.u32 %v3745, 2147483648
    %v3890 = vxor.u32 %v3747, 2147483648
    %v3891 = vxor.u32 %v3751, 2147483648
    %v3892 = vxor.u32 %v3753, 2147483648
    %v3893 = vxor.u32 %v3755, 2147483648
    %v3894 = vxor.u32 %v3757, 2147483648
    %v3895 = vxor.u32 %v3761, 2147483648
    %v3896 = vxor.u32 %v3763, 2147483648
    %v3897 = vxor.u32 %v3765, 2147483648
    %v3898 = vxor.u32 %v3767, 2147483648
    %v3899 = vxor.u32 %v3771, 2147483648
    %v3900 = vxor.u32 %v3773, 2147483648
    %v3901 = vxor.u32 %v3775, 2147483648
    %v3902 = vxor.u32 %v3777, 2147483648
    %v3903 = vxor.u32 %v3781, 2147483648
    %v3904 = vxor.u32 %v3783, 2147483648
    %v3905 = vxor.u32 %v3785, 2147483648
    %v3906 = vxor.u32 %v3787, 2147483648
    %v3907 = vxor.u32 %v3791, 2147483648
    %v3908 = vxor.u32 %v3793, 2147483648
    %v3909 = vxor.u32 %v3795, 2147483648
    %v3910 = vxor.u32 %v3797, 2147483648
    %v3911 = vxor.u32 %v3801, 2147483648
    %v3912 = vxor.u32 %v3803, 2147483648
    %v3913 = vxor.u32 %v3805, 2147483648
    %v3914 = vxor.u32 %v3807, 2147483648
    %v3915 = vxor.u32 %v3811, 2147483648
    %v3916 = vxor.u32 %v3813, 2147483648
    %v3917 = vxor.u32 %v3815, 2147483648
    %v3918 = vxor.u32 %v3817, 2147483648
    %v3919 = vxor.u32 %v3821, 2147483648
    %v3920 = vxor.u32 %v3823, 2147483648
    %v3921 = vxor.u32 %v3825, 2147483648
    %v3922 = vxor.u32 %v3827, 2147483648
    %v3923 = vxor.u32 %v3831, 2147483648
    %v3924 = vxor.u32 %v3833, 2147483648
    %v3925 = vxor.u32 %v3835, 2147483648
    %v3926 = vxor.u32 %v3837, 2147483648
    %v3927 = vxor.u32 %v3841, 2147483648
    %v3928 = vxor.u32 %v3843, 2147483648
    %v3929 = vxor.u32 %v3845, 2147483648
    %v3930 = vxor.u32 %v3847, 2147483648
    %v3931 = vxor.u32 %v3851, 2147483648
    %v3932 = vxor.u32 %v3853, 2147483648
    %v3933 = vxor.u32 %v3855, 2147483648
    %v3934 = vxor.u32 %v3857, 2147483648
    %v3935 = vxor.u32 %v3861, 2147483648
    %v3936 = vxor.u32 %v3863, 2147483648
    %v3937 = vxor.u32 %v3865, 2147483648
    %v3938 = vxor.u32 %v3867, 2147483648
    %v3939 = vxor.u32 %v3871, 2147483648
    %v3940 = vxor.u32 %v3873, 2147483648
    %v3941 = vxor.u32 %v3875, 2147483648
    %v3942 = vxor.u32 %v3877, 2147483648
    %v3943 = vmul.f32 %v3879, 1.442695
    %v3944 = vpow.pop %v3943
    %v3945 = vmul.f32 %v3880, 1.442695
    %v3946 = vpow.pop %v3945
    %v3947 = vmul.f32 %v3881, 1.442695
    %v3948 = vpow.pop %v3947
    %v3949 = vmul.f32 %v3882, 1.442695
    %v3950 = vpow.pop %v3949
    %v3951 = vmul.f32 %v3883, 1.442695
    %v3952 = vpow.pop %v3951
    %v3953 = vmul.f32 %v3884, 1.442695
    %v3954 = vpow.pop %v3953
    %v3955 = vmul.f32 %v3885, 1.442695
    %v3956 = vpow.pop %v3955
    %v3957 = vmul.f32 %v3886, 1.442695
    %v3958 = vpow.pop %v3957
    %v3959 = vmul.f32 %v3887, 1.442695
    %v3960 = vpow.pop %v3959
    %v3961 = vmul.f32 %v3888, 1.442695
    %v3962 = vpow.pop %v3961
    %v3963 = vmul.f32 %v3889, 1.442695
    %v3964 = vpow.pop %v3963
    %v3965 = vmul.f32 %v3890, 1.442695
    %v3966 = vpow.pop %v3965
    %v3967 = vmul.f32 %v3891, 1.442695
    %v3968 = vpow.pop %v3967
    %v3969 = vmul.f32 %v3892, 1.442695
    %v3970 = vpow.pop %v3969
    %v3971 = vmul.f32 %v3893, 1.442695
    %v3972 = vpow.pop %v3971
    %v3973 = vmul.f32 %v3894, 1.442695
    %v3974 = vpow.pop %v3973
    %v3975 = vmul.f32 %v3895, 1.442695
    %v3976 = vpow.pop %v3975
    %v3977 = vmul.f32 %v3896, 1.442695
    %v3978 = vpow.pop %v3977
    %v3979 = vmul.f32 %v3897, 1.442695
    %v3980 = vpow.pop %v3979
    %v3981 = vmul.f32 %v3898, 1.442695
    %v3982 = vpow.pop %v3981
    %v3983 = vmul.f32 %v3899, 1.442695
    %v3984 = vpow.pop %v3983
    %v3985 = vmul.f32 %v3900, 1.442695
    %v3986 = vpow.pop %v3985
    %v3987 = vmul.f32 %v3901, 1.442695
    %v3988 = vpow.pop %v3987
    %v3989 = vmul.f32 %v3902, 1.442695
    %v3990 = vpow.pop %v3989
    %v3991 = vmul.f32 %v3903, 1.442695
    %v3992 = vpow.pop %v3991
    %v3993 = vmul.f32 %v3904, 1.442695
    %v3994 = vpow.pop %v3993
    %v3995 = vmul.f32 %v3905, 1.442695
    %v3996 = vpow.pop %v3995
    %v3997 = vmul.f32 %v3906, 1.442695
    %v3998 = vpow.pop %v3997
    %v3999 = vmul.f32 %v3907, 1.442695
    %v4000 = vpow.pop %v3999
    %v4001 = vmul.f32 %v3908, 1.442695
    %v4002 = vpow.pop %v4001
    %v4003 = vmul.f32 %v3909, 1.442695
    %v4004 = vpow.pop %v4003
    %v4005 = vmul.f32 %v3910, 1.442695
    %v4006 = vpow.pop %v4005
    %v4007 = vmul.f32 %v3911, 1.442695
    %v4008 = vpow.pop %v4007
    %v4009 = vmul.f32 %v3912, 1.442695
    %v4010 = vpow.pop %v4009
    %v4011 = vmul.f32 %v3913, 1.442695
    %v4012 = vpow.pop %v4011
    %v4013 = vmul.f32 %v3914, 1.442695
    %v4014 = vpow.pop %v4013
    %v4015 = vmul.f32 %v3915, 1.442695
    %v4016 = vpow.pop %v4015
    %v4017 = vmul.f32 %v3916, 1.442695
    %v4018 = vpow.pop %v4017
    %v4019 = vmul.f32 %v3917, 1.442695
    %v4020 = vpow.pop %v4019
    %v4021 = vmul.f32 %v3918, 1.442695
    %v4022 = vpow.pop %v4021
    %v4023 = vmul.f32 %v3919, 1.442695
    %v4024 = vpow.pop %v4023
    %v4025 = vmul.f32 %v3920, 1.442695
    %v4026 = vpow.pop %v4025
    %v4027 = vmul.f32 %v3921, 1.442695
    %v4028 = vpow.pop %v4027
    %v4029 = vmul.f32 %v3922, 1.442695
    %v4030 = vpow.pop %v4029
    %v4031 = vmul.f32 %v3923, 1.442695
    %v4032 = vpow.pop %v4031
    %v4033 = vmul.f32 %v3924, 1.442695
    %v4034 = vpow.pop %v4033
    %v4035 = vmul.f32 %v3925, 1.442695
    %v4036 = vpow.pop %v4035
    %v4037 = vmul.f32 %v3926, 1.442695
    %v4038 = vpow.pop %v4037
    %v4039 = vmul.f32 %v3927, 1.442695
    %v4040 = vpow.pop %v4039
    %v4041 = vmul.f32 %v3928, 1.442695
    %v4042 = vpow.pop %v4041
    %v4043 = vmul.f32 %v3929, 1.442695
    %v4044 = vpow.pop %v4043
    %v4045 = vmul.f32 %v3930, 1.442695
    %v4046 = vpow.pop %v4045
    %v4047 = vmul.f32 %v3931, 1.442695
    %v4048 = vpow.pop %v4047
    %v4049 = vmul.f32 %v3932, 1.442695
    %v4050 = vpow.pop %v4049
    %v4051 = vmul.f32 %v3933, 1.442695
    %v4052 = vpow.pop %v4051
    %v4053 = vmul.f32 %v3934, 1.442695
    %v4054 = vpow.pop %v4053
    %v4055 = vmul.f32 %v3935, 1.442695
    %v4056 = vpow.pop %v4055
    %v4057 = vmul.f32 %v3936, 1.442695
    %v4058 = vpow.pop %v4057
    %v4059 = vmul.f32 %v3937, 1.442695
    %v4060 = vpow.pop %v4059
    %v4061 = vmul.f32 %v3938, 1.442695
    %v4062 = vpow.pop %v4061
    %v4063 = vmul.f32 %v3939, 1.442695
    %v4064 = vpow.pop %v4063
    %v4065 = vmul.f32 %v3940, 1.442695
    %v4066 = vpow.pop %v4065
    %v4067 = vmul.f32 %v3941, 1.442695
    %v4068 = vpow.pop %v4067
    %v4069 = vmul.f32 %v3942, 1.442695
    %v4070 = vpow.pop %v4069
    %v4071 = vadd.f32 %v3944, 1.0
    %v4072 = vadd.f32 %v3946, 1.0
    %v4073 = vadd.f32 %v3948, 1.0
    %v4074 = vadd.f32 %v3950, 1.0
    %v4075 = vadd.f32 %v3952, 1.0
    %v4076 = vadd.f32 %v3954, 1.0
    %v4077 = vadd.f32 %v3956, 1.0
    %v4078 = vadd.f32 %v3958, 1.0
    %v4079 = vadd.f32 %v3960, 1.0
    %v4080 = vadd.f32 %v3962, 1.0
    %v4081 = vadd.f32 %v3964, 1.0
    %v4082 = vadd.f32 %v3966, 1.0
    %v4083 = vadd.f32 %v3968, 1.0
    %v4084 = vadd.f32 %v3970, 1.0
    %v4085 = vadd.f32 %v3972, 1.0
    %v4086 = vadd.f32 %v3974, 1.0
    %v4087 = vadd.f32 %v3976, 1.0
    %v4088 = vadd.f32 %v3978, 1.0
    %v4089 = vadd.f32 %v3980, 1.0
    %v4090 = vadd.f32 %v3982, 1.0
    %v4091 = vadd.f32 %v3984, 1.0
    %v4092 = vadd.f32 %v3986, 1.0
    %v4093 = vadd.f32 %v3988, 1.0
    %v4094 = vadd.f32 %v3990, 1.0
    %v4095 = vadd.f32 %v3992, 1.0
    %v4096 = vadd.f32 %v3994, 1.0
    %v4097 = vadd.f32 %v3996, 1.0
    %v4098 = vadd.f32 %v3998, 1.0
    %v4099 = vadd.f32 %v4000, 1.0
    %v4100 = vadd.f32 %v4002, 1.0
    %v4101 = vadd.f32 %v4004, 1.0
    %v4102 = vadd.f32 %v4006, 1.0
    %v4103 = vadd.f32 %v4008, 1.0
    %v4104 = vadd.f32 %v4010, 1.0
    %v4105 = vadd.f32 %v4012, 1.0
    %v4106 = vadd.f32 %v4014, 1.0
    %v4107 = vadd.f32 %v4016, 1.0
    %v4108 = vadd.f32 %v4018, 1.0
    %v4109 = vadd.f32 %v4020, 1.0
    %v4110 = vadd.f32 %v4022, 1.0
    %v4111 = vadd.f32 %v4024, 1.0
    %v4112 = vadd.f32 %v4026, 1.0
    %v4113 = vadd.f32 %v4028, 1.0
    %v4114 = vadd.f32 %v4030, 1.0
    %v4115 = vadd.f32 %v4032, 1.0
    %v4116 = vadd.f32 %v4034, 1.0
    %v4117 = vadd.f32 %v4036, 1.0
    %v4118 = vadd.f32 %v4038, 1.0
    %v4119 = vadd.f32 %v4040, 1.0
    %v4120 = vadd.f32 %v4042, 1.0
    %v4121 = vadd.f32 %v4044, 1.0
    %v4122 = vadd.f32 %v4046, 1.0
    %v4123 = vadd.f32 %v4048, 1.0
    %v4124 = vadd.f32 %v4050, 1.0
    %v4125 = vadd.f32 %v4052, 1.0
    %v4126 = vadd.f32 %v4054, 1.0
    %v4127 = vadd.f32 %v4056, 1.0
    %v4128 = vadd.f32 %v4058, 1.0
    %v4129 = vadd.f32 %v4060, 1.0
    %v4130 = vadd.f32 %v4062, 1.0
    %v4131 = vadd.f32 %v4064, 1.0
    %v4132 = vadd.f32 %v4066, 1.0
    %v4133 = vadd.f32 %v4068, 1.0
    %v4134 = vadd.f32 %v4070, 1.0
    %v4135 = vrcp.pop %v4071
    %v4136 = vmul.f32 1.0, %v4135
    %v4137 = vrcp.pop %v4072
    %v4138 = vmul.f32 1.0, %v4137
    %v4139 = vrcp.pop %v4073
    %v4140 = vmul.f32 1.0, %v4139
    %v4141 = vrcp.pop %v4074
    %v4142 = vmul.f32 1.0, %v4141
    %v4143 = vrcp.pop %v4075
    %v4144 = vmul.f32 1.0, %v4143
    %v4145 = vrcp.pop %v4076
    %v4146 = vmul.f32 1.0, %v4145
    %v4147 = vrcp.pop %v4077
    %v4148 = vmul.f32 1.0, %v4147
    %v4149 = vrcp.pop %v4078
    %v4150 = vmul.f32 1.0, %v4149
    %v4151 = vrcp.pop %v4079
    %v4152 = vmul.f32 1.0, %v4151
    %v4153 = vrcp.pop %v4080
    %v4154 = vmul.f32 1.0, %v4153
    %v4155 = vrcp.pop %v4081
    %v4156 = vmul.f32 1.0, %v4155
    %v4157 = vrcp.pop %v4082
    %v4158 = vmul.f32 1.0, %v4157
    %v4159 = vrcp.pop %v4083
    %v4160 = vmul.f32 1.0, %v4159
    %v4161 = vrcp.pop %v4084
    %v4162 = vmul.f32 1.0, %v4161
    %v4163 = vrcp.pop %v4085
    %v4164 = vmul.f32 1.0, %v4163
    %v4165 = vrcp.pop %v4086
    %v4166 = vmul.f32 1.0, %v4165
    %v4167 = vrcp.pop %v4087
    %v4168 = vmul.f32 1.0, %v4167
    %v4169 = vrcp.pop %v4088
    %v4170 = vmul.f32 1.0, %v4169
    %v4171 = vrcp.pop %v4089
    %v4172 = vmul.f32 1.0, %v4171
    %v4173 = vrcp.pop %v4090
    %v4174 = vmul.f32 1.0, %v4173
    %v4175 = vrcp.pop %v4091
    %v4176 = vmul.f32 1.0, %v4175
    %v4177 = vrcp.pop %v4092
    %v4178 = vmul.f32 1.0, %v4177
    %v4179 = vrcp.pop %v4093
    %v4180 = vmul.f32 1.0, %v4179
    %v4181 = vrcp.pop %v4094
    %v4182 = vmul.f32 1.0, %v4181
    %v4183 = vrcp.pop %v4095
    %v4184 = vmul.f32 1.0, %v4183
    %v4185 = vrcp.pop %v4096
    %v4186 = vmul.f32 1.0, %v4185
    %v4187 = vrcp.pop %v4097
    %v4188 = vmul.f32 1.0, %v4187
    %v4189 = vrcp.pop %v4098
    %v4190 = vmul.f32 1.0, %v4189
    %v4191 = vrcp.pop %v4099
    %v4192 = vmul.f32 1.0, %v4191
    %v4193 = vrcp.pop %v4100
    %v4194 = vmul.f32 1.0, %v4193
    %v4195 = vrcp.pop %v4101
    %v4196 = vmul.f32 1.0, %v4195
    %v4197 = vrcp.pop %v4102
    %v4198 = vmul.f32 1.0, %v4197
    %v4199 = vrcp.pop %v4103
    %v4200 = vmul.f32 1.0, %v4199
    %v4201 = vrcp.pop %v4104
    %v4202 = vmul.f32 1.0, %v4201
    %v4203 = vrcp.pop %v4105
    %v4204 = vmul.f32 1.0, %v4203
    %v4205 = vrcp.pop %v4106
    %v4206 = vmul.f32 1.0, %v4205
    %v4207 = vrcp.pop %v4107
    %v4208 = vmul.f32 1.0, %v4207
    %v4209 = vrcp.pop %v4108
    %v4210 = vmul.f32 1.0, %v4209
    %v4211 = vrcp.pop %v4109
    %v4212 = vmul.f32 1.0, %v4211
    %v4213 = vrcp.pop %v4110
    %v4214 = vmul.f32 1.0, %v4213
    %v4215 = vrcp.pop %v4111
    %v4216 = vmul.f32 1.0, %v4215
    %v4217 = vrcp.pop %v4112
    %v4218 = vmul.f32 1.0, %v4217
    %v4219 = vrcp.pop %v4113
    %v4220 = vmul.f32 1.0, %v4219
    %v4221 = vrcp.pop %v4114
    %v4222 = vmul.f32 1.0, %v4221
    %v4223 = vrcp.pop %v4115
    %v4224 = vmul.f32 1.0, %v4223
    %v4225 = vrcp.pop %v4116
    %v4226 = vmul.f32 1.0, %v4225
    %v4227 = vrcp.pop %v4117
    %v4228 = vmul.f32 1.0, %v4227
    %v4229 = vrcp.pop %v4118
    %v4230 = vmul.f32 1.0, %v4229
    %v4231 = vrcp.pop %v4119
    %v4232 = vmul.f32 1.0, %v4231
    %v4233 = vrcp.pop %v4120
    %v4234 = vmul.f32 1.0, %v4233
    %v4235 = vrcp.pop %v4121
    %v4236 = vmul.f32 1.0, %v4235
    %v4237 = vrcp.pop %v4122
    %v4238 = vmul.f32 1.0, %v4237
    %v4239 = vrcp.pop %v4123
    %v4240 = vmul.f32 1.0, %v4239
    %v4241 = vrcp.pop %v4124
    %v4242 = vmul.f32 1.0, %v4241
    %v4243 = vrcp.pop %v4125
    %v4244 = vmul.f32 1.0, %v4243
    %v4245 = vrcp.pop %v4126
    %v4246 = vmul.f32 1.0, %v4245
    %v4247 = vrcp.pop %v4127
    %v4248 = vmul.f32 1.0, %v4247
    %v4249 = vrcp.pop %v4128
    %v4250 = vmul.f32 1.0, %v4249
    %v4251 = vrcp.pop %v4129
    %v4252 = vmul.f32 1.0, %v4251
    %v4253 = vrcp.pop %v4130
    %v4254 = vmul.f32 1.0, %v4253
    %v4255 = vrcp.pop %v4131
    %v4256 = vmul.f32 1.0, %v4255
    %v4257 = vrcp.pop %v4132
    %v4258 = vmul.f32 1.0, %v4257
    %v4259 = vrcp.pop %v4133
    %v4260 = vmul.f32 1.0, %v4259
    %v4261 = vrcp.pop %v4134
    %v4262 = vmul.f32 1.0, %v4261
    %v4263 = vmul.f32 %v3721, %v4136
    %v4264 = vmul.f32 %v3723, %v4138
    %v4265 = vmul.f32 %v3725, %v4140
    %v4266 = vmul.f32 %v3727, %v4142
    %v4267 = vmul.f32 %v3731, %v4144
    %v4268 = vmul.f32 %v3733, %v4146
    %v4269 = vmul.f32 %v3735, %v4148
    %v4270 = vmul.f32 %v3737, %v4150
    %v4271 = vmul.f32 %v3741, %v4152
    %v4272 = vmul.f32 %v3743, %v4154
    %v4273 = vmul.f32 %v3745, %v4156
    %v4274 = vmul.f32 %v3747, %v4158
    %v4275 = vmul.f32 %v3751, %v4160
    %v4276 = vmul.f32 %v3753, %v4162
    %v4277 = vmul.f32 %v3755, %v4164
    %v4278 = vmul.f32 %v3757, %v4166
    %v4279 = vmul.f32 %v3761, %v4168
    %v4280 = vmul.f32 %v3763, %v4170
    %v4281 = vmul.f32 %v3765, %v4172
    %v4282 = vmul.f32 %v3767, %v4174
    %v4283 = vmul.f32 %v3771, %v4176
    %v4284 = vmul.f32 %v3773, %v4178
    %v4285 = vmul.f32 %v3775, %v4180
    %v4286 = vmul.f32 %v3777, %v4182
    %v4287 = vmul.f32 %v3781, %v4184
    %v4288 = vmul.f32 %v3783, %v4186
    %v4289 = vmul.f32 %v3785, %v4188
    %v4290 = vmul.f32 %v3787, %v4190
    %v4291 = vmul.f32 %v3791, %v4192
    %v4292 = vmul.f32 %v3793, %v4194
    %v4293 = vmul.f32 %v3795, %v4196
    %v4294 = vmul.f32 %v3797, %v4198
    %v4295 = vmul.f32 %v3801, %v4200
    %v4296 = vmul.f32 %v3803, %v4202
    %v4297 = vmul.f32 %v3805, %v4204
    %v4298 = vmul.f32 %v3807, %v4206
    %v4299 = vmul.f32 %v3811, %v4208
    %v4300 = vmul.f32 %v3813, %v4210
    %v4301 = vmul.f32 %v3815, %v4212
    %v4302 = vmul.f32 %v3817, %v4214
    %v4303 = vmul.f32 %v3821, %v4216
    %v4304 = vmul.f32 %v3823, %v4218
    %v4305 = vmul.f32 %v3825, %v4220
    %v4306 = vmul.f32 %v3827, %v4222
    %v4307 = vmul.f32 %v3831, %v4224
    %v4308 = vmul.f32 %v3833, %v4226
    %v4309 = vmul.f32 %v3835, %v4228
    %v4310 = vmul.f32 %v3837, %v4230
    %v4311 = vmul.f32 %v3841, %v4232
    %v4312 = vmul.f32 %v3843, %v4234
    %v4313 = vmul.f32 %v3845, %v4236
    %v4314 = vmul.f32 %v3847, %v4238
    %v4315 = vmul.f32 %v3851, %v4240
    %v4316 = vmul.f32 %v3853, %v4242
    %v4317 = vmul.f32 %v3855, %v4244
    %v4318 = vmul.f32 %v3857, %v4246
    %v4319 = vmul.f32 %v3861, %v4248
    %v4320 = vmul.f32 %v3863, %v4250
    %v4321 = vmul.f32 %v3865, %v4252
    %v4322 = vmul.f32 %v3867, %v4254
    %v4323 = vmul.f32 %v3871, %v4256
    %v4324 = vmul.f32 %v3873, %v4258
    %v4325 = vmul.f32 %v3875, %v4260
    %v4326 = vmul.f32 %v3877, %v4262
    %v4327 = vadd.f32 %v4263, %v4264
    %4328 = vadd.xlane.f32.xlu0 %v4327
    %v4329 = vpop.xlane.xlu0 %4328
    %v4330 = vadd.f32 %v4265, %v4266
    %4331 = vadd.xlane.f32.xlu0 %v4330
    %v4332 = vpop.xlane.xlu0 %4331
    %v4333 = vadd.f32 %v4267, %v4268
    %4334 = vadd.xlane.f32.xlu0 %v4333
    %v4335 = vpop.xlane.xlu0 %4334
    %v4336 = vadd.f32 %v4269, %v4270
    %4337 = vadd.xlane.f32.xlu0 %v4336
    %v4338 = vpop.xlane.xlu0 %4337
    %v4339 = vadd.f32 %v4271, %v4272
    %4340 = vadd.xlane.f32.xlu0 %v4339
    %v4341 = vpop.xlane.xlu0 %4340
    %v4342 = vadd.f32 %v4273, %v4274
    %4343 = vadd.xlane.f32.xlu0 %v4342
    %v4344 = vpop.xlane.xlu0 %4343
    %v4345 = vadd.f32 %v4275, %v4276
    %4346 = vadd.xlane.f32.xlu0 %v4345
    %v4347 = vpop.xlane.xlu0 %4346
    %v4348 = vadd.f32 %v4277, %v4278
    %4349 = vadd.xlane.f32.xlu0 %v4348
    %v4350 = vpop.xlane.xlu0 %4349
    %v4351 = vadd.f32 %v4279, %v4280
    %4352 = vadd.xlane.f32.xlu0 %v4351
    %v4353 = vpop.xlane.xlu0 %4352
    %v4354 = vadd.f32 %v4281, %v4282
    %4355 = vadd.xlane.f32.xlu0 %v4354
    %v4356 = vpop.xlane.xlu0 %4355
    %v4357 = vadd.f32 %v4283, %v4284
    %4358 = vadd.xlane.f32.xlu0 %v4357
    %v4359 = vpop.xlane.xlu0 %4358
    %v4360 = vadd.f32 %v4285, %v4286
    %4361 = vadd.xlane.f32.xlu0 %v4360
    %v4362 = vpop.xlane.xlu0 %4361
    %v4363 = vadd.f32 %v4287, %v4288
    %4364 = vadd.xlane.f32.xlu0 %v4363
    %v4365 = vpop.xlane.xlu0 %4364
    %v4366 = vadd.f32 %v4289, %v4290
    %4367 = vadd.xlane.f32.xlu0 %v4366
    %v4368 = vpop.xlane.xlu0 %4367
    %v4369 = vadd.f32 %v4291, %v4292
    %4370 = vadd.xlane.f32.xlu0 %v4369
    %v4371 = vpop.xlane.xlu0 %4370
    %v4372 = vadd.f32 %v4293, %v4294
    %4373 = vadd.xlane.f32.xlu0 %v4372
    %v4374 = vpop.xlane.xlu0 %4373
    %v4375 = vadd.f32 %v4295, %v4296
    %4376 = vadd.xlane.f32.xlu0 %v4375
    %v4377 = vpop.xlane.xlu0 %4376
    %v4378 = vadd.f32 %v4297, %v4298
    %4379 = vadd.xlane.f32.xlu0 %v4378
    %v4380 = vpop.xlane.xlu0 %4379
    %v4381 = vadd.f32 %v4299, %v4300
    %4382 = vadd.xlane.f32.xlu0 %v4381
    %v4383 = vpop.xlane.xlu0 %4382
    %v4384 = vadd.f32 %v4301, %v4302
    %4385 = vadd.xlane.f32.xlu0 %v4384
    %v4386 = vpop.xlane.xlu0 %4385
    %v4387 = vadd.f32 %v4303, %v4304
    %4388 = vadd.xlane.f32.xlu0 %v4387
    %v4389 = vpop.xlane.xlu0 %4388
    %v4390 = vadd.f32 %v4305, %v4306
    %4391 = vadd.xlane.f32.xlu0 %v4390
    %v4392 = vpop.xlane.xlu0 %4391
    %v4393 = vadd.f32 %v4307, %v4308
    %4394 = vadd.xlane.f32.xlu0 %v4393
    %v4395 = vpop.xlane.xlu0 %4394
    %v4396 = vadd.f32 %v4309, %v4310
    %4397 = vadd.xlane.f32.xlu0 %v4396
    %v4398 = vpop.xlane.xlu0 %4397
    %v4399 = vadd.f32 %v4311, %v4312
    %4400 = vadd.xlane.f32.xlu0 %v4399
    %v4401 = vpop.xlane.xlu0 %4400
    %v4402 = vadd.f32 %v4313, %v4314
    %4403 = vadd.xlane.f32.xlu0 %v4402
    %v4404 = vpop.xlane.xlu0 %4403
    %v4405 = vadd.f32 %v4315, %v4316
    %4406 = vadd.xlane.f32.xlu0 %v4405
    %v4407 = vpop.xlane.xlu0 %4406
    %v4408 = vadd.f32 %v4317, %v4318
    %4409 = vadd.xlane.f32.xlu0 %v4408
    %v4410 = vpop.xlane.xlu0 %4409
    %v4411 = vadd.f32 %v4319, %v4320
    %4412 = vadd.xlane.f32.xlu0 %v4411
    %v4413 = vpop.xlane.xlu0 %4412
    %v4414 = vadd.f32 %v4321, %v4322
    %4415 = vadd.xlane.f32.xlu0 %v4414
    %v4416 = vpop.xlane.xlu0 %4415
    %v4417 = vadd.f32 %v4323, %v4324
    %4418 = vadd.xlane.f32.xlu0 %v4417
    %v4419 = vpop.xlane.xlu0 %4418
    %v4420 = vadd.f32 %v4325, %v4326
    %4421 = vadd.xlane.f32.xlu0 %v4420
    %v4422 = vpop.xlane.xlu0 %4421
    %v4423 = vmul.f32 %v4329, %v1193
    %v4424 = vmul.f32 %v4332, %v1193
    %v4425 = vmul.f32 %v4335, %v1193
    %v4426 = vmul.f32 %v4338, %v1193
    %v4427 = vmul.f32 %v4341, %v1193
    %v4428 = vmul.f32 %v4344, %v1193
    %v4429 = vmul.f32 %v4347, %v1193
    %v4430 = vmul.f32 %v4350, %v1193
    %v4431 = vmul.f32 %v4353, %v1193
    %v4432 = vmul.f32 %v4356, %v1193
    %v4433 = vmul.f32 %v4359, %v1193
    %v4434 = vmul.f32 %v4362, %v1193
    %v4435 = vmul.f32 %v4365, %v1193
    %v4436 = vmul.f32 %v4368, %v1193
    %v4437 = vmul.f32 %v4371, %v1193
    %v4438 = vmul.f32 %v4374, %v1193
    %v4439 = vmul.f32 %v4377, %v1193
    %v4440 = vmul.f32 %v4380, %v1193
    %v4441 = vmul.f32 %v4383, %v1193
    %v4442 = vmul.f32 %v4386, %v1193
    %v4443 = vmul.f32 %v4389, %v1193
    %v4444 = vmul.f32 %v4392, %v1193
    %v4445 = vmul.f32 %v4395, %v1193
    %v4446 = vmul.f32 %v4398, %v1193
    %v4447 = vmul.f32 %v4401, %v1193
    %v4448 = vmul.f32 %v4404, %v1193
    %v4449 = vmul.f32 %v4407, %v1193
    %v4450 = vmul.f32 %v4410, %v1193
    %v4451 = vmul.f32 %v4413, %v1193
    %v4452 = vmul.f32 %v4416, %v1193
    %v4453 = vmul.f32 %v4419, %v1193
    %v4454 = vmul.f32 %v4422, %v1193
    %v4455 = vsub.f32 %v4263, %v4423
    %v4456 = vsub.f32 %v4264, %v4423
    %v4457 = vsub.f32 %v4265, %v4424
    %v4458 = vsub.f32 %v4266, %v4424
    %v4459 = vsub.f32 %v4267, %v4425
    %v4460 = vsub.f32 %v4268, %v4425
    %v4461 = vsub.f32 %v4269, %v4426
    %v4462 = vsub.f32 %v4270, %v4426
    %v4463 = vsub.f32 %v4271, %v4427
    %v4464 = vsub.f32 %v4272, %v4427
    %v4465 = vsub.f32 %v4273, %v4428
    %v4466 = vsub.f32 %v4274, %v4428
    %v4467 = vsub.f32 %v4275, %v4429
    %v4468 = vsub.f32 %v4276, %v4429
    %v4469 = vsub.f32 %v4277, %v4430
    %v4470 = vsub.f32 %v4278, %v4430
    %v4471 = vsub.f32 %v4279, %v4431
    %v4472 = vsub.f32 %v4280, %v4431
    %v4473 = vsub.f32 %v4281, %v4432
    %v4474 = vsub.f32 %v4282, %v4432
    %v4475 = vsub.f32 %v4283, %v4433
    %v4476 = vsub.f32 %v4284, %v4433
    %v4477 = vsub.f32 %v4285, %v4434
    %v4478 = vsub.f32 %v4286, %v4434
    %v4479 = vsub.f32 %v4287, %v4435
    %v4480 = vsub.f32 %v4288, %v4435
    %v4481 = vsub.f32 %v4289, %v4436
    %v4482 = vsub.f32 %v4290, %v4436
    %v4483 = vsub.f32 %v4291, %v4437
    %v4484 = vsub.f32 %v4292, %v4437
    %v4485 = vsub.f32 %v4293, %v4438
    %v4486 = vsub.f32 %v4294, %v4438
    %v4487 = vsub.f32 %v4295, %v4439
    %v4488 = vsub.f32 %v4296, %v4439
    %v4489 = vsub.f32 %v4297, %v4440
    %v4490 = vsub.f32 %v4298, %v4440
    %v4491 = vsub.f32 %v4299, %v4441
    %v4492 = vsub.f32 %v4300, %v4441
    %v4493 = vsub.f32 %v4301, %v4442
    %v4494 = vsub.f32 %v4302, %v4442
    %v4495 = vsub.f32 %v4303, %v4443
    %v4496 = vsub.f32 %v4304, %v4443
    %v4497 = vsub.f32 %v4305, %v4444
    %v4498 = vsub.f32 %v4306, %v4444
    %v4499 = vsub.f32 %v4307, %v4445
    %v4500 = vsub.f32 %v4308, %v4445
    %v4501 = vsub.f32 %v4309, %v4446
    %v4502 = vsub.f32 %v4310, %v4446
    %v4503 = vsub.f32 %v4311, %v4447
    %v4504 = vsub.f32 %v4312, %v4447
    %v4505 = vsub.f32 %v4313, %v4448
    %v4506 = vsub.f32 %v4314, %v4448
    %v4507 = vsub.f32 %v4315, %v4449
    %v4508 = vsub.f32 %v4316, %v4449
    %v4509 = vsub.f32 %v4317, %v4450
    %v4510 = vsub.f32 %v4318, %v4450
    %v4511 = vsub.f32 %v4319, %v4451
    %v4512 = vsub.f32 %v4320, %v4451
    %v4513 = vsub.f32 %v4321, %v4452
    %v4514 = vsub.f32 %v4322, %v4452
    %v4515 = vsub.f32 %v4323, %v4453
    %v4516 = vsub.f32 %v4324, %v4453
    %v4517 = vsub.f32 %v4325, %v4454
    %v4518 = vsub.f32 %v4326, %v4454
    %v4519 = vmul.f32 %v4455, %v4455
    %v4520 = vmul.f32 %v4456, %v4456
    %v4521 = vmul.f32 %v4457, %v4457
    %v4522 = vmul.f32 %v4458, %v4458
    %v4523 = vmul.f32 %v4459, %v4459
    %v4524 = vmul.f32 %v4460, %v4460
    %v4525 = vmul.f32 %v4461, %v4461
    %v4526 = vmul.f32 %v4462, %v4462
    %v4527 = vmul.f32 %v4463, %v4463
    %v4528 = vmul.f32 %v4464, %v4464
    %v4529 = vmul.f32 %v4465, %v4465
    %v4530 = vmul.f32 %v4466, %v4466
    %v4531 = vmul.f32 %v4467, %v4467
    %v4532 = vmul.f32 %v4468, %v4468
    %v4533 = vmul.f32 %v4469, %v4469
    %v4534 = vmul.f32 %v4470, %v4470
    %v4535 = vmul.f32 %v4471, %v4471
    %v4536 = vmul.f32 %v4472, %v4472
    %v4537 = vmul.f32 %v4473, %v4473
    %v4538 = vmul.f32 %v4474, %v4474
    %v4539 = vmul.f32 %v4475, %v4475
    %v4540 = vmul.f32 %v4476, %v4476
    %v4541 = vmul.f32 %v4477, %v4477
    %v4542 = vmul.f32 %v4478, %v4478
    %v4543 = vmul.f32 %v4479, %v4479
    %v4544 = vmul.f32 %v4480, %v4480
    %v4545 = vmul.f32 %v4481, %v4481
    %v4546 = vmul.f32 %v4482, %v4482
    %v4547 = vmul.f32 %v4483, %v4483
    %v4548 = vmul.f32 %v4484, %v4484
    %v4549 = vmul.f32 %v4485, %v4485
    %v4550 = vmul.f32 %v4486, %v4486
    %v4551 = vmul.f32 %v4487, %v4487
    %v4552 = vmul.f32 %v4488, %v4488
    %v4553 = vmul.f32 %v4489, %v4489
    %v4554 = vmul.f32 %v4490, %v4490
    %v4555 = vmul.f32 %v4491, %v4491
    %v4556 = vmul.f32 %v4492, %v4492
    %v4557 = vmul.f32 %v4493, %v4493
    %v4558 = vmul.f32 %v4494, %v4494
    %v4559 = vmul.f32 %v4495, %v4495
    %v4560 = vmul.f32 %v4496, %v4496
    %v4561 = vmul.f32 %v4497, %v4497
    %v4562 = vmul.f32 %v4498, %v4498
    %v4563 = vmul.f32 %v4499, %v4499
    %v4564 = vmul.f32 %v4500, %v4500
    %v4565 = vmul.f32 %v4501, %v4501
    %v4566 = vmul.f32 %v4502, %v4502
    %v4567 = vmul.f32 %v4503, %v4503
    %v4568 = vmul.f32 %v4504, %v4504
    %v4569 = vmul.f32 %v4505, %v4505
    %v4570 = vmul.f32 %v4506, %v4506
    %v4571 = vmul.f32 %v4507, %v4507
    %v4572 = vmul.f32 %v4508, %v4508
    %v4573 = vmul.f32 %v4509, %v4509
    %v4574 = vmul.f32 %v4510, %v4510
    %v4575 = vmul.f32 %v4511, %v4511
    %v4576 = vmul.f32 %v4512, %v4512
    %v4577 = vmul.f32 %v4513, %v4513
    %v4578 = vmul.f32 %v4514, %v4514
    %v4579 = vmul.f32 %v4515, %v4515
    %v4580 = vmul.f32 %v4516, %v4516
    %v4581 = vmul.f32 %v4517, %v4517
    %v4582 = vmul.f32 %v4518, %v4518
    %v4583 = vadd.f32 %v4519, %v4520
    %4584 = vadd.xlane.f32.xlu0 %v4583
    %v4585 = vpop.xlane.xlu0 %4584
    %v4586 = vadd.f32 %v4521, %v4522
    %4587 = vadd.xlane.f32.xlu0 %v4586
    %v4588 = vpop.xlane.xlu0 %4587
    %v4589 = vadd.f32 %v4523, %v4524
    %4590 = vadd.xlane.f32.xlu0 %v4589
    %v4591 = vpop.xlane.xlu0 %4590
    %v4592 = vadd.f32 %v4525, %v4526
    %4593 = vadd.xlane.f32.xlu0 %v4592
    %v4594 = vpop.xlane.xlu0 %4593
    %v4595 = vadd.f32 %v4527, %v4528
    %4596 = vadd.xlane.f32.xlu0 %v4595
    %v4597 = vpop.xlane.xlu0 %4596
    %v4598 = vadd.f32 %v4529, %v4530
    %4599 = vadd.xlane.f32.xlu0 %v4598
    %v4600 = vpop.xlane.xlu0 %4599
    %v4601 = vadd.f32 %v4531, %v4532
    %4602 = vadd.xlane.f32.xlu0 %v4601
    %v4603 = vpop.xlane.xlu0 %4602
    %v4604 = vadd.f32 %v4533, %v4534
    %4605 = vadd.xlane.f32.xlu0 %v4604
    %v4606 = vpop.xlane.xlu0 %4605
    %v4607 = vadd.f32 %v4535, %v4536
    %4608 = vadd.xlane.f32.xlu0 %v4607
    %v4609 = vpop.xlane.xlu0 %4608
    %v4610 = vadd.f32 %v4537, %v4538
    %4611 = vadd.xlane.f32.xlu0 %v4610
    %v4612 = vpop.xlane.xlu0 %4611
    %v4613 = vadd.f32 %v4539, %v4540
    %4614 = vadd.xlane.f32.xlu0 %v4613
    %v4615 = vpop.xlane.xlu0 %4614
    %v4616 = vadd.f32 %v4541, %v4542
    %4617 = vadd.xlane.f32.xlu0 %v4616
    %v4618 = vpop.xlane.xlu0 %4617
    %v4619 = vadd.f32 %v4543, %v4544
    %4620 = vadd.xlane.f32.xlu0 %v4619
    %v4621 = vpop.xlane.xlu0 %4620
    %v4622 = vadd.f32 %v4545, %v4546
    %4623 = vadd.xlane.f32.xlu0 %v4622
    %v4624 = vpop.xlane.xlu0 %4623
    %v4625 = vadd.f32 %v4547, %v4548
    %4626 = vadd.xlane.f32.xlu0 %v4625
    %v4627 = vpop.xlane.xlu0 %4626
    %v4628 = vadd.f32 %v4549, %v4550
    %4629 = vadd.xlane.f32.xlu0 %v4628
    %v4630 = vpop.xlane.xlu0 %4629
    %v4631 = vadd.f32 %v4551, %v4552
    %4632 = vadd.xlane.f32.xlu0 %v4631
    %v4633 = vpop.xlane.xlu0 %4632
    %v4634 = vadd.f32 %v4553, %v4554
    %4635 = vadd.xlane.f32.xlu0 %v4634
    %v4636 = vpop.xlane.xlu0 %4635
    %v4637 = vadd.f32 %v4555, %v4556
    %4638 = vadd.xlane.f32.xlu0 %v4637
    %v4639 = vpop.xlane.xlu0 %4638
    %v4640 = vadd.f32 %v4557, %v4558
    %4641 = vadd.xlane.f32.xlu0 %v4640
    %v4642 = vpop.xlane.xlu0 %4641
    %v4643 = vadd.f32 %v4559, %v4560
    %4644 = vadd.xlane.f32.xlu0 %v4643
    %v4645 = vpop.xlane.xlu0 %4644
    %v4646 = vadd.f32 %v4561, %v4562
    %4647 = vadd.xlane.f32.xlu0 %v4646
    %v4648 = vpop.xlane.xlu0 %4647
    %v4649 = vadd.f32 %v4563, %v4564
    %4650 = vadd.xlane.f32.xlu0 %v4649
    %v4651 = vpop.xlane.xlu0 %4650
    %v4652 = vadd.f32 %v4565, %v4566
    %4653 = vadd.xlane.f32.xlu0 %v4652
    %v4654 = vpop.xlane.xlu0 %4653
    %v4655 = vadd.f32 %v4567, %v4568
    %4656 = vadd.xlane.f32.xlu0 %v4655
    %v4657 = vpop.xlane.xlu0 %4656
    %v4658 = vadd.f32 %v4569, %v4570
    %4659 = vadd.xlane.f32.xlu0 %v4658
    %v4660 = vpop.xlane.xlu0 %4659
    %v4661 = vadd.f32 %v4571, %v4572
    %4662 = vadd.xlane.f32.xlu0 %v4661
    %v4663 = vpop.xlane.xlu0 %4662
    %v4664 = vadd.f32 %v4573, %v4574
    %4665 = vadd.xlane.f32.xlu0 %v4664
    %v4666 = vpop.xlane.xlu0 %4665
    %v4667 = vadd.f32 %v4575, %v4576
    %4668 = vadd.xlane.f32.xlu0 %v4667
    %v4669 = vpop.xlane.xlu0 %4668
    %v4670 = vadd.f32 %v4577, %v4578
    %4671 = vadd.xlane.f32.xlu0 %v4670
    %v4672 = vpop.xlane.xlu0 %4671
    %v4673 = vadd.f32 %v4579, %v4580
    %4674 = vadd.xlane.f32.xlu0 %v4673
    %v4675 = vpop.xlane.xlu0 %4674
    %v4676 = vadd.f32 %v4581, %v4582
    %4677 = vadd.xlane.f32.xlu0 %v4676
    %v4678 = vpop.xlane.xlu0 %4677
    %v4679 = vmul.f32 %v4585, %v1193
    %v4680 = vmul.f32 %v4588, %v1193
    %v4681 = vmul.f32 %v4591, %v1193
    %v4682 = vmul.f32 %v4594, %v1193
    %v4683 = vmul.f32 %v4597, %v1193
    %v4684 = vmul.f32 %v4600, %v1193
    %v4685 = vmul.f32 %v4603, %v1193
    %v4686 = vmul.f32 %v4606, %v1193
    %v4687 = vmul.f32 %v4609, %v1193
    %v4688 = vmul.f32 %v4612, %v1193
    %v4689 = vmul.f32 %v4615, %v1193
    %v4690 = vmul.f32 %v4618, %v1193
    %v4691 = vmul.f32 %v4621, %v1193
    %v4692 = vmul.f32 %v4624, %v1193
    %v4693 = vmul.f32 %v4627, %v1193
    %v4694 = vmul.f32 %v4630, %v1193
    %v4695 = vmul.f32 %v4633, %v1193
    %v4696 = vmul.f32 %v4636, %v1193
    %v4697 = vmul.f32 %v4639, %v1193
    %v4698 = vmul.f32 %v4642, %v1193
    %v4699 = vmul.f32 %v4645, %v1193
    %v4700 = vmul.f32 %v4648, %v1193
    %v4701 = vmul.f32 %v4651, %v1193
    %v4702 = vmul.f32 %v4654, %v1193
    %v4703 = vmul.f32 %v4657, %v1193
    %v4704 = vmul.f32 %v4660, %v1193
    %v4705 = vmul.f32 %v4663, %v1193
    %v4706 = vmul.f32 %v4666, %v1193
    %v4707 = vmul.f32 %v4669, %v1193
    %v4708 = vmul.f32 %v4672, %v1193
    %v4709 = vmul.f32 %v4675, %v1193
    %v4710 = vmul.f32 %v4678, %v1193
    %v4711 = vadd.f32 %v4679, 1e-05
    %v4712 = vadd.f32 %v4680, 1e-05
    %v4713 = vadd.f32 %v4681, 1e-05
    %v4714 = vadd.f32 %v4682, 1e-05
    %v4715 = vadd.f32 %v4683, 1e-05
    %v4716 = vadd.f32 %v4684, 1e-05
    %v4717 = vadd.f32 %v4685, 1e-05
    %v4718 = vadd.f32 %v4686, 1e-05
    %v4719 = vadd.f32 %v4687, 1e-05
    %v4720 = vadd.f32 %v4688, 1e-05
    %v4721 = vadd.f32 %v4689, 1e-05
    %v4722 = vadd.f32 %v4690, 1e-05
    %v4723 = vadd.f32 %v4691, 1e-05
    %v4724 = vadd.f32 %v4692, 1e-05
    %v4725 = vadd.f32 %v4693, 1e-05
    %v4726 = vadd.f32 %v4694, 1e-05
    %v4727 = vadd.f32 %v4695, 1e-05
    %v4728 = vadd.f32 %v4696, 1e-05
    %v4729 = vadd.f32 %v4697, 1e-05
    %v4730 = vadd.f32 %v4698, 1e-05
    %v4731 = vadd.f32 %v4699, 1e-05
    %v4732 = vadd.f32 %v4700, 1e-05
    %v4733 = vadd.f32 %v4701, 1e-05
    %v4734 = vadd.f32 %v4702, 1e-05
    %v4735 = vadd.f32 %v4703, 1e-05
    %v4736 = vadd.f32 %v4704, 1e-05
    %v4737 = vadd.f32 %v4705, 1e-05
    %v4738 = vadd.f32 %v4706, 1e-05
    %v4739 = vadd.f32 %v4707, 1e-05
    %v4740 = vadd.f32 %v4708, 1e-05
    %v4741 = vadd.f32 %v4709, 1e-05
    %v4742 = vadd.f32 %v4710, 1e-05
    %v4743 = vrsqrt.pop %v4711
    %v4744 = vrsqrt.pop %v4712
    %v4745 = vrsqrt.pop %v4713
    %v4746 = vrsqrt.pop %v4714
    %v4747 = vrsqrt.pop %v4715
    %v4748 = vrsqrt.pop %v4716
    %v4749 = vrsqrt.pop %v4717
    %v4750 = vrsqrt.pop %v4718
    %v4751 = vrsqrt.pop %v4719
    %v4752 = vrsqrt.pop %v4720
    %v4753 = vrsqrt.pop %v4721
    %v4754 = vrsqrt.pop %v4722
    %v4755 = vrsqrt.pop %v4723
    %v4756 = vrsqrt.pop %v4724
    %v4757 = vrsqrt.pop %v4725
    %v4758 = vrsqrt.pop %v4726
    %v4759 = vrsqrt.pop %v4727
    %v4760 = vrsqrt.pop %v4728
    %v4761 = vrsqrt.pop %v4729
    %v4762 = vrsqrt.pop %v4730
    %v4763 = vrsqrt.pop %v4731
    %v4764 = vrsqrt.pop %v4732
    %v4765 = vrsqrt.pop %v4733
    %v4766 = vrsqrt.pop %v4734
    %v4767 = vrsqrt.pop %v4735
    %v4768 = vrsqrt.pop %v4736
    %v4769 = vrsqrt.pop %v4737
    %v4770 = vrsqrt.pop %v4738
    %v4771 = vrsqrt.pop %v4739
    %v4772 = vrsqrt.pop %v4740
    %v4773 = vrsqrt.pop %v4741
    %v4774 = vrsqrt.pop %v4742
    %v4775 = vmul.f32 %v4455, %v4743
    %v4776 = vmul.f32 %v4456, %v4743
    %v4777 = vmul.f32 %v4457, %v4744
    %v4778 = vmul.f32 %v4458, %v4744
    %v4779 = vmul.f32 %v4459, %v4745
    %v4780 = vmul.f32 %v4460, %v4745
    %v4781 = vmul.f32 %v4461, %v4746
    %v4782 = vmul.f32 %v4462, %v4746
    %v4783 = vmul.f32 %v4463, %v4747
    %v4784 = vmul.f32 %v4464, %v4747
    %v4785 = vmul.f32 %v4465, %v4748
    %v4786 = vmul.f32 %v4466, %v4748
    %v4787 = vmul.f32 %v4467, %v4749
    %v4788 = vmul.f32 %v4468, %v4749
    %v4789 = vmul.f32 %v4469, %v4750
    %v4790 = vmul.f32 %v4470, %v4750
    %v4791 = vmul.f32 %v4471, %v4751
    %v4792 = vmul.f32 %v4472, %v4751
    %v4793 = vmul.f32 %v4473, %v4752
    %v4794 = vmul.f32 %v4474, %v4752
    %v4795 = vmul.f32 %v4475, %v4753
    %v4796 = vmul.f32 %v4476, %v4753
    %v4797 = vmul.f32 %v4477, %v4754
    %v4798 = vmul.f32 %v4478, %v4754
    %v4799 = vmul.f32 %v4479, %v4755
    %v4800 = vmul.f32 %v4480, %v4755
    %v4801 = vmul.f32 %v4481, %v4756
    %v4802 = vmul.f32 %v4482, %v4756
    %v4803 = vmul.f32 %v4483, %v4757
    %v4804 = vmul.f32 %v4484, %v4757
    %v4805 = vmul.f32 %v4485, %v4758
    %v4806 = vmul.f32 %v4486, %v4758
    %v4807 = vmul.f32 %v4487, %v4759
    %v4808 = vmul.f32 %v4488, %v4759
    %v4809 = vmul.f32 %v4489, %v4760
    %v4810 = vmul.f32 %v4490, %v4760
    %v4811 = vmul.f32 %v4491, %v4761
    %v4812 = vmul.f32 %v4492, %v4761
    %v4813 = vmul.f32 %v4493, %v4762
    %v4814 = vmul.f32 %v4494, %v4762
    %v4815 = vmul.f32 %v4495, %v4763
    %v4816 = vmul.f32 %v4496, %v4763
    %v4817 = vmul.f32 %v4497, %v4764
    %v4818 = vmul.f32 %v4498, %v4764
    %v4819 = vmul.f32 %v4499, %v4765
    %v4820 = vmul.f32 %v4500, %v4765
    %v4821 = vmul.f32 %v4501, %v4766
    %v4822 = vmul.f32 %v4502, %v4766
    %v4823 = vmul.f32 %v4503, %v4767
    %v4824 = vmul.f32 %v4504, %v4767
    %v4825 = vmul.f32 %v4505, %v4768
    %v4826 = vmul.f32 %v4506, %v4768
    %v4827 = vmul.f32 %v4507, %v4769
    %v4828 = vmul.f32 %v4508, %v4769
    %v4829 = vmul.f32 %v4509, %v4770
    %v4830 = vmul.f32 %v4510, %v4770
    %v4831 = vmul.f32 %v4511, %v4771
    %v4832 = vmul.f32 %v4512, %v4771
    %v4833 = vmul.f32 %v4513, %v4772
    %v4834 = vmul.f32 %v4514, %v4772
    %v4835 = vmul.f32 %v4515, %v4773
    %v4836 = vmul.f32 %v4516, %v4773
    %v4837 = vmul.f32 %v4517, %v4774
    %v4838 = vmul.f32 %v4518, %v4774
    %v4839 = vmul.f32 %v4775, %v3144
    %v4840 = vmul.f32 %v4776, %v3148
    %v4841 = vmul.f32 %v4777, %v3144
    %v4842 = vmul.f32 %v4778, %v3148
    %v4843 = vmul.f32 %v4779, %v3144
    %v4844 = vmul.f32 %v4780, %v3148
    %v4845 = vmul.f32 %v4781, %v3144
    %v4846 = vmul.f32 %v4782, %v3148
    %v4847 = vmul.f32 %v4783, %v3144
    %v4848 = vmul.f32 %v4784, %v3148
    %v4849 = vmul.f32 %v4785, %v3144
    %v4850 = vmul.f32 %v4786, %v3148
    %v4851 = vmul.f32 %v4787, %v3144
    %v4852 = vmul.f32 %v4788, %v3148
    %v4853 = vmul.f32 %v4789, %v3144
    %v4854 = vmul.f32 %v4790, %v3148
    %v4855 = vmul.f32 %v4791, %v3144
    %v4856 = vmul.f32 %v4792, %v3148
    %v4857 = vmul.f32 %v4793, %v3144
    %v4858 = vmul.f32 %v4794, %v3148
    %v4859 = vmul.f32 %v4795, %v3144
    %v4860 = vmul.f32 %v4796, %v3148
    %v4861 = vmul.f32 %v4797, %v3144
    %v4862 = vmul.f32 %v4798, %v3148
    %v4863 = vmul.f32 %v4799, %v3144
    %v4864 = vmul.f32 %v4800, %v3148
    %v4865 = vmul.f32 %v4801, %v3144
    %v4866 = vmul.f32 %v4802, %v3148
    %v4867 = vmul.f32 %v4803, %v3144
    %v4868 = vmul.f32 %v4804, %v3148
    %v4869 = vmul.f32 %v4805, %v3144
    %v4870 = vmul.f32 %v4806, %v3148
    %v4871 = vmul.f32 %v4807, %v3144
    %v4872 = vmul.f32 %v4808, %v3148
    %v4873 = vmul.f32 %v4809, %v3144
    %v4874 = vmul.f32 %v4810, %v3148
    %v4875 = vmul.f32 %v4811, %v3144
    %v4876 = vmul.f32 %v4812, %v3148
    %v4877 = vmul.f32 %v4813, %v3144
    %v4878 = vmul.f32 %v4814, %v3148
    %v4879 = vmul.f32 %v4815, %v3144
    %v4880 = vmul.f32 %v4816, %v3148
    %v4881 = vmul.f32 %v4817, %v3144
    %v4882 = vmul.f32 %v4818, %v3148
    %v4883 = vmul.f32 %v4819, %v3144
    %v4884 = vmul.f32 %v4820, %v3148
    %v4885 = vmul.f32 %v4821, %v3144
    %v4886 = vmul.f32 %v4822, %v3148
    %v4887 = vmul.f32 %v4823, %v3144
    %v4888 = vmul.f32 %v4824, %v3148
    %v4889 = vmul.f32 %v4825, %v3144
    %v4890 = vmul.f32 %v4826, %v3148
    %v4891 = vmul.f32 %v4827, %v3144
    %v4892 = vmul.f32 %v4828, %v3148
    %v4893 = vmul.f32 %v4829, %v3144
    %v4894 = vmul.f32 %v4830, %v3148
    %v4895 = vmul.f32 %v4831, %v3144
    %v4896 = vmul.f32 %v4832, %v3148
    %v4897 = vmul.f32 %v4833, %v3144
    %v4898 = vmul.f32 %v4834, %v3148
    %v4899 = vmul.f32 %v4835, %v3144
    %v4900 = vmul.f32 %v4836, %v3148
    %v4901 = vmul.f32 %v4837, %v3144
    %v4902 = vmul.f32 %v4838, %v3148
    %v4903 = vadd.f32 %v4839, %v3219
    %v4904 = vadd.f32 %v4840, %v3223
    %v4905 = vadd.f32 %v4841, %v3219
    %v4906 = vadd.f32 %v4842, %v3223
    %v4907 = vadd.f32 %v4843, %v3219
    %v4908 = vadd.f32 %v4844, %v3223
    %v4909 = vadd.f32 %v4845, %v3219
    %v4910 = vadd.f32 %v4846, %v3223
    %v4911 = vadd.f32 %v4847, %v3219
    %v4912 = vadd.f32 %v4848, %v3223
    %v4913 = vadd.f32 %v4849, %v3219
    %v4914 = vadd.f32 %v4850, %v3223
    %v4915 = vadd.f32 %v4851, %v3219
    %v4916 = vadd.f32 %v4852, %v3223
    %v4917 = vadd.f32 %v4853, %v3219
    %v4918 = vadd.f32 %v4854, %v3223
    %v4919 = vadd.f32 %v4855, %v3219
    %v4920 = vadd.f32 %v4856, %v3223
    %v4921 = vadd.f32 %v4857, %v3219
    %v4922 = vadd.f32 %v4858, %v3223
    %v4923 = vadd.f32 %v4859, %v3219
    %v4924 = vadd.f32 %v4860, %v3223
    %v4925 = vadd.f32 %v4861, %v3219
    %v4926 = vadd.f32 %v4862, %v3223
    %v4927 = vadd.f32 %v4863, %v3219
    %v4928 = vadd.f32 %v4864, %v3223
    %v4929 = vadd.f32 %v4865, %v3219
    %v4930 = vadd.f32 %v4866, %v3223
    %v4931 = vadd.f32 %v4867, %v3219
    %v4932 = vadd.f32 %v4868, %v3223
    %v4933 = vadd.f32 %v4869, %v3219
    %v4934 = vadd.f32 %v4870, %v3223
    %v4935 = vadd.f32 %v4871, %v3219
    %v4936 = vadd.f32 %v4872, %v3223
    %v4937 = vadd.f32 %v4873, %v3219
    %v4938 = vadd.f32 %v4874, %v3223
    %v4939 = vadd.f32 %v4875, %v3219
    %v4940 = vadd.f32 %v4876, %v3223
    %v4941 = vadd.f32 %v4877, %v3219
    %v4942 = vadd.f32 %v4878, %v3223
    %v4943 = vadd.f32 %v4879, %v3219
    %v4944 = vadd.f32 %v4880, %v3223
    %v4945 = vadd.f32 %v4881, %v3219
    %v4946 = vadd.f32 %v4882, %v3223
    %v4947 = vadd.f32 %v4883, %v3219
    %v4948 = vadd.f32 %v4884, %v3223
    %v4949 = vadd.f32 %v4885, %v3219
    %v4950 = vadd.f32 %v4886, %v3223
    %v4951 = vadd.f32 %v4887, %v3219
    %v4952 = vadd.f32 %v4888, %v3223
    %v4953 = vadd.f32 %v4889, %v3219
    %v4954 = vadd.f32 %v4890, %v3223
    %v4955 = vadd.f32 %v4891, %v3219
    %v4956 = vadd.f32 %v4892, %v3223
    %v4957 = vadd.f32 %v4893, %v3219
    %v4958 = vadd.f32 %v4894, %v3223
    %v4959 = vadd.f32 %v4895, %v3219
    %v4960 = vadd.f32 %v4896, %v3223
    %v4961 = vadd.f32 %v4897, %v3219
    %v4962 = vadd.f32 %v4898, %v3223
    %v4963 = vadd.f32 %v4899, %v3219
    %v4964 = vadd.f32 %v4900, %v3223
    %v4965 = vadd.f32 %v4901, %v3219
    %v4966 = vadd.f32 %v4902, %v3223
    %v4967 = vmul.f32 %v4903, %v3294
    %v4968 = vmul.f32 %v4904, %v3298
    %v4969 = vmul.f32 %v4905, %v3294
    %v4970 = vmul.f32 %v4906, %v3298
    %v4971 = vmul.f32 %v4907, %v3294
    %v4972 = vmul.f32 %v4908, %v3298
    %v4973 = vmul.f32 %v4909, %v3294
    %v4974 = vmul.f32 %v4910, %v3298
    %v4975 = vmul.f32 %v4911, %v3294
    %v4976 = vmul.f32 %v4912, %v3298
    %v4977 = vmul.f32 %v4913, %v3294
    %v4978 = vmul.f32 %v4914, %v3298
    %v4979 = vmul.f32 %v4915, %v3294
    %v4980 = vmul.f32 %v4916, %v3298
    %v4981 = vmul.f32 %v4917, %v3294
    %v4982 = vmul.f32 %v4918, %v3298
    %v4983 = vmul.f32 %v4919, %v3294
    %v4984 = vmul.f32 %v4920, %v3298
    %v4985 = vmul.f32 %v4921, %v3294
    %v4986 = vmul.f32 %v4922, %v3298
    %v4987 = vmul.f32 %v4923, %v3294
    %v4988 = vmul.f32 %v4924, %v3298
    %v4989 = vmul.f32 %v4925, %v3294
    %v4990 = vmul.f32 %v4926, %v3298
    %v4991 = vmul.f32 %v4927, %v3294
    %v4992 = vmul.f32 %v4928, %v3298
    %v4993 = vmul.f32 %v4929, %v3294
    %v4994 = vmul.f32 %v4930, %v3298
    %v4995 = vmul.f32 %v4931, %v3294
    %v4996 = vmul.f32 %v4932, %v3298
    %v4997 = vmul.f32 %v4933, %v3294
    %v4998 = vmul.f32 %v4934, %v3298
    %v4999 = vmul.f32 %v4935, %v3294
    %v5000 = vmul.f32 %v4936, %v3298
    %v5001 = vmul.f32 %v4937, %v3294
    %v5002 = vmul.f32 %v4938, %v3298
    %v5003 = vmul.f32 %v4939, %v3294
    %v5004 = vmul.f32 %v4940, %v3298
    %v5005 = vmul.f32 %v4941, %v3294
    %v5006 = vmul.f32 %v4942, %v3298
    %v5007 = vmul.f32 %v4943, %v3294
    %v5008 = vmul.f32 %v4944, %v3298
    %v5009 = vmul.f32 %v4945, %v3294
    %v5010 = vmul.f32 %v4946, %v3298
    %v5011 = vmul.f32 %v4947, %v3294
    %v5012 = vmul.f32 %v4948, %v3298
    %v5013 = vmul.f32 %v4949, %v3294
    %v5014 = vmul.f32 %v4950, %v3298
    %v5015 = vmul.f32 %v4951, %v3294
    %v5016 = vmul.f32 %v4952, %v3298
    %v5017 = vmul.f32 %v4953, %v3294
    %v5018 = vmul.f32 %v4954, %v3298
    %v5019 = vmul.f32 %v4955, %v3294
    %v5020 = vmul.f32 %v4956, %v3298
    %v5021 = vmul.f32 %v4957, %v3294
    %v5022 = vmul.f32 %v4958, %v3298
    %v5023 = vmul.f32 %v4959, %v3294
    %v5024 = vmul.f32 %v4960, %v3298
    %v5025 = vmul.f32 %v4961, %v3294
    %v5026 = vmul.f32 %v4962, %v3298
    %v5027 = vmul.f32 %v4963, %v3294
    %v5028 = vmul.f32 %v4964, %v3298
    %v5029 = vmul.f32 %v4965, %v3294
    %v5030 = vmul.f32 %v4966, %v3298
    %v5031 = vadd.f32 %v4967, %v4968
    %5032 = vadd.xlane.f32.xlu0 %v5031
    %v5033 = vpop.xlane.xlu0 %5032
    %v5034 = vadd.f32 %v4969, %v4970
    %5035 = vadd.xlane.f32.xlu0 %v5034
    %v5036 = vpop.xlane.xlu0 %5035
    %v5037 = vadd.f32 %v4971, %v4972
    %5038 = vadd.xlane.f32.xlu0 %v5037
    %v5039 = vpop.xlane.xlu0 %5038
    %v5040 = vadd.f32 %v4973, %v4974
    %5041 = vadd.xlane.f32.xlu0 %v5040
    %v5042 = vpop.xlane.xlu0 %5041
    %v5043 = vadd.f32 %v4975, %v4976
    %5044 = vadd.xlane.f32.xlu0 %v5043
    %v5045 = vpop.xlane.xlu0 %5044
    %v5046 = vadd.f32 %v4977, %v4978
    %5047 = vadd.xlane.f32.xlu0 %v5046
    %v5048 = vpop.xlane.xlu0 %5047
    %v5049 = vadd.f32 %v4979, %v4980
    %5050 = vadd.xlane.f32.xlu0 %v5049
    %v5051 = vpop.xlane.xlu0 %5050
    %v5052 = vadd.f32 %v4981, %v4982
    %5053 = vadd.xlane.f32.xlu0 %v5052
    %v5054 = vpop.xlane.xlu0 %5053
    %v5055 = vadd.f32 %v4983, %v4984
    %5056 = vadd.xlane.f32.xlu0 %v5055
    %v5057 = vpop.xlane.xlu0 %5056
    %v5058 = vadd.f32 %v4985, %v4986
    %5059 = vadd.xlane.f32.xlu0 %v5058
    %v5060 = vpop.xlane.xlu0 %5059
    %v5061 = vadd.f32 %v4987, %v4988
    %5062 = vadd.xlane.f32.xlu0 %v5061
    %v5063 = vpop.xlane.xlu0 %5062
    %v5064 = vadd.f32 %v4989, %v4990
    %5065 = vadd.xlane.f32.xlu0 %v5064
    %v5066 = vpop.xlane.xlu0 %5065
    %v5067 = vadd.f32 %v4991, %v4992
    %5068 = vadd.xlane.f32.xlu0 %v5067
    %v5069 = vpop.xlane.xlu0 %5068
    %v5070 = vadd.f32 %v4993, %v4994
    %5071 = vadd.xlane.f32.xlu0 %v5070
    %v5072 = vpop.xlane.xlu0 %5071
    %v5073 = vadd.f32 %v4995, %v4996
    %5074 = vadd.xlane.f32.xlu0 %v5073
    %v5075 = vpop.xlane.xlu0 %5074
    %v5076 = vadd.f32 %v4997, %v4998
    %5077 = vadd.xlane.f32.xlu0 %v5076
    %v5078 = vpop.xlane.xlu0 %5077
    %v5079 = vadd.f32 %v4999, %v5000
    %5080 = vadd.xlane.f32.xlu0 %v5079
    %v5081 = vpop.xlane.xlu0 %5080
    %v5082 = vadd.f32 %v5001, %v5002
    %5083 = vadd.xlane.f32.xlu0 %v5082
    %v5084 = vpop.xlane.xlu0 %5083
    %v5085 = vadd.f32 %v5003, %v5004
    %5086 = vadd.xlane.f32.xlu0 %v5085
    %v5087 = vpop.xlane.xlu0 %5086
    %v5088 = vadd.f32 %v5005, %v5006
    %5089 = vadd.xlane.f32.xlu0 %v5088
    %v5090 = vpop.xlane.xlu0 %5089
    %v5091 = vadd.f32 %v5007, %v5008
    %5092 = vadd.xlane.f32.xlu0 %v5091
    %v5093 = vpop.xlane.xlu0 %5092
    %v5094 = vadd.f32 %v5009, %v5010
    %5095 = vadd.xlane.f32.xlu0 %v5094
    %v5096 = vpop.xlane.xlu0 %5095
    %v5097 = vadd.f32 %v5011, %v5012
    %5098 = vadd.xlane.f32.xlu0 %v5097
    %v5099 = vpop.xlane.xlu0 %5098
    %v5100 = vadd.f32 %v5013, %v5014
    %5101 = vadd.xlane.f32.xlu0 %v5100
    %v5102 = vpop.xlane.xlu0 %5101
    %v5103 = vadd.f32 %v5015, %v5016
    %5104 = vadd.xlane.f32.xlu0 %v5103
    %v5105 = vpop.xlane.xlu0 %5104
    %v5106 = vadd.f32 %v5017, %v5018
    %5107 = vadd.xlane.f32.xlu0 %v5106
    %v5108 = vpop.xlane.xlu0 %5107
    %v5109 = vadd.f32 %v5019, %v5020
    %5110 = vadd.xlane.f32.xlu0 %v5109
    %v5111 = vpop.xlane.xlu0 %5110
    %v5112 = vadd.f32 %v5021, %v5022
    %5113 = vadd.xlane.f32.xlu0 %v5112
    %v5114 = vpop.xlane.xlu0 %5113
    %v5115 = vadd.f32 %v5023, %v5024
    %5116 = vadd.xlane.f32.xlu0 %v5115
    %v5117 = vpop.xlane.xlu0 %5116
    %v5118 = vadd.f32 %v5025, %v5026
    %5119 = vadd.xlane.f32.xlu0 %v5118
    %v5120 = vpop.xlane.xlu0 %5119
    %v5121 = vadd.f32 %v5027, %v5028
    %5122 = vadd.xlane.f32.xlu0 %v5121
    %v5123 = vpop.xlane.xlu0 %5122
    %v5124 = vadd.f32 %v5029, %v5030
    %5125 = vadd.xlane.f32.xlu0 %v5124
    %v5126 = vpop.xlane.xlu0 %5125
    %vm5127 = vcmask 15368
    %5128 = vst.msk [vmem:[%s8] sm:$0xff] %vm5127, %v5033
    %5129 = vst.msk [vmem:[%s8 + $0x8] sm:$0xff] %vm5127, %v5036
    %5130 = vst.msk [vmem:[%s8 + $0x10] sm:$0xff] %vm5127, %v5039
    %5131 = vst.msk [vmem:[%s8 + $0x18] sm:$0xff] %vm5127, %v5042
    %5132 = vst.msk [vmem:[%s8 + $0x20] sm:$0xff] %vm5127, %v5045
    %5133 = vst.msk [vmem:[%s8 + $0x28] sm:$0xff] %vm5127, %v5048
    %5134 = vst.msk [vmem:[%s8 + $0x30] sm:$0xff] %vm5127, %v5051
    %5135 = vst.msk [vmem:[%s8 + $0x38] sm:$0xff] %vm5127, %v5054
    %5136 = vst.msk [vmem:[%s8 + $0x40] sm:$0xff] %vm5127, %v5057
    %5137 = vst.msk [vmem:[%s8 + $0x48] sm:$0xff] %vm5127, %v5060
    %5138 = vst.msk [vmem:[%s8 + $0x50] sm:$0xff] %vm5127, %v5063
    %5139 = vst.msk [vmem:[%s8 + $0x58] sm:$0xff] %vm5127, %v5066
    %5140 = vst.msk [vmem:[%s8 + $0x60] sm:$0xff] %vm5127, %v5069
    %5141 = vst.msk [vmem:[%s8 + $0x68] sm:$0xff] %vm5127, %v5072
    %5142 = vst.msk [vmem:[%s8 + $0x70] sm:$0xff] %vm5127, %v5075
    %5143 = vst.msk [vmem:[%s8 + $0x78] sm:$0xff] %vm5127, %v5078
    %5144 = vst.msk [vmem:[%s8 + $0x80] sm:$0xff] %vm5127, %v5081
    %5145 = vst.msk [vmem:[%s8 + $0x88] sm:$0xff] %vm5127, %v5084
    %5146 = vst.msk [vmem:[%s8 + $0x90] sm:$0xff] %vm5127, %v5087
    %5147 = vst.msk [vmem:[%s8 + $0x98] sm:$0xff] %vm5127, %v5090
    %5148 = vst.msk [vmem:[%s8 + $0xa0] sm:$0xff] %vm5127, %v5093
    %5149 = vst.msk [vmem:[%s8 + $0xa8] sm:$0xff] %vm5127, %v5096
    %5150 = vst.msk [vmem:[%s8 + $0xb0] sm:$0xff] %vm5127, %v5099
    %5151 = vst.msk [vmem:[%s8 + $0xb8] sm:$0xff] %vm5127, %v5102
    %5152 = vst.msk [vmem:[%s8 + $0xc0] sm:$0xff] %vm5127, %v5105
    %5153 = vst.msk [vmem:[%s8 + $0xc8] sm:$0xff] %vm5127, %v5108
    %5154 = vst.msk [vmem:[%s8 + $0xd0] sm:$0xff] %vm5127, %v5111
    %5155 = vst.msk [vmem:[%s8 + $0xd8] sm:$0xff] %vm5127, %v5114
    %5156 = vst.msk [vmem:[%s8 + $0xe0] sm:$0xff] %vm5127, %v5117
    %5157 = vst.msk [vmem:[%s8 + $0xe8] sm:$0xff] %vm5127, %v5120
    %5158 = vst.msk [vmem:[%s8 + $0xf0] sm:$0xff] %vm5127, %v5123
    %5159 = vst.msk [vmem:[%s8 + $0xf8] sm:$0xff] %vm5127, %v5126
    %v5160 = vld [vmem:[#allocation6 + $0x10] sm:$0xff]
    %v5161 = vld [vmem:[#allocation6 + $0x28] sm:$0xff]
    %v5162 = vld [vmem:[#allocation6 + $0x40] sm:$0xff]
    %v5163 = vld [vmem:[#allocation6 + $0x58] sm:$0xff]
    %v5164 = vld [vmem:[#allocation6 + $0x70] sm:$0xff]
    %v5165 = vld [vmem:[#allocation6 + $0x88] sm:$0xff]
    %v5166 = vld [vmem:[#allocation6 + $0xa0] sm:$0xff]
    %v5167 = vld [vmem:[#allocation6 + $0xb8] sm:$0xff]
    %v5168 = vld [vmem:[#allocation6 + $0xd0] sm:$0xff]
    %v5169 = vld [vmem:[#allocation6 + $0xe8] sm:$0xff]
    %v5170 = vld [vmem:[#allocation6 + $0x100] sm:$0xff]
    %v5171 = vld [vmem:[#allocation6 + $0x118] sm:$0xff]
    %v5172 = vld [vmem:[#allocation6 + $0x130] sm:$0xff]
    %v5173 = vld [vmem:[#allocation6 + $0x148] sm:$0xff]
    %v5174 = vld [vmem:[#allocation6 + $0x160] sm:$0xff]
    %v5175 = vld [vmem:[#allocation6 + $0x178] sm:$0xff]
    %v5176 = vld [vmem:[#allocation6 + $0x190] sm:$0xff]
    %v5177 = vld [vmem:[#allocation6 + $0x1a8] sm:$0xff]
    %v5178 = vld [vmem:[#allocation6 + $0x1c0] sm:$0xff]
    %v5179 = vld [vmem:[#allocation6 + $0x1d8] sm:$0xff]
    %v5180 = vld [vmem:[#allocation6 + $0x1f0] sm:$0xff]
    %v5181 = vld [vmem:[#allocation6 + $0x208] sm:$0xff]
    %v5182 = vld [vmem:[#allocation6 + $0x220] sm:$0xff]
    %v5183 = vld [vmem:[#allocation6 + $0x238] sm:$0xff]
    %v5184 = vld [vmem:[#allocation6 + $0x250] sm:$0xff]
    %v5185 = vld [vmem:[#allocation6 + $0x268] sm:$0xff]
    %v5186 = vld [vmem:[#allocation6 + $0x280] sm:$0xff]
    %v5187 = vld [vmem:[#allocation6 + $0x298] sm:$0xff]
    %v5188 = vld [vmem:[#allocation6 + $0x2b0] sm:$0xff]
    %v5189 = vld [vmem:[#allocation6 + $0x2c8] sm:$0xff]
    %v5190 = vld [vmem:[#allocation6 + $0x2e0] sm:$0xff]
    %v5191 = vld [vmem:[#allocation6 + $0x2f8] sm:$0xff]
    %v5224 = vunpack.c.l.b16 %v5160
    %v5225 = vunpack.c.h.b16 %v5160
    %v5226 = vunpack.c.l.b16 %v5161
    %v5227 = vunpack.c.h.b16 %v5161
    %v5228 = vunpack.c.l.b16 %v5162
    %v5229 = vunpack.c.h.b16 %v5162
    %v5230 = vunpack.c.l.b16 %v5163
    %v5231 = vunpack.c.h.b16 %v5163
    %v5232 = vunpack.c.l.b16 %v5164
    %v5233 = vunpack.c.h.b16 %v5164
    %v5234 = vunpack.c.l.b16 %v5165
    %v5235 = vunpack.c.h.b16 %v5165
    %v5236 = vunpack.c.l.b16 %v5166
    %v5237 = vunpack.c.h.b16 %v5166
    %v5238 = vunpack.c.l.b16 %v5167
    %v5239 = vunpack.c.h.b16 %v5167
    %v5240 = vunpack.c.l.b16 %v5168
    %v5241 = vunpack.c.h.b16 %v5168
    %v5242 = vunpack.c.l.b16 %v5169
    %v5243 = vunpack.c.h.b16 %v5169
    %v5244 = vunpack.c.l.b16 %v5170
    %v5245 = vunpack.c.h.b16 %v5170
    %v5246 = vunpack.c.l.b16 %v5171
    %v5247 = vunpack.c.h.b16 %v5171
    %v5248 = vunpack.c.l.b16 %v5172
    %v5249 = vunpack.c.h.b16 %v5172
    %v5250 = vunpack.c.l.b16 %v5173
    %v5251 = vunpack.c.h.b16 %v5173
    %v5252 = vunpack.c.l.b16 %v5174
    %v5253 = vunpack.c.h.b16 %v5174
    %v5254 = vunpack.c.l.b16 %v5175
    %v5255 = vunpack.c.h.b16 %v5175
    %v5256 = vunpack.c.l.b16 %v5176
    %v5257 = vunpack.c.h.b16 %v5176
    %v5258 = vunpack.c.l.b16 %v5177
    %v5259 = vunpack.c.h.b16 %v5177
    %v5260 = vunpack.c.l.b16 %v5178
    %v5261 = vunpack.c.h.b16 %v5178
    %v5262 = vunpack.c.l.b16 %v5179
    %v5263 = vunpack.c.h.b16 %v5179
    %v5264 = vunpack.c.l.b16 %v5180
    %v5265 = vunpack.c.h.b16 %v5180
    %v5266 = vunpack.c.l.b16 %v5181
    %v5267 = vunpack.c.h.b16 %v5181
    %v5268 = vunpack.c.l.b16 %v5182
    %v5269 = vunpack.c.h.b16 %v5182
    %v5270 = vunpack.c.l.b16 %v5183
    %v5271 = vunpack.c.h.b16 %v5183
    %v5272 = vunpack.c.l.b16 %v5184
    %v5273 = vunpack.c.h.b16 %v5184
    %v5274 = vunpack.c.l.b16 %v5185
    %v5275 = vunpack.c.h.b16 %v5185
    %v5276 = vunpack.c.l.b16 %v5186
    %v5277 = vunpack.c.h.b16 %v5186
    %v5278 = vunpack.c.l.b16 %v5187
    %v5279 = vunpack.c.h.b16 %v5187
    %v5280 = vunpack.c.l.b16 %v5188
    %v5281 = vunpack.c.h.b16 %v5188
    %v5282 = vunpack.c.l.b16 %v5189
    %v5283 = vunpack.c.h.b16 %v5189
    %v5284 = vunpack.c.l.b16 %v5190
    %v5285 = vunpack.c.h.b16 %v5190
    %v5286 = vunpack.c.l.b16 %v5191
    %v5287 = vunpack.c.h.b16 %v5191
    %v5288 = vpack.c.b16 %v5226, %v5224
    %v5289 = vpack.c.b16 %v5227, %v5225
    %v5290 = vpack.c.b16 %v5230, %v5228
    %v5291 = vpack.c.b16 %v5231, %v5229
    %v5292 = vpack.c.b16 %v5234, %v5232
    %v5293 = vpack.c.b16 %v5235, %v5233
    %v5294 = vpack.c.b16 %v5238, %v5236
    %v5295 = vpack.c.b16 %v5239, %v5237
    %v5296 = vpack.c.b16 %v5242, %v5240
    %v5297 = vpack.c.b16 %v5243, %v5241
    %v5298 = vpack.c.b16 %v5246, %v5244
    %v5299 = vpack.c.b16 %v5247, %v5245
    %v5300 = vpack.c.b16 %v5250, %v5248
    %v5301 = vpack.c.b16 %v5251, %v5249
    %v5302 = vpack.c.b16 %v5254, %v5252
    %v5303 = vpack.c.b16 %v5255, %v5253
    %v5304 = vpack.c.b16 %v5258, %v5256
    %v5305 = vpack.c.b16 %v5259, %v5257
    %v5306 = vpack.c.b16 %v5262, %v5260
    %v5307 = vpack.c.b16 %v5263, %v5261
    %v5308 = vpack.c.b16 %v5266, %v5264
    %v5309 = vpack.c.b16 %v5267, %v5265
    %v5310 = vpack.c.b16 %v5270, %v5268
    %v5311 = vpack.c.b16 %v5271, %v5269
    %v5312 = vpack.c.b16 %v5274, %v5272
    %v5313 = vpack.c.b16 %v5275, %v5273
    %v5314 = vpack.c.b16 %v5278, %v5276
    %v5315 = vpack.c.b16 %v5279, %v5277
    %v5316 = vpack.c.b16 %v5282, %v5280
    %v5317 = vpack.c.b16 %v5283, %v5281
    %v5318 = vpack.c.b16 %v5286, %v5284
    %v5319 = vpack.c.b16 %v5287, %v5285
    %5352 = vmatprep.subr.bf16.mxu0 %v5289
    %5353 = vmatpush1.bf16.msra.mxu0 %v5288
    %5354 = vmatprep.subr.bf16.mxu0 %v5291
    %5355 = vmatpush1.bf16.msra.mxu0 %v5290
    %5356 = vmatprep.subr.bf16.mxu0 %v5293
    %5357 = vmatpush1.bf16.msra.mxu0 %v5292
    %5358 = vmatprep.subr.bf16.mxu0 %v5295
    %5359 = vmatpush1.bf16.msra.mxu0 %v5294
    %5360 = vmatprep.subr.bf16.mxu0 %v5297
    %5361 = vmatpush1.bf16.msra.mxu0 %v5296
    %5362 = vmatprep.subr.bf16.mxu0 %v5299
    %5363 = vmatpush1.bf16.msra.mxu0 %v5298
    %5364 = vmatprep.subr.bf16.mxu0 %v5301
    %5365 = vmatpush1.bf16.msra.mxu0 %v5300
    %5366 = vmatprep.subr.bf16.mxu0 %v5303
    %5367 = vmatpush1.bf16.msra.mxu0 %v5302
    %5368 = vmatprep.subr.bf16.mxu0 %v5305
    %5369 = vmatpush1.bf16.msra.mxu0 %v5304
    %5370 = vmatprep.subr.bf16.mxu0 %v5307
    %5371 = vmatpush1.bf16.msra.mxu0 %v5306
    %5372 = vmatprep.subr.bf16.mxu0 %v5309
    %5373 = vmatpush1.bf16.msra.mxu0 %v5308
    %5374 = vmatprep.subr.bf16.mxu0 %v5311
    %5375 = vmatpush1.bf16.msra.mxu0 %v5310
    %5376 = vmatprep.subr.bf16.mxu0 %v5313
    %5377 = vmatpush1.bf16.msra.mxu0 %v5312
    %5378 = vmatprep.subr.bf16.mxu0 %v5315
    %5379 = vmatpush1.bf16.msra.mxu0 %v5314
    %5380 = vmatprep.subr.bf16.mxu0 %v5317
    %5381 = vmatpush1.bf16.msra.mxu0 %v5316
    %5382 = vmatprep.subr.bf16.mxu0 %v5319
    %5383 = vmatpush1.bf16.msra.mxu0 %v5318
    %5384 = vmatprep.mubr.bf16.mxu0 %v1761
    %5385 = vmatmul.mubr.bf16.gmra.mrb[0].mxu0 %v1760
    %v5386 = vpop.f32.mrb[0].mxu0
    %v5387 = vadd.f32 0.0, %v5386
    %v5388 = vpop.f32.mrb[0].mxu0
    %v5389 = vadd.f32 0.0, %v5388
    %v5390 = vpop.f32.mrb[0].mxu0
    %v5391 = vadd.f32 0.0, %v5390
    %v5392 = vpop.f32.mrb[0].mxu0
    %v5393 = vadd.f32 0.0, %v5392
    %5394 = vmatprep.mubr.bf16.mxu0 %v1763
    %5395 = vmatmul.mubr.bf16.gmra.mrb[0].mxu0 %v1762
    %v5396 = vpop.f32.mrb[0].mxu0
    %v5397 = vadd.f32 0.0, %v5396
    %v5398 = vpop.f32.mrb[0].mxu0
    %v5399 = vadd.f32 0.0, %v5398
    %v5400 = vpop.f32.mrb[0].mxu0
    %v5401 = vadd.f32 0.0, %v5400
    %v5402 = vpop.f32.mrb[0].mxu0
    %v5403 = vadd.f32 0.0, %v5402
    %5404 = vmatprep.mubr.bf16.mxu0 %v1765
    %5405 = vmatmul.mubr.bf16.gmra.mrb[0].mxu0 %v1764
    %v5406 = vpop.f32.mrb[0].mxu0
    %v5407 = vadd.f32 0.0, %v5406
    %v5408 = vpop.f32.mrb[0].mxu0
    %v5409 = vadd.f32 0.0, %v5408
    %v5410 = vpop.f32.mrb[0].mxu0
    %v5411 = vadd.f32 0.0, %v5410
    %v5412 = vpop.f32.mrb[0].mxu0
    %v5413 = vadd.f32 0.0, %v5412
    %5414 = vmatprep.mubr.bf16.mxu0 %v1767
    %5415 = vmatmul.mubr.bf16.gmra.mrb[0].mxu0 %v1766
    %v5416 = vpop.f32.mrb[0].mxu0
    %v5417 = vadd.f32 0.0, %v5416
    %v5418 = vpop.f32.mrb[0].mxu0
    %v5419 = vadd.f32 0.0, %v5418
    %v5420 = vpop.f32.mrb[0].mxu0
    %v5421 = vadd.f32 0.0, %v5420
    %v5422 = vpop.f32.mrb[0].mxu0
    %v5423 = vadd.f32 0.0, %v5422
    %5424 = vmatprep.mubr.bf16.mxu0 %v1769
    %5425 = vmatmul.mubr.bf16.gmra.mrb[0].mxu0 %v1768
    %v5426 = vpop.f32.mrb[0].mxu0
    %v5427 = vadd.f32 0.0, %v5426
    %v5428 = vpop.f32.mrb[0].mxu0
    %v5429 = vadd.f32 0.0, %v5428
    %v5430 = vpop.f32.mrb[0].mxu0
    %v5431 = vadd.f32 0.0, %v5430
    %v5432 = vpop.f32.mrb[0].mxu0
    %v5433 = vadd.f32 0.0, %v5432
    %5434 = vmatprep.mubr.bf16.mxu0 %v1771
    %5435 = vmatmul.mubr.bf16.gmra.mrb[0].mxu0 %v1770
    %v5436 = vpop.f32.mrb[0].mxu0
    %v5437 = vadd.f32 0.0, %v5436
    %v5438 = vpop.f32.mrb[0].mxu0
    %v5439 = vadd.f32 0.0, %v5438
    %v5440 = vpop.f32.mrb[0].mxu0
    %v5441 = vadd.f32 0.0, %v5440
    %v5442 = vpop.f32.mrb[0].mxu0
    %v5443 = vadd.f32 0.0, %v5442
    %5444 = vmatprep.mubr.bf16.mxu0 %v1773
    %5445 = vmatmul.mubr.bf16.gmra.mrb[0].mxu0 %v1772
    %v5446 = vpop.f32.mrb[0].mxu0
    %v5447 = vadd.f32 0.0, %v5446
    %v5448 = vpop.f32.mrb[0].mxu0
    %v5449 = vadd.f32 0.0, %v5448
    %v5450 = vpop.f32.mrb[0].mxu0
    %v5451 = vadd.f32 0.0, %v5450
    %v5452 = vpop.f32.mrb[0].mxu0
    %v5453 = vadd.f32 0.0, %v5452
    %5454 = vmatprep.mubr.bf16.mxu0 %v1775
    %5455 = vmatmul.mubr.bf16.gmra.mrb[0].mxu0 %v1774
    %v5456 = vpop.f32.mrb[0].mxu0
    %v5457 = vadd.f32 0.0, %v5456
    %v5458 = vpop.f32.mrb[0].mxu0
    %v5459 = vadd.f32 0.0, %v5458
    %v5460 = vpop.f32.mrb[0].mxu0
    %v5461 = vadd.f32 0.0, %v5460
    %v5462 = vpop.f32.mrb[0].mxu0
    %v5463 = vadd.f32 0.0, %v5462
    %5464 = vmatprep.mubr.bf16.mxu0 %v1777
    %5465 = vmatmul.mubr.bf16.gmra.mrb[0].mxu0 %v1776
    %v5466 = vpop.f32.mrb[0].mxu0
    %v5467 = vadd.f32 0.0, %v5466
    %v5468 = vpop.f32.mrb[0].mxu0
    %v5469 = vadd.f32 0.0, %v5468
    %v5470 = vpop.f32.mrb[0].mxu0
    %v5471 = vadd.f32 0.0, %v5470
    %v5472 = vpop.f32.mrb[0].mxu0
    %v5473 = vadd.f32 0.0, %v5472
    %5474 = vmatprep.mubr.bf16.mxu0 %v1779
    %5475 = vmatmul.mubr.bf16.gmra.mrb[0].mxu0 %v1778
    %v5476 = vpop.f32.mrb[0].mxu0
    %v5477 = vadd.f32 0.0, %v5476
    %v5478 = vpop.f32.mrb[0].mxu0
    %v5479 = vadd.f32 0.0, %v5478
    %v5480 = vpop.f32.mrb[0].mxu0
    %v5481 = vadd.f32 0.0, %v5480
    %v5482 = vpop.f32.mrb[0].mxu0
    %v5483 = vadd.f32 0.0, %v5482
    %5484 = vmatprep.mubr.bf16.mxu0 %v1781
    %5485 = vmatmul.mubr.bf16.gmra.mrb[0].mxu0 %v1780
    %v5486 = vpop.f32.mrb[0].mxu0
    %v5487 = vadd.f32 0.0, %v5486
    %v5488 = vpop.f32.mrb[0].mxu0
    %v5489 = vadd.f32 0.0, %v5488
    %v5490 = vpop.f32.mrb[0].mxu0
    %v5491 = vadd.f32 0.0, %v5490
    %v5492 = vpop.f32.mrb[0].mxu0
    %v5493 = vadd.f32 0.0, %v5492
    %5494 = vmatprep.mubr.bf16.mxu0 %v1783
    %5495 = vmatmul.mubr.bf16.gmra.mrb[0].mxu0 %v1782
    %v5496 = vpop.f32.mrb[0].mxu0
    %v5497 = vadd.f32 0.0, %v5496
    %v5498 = vpop.f32.mrb[0].mxu0
    %v5499 = vadd.f32 0.0, %v5498
    %v5500 = vpop.f32.mrb[0].mxu0
    %v5501 = vadd.f32 0.0, %v5500
    %v5502 = vpop.f32.mrb[0].mxu0
    %v5503 = vadd.f32 0.0, %v5502
    %5504 = vmatprep.mubr.bf16.mxu0 %v1785
    %5505 = vmatmul.mubr.bf16.gmra.mrb[0].mxu0 %v1784
    %v5506 = vpop.f32.mrb[0].mxu0
    %v5507 = vadd.f32 0.0, %v5506
    %v5508 = vpop.f32.mrb[0].mxu0
    %v5509 = vadd.f32 0.0, %v5508
    %v5510 = vpop.f32.mrb[0].mxu0
    %v5511 = vadd.f32 0.0, %v5510
    %v5512 = vpop.f32.mrb[0].mxu0
    %v5513 = vadd.f32 0.0, %v5512
    %5514 = vmatprep.mubr.bf16.mxu0 %v1787
    %5515 = vmatmul.mubr.bf16.gmra.mrb[0].mxu0 %v1786
    %v5516 = vpop.f32.mrb[0].mxu0
    %v5517 = vadd.f32 0.0, %v5516
    %v5518 = vpop.f32.mrb[0].mxu0
    %v5519 = vadd.f32 0.0, %v5518
    %v5520 = vpop.f32.mrb[0].mxu0
    %v5521 = vadd.f32 0.0, %v5520
    %v5522 = vpop.f32.mrb[0].mxu0
    %v5523 = vadd.f32 0.0, %v5522
    %5524 = vmatprep.mubr.bf16.mxu0 %v1789
    %5525 = vmatmul.mubr.bf16.gmra.mrb[0].mxu0 %v1788
    %v5526 = vpop.f32.mrb[0].mxu0
    %v5527 = vadd.f32 0.0, %v5526
    %v5528 = vpop.f32.mrb[0].mxu0
    %v5529 = vadd.f32 0.0, %v5528
    %v5530 = vpop.f32.mrb[0].mxu0
    %v5531 = vadd.f32 0.0, %v5530
    %v5532 = vpop.f32.mrb[0].mxu0
    %v5533 = vadd.f32 0.0, %v5532
    %5534 = vmatprep.mubr.bf16.mxu0 %v1791
    %5535 = vmatmul.mubr.bf16.gmra.mrb[0].mxu0 %v1790
    %v5536 = vpop.f32.mrb[0].mxu0
    %v5537 = vadd.f32 0.0, %v5536
    %v5538 = vpop.f32.mrb[0].mxu0
    %v5539 = vadd.f32 0.0, %v5538
    %v5540 = vpop.f32.mrb[0].mxu0
    %v5541 = vadd.f32 0.0, %v5540
    %v5542 = vpop.f32.mrb[0].mxu0
    %v5543 = vadd.f32 0.0, %v5542
    %5544 = vdwg.mxu0
    %v5545 = vxor.u32 %v5387, 2147483648
    %v5546 = vxor.u32 %v5389, 2147483648
    %v5547 = vxor.u32 %v5391, 2147483648
    %v5548 = vxor.u32 %v5393, 2147483648
    %v5549 = vxor.u32 %v5397, 2147483648
    %v5550 = vxor.u32 %v5399, 2147483648
    %v5551 = vxor.u32 %v5401, 2147483648
    %v5552 = vxor.u32 %v5403, 2147483648
    %v5553 = vxor.u32 %v5407, 2147483648
    %v5554 = vxor.u32 %v5409, 2147483648
    %v5555 = vxor.u32 %v5411, 2147483648
    %v5556 = vxor.u32 %v5413, 2147483648
    %v5557 = vxor.u32 %v5417, 2147483648
    %v5558 = vxor.u32 %v5419, 2147483648
    %v5559 = vxor.u32 %v5421, 2147483648
    %v5560 = vxor.u32 %v5423, 2147483648
    %v5561 = vxor.u32 %v5427, 2147483648
    %v5562 = vxor.u32 %v5429, 2147483648
    %v5563 = vxor.u32 %v5431, 2147483648
    %v5564 = vxor.u32 %v5433, 2147483648
    %v5565 = vxor.u32 %v5437, 2147483648
    %v5566 = vxor.u32 %v5439, 2147483648
    %v5567 = vxor.u32 %v5441, 2147483648
    %v5568 = vxor.u32 %v5443, 2147483648
    %v5569 = vxor.u32 %v5447, 2147483648
    %v5570 = vxor.u32 %v5449, 2147483648
    %v5571 = vxor.u32 %v5451, 2147483648
    %v5572 = vxor.u32 %v5453, 2147483648
    %v5573 = vxor.u32 %v5457, 2147483648
    %v5574 = vxor.u32 %v5459, 2147483648
    %v5575 = vxor.u32 %v5461, 2147483648
    %v5576 = vxor.u32 %v5463, 2147483648
    %v5577 = vxor.u32 %v5467, 2147483648
    %v5578 = vxor.u32 %v5469, 2147483648
    %v5579 = vxor.u32 %v5471, 2147483648
    %v5580 = vxor.u32 %v5473, 2147483648
    %v5581 = vxor.u32 %v5477, 2147483648
    %v5582 = vxor.u32 %v5479, 2147483648
    %v5583 = vxor.u32 %v5481, 2147483648
    %v5584 = vxor.u32 %v5483, 2147483648
    %v5585 = vxor.u32 %v5487, 2147483648
    %v5586 = vxor.u32 %v5489, 2147483648
    %v5587 = vxor.u32 %v5491, 2147483648
    %v5588 = vxor.u32 %v5493, 2147483648
    %v5589 = vxor.u32 %v5497, 2147483648
    %v5590 = vxor.u32 %v5499, 2147483648
    %v5591 = vxor.u32 %v5501, 2147483648
    %v5592 = vxor.u32 %v5503, 2147483648
    %v5593 = vxor.u32 %v5507, 2147483648
    %v5594 = vxor.u32 %v5509, 2147483648
    %v5595 = vxor.u32 %v5511, 2147483648
    %v5596 = vxor.u32 %v5513, 2147483648
    %v5597 = vxor.u32 %v5517, 2147483648
    %v5598 = vxor.u32 %v5519, 2147483648
    %v5599 = vxor.u32 %v5521, 2147483648
    %v5600 = vxor.u32 %v5523, 2147483648
    %v5601 = vxor.u32 %v5527, 2147483648
    %v5602 = vxor.u32 %v5529, 2147483648
    %v5603 = vxor.u32 %v5531, 2147483648
    %v5604 = vxor.u32 %v5533, 2147483648
    %v5605 = vxor.u32 %v5537, 2147483648
    %v5606 = vxor.u32 %v5539, 2147483648
    %v5607 = vxor.u32 %v5541, 2147483648
    %v5608 = vxor.u32 %v5543, 2147483648
    %v5609 = vmul.f32 %v5545, 1.442695
    %v5610 = vpow.pop %v5609
    %v5611 = vmul.f32 %v5546, 1.442695
    %v5612 = vpow.pop %v5611
    %v5613 = vmul.f32 %v5547, 1.442695
    %v5614 = vpow.pop %v5613
    %v5615 = vmul.f32 %v5548, 1.442695
    %v5616 = vpow.pop %v5615
    %v5617 = vmul.f32 %v5549, 1.442695
    %v5618 = vpow.pop %v5617
    %v5619 = vmul.f32 %v5550, 1.442695
    %v5620 = vpow.pop %v5619
    %v5621 = vmul.f32 %v5551, 1.442695
    %v5622 = vpow.pop %v5621
    %v5623 = vmul.f32 %v5552, 1.442695
    %v5624 = vpow.pop %v5623
    %v5625 = vmul.f32 %v5553, 1.442695
    %v5626 = vpow.pop %v5625
    %v5627 = vmul.f32 %v5554, 1.442695
    %v5628 = vpow.pop %v5627
    %v5629 = vmul.f32 %v5555, 1.442695
    %v5630 = vpow.pop %v5629
    %v5631 = vmul.f32 %v5556, 1.442695
    %v5632 = vpow.pop %v5631
    %v5633 = vmul.f32 %v5557, 1.442695
    %v5634 = vpow.pop %v5633
    %v5635 = vmul.f32 %v5558, 1.442695
    %v5636 = vpow.pop %v5635
    %v5637 = vmul.f32 %v5559, 1.442695
    %v5638 = vpow.pop %v5637
    %v5639 = vmul.f32 %v5560, 1.442695
    %v5640 = vpow.pop %v5639
    %v5641 = vmul.f32 %v5561, 1.442695
    %v5642 = vpow.pop %v5641
    %v5643 = vmul.f32 %v5562, 1.442695
    %v5644 = vpow.pop %v5643
    %v5645 = vmul.f32 %v5563, 1.442695
    %v5646 = vpow.pop %v5645
    %v5647 = vmul.f32 %v5564, 1.442695
    %v5648 = vpow.pop %v5647
    %v5649 = vmul.f32 %v5565, 1.442695
    %v5650 = vpow.pop %v5649
    %v5651 = vmul.f32 %v5566, 1.442695
    %v5652 = vpow.pop %v5651
    %v5653 = vmul.f32 %v5567, 1.442695
    %v5654 = vpow.pop %v5653
    %v5655 = vmul.f32 %v5568, 1.442695
    %v5656 = vpow.pop %v5655
    %v5657 = vmul.f32 %v5569, 1.442695
    %v5658 = vpow.pop %v5657
    %v5659 = vmul.f32 %v5570, 1.442695
    %v5660 = vpow.pop %v5659
    %v5661 = vmul.f32 %v5571, 1.442695
    %v5662 = vpow.pop %v5661
    %v5663 = vmul.f32 %v5572, 1.442695
    %v5664 = vpow.pop %v5663
    %v5665 = vmul.f32 %v5573, 1.442695
    %v5666 = vpow.pop %v5665
    %v5667 = vmul.f32 %v5574, 1.442695
    %v5668 = vpow.pop %v5667
    %v5669 = vmul.f32 %v5575, 1.442695
    %v5670 = vpow.pop %v5669
    %v5671 = vmul.f32 %v5576, 1.442695
    %v5672 = vpow.pop %v5671
    %v5673 = vmul.f32 %v5577, 1.442695
    %v5674 = vpow.pop %v5673
    %v5675 = vmul.f32 %v5578, 1.442695
    %v5676 = vpow.pop %v5675
    %v5677 = vmul.f32 %v5579, 1.442695
    %v5678 = vpow.pop %v5677
    %v5679 = vmul.f32 %v5580, 1.442695
    %v5680 = vpow.pop %v5679
    %v5681 = vmul.f32 %v5581, 1.442695
    %v5682 = vpow.pop %v5681
    %v5683 = vmul.f32 %v5582, 1.442695
    %v5684 = vpow.pop %v5683
    %v5685 = vmul.f32 %v5583, 1.442695
    %v5686 = vpow.pop %v5685
    %v5687 = vmul.f32 %v5584, 1.442695
    %v5688 = vpow.pop %v5687
    %v5689 = vmul.f32 %v5585, 1.442695
    %v5690 = vpow.pop %v5689
    %v5691 = vmul.f32 %v5586, 1.442695
    %v5692 = vpow.pop %v5691
    %v5693 = vmul.f32 %v5587, 1.442695
    %v5694 = vpow.pop %v5693
    %v5695 = vmul.f32 %v5588, 1.442695
    %v5696 = vpow.pop %v5695
    %v5697 = vmul.f32 %v5589, 1.442695
    %v5698 = vpow.pop %v5697
    %v5699 = vmul.f32 %v5590, 1.442695
    %v5700 = vpow.pop %v5699
    %v5701 = vmul.f32 %v5591, 1.442695
    %v5702 = vpow.pop %v5701
    %v5703 = vmul.f32 %v5592, 1.442695
    %v5704 = vpow.pop %v5703
    %v5705 = vmul.f32 %v5593, 1.442695
    %v5706 = vpow.pop %v5705
    %v5707 = vmul.f32 %v5594, 1.442695
    %v5708 = vpow.pop %v5707
    %v5709 = vmul.f32 %v5595, 1.442695
    %v5710 = vpow.pop %v5709
    %v5711 = vmul.f32 %v5596, 1.442695
    %v5712 = vpow.pop %v5711
    %v5713 = vmul.f32 %v5597, 1.442695
    %v5714 = vpow.pop %v5713
    %v5715 = vmul.f32 %v5598, 1.442695
    %v5716 = vpow.pop %v5715
    %v5717 = vmul.f32 %v5599, 1.442695
    %v5718 = vpow.pop %v5717
    %v5719 = vmul.f32 %v5600, 1.442695
    %v5720 = vpow.pop %v5719
    %v5721 = vmul.f32 %v5601, 1.442695
    %v5722 = vpow.pop %v5721
    %v5723 = vmul.f32 %v5602, 1.442695
    %v5724 = vpow.pop %v5723
    %v5725 = vmul.f32 %v5603, 1.442695
    %v5726 = vpow.pop %v5725
    %v5727 = vmul.f32 %v5604, 1.442695
    %v5728 = vpow.pop %v5727
    %v5729 = vmul.f32 %v5605, 1.442695
    %v5730 = vpow.pop %v5729
    %v5731 = vmul.f32 %v5606, 1.442695
    %v5732 = vpow.pop %v5731
    %v5733 = vmul.f32 %v5607, 1.442695
    %v5734 = vpow.pop %v5733
    %v5735 = vmul.f32 %v5608, 1.442695
    %v5736 = vpow.pop %v5735
    %v5737 = vadd.f32 %v5610, 1.0
    %v5738 = vadd.f32 %v5612, 1.0
    %v5739 = vadd.f32 %v5614, 1.0
    %v5740 = vadd.f32 %v5616, 1.0
    %v5741 = vadd.f32 %v5618, 1.0
    %v5742 = vadd.f32 %v5620, 1.0
    %v5743 = vadd.f32 %v5622, 1.0
    %v5744 = vadd.f32 %v5624, 1.0
    %v5745 = vadd.f32 %v5626, 1.0
    %v5746 = vadd.f32 %v5628, 1.0
    %v5747 = vadd.f32 %v5630, 1.0
    %v5748 = vadd.f32 %v5632, 1.0
    %v5749 = vadd.f32 %v5634, 1.0
    %v5750 = vadd.f32 %v5636, 1.0
    %v5751 = vadd.f32 %v5638, 1.0
    %v5752 = vadd.f32 %v5640, 1.0
    %v5753 = vadd.f32 %v5642, 1.0
    %v5754 = vadd.f32 %v5644, 1.0
    %v5755 = vadd.f32 %v5646, 1.0
    %v5756 = vadd.f32 %v5648, 1.0
    %v5757 = vadd.f32 %v5650, 1.0
    %v5758 = vadd.f32 %v5652, 1.0
    %v5759 = vadd.f32 %v5654, 1.0
    %v5760 = vadd.f32 %v5656, 1.0
    %v5761 = vadd.f32 %v5658, 1.0
    %v5762 = vadd.f32 %v5660, 1.0
    %v5763 = vadd.f32 %v5662, 1.0
    %v5764 = vadd.f32 %v5664, 1.0
    %v5765 = vadd.f32 %v5666, 1.0
    %v5766 = vadd.f32 %v5668, 1.0
    %v5767 = vadd.f32 %v5670, 1.0
    %v5768 = vadd.f32 %v5672, 1.0
    %v5769 = vadd.f32 %v5674, 1.0
    %v5770 = vadd.f32 %v5676, 1.0
    %v5771 = vadd.f32 %v5678, 1.0
    %v5772 = vadd.f32 %v5680, 1.0
    %v5773 = vadd.f32 %v5682, 1.0
    %v5774 = vadd.f32 %v5684, 1.0
    %v5775 = vadd.f32 %v5686, 1.0
    %v5776 = vadd.f32 %v5688, 1.0
    %v5777 = vadd.f32 %v5690, 1.0
    %v5778 = vadd.f32 %v5692, 1.0
    %v5779 = vadd.f32 %v5694, 1.0
    %v5780 = vadd.f32 %v5696, 1.0
    %v5781 = vadd.f32 %v5698, 1.0
    %v5782 = vadd.f32 %v5700, 1.0
    %v5783 = vadd.f32 %v5702, 1.0
    %v5784 = vadd.f32 %v5704, 1.0
    %v5785 = vadd.f32 %v5706, 1.0
    %v5786 = vadd.f32 %v5708, 1.0
    %v5787 = vadd.f32 %v5710, 1.0
    %v5788 = vadd.f32 %v5712, 1.0
    %v5789 = vadd.f32 %v5714, 1.0
    %v5790 = vadd.f32 %v5716, 1.0
    %v5791 = vadd.f32 %v5718, 1.0
    %v5792 = vadd.f32 %v5720, 1.0
    %v5793 = vadd.f32 %v5722, 1.0
    %v5794 = vadd.f32 %v5724, 1.0
    %v5795 = vadd.f32 %v5726, 1.0
    %v5796 = vadd.f32 %v5728, 1.0
    %v5797 = vadd.f32 %v5730, 1.0
    %v5798 = vadd.f32 %v5732, 1.0
    %v5799 = vadd.f32 %v5734, 1.0
    %v5800 = vadd.f32 %v5736, 1.0
    %v5801 = vrcp.pop %v5737
    %v5802 = vmul.f32 1.0, %v5801
    %v5803 = vrcp.pop %v5738
    %v5804 = vmul.f32 1.0, %v5803
    %v5805 = vrcp.pop %v5739
    %v5806 = vmul.f32 1.0, %v5805
    %v5807 = vrcp.pop %v5740
    %v5808 = vmul.f32 1.0, %v5807
    %v5809 = vrcp.pop %v5741
    %v5810 = vmul.f32 1.0, %v5809
    %v5811 = vrcp.pop %v5742
    %v5812 = vmul.f32 1.0, %v5811
    %v5813 = vrcp.pop %v5743
    %v5814 = vmul.f32 1.0, %v5813
    %v5815 = vrcp.pop %v5744
    %v5816 = vmul.f32 1.0, %v5815
    %v5817 = vrcp.pop %v5745
    %v5818 = vmul.f32 1.0, %v5817
    %v5819 = vrcp.pop %v5746
    %v5820 = vmul.f32 1.0, %v5819
    %v5821 = vrcp.pop %v5747
    %v5822 = vmul.f32 1.0, %v5821
    %v5823 = vrcp.pop %v5748
    %v5824 = vmul.f32 1.0, %v5823
    %v5825 = vrcp.pop %v5749
    %v5826 = vmul.f32 1.0, %v5825
    %v5827 = vrcp.pop %v5750
    %v5828 = vmul.f32 1.0, %v5827
    %v5829 = vrcp.pop %v5751
    %v5830 = vmul.f32 1.0, %v5829
    %v5831 = vrcp.pop %v5752
    %v5832 = vmul.f32 1.0, %v5831
    %v5833 = vrcp.pop %v5753
    %v5834 = vmul.f32 1.0, %v5833
    %v5835 = vrcp.pop %v5754
    %v5836 = vmul.f32 1.0, %v5835
    %v5837 = vrcp.pop %v5755
    %v5838 = vmul.f32 1.0, %v5837
    %v5839 = vrcp.pop %v5756
    %v5840 = vmul.f32 1.0, %v5839
    %v5841 = vrcp.pop %v5757
    %v5842 = vmul.f32 1.0, %v5841
    %v5843 = vrcp.pop %v5758
    %v5844 = vmul.f32 1.0, %v5843
    %v5845 = vrcp.pop %v5759
    %v5846 = vmul.f32 1.0, %v5845
    %v5847 = vrcp.pop %v5760
    %v5848 = vmul.f32 1.0, %v5847
    %v5849 = vrcp.pop %v5761
    %v5850 = vmul.f32 1.0, %v5849
    %v5851 = vrcp.pop %v5762
    %v5852 = vmul.f32 1.0, %v5851
    %v5853 = vrcp.pop %v5763
    %v5854 = vmul.f32 1.0, %v5853
    %v5855 = vrcp.pop %v5764
    %v5856 = vmul.f32 1.0, %v5855
    %v5857 = vrcp.pop %v5765
    %v5858 = vmul.f32 1.0, %v5857
    %v5859 = vrcp.pop %v5766
    %v5860 = vmul.f32 1.0, %v5859
    %v5861 = vrcp.pop %v5767
    %v5862 = vmul.f32 1.0, %v5861
    %v5863 = vrcp.pop %v5768
    %v5864 = vmul.f32 1.0, %v5863
    %v5865 = vrcp.pop %v5769
    %v5866 = vmul.f32 1.0, %v5865
    %v5867 = vrcp.pop %v5770
    %v5868 = vmul.f32 1.0, %v5867
    %v5869 = vrcp.pop %v5771
    %v5870 = vmul.f32 1.0, %v5869
    %v5871 = vrcp.pop %v5772
    %v5872 = vmul.f32 1.0, %v5871
    %v5873 = vrcp.pop %v5773
    %v5874 = vmul.f32 1.0, %v5873
    %v5875 = vrcp.pop %v5774
    %v5876 = vmul.f32 1.0, %v5875
    %v5877 = vrcp.pop %v5775
    %v5878 = vmul.f32 1.0, %v5877
    %v5879 = vrcp.pop %v5776
    %v5880 = vmul.f32 1.0, %v5879
    %v5881 = vrcp.pop %v5777
    %v5882 = vmul.f32 1.0, %v5881
    %v5883 = vrcp.pop %v5778
    %v5884 = vmul.f32 1.0, %v5883
    %v5885 = vrcp.pop %v5779
    %v5886 = vmul.f32 1.0, %v5885
    %v5887 = vrcp.pop %v5780
    %v5888 = vmul.f32 1.0, %v5887
    %v5889 = vrcp.pop %v5781
    %v5890 = vmul.f32 1.0, %v5889
    %v5891 = vrcp.pop %v5782
    %v5892 = vmul.f32 1.0, %v5891
    %v5893 = vrcp.pop %v5783
    %v5894 = vmul.f32 1.0, %v5893
    %v5895 = vrcp.pop %v5784
    %v5896 = vmul.f32 1.0, %v5895
    %v5897 = vrcp.pop %v5785
    %v5898 = vmul.f32 1.0, %v5897
    %v5899 = vrcp.pop %v5786
    %v5900 = vmul.f32 1.0, %v5899
    %v5901 = vrcp.pop %v5787
    %v5902 = vmul.f32 1.0, %v5901
    %v5903 = vrcp.pop %v5788
    %v5904 = vmul.f32 1.0, %v5903
    %v5905 = vrcp.pop %v5789
    %v5906 = vmul.f32 1.0, %v5905
    %v5907 = vrcp.pop %v5790
    %v5908 = vmul.f32 1.0, %v5907
    %v5909 = vrcp.pop %v5791
    %v5910 = vmul.f32 1.0, %v5909
    %v5911 = vrcp.pop %v5792
    %v5912 = vmul.f32 1.0, %v5911
    %v5913 = vrcp.pop %v5793
    %v5914 = vmul.f32 1.0, %v5913
    %v5915 = vrcp.pop %v5794
    %v5916 = vmul.f32 1.0, %v5915
    %v5917 = vrcp.pop %v5795
    %v5918 = vmul.f32 1.0, %v5917
    %v5919 = vrcp.pop %v5796
    %v5920 = vmul.f32 1.0, %v5919
    %v5921 = vrcp.pop %v5797
    %v5922 = vmul.f32 1.0, %v5921
    %v5923 = vrcp.pop %v5798
    %v5924 = vmul.f32 1.0, %v5923
    %v5925 = vrcp.pop %v5799
    %v5926 = vmul.f32 1.0, %v5925
    %v5927 = vrcp.pop %v5800
    %v5928 = vmul.f32 1.0, %v5927
    %v5929 = vmul.f32 %v5387, %v5802
    %v5930 = vmul.f32 %v5389, %v5804
    %v5931 = vmul.f32 %v5391, %v5806
    %v5932 = vmul.f32 %v5393, %v5808
    %v5933 = vmul.f32 %v5397, %v5810
    %v5934 = vmul.f32 %v5399, %v5812
    %v5935 = vmul.f32 %v5401, %v5814
    %v5936 = vmul.f32 %v5403, %v5816
    %v5937 = vmul.f32 %v5407, %v5818
    %v5938 = vmul.f32 %v5409, %v5820
    %v5939 = vmul.f32 %v5411, %v5822
    %v5940 = vmul.f32 %v5413, %v5824
    %v5941 = vmul.f32 %v5417, %v5826
    %v5942 = vmul.f32 %v5419, %v5828
    %v5943 = vmul.f32 %v5421, %v5830
    %v5944 = vmul.f32 %v5423, %v5832
    %v5945 = vmul.f32 %v5427, %v5834
    %v5946 = vmul.f32 %v5429, %v5836
    %v5947 = vmul.f32 %v5431, %v5838
    %v5948 = vmul.f32 %v5433, %v5840
    %v5949 = vmul.f32 %v5437, %v5842
    %v5950 = vmul.f32 %v5439, %v5844
    %v5951 = vmul.f32 %v5441, %v5846
    %v5952 = vmul.f32 %v5443, %v5848
    %v5953 = vmul.f32 %v5447, %v5850
    %v5954 = vmul.f32 %v5449, %v5852
    %v5955 = vmul.f32 %v5451, %v5854
    %v5956 = vmul.f32 %v5453, %v5856
    %v5957 = vmul.f32 %v5457, %v5858
    %v5958 = vmul.f32 %v5459, %v5860
    %v5959 = vmul.f32 %v5461, %v5862
    %v5960 = vmul.f32 %v5463, %v5864
    %v5961 = vmul.f32 %v5467, %v5866
    %v5962 = vmul.f32 %v5469, %v5868
    %v5963 = vmul.f32 %v5471, %v5870
    %v5964 = vmul.f32 %v5473, %v5872
    %v5965 = vmul.f32 %v5477, %v5874
    %v5966 = vmul.f32 %v5479, %v5876
    %v5967 = vmul.f32 %v5481, %v5878
    %v5968 = vmul.f32 %v5483, %v5880
    %v5969 = vmul.f32 %v5487, %v5882
    %v5970 = vmul.f32 %v5489, %v5884
    %v5971 = vmul.f32 %v5491, %v5886
    %v5972 = vmul.f32 %v5493, %v5888
    %v5973 = vmul.f32 %v5497, %v5890
    %v5974 = vmul.f32 %v5499, %v5892
    %v5975 = vmul.f32 %v5501, %v5894
    %v5976 = vmul.f32 %v5503, %v5896
    %v5977 = vmul.f32 %v5507, %v5898
    %v5978 = vmul.f32 %v5509, %v5900
    %v5979 = vmul.f32 %v5511, %v5902
    %v5980 = vmul.f32 %v5513, %v5904
    %v5981 = vmul.f32 %v5517, %v5906
    %v5982 = vmul.f32 %v5519, %v5908
    %v5983 = vmul.f32 %v5521, %v5910
    %v5984 = vmul.f32 %v5523, %v5912
    %v5985 = vmul.f32 %v5527, %v5914
    %v5986 = vmul.f32 %v5529, %v5916
    %v5987 = vmul.f32 %v5531, %v5918
    %v5988 = vmul.f32 %v5533, %v5920
    %v5989 = vmul.f32 %v5537, %v5922
    %v5990 = vmul.f32 %v5539, %v5924
    %v5991 = vmul.f32 %v5541, %v5926
    %v5992 = vmul.f32 %v5543, %v5928
    %v5993 = vadd.f32 %v5929, %v5930
    %5994 = vadd.xlane.f32.xlu0 %v5993
    %v5995 = vpop.xlane.xlu0 %5994
    %v5996 = vadd.f32 %v5931, %v5932
    %5997 = vadd.xlane.f32.xlu0 %v5996
    %v5998 = vpop.xlane.xlu0 %5997
    %v5999 = vadd.f32 %v5933, %v5934
    %6000 = vadd.xlane.f32.xlu0 %v5999
    %v6001 = vpop.xlane.xlu0 %6000
    %v6002 = vadd.f32 %v5935, %v5936
    %6003 = vadd.xlane.f32.xlu0 %v6002
    %v6004 = vpop.xlane.xlu0 %6003
    %v6005 = vadd.f32 %v5937, %v5938
    %6006 = vadd.xlane.f32.xlu0 %v6005
    %v6007 = vpop.xlane.xlu0 %6006
    %v6008 = vadd.f32 %v5939, %v5940
    %6009 = vadd.xlane.f32.xlu0 %v6008
    %v6010 = vpop.xlane.xlu0 %6009
    %v6011 = vadd.f32 %v5941, %v5942
    %6012 = vadd.xlane.f32.xlu0 %v6011
    %v6013 = vpop.xlane.xlu0 %6012
    %v6014 = vadd.f32 %v5943, %v5944
    %6015 = vadd.xlane.f32.xlu0 %v6014
    %v6016 = vpop.xlane.xlu0 %6015
    %v6017 = vadd.f32 %v5945, %v5946
    %6018 = vadd.xlane.f32.xlu0 %v6017
    %v6019 = vpop.xlane.xlu0 %6018
    %v6020 = vadd.f32 %v5947, %v5948
    %6021 = vadd.xlane.f32.xlu0 %v6020
    %v6022 = vpop.xlane.xlu0 %6021
    %v6023 = vadd.f32 %v5949, %v5950
    %6024 = vadd.xlane.f32.xlu0 %v6023
    %v6025 = vpop.xlane.xlu0 %6024
    %v6026 = vadd.f32 %v5951, %v5952
    %6027 = vadd.xlane.f32.xlu0 %v6026
    %v6028 = vpop.xlane.xlu0 %6027
    %v6029 = vadd.f32 %v5953, %v5954
    %6030 = vadd.xlane.f32.xlu0 %v6029
    %v6031 = vpop.xlane.xlu0 %6030
    %v6032 = vadd.f32 %v5955, %v5956
    %6033 = vadd.xlane.f32.xlu0 %v6032
    %v6034 = vpop.xlane.xlu0 %6033
    %v6035 = vadd.f32 %v5957, %v5958
    %6036 = vadd.xlane.f32.xlu0 %v6035
    %v6037 = vpop.xlane.xlu0 %6036
    %v6038 = vadd.f32 %v5959, %v5960
    %6039 = vadd.xlane.f32.xlu0 %v6038
    %v6040 = vpop.xlane.xlu0 %6039
    %v6041 = vadd.f32 %v5961, %v5962
    %6042 = vadd.xlane.f32.xlu0 %v6041
    %v6043 = vpop.xlane.xlu0 %6042
    %v6044 = vadd.f32 %v5963, %v5964
    %6045 = vadd.xlane.f32.xlu0 %v6044
    %v6046 = vpop.xlane.xlu0 %6045
    %v6047 = vadd.f32 %v5965, %v5966
    %6048 = vadd.xlane.f32.xlu0 %v6047
    %v6049 = vpop.xlane.xlu0 %6048
    %v6050 = vadd.f32 %v5967, %v5968
    %6051 = vadd.xlane.f32.xlu0 %v6050
    %v6052 = vpop.xlane.xlu0 %6051
    %v6053 = vadd.f32 %v5969, %v5970
    %6054 = vadd.xlane.f32.xlu0 %v6053
    %v6055 = vpop.xlane.xlu0 %6054
    %v6056 = vadd.f32 %v5971, %v5972
    %6057 = vadd.xlane.f32.xlu0 %v6056
    %v6058 = vpop.xlane.xlu0 %6057
    %v6059 = vadd.f32 %v5973, %v5974
    %6060 = vadd.xlane.f32.xlu0 %v6059
    %v6061 = vpop.xlane.xlu0 %6060
    %v6062 = vadd.f32 %v5975, %v5976
    %6063 = vadd.xlane.f32.xlu0 %v6062
    %v6064 = vpop.xlane.xlu0 %6063
    %v6065 = vadd.f32 %v5977, %v5978
    %6066 = vadd.xlane.f32.xlu0 %v6065
    %v6067 = vpop.xlane.xlu0 %6066
    %v6068 = vadd.f32 %v5979, %v5980
    %6069 = vadd.xlane.f32.xlu0 %v6068
    %v6070 = vpop.xlane.xlu0 %6069
    %v6071 = vadd.f32 %v5981, %v5982
    %6072 = vadd.xlane.f32.xlu0 %v6071
    %v6073 = vpop.xlane.xlu0 %6072
    %v6074 = vadd.f32 %v5983, %v5984
    %6075 = vadd.xlane.f32.xlu0 %v6074
    %v6076 = vpop.xlane.xlu0 %6075
    %v6077 = vadd.f32 %v5985, %v5986
    %6078 = vadd.xlane.f32.xlu0 %v6077
    %v6079 = vpop.xlane.xlu0 %6078
    %v6080 = vadd.f32 %v5987, %v5988
    %6081 = vadd.xlane.f32.xlu0 %v6080
    %v6082 = vpop.xlane.xlu0 %6081
    %v6083 = vadd.f32 %v5989, %v5990
    %6084 = vadd.xlane.f32.xlu0 %v6083
    %v6085 = vpop.xlane.xlu0 %6084
    %v6086 = vadd.f32 %v5991, %v5992
    %6087 = vadd.xlane.f32.xlu0 %v6086
    %v6088 = vpop.xlane.xlu0 %6087
    %v6089 = vmul.f32 %v5995, %v1193
    %v6090 = vmul.f32 %v5998, %v1193
    %v6091 = vmul.f32 %v6001, %v1193
    %v6092 = vmul.f32 %v6004, %v1193
    %v6093 = vmul.f32 %v6007, %v1193
    %v6094 = vmul.f32 %v6010, %v1193
    %v6095 = vmul.f32 %v6013, %v1193
    %v6096 = vmul.f32 %v6016, %v1193
    %v6097 = vmul.f32 %v6019, %v1193
    %v6098 = vmul.f32 %v6022, %v1193
    %v6099 = vmul.f32 %v6025, %v1193
    %v6100 = vmul.f32 %v6028, %v1193
    %v6101 = vmul.f32 %v6031, %v1193
    %v6102 = vmul.f32 %v6034, %v1193
    %v6103 = vmul.f32 %v6037, %v1193
    %v6104 = vmul.f32 %v6040, %v1193
    %v6105 = vmul.f32 %v6043, %v1193
    %v6106 = vmul.f32 %v6046, %v1193
    %v6107 = vmul.f32 %v6049, %v1193
    %v6108 = vmul.f32 %v6052, %v1193
    %v6109 = vmul.f32 %v6055, %v1193
    %v6110 = vmul.f32 %v6058, %v1193
    %v6111 = vmul.f32 %v6061, %v1193
    %v6112 = vmul.f32 %v6064, %v1193
    %v6113 = vmul.f32 %v6067, %v1193
    %v6114 = vmul.f32 %v6070, %v1193
    %v6115 = vmul.f32 %v6073, %v1193
    %v6116 = vmul.f32 %v6076, %v1193
    %v6117 = vmul.f32 %v6079, %v1193
    %v6118 = vmul.f32 %v6082, %v1193
    %v6119 = vmul.f32 %v6085, %v1193
    %v6120 = vmul.f32 %v6088, %v1193
    %v6121 = vsub.f32 %v5929, %v6089
    %v6122 = vsub.f32 %v5930, %v6089
    %v6123 = vsub.f32 %v5931, %v6090
    %v6124 = vsub.f32 %v5932, %v6090
    %v6125 = vsub.f32 %v5933, %v6091
    %v6126 = vsub.f32 %v5934, %v6091
    %v6127 = vsub.f32 %v5935, %v6092
    %v6128 = vsub.f32 %v5936, %v6092
    %v6129 = vsub.f32 %v5937, %v6093
    %v6130 = vsub.f32 %v5938, %v6093
    %v6131 = vsub.f32 %v5939, %v6094
    %v6132 = vsub.f32 %v5940, %v6094
    %v6133 = vsub.f32 %v5941, %v6095
    %v6134 = vsub.f32 %v5942, %v6095
    %v6135 = vsub.f32 %v5943, %v6096
    %v6136 = vsub.f32 %v5944, %v6096
    %v6137 = vsub.f32 %v5945, %v6097
    %v6138 = vsub.f32 %v5946, %v6097
    %v6139 = vsub.f32 %v5947, %v6098
    %v6140 = vsub.f32 %v5948, %v6098
    %v6141 = vsub.f32 %v5949, %v6099
    %v6142 = vsub.f32 %v5950, %v6099
    %v6143 = vsub.f32 %v5951, %v6100
    %v6144 = vsub.f32 %v5952, %v6100
    %v6145 = vsub.f32 %v5953, %v6101
    %v6146 = vsub.f32 %v5954, %v6101
    %v6147 = vsub.f32 %v5955, %v6102
    %v6148 = vsub.f32 %v5956, %v6102
    %v6149 = vsub.f32 %v5957, %v6103
    %v6150 = vsub.f32 %v5958, %v6103
    %v6151 = vsub.f32 %v5959, %v6104
    %v6152 = vsub.f32 %v5960, %v6104
    %v6153 = vsub.f32 %v5961, %v6105
    %v6154 = vsub.f32 %v5962, %v6105
    %v6155 = vsub.f32 %v5963, %v6106
    %v6156 = vsub.f32 %v5964, %v6106
    %v6157 = vsub.f32 %v5965, %v6107
    %v6158 = vsub.f32 %v5966, %v6107
    %v6159 = vsub.f32 %v5967, %v6108
    %v6160 = vsub.f32 %v5968, %v6108
    %v6161 = vsub.f32 %v5969, %v6109
    %v6162 = vsub.f32 %v5970, %v6109
    %v6163 = vsub.f32 %v5971, %v6110
    %v6164 = vsub.f32 %v5972, %v6110
    %v6165 = vsub.f32 %v5973, %v6111
    %v6166 = vsub.f32 %v5974, %v6111
    %v6167 = vsub.f32 %v5975, %v6112
    %v6168 = vsub.f32 %v5976, %v6112
    %v6169 = vsub.f32 %v5977, %v6113
    %v6170 = vsub.f32 %v5978, %v6113
    %v6171 = vsub.f32 %v5979, %v6114
    %v6172 = vsub.f32 %v5980, %v6114
    %v6173 = vsub.f32 %v5981, %v6115
    %v6174 = vsub.f32 %v5982, %v6115
    %v6175 = vsub.f32 %v5983, %v6116
    %v6176 = vsub.f32 %v5984, %v6116
    %v6177 = vsub.f32 %v5985, %v6117
    %v6178 = vsub.f32 %v5986, %v6117
    %v6179 = vsub.f32 %v5987, %v6118
    %v6180 = vsub.f32 %v5988, %v6118
    %v6181 = vsub.f32 %v5989, %v6119
    %v6182 = vsub.f32 %v5990, %v6119
    %v6183 = vsub.f32 %v5991, %v6120
    %v6184 = vsub.f32 %v5992, %v6120
    %v6185 = vmul.f32 %v6121, %v6121
    %v6186 = vmul.f32 %v6122, %v6122
    %v6187 = vmul.f32 %v6123, %v6123
    %v6188 = vmul.f32 %v6124, %v6124
    %v6189 = vmul.f32 %v6125, %v6125
    %v6190 = vmul.f32 %v6126, %v6126
    %v6191 = vmul.f32 %v6127, %v6127
    %v6192 = vmul.f32 %v6128, %v6128
    %v6193 = vmul.f32 %v6129, %v6129
    %v6194 = vmul.f32 %v6130, %v6130
    %v6195 = vmul.f32 %v6131, %v6131
    %v6196 = vmul.f32 %v6132, %v6132
    %v6197 = vmul.f32 %v6133, %v6133
    %v6198 = vmul.f32 %v6134, %v6134
    %v6199 = vmul.f32 %v6135, %v6135
    %v6200 = vmul.f32 %v6136, %v6136
    %v6201 = vmul.f32 %v6137, %v6137
    %v6202 = vmul.f32 %v6138, %v6138
    %v6203 = vmul.f32 %v6139, %v6139
    %v6204 = vmul.f32 %v6140, %v6140
    %v6205 = vmul.f32 %v6141, %v6141
    %v6206 = vmul.f32 %v6142, %v6142
    %v6207 = vmul.f32 %v6143, %v6143
    %v6208 = vmul.f32 %v6144, %v6144
    %v6209 = vmul.f32 %v6145, %v6145
    %v6210 = vmul.f32 %v6146, %v6146
    %v6211 = vmul.f32 %v6147, %v6147
    %v6212 = vmul.f32 %v6148, %v6148
    %v6213 = vmul.f32 %v6149, %v6149
    %v6214 = vmul.f32 %v6150, %v6150
    %v6215 = vmul.f32 %v6151, %v6151
    %v6216 = vmul.f32 %v6152, %v6152
    %v6217 = vmul.f32 %v6153, %v6153
    %v6218 = vmul.f32 %v6154, %v6154
    %v6219 = vmul.f32 %v6155, %v6155
    %v6220 = vmul.f32 %v6156, %v6156
    %v6221 = vmul.f32 %v6157, %v6157
    %v6222 = vmul.f32 %v6158, %v6158
    %v6223 = vmul.f32 %v6159, %v6159
    %v6224 = vmul.f32 %v6160, %v6160
    %v6225 = vmul.f32 %v6161, %v6161
    %v6226 = vmul.f32 %v6162, %v6162
    %v6227 = vmul.f32 %v6163, %v6163
    %v6228 = vmul.f32 %v6164, %v6164
    %v6229 = vmul.f32 %v6165, %v6165
    %v6230 = vmul.f32 %v6166, %v6166
    %v6231 = vmul.f32 %v6167, %v6167
    %v6232 = vmul.f32 %v6168, %v6168
    %v6233 = vmul.f32 %v6169, %v6169
    %v6234 = vmul.f32 %v6170, %v6170
    %v6235 = vmul.f32 %v6171, %v6171
    %v6236 = vmul.f32 %v6172, %v6172
    %v6237 = vmul.f32 %v6173, %v6173
    %v6238 = vmul.f32 %v6174, %v6174
    %v6239 = vmul.f32 %v6175, %v6175
    %v6240 = vmul.f32 %v6176, %v6176
    %v6241 = vmul.f32 %v6177, %v6177
    %v6242 = vmul.f32 %v6178, %v6178
    %v6243 = vmul.f32 %v6179, %v6179
    %v6244 = vmul.f32 %v6180, %v6180
    %v6245 = vmul.f32 %v6181, %v6181
    %v6246 = vmul.f32 %v6182, %v6182
    %v6247 = vmul.f32 %v6183, %v6183
    %v6248 = vmul.f32 %v6184, %v6184
    %v6249 = vadd.f32 %v6185, %v6186
    %6250 = vadd.xlane.f32.xlu0 %v6249
    %v6251 = vpop.xlane.xlu0 %6250
    %v6252 = vadd.f32 %v6187, %v6188
    %6253 = vadd.xlane.f32.xlu0 %v6252
    %v6254 = vpop.xlane.xlu0 %6253
    %v6255 = vadd.f32 %v6189, %v6190
    %6256 = vadd.xlane.f32.xlu0 %v6255
    %v6257 = vpop.xlane.xlu0 %6256
    %v6258 = vadd.f32 %v6191, %v6192
    %6259 = vadd.xlane.f32.xlu0 %v6258
    %v6260 = vpop.xlane.xlu0 %6259
    %v6261 = vadd.f32 %v6193, %v6194
    %6262 = vadd.xlane.f32.xlu0 %v6261
    %v6263 = vpop.xlane.xlu0 %6262
    %v6264 = vadd.f32 %v6195, %v6196
    %6265 = vadd.xlane.f32.xlu0 %v6264
    %v6266 = vpop.xlane.xlu0 %6265
    %v6267 = vadd.f32 %v6197, %v6198
    %6268 = vadd.xlane.f32.xlu0 %v6267
    %v6269 = vpop.xlane.xlu0 %6268
    %v6270 = vadd.f32 %v6199, %v6200
    %6271 = vadd.xlane.f32.xlu0 %v6270
    %v6272 = vpop.xlane.xlu0 %6271
    %v6273 = vadd.f32 %v6201, %v6202
    %6274 = vadd.xlane.f32.xlu0 %v6273
    %v6275 = vpop.xlane.xlu0 %6274
    %v6276 = vadd.f32 %v6203, %v6204
    %6277 = vadd.xlane.f32.xlu0 %v6276
    %v6278 = vpop.xlane.xlu0 %6277
    %v6279 = vadd.f32 %v6205, %v6206
    %6280 = vadd.xlane.f32.xlu0 %v6279
    %v6281 = vpop.xlane.xlu0 %6280
    %v6282 = vadd.f32 %v6207, %v6208
    %6283 = vadd.xlane.f32.xlu0 %v6282
    %v6284 = vpop.xlane.xlu0 %6283
    %v6285 = vadd.f32 %v6209, %v6210
    %6286 = vadd.xlane.f32.xlu0 %v6285
    %v6287 = vpop.xlane.xlu0 %6286
    %v6288 = vadd.f32 %v6211, %v6212
    %6289 = vadd.xlane.f32.xlu0 %v6288
    %v6290 = vpop.xlane.xlu0 %6289
    %v6291 = vadd.f32 %v6213, %v6214
    %6292 = vadd.xlane.f32.xlu0 %v6291
    %v6293 = vpop.xlane.xlu0 %6292
    %v6294 = vadd.f32 %v6215, %v6216
    %6295 = vadd.xlane.f32.xlu0 %v6294
    %v6296 = vpop.xlane.xlu0 %6295
    %v6297 = vadd.f32 %v6217, %v6218
    %6298 = vadd.xlane.f32.xlu0 %v6297
    %v6299 = vpop.xlane.xlu0 %6298
    %v6300 = vadd.f32 %v6219, %v6220
    %6301 = vadd.xlane.f32.xlu0 %v6300
    %v6302 = vpop.xlane.xlu0 %6301
    %v6303 = vadd.f32 %v6221, %v6222
    %6304 = vadd.xlane.f32.xlu0 %v6303
    %v6305 = vpop.xlane.xlu0 %6304
    %v6306 = vadd.f32 %v6223, %v6224
    %6307 = vadd.xlane.f32.xlu0 %v6306
    %v6308 = vpop.xlane.xlu0 %6307
    %v6309 = vadd.f32 %v6225, %v6226
    %6310 = vadd.xlane.f32.xlu0 %v6309
    %v6311 = vpop.xlane.xlu0 %6310
    %v6312 = vadd.f32 %v6227, %v6228
    %6313 = vadd.xlane.f32.xlu0 %v6312
    %v6314 = vpop.xlane.xlu0 %6313
    %v6315 = vadd.f32 %v6229, %v6230
    %6316 = vadd.xlane.f32.xlu0 %v6315
    %v6317 = vpop.xlane.xlu0 %6316
    %v6318 = vadd.f32 %v6231, %v6232
    %6319 = vadd.xlane.f32.xlu0 %v6318
    %v6320 = vpop.xlane.xlu0 %6319
    %v6321 = vadd.f32 %v6233, %v6234
    %6322 = vadd.xlane.f32.xlu0 %v6321
    %v6323 = vpop.xlane.xlu0 %6322
    %v6324 = vadd.f32 %v6235, %v6236
    %6325 = vadd.xlane.f32.xlu0 %v6324
    %v6326 = vpop.xlane.xlu0 %6325
    %v6327 = vadd.f32 %v6237, %v6238
    %6328 = vadd.xlane.f32.xlu0 %v6327
    %v6329 = vpop.xlane.xlu0 %6328
    %v6330 = vadd.f32 %v6239, %v6240
    %6331 = vadd.xlane.f32.xlu0 %v6330
    %v6332 = vpop.xlane.xlu0 %6331
    %v6333 = vadd.f32 %v6241, %v6242
    %6334 = vadd.xlane.f32.xlu0 %v6333
    %v6335 = vpop.xlane.xlu0 %6334
    %v6336 = vadd.f32 %v6243, %v6244
    %6337 = vadd.xlane.f32.xlu0 %v6336
    %v6338 = vpop.xlane.xlu0 %6337
    %v6339 = vadd.f32 %v6245, %v6246
    %6340 = vadd.xlane.f32.xlu0 %v6339
    %v6341 = vpop.xlane.xlu0 %6340
    %v6342 = vadd.f32 %v6247, %v6248
    %6343 = vadd.xlane.f32.xlu0 %v6342
    %v6344 = vpop.xlane.xlu0 %6343
    %v6345 = vmul.f32 %v6251, %v1193
    %v6346 = vmul.f32 %v6254, %v1193
    %v6347 = vmul.f32 %v6257, %v1193
    %v6348 = vmul.f32 %v6260, %v1193
    %v6349 = vmul.f32 %v6263, %v1193
    %v6350 = vmul.f32 %v6266, %v1193
    %v6351 = vmul.f32 %v6269, %v1193
    %v6352 = vmul.f32 %v6272, %v1193
    %v6353 = vmul.f32 %v6275, %v1193
    %v6354 = vmul.f32 %v6278, %v1193
    %v6355 = vmul.f32 %v6281, %v1193
    %v6356 = vmul.f32 %v6284, %v1193
    %v6357 = vmul.f32 %v6287, %v1193
    %v6358 = vmul.f32 %v6290, %v1193
    %v6359 = vmul.f32 %v6293, %v1193
    %v6360 = vmul.f32 %v6296, %v1193
    %v6361 = vmul.f32 %v6299, %v1193
    %v6362 = vmul.f32 %v6302, %v1193
    %v6363 = vmul.f32 %v6305, %v1193
    %v6364 = vmul.f32 %v6308, %v1193
    %v6365 = vmul.f32 %v6311, %v1193
    %v6366 = vmul.f32 %v6314, %v1193
    %v6367 = vmul.f32 %v6317, %v1193
    %v6368 = vmul.f32 %v6320, %v1193
    %v6369 = vmul.f32 %v6323, %v1193
    %v6370 = vmul.f32 %v6326, %v1193
    %v6371 = vmul.f32 %v6329, %v1193
    %v6372 = vmul.f32 %v6332, %v1193
    %v6373 = vmul.f32 %v6335, %v1193
    %v6374 = vmul.f32 %v6338, %v1193
    %v6375 = vmul.f32 %v6341, %v1193
    %v6376 = vmul.f32 %v6344, %v1193
    %v6377 = vadd.f32 %v6345, 1e-05
    %v6378 = vadd.f32 %v6346, 1e-05
    %v6379 = vadd.f32 %v6347, 1e-05
    %v6380 = vadd.f32 %v6348, 1e-05
    %v6381 = vadd.f32 %v6349, 1e-05
    %v6382 = vadd.f32 %v6350, 1e-05
    %v6383 = vadd.f32 %v6351, 1e-05
    %v6384 = vadd.f32 %v6352, 1e-05
    %v6385 = vadd.f32 %v6353, 1e-05
    %v6386 = vadd.f32 %v6354, 1e-05
    %v6387 = vadd.f32 %v6355, 1e-05
    %v6388 = vadd.f32 %v6356, 1e-05
    %v6389 = vadd.f32 %v6357, 1e-05
    %v6390 = vadd.f32 %v6358, 1e-05
    %v6391 = vadd.f32 %v6359, 1e-05
    %v6392 = vadd.f32 %v6360, 1e-05
    %v6393 = vadd.f32 %v6361, 1e-05
    %v6394 = vadd.f32 %v6362, 1e-05
    %v6395 = vadd.f32 %v6363, 1e-05
    %v6396 = vadd.f32 %v6364, 1e-05
    %v6397 = vadd.f32 %v6365, 1e-05
    %v6398 = vadd.f32 %v6366, 1e-05
    %v6399 = vadd.f32 %v6367, 1e-05
    %v6400 = vadd.f32 %v6368, 1e-05
    %v6401 = vadd.f32 %v6369, 1e-05
    %v6402 = vadd.f32 %v6370, 1e-05
    %v6403 = vadd.f32 %v6371, 1e-05
    %v6404 = vadd.f32 %v6372, 1e-05
    %v6405 = vadd.f32 %v6373, 1e-05
    %v6406 = vadd.f32 %v6374, 1e-05
    %v6407 = vadd.f32 %v6375, 1e-05
    %v6408 = vadd.f32 %v6376, 1e-05
    %v6409 = vrsqrt.pop %v6377
    %v6410 = vrsqrt.pop %v6378
    %v6411 = vrsqrt.pop %v6379
    %v6412 = vrsqrt.pop %v6380
    %v6413 = vrsqrt.pop %v6381
    %v6414 = vrsqrt.pop %v6382
    %v6415 = vrsqrt.pop %v6383
    %v6416 = vrsqrt.pop %v6384
    %v6417 = vrsqrt.pop %v6385
    %v6418 = vrsqrt.pop %v6386
    %v6419 = vrsqrt.pop %v6387
    %v6420 = vrsqrt.pop %v6388
    %v6421 = vrsqrt.pop %v6389
    %v6422 = vrsqrt.pop %v6390
    %v6423 = vrsqrt.pop %v6391
    %v6424 = vrsqrt.pop %v6392
    %v6425 = vrsqrt.pop %v6393
    %v6426 = vrsqrt.pop %v6394
    %v6427 = vrsqrt.pop %v6395
    %v6428 = vrsqrt.pop %v6396
    %v6429 = vrsqrt.pop %v6397
    %v6430 = vrsqrt.pop %v6398
    %v6431 = vrsqrt.pop %v6399
    %v6432 = vrsqrt.pop %v6400
    %v6433 = vrsqrt.pop %v6401
    %v6434 = vrsqrt.pop %v6402
    %v6435 = vrsqrt.pop %v6403
    %v6436 = vrsqrt.pop %v6404
    %v6437 = vrsqrt.pop %v6405
    %v6438 = vrsqrt.pop %v6406
    %v6439 = vrsqrt.pop %v6407
    %v6440 = vrsqrt.pop %v6408
    %v6441 = vmul.f32 %v6121, %v6409
    %v6442 = vmul.f32 %v6122, %v6409
    %v6443 = vmul.f32 %v6123, %v6410
    %v6444 = vmul.f32 %v6124, %v6410
    %v6445 = vmul.f32 %v6125, %v6411
    %v6446 = vmul.f32 %v6126, %v6411
    %v6447 = vmul.f32 %v6127, %v6412
    %v6448 = vmul.f32 %v6128, %v6412
    %v6449 = vmul.f32 %v6129, %v6413
    %v6450 = vmul.f32 %v6130, %v6413
    %v6451 = vmul.f32 %v6131, %v6414
    %v6452 = vmul.f32 %v6132, %v6414
    %v6453 = vmul.f32 %v6133, %v6415
    %v6454 = vmul.f32 %v6134, %v6415
    %v6455 = vmul.f32 %v6135, %v6416
    %v6456 = vmul.f32 %v6136, %v6416
    %v6457 = vmul.f32 %v6137, %v6417
    %v6458 = vmul.f32 %v6138, %v6417
    %v6459 = vmul.f32 %v6139, %v6418
    %v6460 = vmul.f32 %v6140, %v6418
    %v6461 = vmul.f32 %v6141, %v6419
    %v6462 = vmul.f32 %v6142, %v6419
    %v6463 = vmul.f32 %v6143, %v6420
    %v6464 = vmul.f32 %v6144, %v6420
    %v6465 = vmul.f32 %v6145, %v6421
    %v6466 = vmul.f32 %v6146, %v6421
    %v6467 = vmul.f32 %v6147, %v6422
    %v6468 = vmul.f32 %v6148, %v6422
    %v6469 = vmul.f32 %v6149, %v6423
    %v6470 = vmul.f32 %v6150, %v6423
    %v6471 = vmul.f32 %v6151, %v6424
    %v6472 = vmul.f32 %v6152, %v6424
    %v6473 = vmul.f32 %v6153, %v6425
    %v6474 = vmul.f32 %v6154, %v6425
    %v6475 = vmul.f32 %v6155, %v6426
    %v6476 = vmul.f32 %v6156, %v6426
    %v6477 = vmul.f32 %v6157, %v6427
    %v6478 = vmul.f32 %v6158, %v6427
    %v6479 = vmul.f32 %v6159, %v6428
    %v6480 = vmul.f32 %v6160, %v6428
    %v6481 = vmul.f32 %v6161, %v6429
    %v6482 = vmul.f32 %v6162, %v6429
    %v6483 = vmul.f32 %v6163, %v6430
    %v6484 = vmul.f32 %v6164, %v6430
    %v6485 = vmul.f32 %v6165, %v6431
    %v6486 = vmul.f32 %v6166, %v6431
    %v6487 = vmul.f32 %v6167, %v6432
    %v6488 = vmul.f32 %v6168, %v6432
    %v6489 = vmul.f32 %v6169, %v6433
    %v6490 = vmul.f32 %v6170, %v6433
    %v6491 = vmul.f32 %v6171, %v6434
    %v6492 = vmul.f32 %v6172, %v6434
    %v6493 = vmul.f32 %v6173, %v6435
    %v6494 = vmul.f32 %v6174, %v6435
    %v6495 = vmul.f32 %v6175, %v6436
    %v6496 = vmul.f32 %v6176, %v6436
    %v6497 = vmul.f32 %v6177, %v6437
    %v6498 = vmul.f32 %v6178, %v6437
    %v6499 = vmul.f32 %v6179, %v6438
    %v6500 = vmul.f32 %v6180, %v6438
    %v6501 = vmul.f32 %v6181, %v6439
    %v6502 = vmul.f32 %v6182, %v6439
    %v6503 = vmul.f32 %v6183, %v6440
    %v6504 = vmul.f32 %v6184, %v6440
    %v6505 = vmul.f32 %v6441, %v3144
    %v6506 = vmul.f32 %v6442, %v3148
    %v6507 = vmul.f32 %v6443, %v3144
    %v6508 = vmul.f32 %v6444, %v3148
    %v6509 = vmul.f32 %v6445, %v3144
    %v6510 = vmul.f32 %v6446, %v3148
    %v6511 = vmul.f32 %v6447, %v3144
    %v6512 = vmul.f32 %v6448, %v3148
    %v6513 = vmul.f32 %v6449, %v3144
    %v6514 = vmul.f32 %v6450, %v3148
    %v6515 = vmul.f32 %v6451, %v3144
    %v6516 = vmul.f32 %v6452, %v3148
    %v6517 = vmul.f32 %v6453, %v3144
    %v6518 = vmul.f32 %v6454, %v3148
    %v6519 = vmul.f32 %v6455, %v3144
    %v6520 = vmul.f32 %v6456, %v3148
    %v6521 = vmul.f32 %v6457, %v3144
    %v6522 = vmul.f32 %v6458, %v3148
    %v6523 = vmul.f32 %v6459, %v3144
    %v6524 = vmul.f32 %v6460, %v3148
    %v6525 = vmul.f32 %v6461, %v3144
    %v6526 = vmul.f32 %v6462, %v3148
    %v6527 = vmul.f32 %v6463, %v3144
    %v6528 = vmul.f32 %v6464, %v3148
    %v6529 = vmul.f32 %v6465, %v3144
    %v6530 = vmul.f32 %v6466, %v3148
    %v6531 = vmul.f32 %v6467, %v3144
    %v6532 = vmul.f32 %v6468, %v3148
    %v6533 = vmul.f32 %v6469, %v3144
    %v6534 = vmul.f32 %v6470, %v3148
    %v6535 = vmul.f32 %v6471, %v3144
    %v6536 = vmul.f32 %v6472, %v3148
    %v6537 = vmul.f32 %v6473, %v3144
    %v6538 = vmul.f32 %v6474, %v3148
    %v6539 = vmul.f32 %v6475, %v3144
    %v6540 = vmul.f32 %v6476, %v3148
    %v6541 = vmul.f32 %v6477, %v3144
    %v6542 = vmul.f32 %v6478, %v3148
    %v6543 = vmul.f32 %v6479, %v3144
    %v6544 = vmul.f32 %v6480, %v3148
    %v6545 = vmul.f32 %v6481, %v3144
    %v6546 = vmul.f32 %v6482, %v3148
    %v6547 = vmul.f32 %v6483, %v3144
    %v6548 = vmul.f32 %v6484, %v3148
    %v6549 = vmul.f32 %v6485, %v3144
    %v6550 = vmul.f32 %v6486, %v3148
    %v6551 = vmul.f32 %v6487, %v3144
    %v6552 = vmul.f32 %v6488, %v3148
    %v6553 = vmul.f32 %v6489, %v3144
    %v6554 = vmul.f32 %v6490, %v3148
    %v6555 = vmul.f32 %v6491, %v3144
    %v6556 = vmul.f32 %v6492, %v3148
    %v6557 = vmul.f32 %v6493, %v3144
    %v6558 = vmul.f32 %v6494, %v3148
    %v6559 = vmul.f32 %v6495, %v3144
    %v6560 = vmul.f32 %v6496, %v3148
    %v6561 = vmul.f32 %v6497, %v3144
    %v6562 = vmul.f32 %v6498, %v3148
    %v6563 = vmul.f32 %v6499, %v3144
    %v6564 = vmul.f32 %v6500, %v3148
    %v6565 = vmul.f32 %v6501, %v3144
    %v6566 = vmul.f32 %v6502, %v3148
    %v6567 = vmul.f32 %v6503, %v3144
    %v6568 = vmul.f32 %v6504, %v3148
    %v6569 = vadd.f32 %v6505, %v3219
    %v6570 = vadd.f32 %v6506, %v3223
    %v6571 = vadd.f32 %v6507, %v3219
    %v6572 = vadd.f32 %v6508, %v3223
    %v6573 = vadd.f32 %v6509, %v3219
    %v6574 = vadd.f32 %v6510, %v3223
    %v6575 = vadd.f32 %v6511, %v3219
    %v6576 = vadd.f32 %v6512, %v3223
    %v6577 = vadd.f32 %v6513, %v3219
    %v6578 = vadd.f32 %v6514, %v3223
    %v6579 = vadd.f32 %v6515, %v3219
    %v6580 = vadd.f32 %v6516, %v3223
    %v6581 = vadd.f32 %v6517, %v3219
    %v6582 = vadd.f32 %v6518, %v3223
    %v6583 = vadd.f32 %v6519, %v3219
    %v6584 = vadd.f32 %v6520, %v3223
    %v6585 = vadd.f32 %v6521, %v3219
    %v6586 = vadd.f32 %v6522, %v3223
    %v6587 = vadd.f32 %v6523, %v3219
    %v6588 = vadd.f32 %v6524, %v3223
    %v6589 = vadd.f32 %v6525, %v3219
    %v6590 = vadd.f32 %v6526, %v3223
    %v6591 = vadd.f32 %v6527, %v3219
    %v6592 = vadd.f32 %v6528, %v3223
    %v6593 = vadd.f32 %v6529, %v3219
    %v6594 = vadd.f32 %v6530, %v3223
    %v6595 = vadd.f32 %v6531, %v3219
    %v6596 = vadd.f32 %v6532, %v3223
    %v6597 = vadd.f32 %v6533, %v3219
    %v6598 = vadd.f32 %v6534, %v3223
    %v6599 = vadd.f32 %v6535, %v3219
    %v6600 = vadd.f32 %v6536, %v3223
    %v6601 = vadd.f32 %v6537, %v3219
    %v6602 = vadd.f32 %v6538, %v3223
    %v6603 = vadd.f32 %v6539, %v3219
    %v6604 = vadd.f32 %v6540, %v3223
    %v6605 = vadd.f32 %v6541, %v3219
    %v6606 = vadd.f32 %v6542, %v3223
    %v6607 = vadd.f32 %v6543, %v3219
    %v6608 = vadd.f32 %v6544, %v3223
    %v6609 = vadd.f32 %v6545, %v3219
    %v6610 = vadd.f32 %v6546, %v3223
    %v6611 = vadd.f32 %v6547, %v3219
    %v6612 = vadd.f32 %v6548, %v3223
    %v6613 = vadd.f32 %v6549, %v3219
    %v6614 = vadd.f32 %v6550, %v3223
    %v6615 = vadd.f32 %v6551, %v3219
    %v6616 = vadd.f32 %v6552, %v3223
    %v6617 = vadd.f32 %v6553, %v3219
    %v6618 = vadd.f32 %v6554, %v3223
    %v6619 = vadd.f32 %v6555, %v3219
    %v6620 = vadd.f32 %v6556, %v3223
    %v6621 = vadd.f32 %v6557, %v3219
    %v6622 = vadd.f32 %v6558, %v3223
    %v6623 = vadd.f32 %v6559, %v3219
    %v6624 = vadd.f32 %v6560, %v3223
    %v6625 = vadd.f32 %v6561, %v3219
    %v6626 = vadd.f32 %v6562, %v3223
    %v6627 = vadd.f32 %v6563, %v3219
    %v6628 = vadd.f32 %v6564, %v3223
    %v6629 = vadd.f32 %v6565, %v3219
    %v6630 = vadd.f32 %v6566, %v3223
    %v6631 = vadd.f32 %v6567, %v3219
    %v6632 = vadd.f32 %v6568, %v3223
    %v6633 = vmul.f32 %v6569, %v3294
    %v6634 = vmul.f32 %v6570, %v3298
    %v6635 = vmul.f32 %v6571, %v3294
    %v6636 = vmul.f32 %v6572, %v3298
    %v6637 = vmul.f32 %v6573, %v3294
    %v6638 = vmul.f32 %v6574, %v3298
    %v6639 = vmul.f32 %v6575, %v3294
    %v6640 = vmul.f32 %v6576, %v3298
    %v6641 = vmul.f32 %v6577, %v3294
    %v6642 = vmul.f32 %v6578, %v3298
    %v6643 = vmul.f32 %v6579, %v3294
    %v6644 = vmul.f32 %v6580, %v3298
    %v6645 = vmul.f32 %v6581, %v3294
    %v6646 = vmul.f32 %v6582, %v3298
    %v6647 = vmul.f32 %v6583, %v3294
    %v6648 = vmul.f32 %v6584, %v3298
    %v6649 = vmul.f32 %v6585, %v3294
    %v6650 = vmul.f32 %v6586, %v3298
    %v6651 = vmul.f32 %v6587, %v3294
    %v6652 = vmul.f32 %v6588, %v3298
    %v6653 = vmul.f32 %v6589, %v3294
    %v6654 = vmul.f32 %v6590, %v3298
    %v6655 = vmul.f32 %v6591, %v3294
    %v6656 = vmul.f32 %v6592, %v3298
    %v6657 = vmul.f32 %v6593, %v3294
    %v6658 = vmul.f32 %v6594, %v3298
    %v6659 = vmul.f32 %v6595, %v3294
    %v6660 = vmul.f32 %v6596, %v3298
    %v6661 = vmul.f32 %v6597, %v3294
    %v6662 = vmul.f32 %v6598, %v3298
    %v6663 = vmul.f32 %v6599, %v3294
    %v6664 = vmul.f32 %v6600, %v3298
    %v6665 = vmul.f32 %v6601, %v3294
    %v6666 = vmul.f32 %v6602, %v3298
    %v6667 = vmul.f32 %v6603, %v3294
    %v6668 = vmul.f32 %v6604, %v3298
    %v6669 = vmul.f32 %v6605, %v3294
    %v6670 = vmul.f32 %v6606, %v3298
    %v6671 = vmul.f32 %v6607, %v3294
    %v6672 = vmul.f32 %v6608, %v3298
    %v6673 = vmul.f32 %v6609, %v3294
    %v6674 = vmul.f32 %v6610, %v3298
    %v6675 = vmul.f32 %v6611, %v3294
    %v6676 = vmul.f32 %v6612, %v3298
    %v6677 = vmul.f32 %v6613, %v3294
    %v6678 = vmul.f32 %v6614, %v3298
    %v6679 = vmul.f32 %v6615, %v3294
    %v6680 = vmul.f32 %v6616, %v3298
    %v6681 = vmul.f32 %v6617, %v3294
    %v6682 = vmul.f32 %v6618, %v3298
    %v6683 = vmul.f32 %v6619, %v3294
    %v6684 = vmul.f32 %v6620, %v3298
    %v6685 = vmul.f32 %v6621, %v3294
    %v6686 = vmul.f32 %v6622, %v3298
    %v6687 = vmul.f32 %v6623, %v3294
    %v6688 = vmul.f32 %v6624, %v3298
    %v6689 = vmul.f32 %v6625, %v3294
    %v6690 = vmul.f32 %v6626, %v3298
    %v6691 = vmul.f32 %v6627, %v3294
    %v6692 = vmul.f32 %v6628, %v3298
    %v6693 = vmul.f32 %v6629, %v3294
    %v6694 = vmul.f32 %v6630, %v3298
    %v6695 = vmul.f32 %v6631, %v3294
    %v6696 = vmul.f32 %v6632, %v3298
    %v6697 = vadd.f32 %v6633, %v6634
    %6698 = vadd.xlane.f32.xlu0 %v6697
    %v6699 = vpop.xlane.xlu0 %6698
    %v6700 = vadd.f32 %v6635, %v6636
    %6701 = vadd.xlane.f32.xlu0 %v6700
    %v6702 = vpop.xlane.xlu0 %6701
    %v6703 = vadd.f32 %v6637, %v6638
    %6704 = vadd.xlane.f32.xlu0 %v6703
    %v6705 = vpop.xlane.xlu0 %6704
    %v6706 = vadd.f32 %v6639, %v6640
    %6707 = vadd.xlane.f32.xlu0 %v6706
    %v6708 = vpop.xlane.xlu0 %6707
    %v6709 = vadd.f32 %v6641, %v6642
    %6710 = vadd.xlane.f32.xlu0 %v6709
    %v6711 = vpop.xlane.xlu0 %6710
    %v6712 = vadd.f32 %v6643, %v6644
    %6713 = vadd.xlane.f32.xlu0 %v6712
    %v6714 = vpop.xlane.xlu0 %6713
    %v6715 = vadd.f32 %v6645, %v6646
    %6716 = vadd.xlane.f32.xlu0 %v6715
    %v6717 = vpop.xlane.xlu0 %6716
    %v6718 = vadd.f32 %v6647, %v6648
    %6719 = vadd.xlane.f32.xlu0 %v6718
    %v6720 = vpop.xlane.xlu0 %6719
    %v6721 = vadd.f32 %v6649, %v6650
    %6722 = vadd.xlane.f32.xlu0 %v6721
    %v6723 = vpop.xlane.xlu0 %6722
    %v6724 = vadd.f32 %v6651, %v6652
    %6725 = vadd.xlane.f32.xlu0 %v6724
    %v6726 = vpop.xlane.xlu0 %6725
    %v6727 = vadd.f32 %v6653, %v6654
    %6728 = vadd.xlane.f32.xlu0 %v6727
    %v6729 = vpop.xlane.xlu0 %6728
    %v6730 = vadd.f32 %v6655, %v6656
    %6731 = vadd.xlane.f32.xlu0 %v6730
    %v6732 = vpop.xlane.xlu0 %6731
    %v6733 = vadd.f32 %v6657, %v6658
    %6734 = vadd.xlane.f32.xlu0 %v6733
    %v6735 = vpop.xlane.xlu0 %6734
    %v6736 = vadd.f32 %v6659, %v6660
    %6737 = vadd.xlane.f32.xlu0 %v6736
    %v6738 = vpop.xlane.xlu0 %6737
    %v6739 = vadd.f32 %v6661, %v6662
    %6740 = vadd.xlane.f32.xlu0 %v6739
    %v6741 = vpop.xlane.xlu0 %6740
    %v6742 = vadd.f32 %v6663, %v6664
    %6743 = vadd.xlane.f32.xlu0 %v6742
    %v6744 = vpop.xlane.xlu0 %6743
    %v6745 = vadd.f32 %v6665, %v6666
    %6746 = vadd.xlane.f32.xlu0 %v6745
    %v6747 = vpop.xlane.xlu0 %6746
    %v6748 = vadd.f32 %v6667, %v6668
    %6749 = vadd.xlane.f32.xlu0 %v6748
    %v6750 = vpop.xlane.xlu0 %6749
    %v6751 = vadd.f32 %v6669, %v6670
    %6752 = vadd.xlane.f32.xlu0 %v6751
    %v6753 = vpop.xlane.xlu0 %6752
    %v6754 = vadd.f32 %v6671, %v6672
    %6755 = vadd.xlane.f32.xlu0 %v6754
    %v6756 = vpop.xlane.xlu0 %6755
    %v6757 = vadd.f32 %v6673, %v6674
    %6758 = vadd.xlane.f32.xlu0 %v6757
    %v6759 = vpop.xlane.xlu0 %6758
    %v6760 = vadd.f32 %v6675, %v6676
    %6761 = vadd.xlane.f32.xlu0 %v6760
    %v6762 = vpop.xlane.xlu0 %6761
    %v6763 = vadd.f32 %v6677, %v6678
    %6764 = vadd.xlane.f32.xlu0 %v6763
    %v6765 = vpop.xlane.xlu0 %6764
    %v6766 = vadd.f32 %v6679, %v6680
    %6767 = vadd.xlane.f32.xlu0 %v6766
    %v6768 = vpop.xlane.xlu0 %6767
    %v6769 = vadd.f32 %v6681, %v6682
    %6770 = vadd.xlane.f32.xlu0 %v6769
    %v6771 = vpop.xlane.xlu0 %6770
    %v6772 = vadd.f32 %v6683, %v6684
    %6773 = vadd.xlane.f32.xlu0 %v6772
    %v6774 = vpop.xlane.xlu0 %6773
    %v6775 = vadd.f32 %v6685, %v6686
    %6776 = vadd.xlane.f32.xlu0 %v6775
    %v6777 = vpop.xlane.xlu0 %6776
    %v6778 = vadd.f32 %v6687, %v6688
    %6779 = vadd.xlane.f32.xlu0 %v6778
    %v6780 = vpop.xlane.xlu0 %6779
    %v6781 = vadd.f32 %v6689, %v6690
    %6782 = vadd.xlane.f32.xlu0 %v6781
    %v6783 = vpop.xlane.xlu0 %6782
    %v6784 = vadd.f32 %v6691, %v6692
    %6785 = vadd.xlane.f32.xlu0 %v6784
    %v6786 = vpop.xlane.xlu0 %6785
    %v6787 = vadd.f32 %v6693, %v6694
    %6788 = vadd.xlane.f32.xlu0 %v6787
    %v6789 = vpop.xlane.xlu0 %6788
    %v6790 = vadd.f32 %v6695, %v6696
    %6791 = vadd.xlane.f32.xlu0 %v6790
    %v6792 = vpop.xlane.xlu0 %6791
    %vm6793 = vcmask 23568
    %6794 = vst.msk [vmem:[%s8] sm:$0xff] %vm6793, %v6699
    %6795 = vst.msk [vmem:[%s8 + $0x8] sm:$0xff] %vm6793, %v6702
    %6796 = vst.msk [vmem:[%s8 + $0x10] sm:$0xff] %vm6793, %v6705
    %6797 = vst.msk [vmem:[%s8 + $0x18] sm:$0xff] %vm6793, %v6708
    %6798 = vst.msk [vmem:[%s8 + $0x20] sm:$0xff] %vm6793, %v6711
    %6799 = vst.msk [vmem:[%s8 + $0x28] sm:$0xff] %vm6793, %v6714
    %6800 = vst.msk [vmem:[%s8 + $0x30] sm:$0xff] %vm6793, %v6717
    %6801 = vst.msk [vmem:[%s8 + $0x38] sm:$0xff] %vm6793, %v6720
    %6802 = vst.msk [vmem:[%s8 + $0x40] sm:$0xff] %vm6793, %v6723
    %6803 = vst.msk [vmem:[%s8 + $0x48] sm:$0xff] %vm6793, %v6726
    %6804 = vst.msk [vmem:[%s8 + $0x50] sm:$0xff] %vm6793, %v6729
    %6805 = vst.msk [vmem:[%s8 + $0x58] sm:$0xff] %vm6793, %v6732
    %6806 = vst.msk [vmem:[%s8 + $0x60] sm:$0xff] %vm6793, %v6735
    %6807 = vst.msk [vmem:[%s8 + $0x68] sm:$0xff] %vm6793, %v6738
    %6808 = vst.msk [vmem:[%s8 + $0x70] sm:$0xff] %vm6793, %v6741
    %6809 = vst.msk [vmem:[%s8 + $0x78] sm:$0xff] %vm6793, %v6744
    %6810 = vst.msk [vmem:[%s8 + $0x80] sm:$0xff] %vm6793, %v6747
    %6811 = vst.msk [vmem:[%s8 + $0x88] sm:$0xff] %vm6793, %v6750
    %6812 = vst.msk [vmem:[%s8 + $0x90] sm:$0xff] %vm6793, %v6753
    %6813 = vst.msk [vmem:[%s8 + $0x98] sm:$0xff] %vm6793, %v6756
    %6814 = vst.msk [vmem:[%s8 + $0xa0] sm:$0xff] %vm6793, %v6759
    %6815 = vst.msk [vmem:[%s8 + $0xa8] sm:$0xff] %vm6793, %v6762
    %6816 = vst.msk [vmem:[%s8 + $0xb0] sm:$0xff] %vm6793, %v6765
    %6817 = vst.msk [vmem:[%s8 + $0xb8] sm:$0xff] %vm6793, %v6768
    %6818 = vst.msk [vmem:[%s8 + $0xc0] sm:$0xff] %vm6793, %v6771
    %6819 = vst.msk [vmem:[%s8 + $0xc8] sm:$0xff] %vm6793, %v6774
    %6820 = vst.msk [vmem:[%s8 + $0xd0] sm:$0xff] %vm6793, %v6777
    %6821 = vst.msk [vmem:[%s8 + $0xd8] sm:$0xff] %vm6793, %v6780
    %6822 = vst.msk [vmem:[%s8 + $0xe0] sm:$0xff] %vm6793, %v6783
    %6823 = vst.msk [vmem:[%s8 + $0xe8] sm:$0xff] %vm6793, %v6786
    %6824 = vst.msk [vmem:[%s8 + $0xf0] sm:$0xff] %vm6793, %v6789
    %6825 = vst.msk [vmem:[%s8 + $0xf8] sm:$0xff] %vm6793, %v6792
    // Predicated region
    $region46: #{tpu_custom_call.1} parent=1 // pred_check
      _
    $region47: #{tpu_custom_call.1} parent=1 // pred_check_branch
      %6827 = sbr.rel (0) target = $region49
    $region48: #{tpu_custom_call.1} parent=1 // pred_region
      _
    $region49: #{tpu_custom_call.1} parent=1 // pred_fallthru
      _
    // Predicated region
    $region50: #{tpu_custom_call.1} parent=1 // pred_check
      _
    $region51: #{tpu_custom_call.1} parent=1 // pred_check_branch
      %6829 = sbr.rel (0) target = $region53
    $region52: #{tpu_custom_call.1} parent=1 // pred_region
      _
    $region53: #{tpu_custom_call.1} parent=1 // pred_fallthru
      _
    %6830 = vsyncpa [#allocation3], 1
    %6831 = vsyncpa [#allocation5], 1

</llo_original>
